<compile_context>
chip_gen: v7x
topology: tpu7x:2x2x1
jax: 0.10.0
libtpu: 0.0.40
codegen_flags: <defaults>
</compile_context>

<pallas_src>
import math
from functools import partial

import numpy as np
import jax
import jax.numpy as jnp
from jax import lax
from jax.experimental import pallas as pl
from jax.experimental.pallas import tpu as pltpu


# ----------------------------------------------------------------------------
# Glue: window partition / reverse (standard video-Swin helpers)
# ----------------------------------------------------------------------------
def window_partition(x, ws):
    # x: (B, T, H, W, C) -> (B * H/ws * W/ws, T, ws, ws, C)
    B, T, H, W, C = x.shape
    x = x.reshape(B, T, H // ws, ws, W // ws, ws, C)
    x = x.transpose(0, 2, 4, 1, 3, 5, 6)
    return x.reshape(-1, T, ws, ws, C)


def window_reverse(windows, ws, H, W, T):
    # windows: (B * H/ws * W/ws, T, ws, ws, C) -> (B, T, H, W, C)
    B = windows.shape[0] // ((H // ws) * (W // ws))
    x = windows.reshape(B, H // ws, W // ws, T, ws, ws, -1)
    x = x.transpose(0, 3, 1, 4, 2, 5, 6)
    return x.reshape(B, T, H, W, -1)


# ----------------------------------------------------------------------------
# Relative position bias (precomputed on host, exactly matching the PyTorch
# index arithmetic including negative-index wraparound)
# ----------------------------------------------------------------------------
def build_relative_position_bias(table, window_size, T, num_heads):
    wh, ww = window_size
    coords = np.stack(
        np.meshgrid(np.arange(T), np.arange(wh), np.arange(ww), indexing="ij")
    )  # (3, T, wh, ww)
    cf = coords.reshape(3, -1)
    rel = cf[:, :, None] - cf[:, None, :]          # (3, N, N)
    rel = rel.transpose(1, 2, 0).astype(np.int64)  # (N, N, 3)
    rel[:, :, 0] += wh - 1
    rel[:, :, 1] += ww - 1
    rel[:, :, 0] *= 2 * ww - 1
    idx = rel.sum(-1)                               # (N, N)
    tbl_size = table.shape[0]
    idx = np.mod(idx, tbl_size)                     # torch negative-index wrap
    N = T * wh * ww
    bias = jnp.asarray(table)[jnp.asarray(idx.reshape(-1))].reshape(N, N, num_heads)
    return jnp.transpose(bias, (2, 0, 1)).astype(jnp.float32)  # (nh, N, N)


# ----------------------------------------------------------------------------
# Pallas kernel: Bw windows x multi-head attention + batched output projection
# ----------------------------------------------------------------------------
def make_attn_kernel(Bw, num_heads, head_dim, dim, N, scale):
    def kernel(q_ref, k_ref, v_ref, bias_ref, wpt_ref, bp_ref, o_ref, xo_ref):
        # q_ref/k_ref/v_ref: (Bw, nh, N, hd)   bias_ref: (nh, N, N)
        # wpt_ref: (dim, dim) = proj_w.T (pre-transposed in wrapper)
        # bp_ref : (1, dim)   xo_ref: VMEM scratch (Bw, N, dim) f32
        for h in range(num_heads):                 # static, small head loop
            q = (q_ref[:, h, :, :] * scale).astype(jnp.bfloat16)   # (Bw, N, hd)
            k = k_ref[:, h, :, :].astype(jnp.bfloat16)
            v = v_ref[:, h, :, :].astype(jnp.bfloat16)

            # QK^T: contract last axis of both (no explicit transpose), f32 acc.
            s = lax.dot_general(q, k, (((2,), (2,)), ((0,), (0,))),
                                preferred_element_type=jnp.float32)  # (Bw, N, N)
            s = s + bias_ref[h, :, :]              # broadcast over windows
            s = s - jnp.max(s, axis=-1, keepdims=True)
            p = jnp.exp(s)
            p = p * pl.reciprocal(jnp.sum(p, axis=-1, keepdims=True), approx=True)

            # P @ V, bf16 operands, f32 accumulation.
            oh = lax.dot_general(p.astype(jnp.bfloat16), v,
                                 (((2,), (1,)), ((0,), (0,))),
                                 preferred_element_type=jnp.float32)  # (Bw, N, hd)
            xo_ref[:, :, h * head_dim:(h + 1) * head_dim] = oh

        # Output projection batched over all Bw windows: (Bw*N, dim) @ (dim, dim)
        xo = xo_ref[...].reshape(Bw * N, dim)
        y = jnp.dot(xo, wpt_ref[...], preferred_element_type=jnp.float32)
        y = y + bp_ref[...]                        # (1, dim) broadcast
        o_ref[...] = y.reshape(Bw, N, dim).astype(o_ref.dtype)

    return kernel


def _pick_windows_per_block(B_, max_bw=8):
    """Largest divisor of B_ (<= max_bw) that still leaves >= 2 grid steps."""
    best = 1
    for bw in range(1, min(max_bw, B_) + 1):
        if B_ % bw == 0 and (B_ // bw) >= 2:
            best = bw
    return best


def window_attention_pallas(xw, bias, proj_w, proj_b, num_heads, dim, scale):
    # xw: (B_, N, 3*dim) channels-last window tokens.
    B_, N, C3 = xw.shape
    head_dim = dim // num_heads

    # Head split in the wrapper (same permute as the PyTorch module); the
    # BlockSpec DMA then delivers per-head tiles without in-kernel lane slicing.
    qkv = xw.reshape(B_, N, 3, num_heads, head_dim).transpose(2, 0, 3, 1, 4)
    q, k, v = qkv[0], qkv[1], qkv[2]               # each (B_, nh, N, hd)

    wpt = proj_w.T                                 # (dim_in, dim_out): y = x @ W^T
    bp2 = proj_b.reshape(1, dim)

    Bw = _pick_windows_per_block(B_)
    grid = (B_ // Bw,)
    kernel = make_attn_kernel(Bw, num_heads, head_dim, dim, N, scale)

    return pl.pallas_call(
        kernel,
        out_shape=jax.ShapeDtypeStruct((B_, N, dim), xw.dtype),
        grid_spec=pltpu.PrefetchScalarGridSpec(
            num_scalar_prefetch=0,
            grid=grid,
            in_specs=[
                pl.BlockSpec((Bw, num_heads, N, head_dim), lambda i: (i, 0, 0, 0)),  # q
                pl.BlockSpec((Bw, num_heads, N, head_dim), lambda i: (i, 0, 0, 0)),  # k
                pl.BlockSpec((Bw, num_heads, N, head_dim), lambda i: (i, 0, 0, 0)),  # v
                pl.BlockSpec((num_heads, N, N), lambda i: (0, 0, 0)),                # rel bias
                pl.BlockSpec((dim, dim), lambda i: (0, 0)),                          # proj W^T
                pl.BlockSpec((1, dim), lambda i: (0, 0)),                            # proj b
            ],
            out_specs=pl.BlockSpec((Bw, N, dim), lambda i: (i, 0, 0)),
            scratch_shapes=[pltpu.VMEM((Bw, N, dim), jnp.float32)],
        ),
        compiler_params=pltpu.CompilerParams(
            dimension_semantics=("parallel",)
        ),
    )(q, k, v, bias, wpt, bp2)


# ----------------------------------------------------------------------------
# Full forward (mirrors WindowAttention.forward, mask=None, dropout=0)
# ----------------------------------------------------------------------------
# TODO(synk): the optional (0/-inf) attention mask argument of the PyTorch
# forward is not implemented; this path matches mask=None exactly.
def window_attention_forward(qkv, x_size, params, *, dim, window_size, num_heads,
                             T, window_shift=True):
    H, W = x_size                                  # static under jit
    B, L, C = qkv.shape
    ws = window_size[0]
    shift = (window_size[0] // 2 if window_shift else 0,
             window_size[1] // 2 if window_shift else 0)
    head_dim = dim // num_heads
    scale = head_dim ** (-0.5)

    x = qkv.reshape(B, T, H, W, C)
    if shift[0] > 0:
        x = jnp.roll(x, shift=(-shift[0], -shift[1]), axis=(2, 3))
    xw = window_partition(x, ws)                   # (B_, T, ws, ws, C)
    xw = xw.reshape(-1, T * ws * ws, C)            # (B_, N, C)

    out_win = window_attention_pallas(
        xw, params["rel_bias"], params["proj_w"], params["proj_b"],
        num_heads, dim, scale)                     # (B_, N, dim)

    out = out_win.reshape(-1, T, ws, ws, dim)
    out = window_reverse(out, ws, H, W, T)         # (B, T, H, W, dim)
    if shift[0] > 0:
        out = jnp.roll(out, shift=(shift[0], shift[1]), axis=(2, 3))
    return out.reshape(B, T * H * W, dim)


# ----------------------------------------------------------------------------
# Pure-JAX f32 reference for the window-attention hot path (sanity check only)
# ----------------------------------------------------------------------------
def ref_window_attention(xw, bias, proj_w, proj_b, num_heads, dim, scale):
    B_, N, C3 = xw.shape
    hd = dim // num_heads
    qkv = xw.reshape(B_, N, 3, num_heads, hd).transpose(2, 0, 3, 1, 4)
    q, k, v = qkv[0] * scale, qkv[1], qkv[2]
    attn = jnp.einsum("bhnd,bhmd->bhnm", q, k) + bias[None]
    attn = jax.nn.softmax(attn, axis=-1)
    x = jnp.einsum("bhnm,bhmd->bhnd", attn, v).transpose(0, 2, 1, 3).reshape(B_, N, dim)
    return x @ proj_w.T + proj_b


# ----------------------------------------------------------------------------
# Main
# ----------------------------------------------------------------------------
if __name__ == "__main__":
    # Small, module-consistent shapes
    B = 2
    dim = 32
    num_heads = 4
    window_size = (4, 4)
    T = 5
    H = W = 8
    C = 3 * dim
    L = T * H * W

    key = jax.random.PRNGKey(0)
    k_in, k_tbl, k_pw, k_pb = jax.random.split(key, 4)

    # Deterministic parameter init (synthetic; matches __init__ shapes)
    tbl_rows = (T * 2 * window_size[0] - 1) * (2 * window_size[1] - 1)
    rel_table = (jax.random.truncated_normal(
        k_tbl, -2.0, 2.0, (tbl_rows, num_heads), jnp.float32) * 0.02)
    bound = 1.0 / math.sqrt(dim)
    proj_w = jax.random.uniform(k_pw, (dim, dim), jnp.float32, -bound, bound)
    proj_b = jax.random.uniform(k_pb, (dim,), jnp.float32, -bound, bound)

    params = {
        "rel_bias": build_relative_position_bias(
            np.asarray(rel_table), window_size, T, num_heads),
        "proj_w": proj_w,
        "proj_b": proj_b,
    }

    qkv = jax.random.normal(k_in, (B, L, C), jnp.float32)

    # x_size is static (fixes the previous traced-reshape failure under jit).
    fwd = jax.jit(partial(window_attention_forward,
                          dim=dim, window_size=window_size,
                          num_heads=num_heads, T=T, window_shift=True),
                  static_argnums=(1,))
    out = fwd(qkv, (H, W), params)
    out = jax.block_until_ready(out)
    assert out.shape == (B, T * H * W, dim), out.shape

    # Sanity-check the kernel against a pure-JAX f32 reference of the hot path.
    # Tolerance is relaxed because the kernel uses bf16 MXU operands (f32 acc).
    ws = window_size[0]
    shift = (ws // 2, ws // 2)
    head_dim = dim // num_heads
    scale = head_dim ** (-0.5)
    x = qkv.reshape(B, T, H, W, C)
    x = jnp.roll(x, shift=(-shift[0], -shift[1]), axis=(2, 3))
    xw = window_partition(x, ws).reshape(-1, T * ws * ws, C)
    got = window_attention_pallas(xw, params["rel_bias"], proj_w, proj_b,
                                  num_heads, dim, scale)
    got = jax.block_until_ready(got)
    want = ref_window_attention(xw, params["rel_bias"], proj_w, proj_b,
                                num_heads, dim, scale)
    np.testing.assert_allclose(np.asarray(got), np.asarray(want),
                               rtol=5e-2, atol=3e-2)

    print("KERNEL_OK")
</pallas_src>

<mosaic_0001>
module attributes {stable_mosaic.version = 11 : i64} {
  func.func @kernel(%arg0: i32, %arg1: memref<4x4x80x8xf32, #tpu.memory_space<vmem>>, %arg2: memref<4x4x80x8xf32, #tpu.memory_space<vmem>>, %arg3: memref<4x4x80x8xf32, #tpu.memory_space<vmem>>, %arg4: memref<4x80x80xf32, #tpu.memory_space<vmem>>, %arg5: memref<32x32xf32, #tpu.memory_space<vmem>>, %arg6: memref<1x32xf32, #tpu.memory_space<vmem>>, %arg7: memref<4x80x32xf32, #tpu.memory_space<vmem>>, %arg8: memref<4x80x32xf32, #tpu.memory_space<vmem>>) attributes {dimension_semantics = [#tpu.dimension_semantics<parallel>], iteration_bounds = array<i64: 2>, scalar_prefetch = 0 : i64, scratch_operands = 1 : i64, tpu.core_type = #tpu.core_type<tc>, window_params = [{transform_indices = @transform_0, window_bounds = array<i64: 4, 4, 80, 8>}, {transform_indices = @transform_1, window_bounds = array<i64: 4, 4, 80, 8>}, {transform_indices = @transform_2, window_bounds = array<i64: 4, 4, 80, 8>}, {pipeline_mode = #tpu.pipeline_mode<synchronous>, transform_indices = @transform_3, window_bounds = array<i64: 4, 80, 80>}, {pipeline_mode = #tpu.pipeline_mode<synchronous>, transform_indices = @transform_4, window_bounds = array<i64: 32, 32>}, {pipeline_mode = #tpu.pipeline_mode<synchronous>, transform_indices = @transform_5, window_bounds = array<i64: 1, 32>}, {transform_indices = @transform_6, window_bounds = array<i64: 4, 80, 32>}]} {
    %c0 = arith.constant 0 : index
    %c0_0 = arith.constant 0 : index
    %c0_1 = arith.constant 0 : index
    %c0_2 = arith.constant 0 : index
    %0 = vector.load %arg1[%c0, %c0_0, %c0_1, %c0_2] : memref<4x4x80x8xf32, #tpu.memory_space<vmem>>, vector<4x1x80x8xf32>
    %1 = vector.shape_cast %0 : vector<4x1x80x8xf32> to vector<4x80x8xf32>
    %cst = arith.constant 0.353553385 : f32
    %2 = vector.broadcast %cst : f32 to vector<4x80x8xf32>
    %3 = arith.mulf %1, %2 : vector<4x80x8xf32>
    %4 = arith.truncf %3 : vector<4x80x8xf32> to vector<4x80x8xbf16>
    %c0_3 = arith.constant 0 : index
    %c0_4 = arith.constant 0 : index
    %c0_5 = arith.constant 0 : index
    %c0_6 = arith.constant 0 : index
    %5 = vector.load %arg2[%c0_3, %c0_4, %c0_5, %c0_6] : memref<4x4x80x8xf32, #tpu.memory_space<vmem>>, vector<4x1x80x8xf32>
    %6 = vector.shape_cast %5 : vector<4x1x80x8xf32> to vector<4x80x8xf32>
    %7 = arith.truncf %6 : vector<4x80x8xf32> to vector<4x80x8xbf16>
    %c0_7 = arith.constant 0 : index
    %c0_8 = arith.constant 0 : index
    %c0_9 = arith.constant 0 : index
    %c0_10 = arith.constant 0 : index
    %8 = vector.load %arg3[%c0_7, %c0_8, %c0_9, %c0_10] : memref<4x4x80x8xf32, #tpu.memory_space<vmem>>, vector<4x1x80x8xf32>
    %9 = vector.shape_cast %8 : vector<4x1x80x8xf32> to vector<4x80x8xf32>
    %10 = arith.truncf %9 : vector<4x80x8xf32> to vector<4x80x8xbf16>
    %cst_11 = arith.constant dense<0.000000e+00> : vector<4x80x80xf32>
    %11 = tpu.matmul %4, %7, %cst_11 {dimension_numbers = #tpu.dot_dimension_numbers<[2], [2], [1], [1], [0, 0, 0, 1, 1, 1], [0], [0]>} : vector<4x80x8xbf16>, vector<4x80x8xbf16>, vector<4x80x80xf32> -> vector<4x80x80xf32>
    %c0_12 = arith.constant 0 : index
    %c0_13 = arith.constant 0 : index
    %c0_14 = arith.constant 0 : index
    %12 = vector.load %arg4[%c0_12, %c0_13, %c0_14] : memref<4x80x80xf32, #tpu.memory_space<vmem>>, vector<1x80x80xf32>
    %13 = vector.shape_cast %12 : vector<1x80x80xf32> to vector<80x80xf32>
    %14 = vector.shape_cast %13 : vector<80x80xf32> to vector<1x80x80xf32>
    %15 = vector.broadcast %14 : vector<1x80x80xf32> to vector<4x80x80xf32>
    %16 = arith.addf %11, %15 : vector<4x80x80xf32>
    %cst_15 = arith.constant dense<0xFF800000> : vector<4x80xf32>
    %17 = vector.multi_reduction <maximumf>, %16, %cst_15 [2] : vector<4x80x80xf32> to vector<4x80xf32>
    %18 = vector.shape_cast %17 : vector<4x80xf32> to vector<4x80x1xf32>
    %19 = vector.broadcast %18 : vector<4x80x1xf32> to vector<4x80x80xf32>
    %20 = arith.subf %16, %19 : vector<4x80x80xf32>
    %21 = math.exp %20 : vector<4x80x80xf32>
    %cst_16 = arith.constant dense<0.000000e+00> : vector<4x80xf32>
    %22 = vector.multi_reduction <add>, %21, %cst_16 [2] : vector<4x80x80xf32> to vector<4x80xf32>
    %23 = vector.shape_cast %22 : vector<4x80xf32> to vector<4x80x1xf32>
    %24 = tpu.reciprocal %23 {approx = true} : vector<4x80x1xf32> -> vector<4x80x1xf32>
    %25 = vector.broadcast %24 : vector<4x80x1xf32> to vector<4x80x80xf32>
    %26 = arith.mulf %21, %25 : vector<4x80x80xf32>
    %27 = arith.truncf %26 : vector<4x80x80xf32> to vector<4x80x80xbf16>
    %cst_17 = arith.constant dense<0.000000e+00> : vector<4x80x8xf32>
    %28 = tpu.matmul %27, %10, %cst_17 {dimension_numbers = #tpu.dot_dimension_numbers<[2], [1], [1], [2], [0, 0, 0, 1, 1, 2], [0], [0]>} : vector<4x80x80xbf16>, vector<4x80x8xbf16>, vector<4x80x8xf32> -> vector<4x80x8xf32>
    %c0_18 = arith.constant 0 : index
    %c0_19 = arith.constant 0 : index
    %c0_20 = arith.constant 0 : index
    %29 = vector.load %arg8[%c0_18, %c0_19, %c0_20] : memref<4x80x32xf32, #tpu.memory_space<vmem>>, vector<4x80x8xf32>
    tpu.vector_store %arg8[%c0_18, %c0_19, %c0_20], %28 {strides = array<i32>} : memref<4x80x32xf32, #tpu.memory_space<vmem>>, vector<4x80x8xf32>,
    %c0_21 = arith.constant 0 : index
    %c1 = arith.constant 1 : index
    %c0_22 = arith.constant 0 : index
    %c0_23 = arith.constant 0 : index
    %30 = vector.load %arg1[%c0_21, %c1, %c0_22, %c0_23] : memref<4x4x80x8xf32, #tpu.memory_space<vmem>>, vector<4x1x80x8xf32>
    %31 = vector.shape_cast %30 : vector<4x1x80x8xf32> to vector<4x80x8xf32>
    %cst_24 = arith.constant 0.353553385 : f32
    %32 = vector.broadcast %cst_24 : f32 to vector<4x80x8xf32>
    %33 = arith.mulf %31, %32 : vector<4x80x8xf32>
    %34 = arith.truncf %33 : vector<4x80x8xf32> to vector<4x80x8xbf16>
    %c0_25 = arith.constant 0 : index
    %c1_26 = arith.constant 1 : index
    %c0_27 = arith.constant 0 : index
    %c0_28 = arith.constant 0 : index
    %35 = vector.load %arg2[%c0_25, %c1_26, %c0_27, %c0_28] : memref<4x4x80x8xf32, #tpu.memory_space<vmem>>, vector<4x1x80x8xf32>
    %36 = vector.shape_cast %35 : vector<4x1x80x8xf32> to vector<4x80x8xf32>
    %37 = arith.truncf %36 : vector<4x80x8xf32> to vector<4x80x8xbf16>
    %c0_29 = arith.constant 0 : index
    %c1_30 = arith.constant 1 : index
    %c0_31 = arith.constant 0 : index
    %c0_32 = arith.constant 0 : index
    %38 = vector.load %arg3[%c0_29, %c1_30, %c0_31, %c0_32] : memref<4x4x80x8xf32, #tpu.memory_space<vmem>>, vector<4x1x80x8xf32>
    %39 = vector.shape_cast %38 : vector<4x1x80x8xf32> to vector<4x80x8xf32>
    %40 = arith.truncf %39 : vector<4x80x8xf32> to vector<4x80x8xbf16>
    %cst_33 = arith.constant dense<0.000000e+00> : vector<4x80x80xf32>
    %41 = tpu.matmul %34, %37, %cst_33 {dimension_numbers = #tpu.dot_dimension_numbers<[2], [2], [1], [1], [0, 0, 0, 1, 1, 1], [0], [0]>} : vector<4x80x8xbf16>, vector<4x80x8xbf16>, vector<4x80x80xf32> -> vector<4x80x80xf32>
    %c1_34 = arith.constant 1 : index
    %c0_35 = arith.constant 0 : index
    %c0_36 = arith.constant 0 : index
    %42 = vector.load %arg4[%c1_34, %c0_35, %c0_36] : memref<4x80x80xf32, #tpu.memory_space<vmem>>, vector<1x80x80xf32>
    %43 = vector.shape_cast %42 : vector<1x80x80xf32> to vector<80x80xf32>
    %44 = vector.shape_cast %43 : vector<80x80xf32> to vector<1x80x80xf32>
    %45 = vector.broadcast %44 : vector<1x80x80xf32> to vector<4x80x80xf32>
    %46 = arith.addf %41, %45 : vector<4x80x80xf32>
    %cst_37 = arith.constant dense<0xFF800000> : vector<4x80xf32>
    %47 = vector.multi_reduction <maximumf>, %46, %cst_37 [2] : vector<4x80x80xf32> to vector<4x80xf32>
    %48 = vector.shape_cast %47 : vector<4x80xf32> to vector<4x80x1xf32>
    %49 = vector.broadcast %48 : vector<4x80x1xf32> to vector<4x80x80xf32>
    %50 = arith.subf %46, %49 : vector<4x80x80xf32>
    %51 = math.exp %50 : vector<4x80x80xf32>
    %cst_38 = arith.constant dense<0.000000e+00> : vector<4x80xf32>
    %52 = vector.multi_reduction <add>, %51, %cst_38 [2] : vector<4x80x80xf32> to vector<4x80xf32>
    %53 = vector.shape_cast %52 : vector<4x80xf32> to vector<4x80x1xf32>
    %54 = tpu.reciprocal %53 {approx = true} : vector<4x80x1xf32> -> vector<4x80x1xf32>
    %55 = vector.broadcast %54 : vector<4x80x1xf32> to vector<4x80x80xf32>
    %56 = arith.mulf %51, %55 : vector<4x80x80xf32>
    %57 = arith.truncf %56 : vector<4x80x80xf32> to vector<4x80x80xbf16>
    %cst_39 = arith.constant dense<0.000000e+00> : vector<4x80x8xf32>
    %58 = tpu.matmul %57, %40, %cst_39 {dimension_numbers = #tpu.dot_dimension_numbers<[2], [1], [1], [2], [0, 0, 0, 1, 1, 2], [0], [0]>} : vector<4x80x80xbf16>, vector<4x80x8xbf16>, vector<4x80x8xf32> -> vector<4x80x8xf32>
    %c0_40 = arith.constant 0 : index
    %c0_41 = arith.constant 0 : index
    %c8 = arith.constant 8 : index
    %59 = vector.load %arg8[%c0_40, %c0_41, %c8] : memref<4x80x32xf32, #tpu.memory_space<vmem>>, vector<4x80x8xf32>
    tpu.vector_store %arg8[%c0_40, %c0_41, %c8], %58 {strides = array<i32>} : memref<4x80x32xf32, #tpu.memory_space<vmem>>, vector<4x80x8xf32>,
    %c0_42 = arith.constant 0 : index
    %c2 = arith.constant 2 : index
    %c0_43 = arith.constant 0 : index
    %c0_44 = arith.constant 0 : index
    %60 = vector.load %arg1[%c0_42, %c2, %c0_43, %c0_44] : memref<4x4x80x8xf32, #tpu.memory_space<vmem>>, vector<4x1x80x8xf32>
    %61 = vector.shape_cast %60 : vector<4x1x80x8xf32> to vector<4x80x8xf32>
    %cst_45 = arith.constant 0.353553385 : f32
    %62 = vector.broadcast %cst_45 : f32 to vector<4x80x8xf32>
    %63 = arith.mulf %61, %62 : vector<4x80x8xf32>
    %64 = arith.truncf %63 : vector<4x80x8xf32> to vector<4x80x8xbf16>
    %c0_46 = arith.constant 0 : index
    %c2_47 = arith.constant 2 : index
    %c0_48 = arith.constant 0 : index
    %c0_49 = arith.constant 0 : index
    %65 = vector.load %arg2[%c0_46, %c2_47, %c0_48, %c0_49] : memref<4x4x80x8xf32, #tpu.memory_space<vmem>>, vector<4x1x80x8xf32>
    %66 = vector.shape_cast %65 : vector<4x1x80x8xf32> to vector<4x80x8xf32>
    %67 = arith.truncf %66 : vector<4x80x8xf32> to vector<4x80x8xbf16>
    %c0_50 = arith.constant 0 : index
    %c2_51 = arith.constant 2 : index
    %c0_52 = arith.constant 0 : index
    %c0_53 = arith.constant 0 : index
    %68 = vector.load %arg3[%c0_50, %c2_51, %c0_52, %c0_53] : memref<4x4x80x8xf32, #tpu.memory_space<vmem>>, vector<4x1x80x8xf32>
    %69 = vector.shape_cast %68 : vector<4x1x80x8xf32> to vector<4x80x8xf32>
    %70 = arith.truncf %69 : vector<4x80x8xf32> to vector<4x80x8xbf16>
    %cst_54 = arith.constant dense<0.000000e+00> : vector<4x80x80xf32>
    %71 = tpu.matmul %64, %67, %cst_54 {dimension_numbers = #tpu.dot_dimension_numbers<[2], [2], [1], [1], [0, 0, 0, 1, 1, 1], [0], [0]>} : vector<4x80x8xbf16>, vector<4x80x8xbf16>, vector<4x80x80xf32> -> vector<4x80x80xf32>
    %c2_55 = arith.constant 2 : index
    %c0_56 = arith.constant 0 : index
    %c0_57 = arith.constant 0 : index
    %72 = vector.load %arg4[%c2_55, %c0_56, %c0_57] : memref<4x80x80xf32, #tpu.memory_space<vmem>>, vector<1x80x80xf32>
    %73 = vector.shape_cast %72 : vector<1x80x80xf32> to vector<80x80xf32>
    %74 = vector.shape_cast %73 : vector<80x80xf32> to vector<1x80x80xf32>
    %75 = vector.broadcast %74 : vector<1x80x80xf32> to vector<4x80x80xf32>
    %76 = arith.addf %71, %75 : vector<4x80x80xf32>
    %cst_58 = arith.constant dense<0xFF800000> : vector<4x80xf32>
    %77 = vector.multi_reduction <maximumf>, %76, %cst_58 [2] : vector<4x80x80xf32> to vector<4x80xf32>
    %78 = vector.shape_cast %77 : vector<4x80xf32> to vector<4x80x1xf32>
    %79 = vector.broadcast %78 : vector<4x80x1xf32> to vector<4x80x80xf32>
    %80 = arith.subf %76, %79 : vector<4x80x80xf32>
    %81 = math.exp %80 : vector<4x80x80xf32>
    %cst_59 = arith.constant dense<0.000000e+00> : vector<4x80xf32>
    %82 = vector.multi_reduction <add>, %81, %cst_59 [2] : vector<4x80x80xf32> to vector<4x80xf32>
    %83 = vector.shape_cast %82 : vector<4x80xf32> to vector<4x80x1xf32>
    %84 = tpu.reciprocal %83 {approx = true} : vector<4x80x1xf32> -> vector<4x80x1xf32>
    %85 = vector.broadcast %84 : vector<4x80x1xf32> to vector<4x80x80xf32>
    %86 = arith.mulf %81, %85 : vector<4x80x80xf32>
    %87 = arith.truncf %86 : vector<4x80x80xf32> to vector<4x80x80xbf16>
    %cst_60 = arith.constant dense<0.000000e+00> : vector<4x80x8xf32>
    %88 = tpu.matmul %87, %70, %cst_60 {dimension_numbers = #tpu.dot_dimension_numbers<[2], [1], [1], [2], [0, 0, 0, 1, 1, 2], [0], [0]>} : vector<4x80x80xbf16>, vector<4x80x8xbf16>, vector<4x80x8xf32> -> vector<4x80x8xf32>
    %c0_61 = arith.constant 0 : index
    %c0_62 = arith.constant 0 : index
    %c16 = arith.constant 16 : index
    %89 = vector.load %arg8[%c0_61, %c0_62, %c16] : memref<4x80x32xf32, #tpu.memory_space<vmem>>, vector<4x80x8xf32>
    tpu.vector_store %arg8[%c0_61, %c0_62, %c16], %88 {strides = array<i32>} : memref<4x80x32xf32, #tpu.memory_space<vmem>>, vector<4x80x8xf32>,
    %c0_63 = arith.constant 0 : index
    %c3 = arith.constant 3 : index
    %c0_64 = arith.constant 0 : index
    %c0_65 = arith.constant 0 : index
    %90 = vector.load %arg1[%c0_63, %c3, %c0_64, %c0_65] : memref<4x4x80x8xf32, #tpu.memory_space<vmem>>, vector<4x1x80x8xf32>
    %91 = vector.shape_cast %90 : vector<4x1x80x8xf32> to vector<4x80x8xf32>
    %cst_66 = arith.constant 0.353553385 : f32
    %92 = vector.broadcast %cst_66 : f32 to vector<4x80x8xf32>
    %93 = arith.mulf %91, %92 : vector<4x80x8xf32>
    %94 = arith.truncf %93 : vector<4x80x8xf32> to vector<4x80x8xbf16>
    %c0_67 = arith.constant 0 : index
    %c3_68 = arith.constant 3 : index
    %c0_69 = arith.constant 0 : index
    %c0_70 = arith.constant 0 : index
    %95 = vector.load %arg2[%c0_67, %c3_68, %c0_69, %c0_70] : memref<4x4x80x8xf32, #tpu.memory_space<vmem>>, vector<4x1x80x8xf32>
    %96 = vector.shape_cast %95 : vector<4x1x80x8xf32> to vector<4x80x8xf32>
    %97 = arith.truncf %96 : vector<4x80x8xf32> to vector<4x80x8xbf16>
    %c0_71 = arith.constant 0 : index
    %c3_72 = arith.constant 3 : index
    %c0_73 = arith.constant 0 : index
    %c0_74 = arith.constant 0 : index
    %98 = vector.load %arg3[%c0_71, %c3_72, %c0_73, %c0_74] : memref<4x4x80x8xf32, #tpu.memory_space<vmem>>, vector<4x1x80x8xf32>
    %99 = vector.shape_cast %98 : vector<4x1x80x8xf32> to vector<4x80x8xf32>
    %100 = arith.truncf %99 : vector<4x80x8xf32> to vector<4x80x8xbf16>
    %cst_75 = arith.constant dense<0.000000e+00> : vector<4x80x80xf32>
    %101 = tpu.matmul %94, %97, %cst_75 {dimension_numbers = #tpu.dot_dimension_numbers<[2], [2], [1], [1], [0, 0, 0, 1, 1, 1], [0], [0]>} : vector<4x80x8xbf16>, vector<4x80x8xbf16>, vector<4x80x80xf32> -> vector<4x80x80xf32>
    %c3_76 = arith.constant 3 : index
    %c0_77 = arith.constant 0 : index
    %c0_78 = arith.constant 0 : index
    %102 = vector.load %arg4[%c3_76, %c0_77, %c0_78] : memref<4x80x80xf32, #tpu.memory_space<vmem>>, vector<1x80x80xf32>
    %103 = vector.shape_cast %102 : vector<1x80x80xf32> to vector<80x80xf32>
    %104 = vector.shape_cast %103 : vector<80x80xf32> to vector<1x80x80xf32>
    %105 = vector.broadcast %104 : vector<1x80x80xf32> to vector<4x80x80xf32>
    %106 = arith.addf %101, %105 : vector<4x80x80xf32>
    %cst_79 = arith.constant dense<0xFF800000> : vector<4x80xf32>
    %107 = vector.multi_reduction <maximumf>, %106, %cst_79 [2] : vector<4x80x80xf32> to vector<4x80xf32>
    %108 = vector.shape_cast %107 : vector<4x80xf32> to vector<4x80x1xf32>
    %109 = vector.broadcast %108 : vector<4x80x1xf32> to vector<4x80x80xf32>
    %110 = arith.subf %106, %109 : vector<4x80x80xf32>
    %111 = math.exp %110 : vector<4x80x80xf32>
    %cst_80 = arith.constant dense<0.000000e+00> : vector<4x80xf32>
    %112 = vector.multi_reduction <add>, %111, %cst_80 [2] : vector<4x80x80xf32> to vector<4x80xf32>
    %113 = vector.shape_cast %112 : vector<4x80xf32> to vector<4x80x1xf32>
    %114 = tpu.reciprocal %113 {approx = true} : vector<4x80x1xf32> -> vector<4x80x1xf32>
    %115 = vector.broadcast %114 : vector<4x80x1xf32> to vector<4x80x80xf32>
    %116 = arith.mulf %111, %115 : vector<4x80x80xf32>
    %117 = arith.truncf %116 : vector<4x80x80xf32> to vector<4x80x80xbf16>
    %cst_81 = arith.constant dense<0.000000e+00> : vector<4x80x8xf32>
    %118 = tpu.matmul %117, %100, %cst_81 {dimension_numbers = #tpu.dot_dimension_numbers<[2], [1], [1], [2], [0, 0, 0, 1, 1, 2], [0], [0]>} : vector<4x80x80xbf16>, vector<4x80x8xbf16>, vector<4x80x8xf32> -> vector<4x80x8xf32>
    %c0_82 = arith.constant 0 : index
    %c0_83 = arith.constant 0 : index
    %c24 = arith.constant 24 : index
    %119 = vector.load %arg8[%c0_82, %c0_83, %c24] : memref<4x80x32xf32, #tpu.memory_space<vmem>>, vector<4x80x8xf32>
    tpu.vector_store %arg8[%c0_82, %c0_83, %c24], %118 {strides = array<i32>} : memref<4x80x32xf32, #tpu.memory_space<vmem>>, vector<4x80x8xf32>,
    %c0_84 = arith.constant 0 : index
    %c0_85 = arith.constant 0 : index
    %c0_86 = arith.constant 0 : index
    %120 = vector.load %arg8[%c0_84, %c0_85, %c0_86] : memref<4x80x32xf32, #tpu.memory_space<vmem>>, vector<4x80x32xf32>
    %121 = vector.shape_cast %120 : vector<4x80x32xf32> to vector<320x32xf32>
    %c0_87 = arith.constant 0 : index
    %c0_88 = arith.constant 0 : index
    %122 = vector.load %arg5[%c0_87, %c0_88] : memref<32x32xf32, #tpu.memory_space<vmem>>, vector<32x32xf32>
    %cst_89 = arith.constant dense<0.000000e+00> : vector<320x32xf32>
    %123 = tpu.matmul %121, %122, %cst_89 {dimension_numbers = #tpu.dot_dimension_numbers<[1], [0], [0], [1], [0, 0, 1, 1], [], []>} : vector<320x32xf32>, vector<32x32xf32>, vector<320x32xf32> -> vector<320x32xf32>
    %c0_90 = arith.constant 0 : index
    %c0_91 = arith.constant 0 : index
    %124 = vector.load %arg6[%c0_90, %c0_91] : memref<1x32xf32, #tpu.memory_space<vmem>>, vector<1x32xf32>
    %125 = vector.broadcast %124 : vector<1x32xf32> to vector<320x32xf32>
    %126 = arith.addf %123, %125 : vector<320x32xf32>
    %127 = vector.shape_cast %126 : vector<320x32xf32> to vector<4x80x32xf32>
    %c0_92 = arith.constant 0 : index
    %c0_93 = arith.constant 0 : index
    %c0_94 = arith.constant 0 : index
    %128 = vector.load %arg7[%c0_92, %c0_93, %c0_94] : memref<4x80x32xf32, #tpu.memory_space<vmem>>, vector<4x80x32xf32>
    tpu.vector_store %arg7[%c0_92, %c0_93, %c0_94], %127 {strides = array<i32>} : memref<4x80x32xf32, #tpu.memory_space<vmem>>, vector<4x80x32xf32>,
    return
  }
  func.func @transform_0(%arg0: i32) -> (i32, i32, i32, i32) {
    %c0_i32 = arith.constant 0 : i32
    %c0_i32_0 = arith.constant 0 : i32
    %c0_i32_1 = arith.constant 0 : i32
    %c0_i32_2 = arith.constant 0 : i32
    return %arg0, %c0_i32, %c0_i32_0, %c0_i32_1 : i32, i32, i32, i32
  }
  func.func @transform_1(%arg0: i32) -> (i32, i32, i32, i32) {
    %c0_i32 = arith.constant 0 : i32
    %c0_i32_0 = arith.constant 0 : i32
    %c0_i32_1 = arith.constant 0 : i32
    %c0_i32_2 = arith.constant 0 : i32
    return %arg0, %c0_i32, %c0_i32_0, %c0_i32_1 : i32, i32, i32, i32
  }
  func.func @transform_2(%arg0: i32) -> (i32, i32, i32, i32) {
    %c0_i32 = arith.constant 0 : i32
    %c0_i32_0 = arith.constant 0 : i32
    %c0_i32_1 = arith.constant 0 : i32
    %c0_i32_2 = arith.constant 0 : i32
    return %arg0, %c0_i32, %c0_i32_0, %c0_i32_1 : i32, i32, i32, i32
  }
  func.func @transform_3(%arg0: i32) -> (i32, i32, i32) {
    %c0_i32 = arith.constant 0 : i32
    %c0_i32_0 = arith.constant 0 : i32
    %c0_i32_1 = arith.constant 0 : i32
    %c0_i32_2 = arith.constant 0 : i32
    return %c0_i32, %c0_i32_0, %c0_i32_1 : i32, i32, i32
  }
  func.func @transform_4(%arg0: i32) -> (i32, i32) {
    %c0_i32 = arith.constant 0 : i32
    %c0_i32_0 = arith.constant 0 : i32
    %c0_i32_1 = arith.constant 0 : i32
    return %c0_i32, %c0_i32_0 : i32, i32
  }
  func.func @transform_5(%arg0: i32) -> (i32, i32) {
    %c0_i32 = arith.constant 0 : i32
    %c0_i32_0 = arith.constant 0 : i32
    %c0_i32_1 = arith.constant 0 : i32
    return %c0_i32, %c0_i32_0 : i32, i32
  }
  func.func @transform_6(%arg0: i32) -> (i32, i32, i32) {
    %c0_i32 = arith.constant 0 : i32
    %c0_i32_0 = arith.constant 0 : i32
    %c0_i32_1 = arith.constant 0 : i32
    return %arg0, %c0_i32, %c0_i32_0 : i32, i32, i32
  }
}

</mosaic_0001>

<llo_original>
// kernel: window_attention_forward.1
$region0: #{window_attention_forward.1}
  #allocation0 [shape = 'u32[]', space=smem, size = 0x4, offset = 0x4, fixed_abs, tag = 'smem constant byte address 0x4 - core index']
  #allocation1 [shape = 'u32[144,128]{1,0:T(1,128)}', space=vmem, size = 0x12000, scoped, tag = 'internal scratch']
  #allocation2 [shape = 'f32[4,80,32]{2,1,0:T(8,128)}', space=vmem, size = 0x28000, scoped, tag = 'scratch operand']
  %s0 = inlined_call_operand.vmem [shape: f32[8,4,80,8], index: 0, kind: input, shape index: {}]
  %s1 = inlined_call_operand.vmem [shape: f32[8,4,80,8], index: 1, kind: input, shape index: {}]
  %s2 = inlined_call_operand.vmem [shape: f32[8,4,80,8], index: 2, kind: input, shape index: {}]
  %s3 = inlined_call_operand.vmem [shape: f32[4,80,80], index: 3, kind: input, shape index: {}]
  %s4 = inlined_call_operand.vmem [shape: f32[32,32], index: 4, kind: input, shape index: {}]
  %s5 = inlined_call_operand.vmem [shape: f32[1,32], index: 5, kind: input, shape index: {}]
  %s6 = inlined_call_operand.vmem [shape: f32[8,80,32], index: 6, kind: output, shape index: {}]
  %s7 = sld [smem:[#allocation0]]
  $region57: #{window_attention_forward.1} parent=0
    _
  %s9 = ssub.s32 1, %s7
  %s10 = scalar_select 0, %s9, %s7
  loop: start=0, step=1, limit=4
  $region2: #{window_attention_forward.1} parent=0 // loop_pre_header
    _
  $region3: #{window_attention_forward.1} parent=0 // loop_header
    %s12 = sphi 0, %s16
    %p13 = scmp.ge.s32.totalorder %s12, 4
    %s22 = sphi 0, %s24
    %s25 = sphi 0, %s22
    %s26 = sphi 0, %s25
    %s42 = sphi 0, %s26
    %s48 = sphi 0, %s50
    %s51 = sphi 0, %s48
    %s52 = sphi 0, %s51
    %s68 = sphi 0, %s52
    %s74 = sphi 0, %s76
    %s77 = sphi 0, %s74
    %s78 = sphi 0, %s77
    %s94 = sphi 0, %s78
    %s98 = sphi 0, %s98
    %s100 = sphi 0, %s98
    %s101 = sphi 0, %s100
    %s115 = sphi 0, %s101
    %s119 = sphi 0, %s119
    %s121 = sphi 0, %s119
    %s122 = sphi 0, %s121
    %s136 = sphi 0, %s122
    %s140 = sphi 0, %s140
    %s142 = sphi 0, %s140
    %s143 = sphi 0, %s142
    %s157 = sphi 0, %s143
    %s163 = sphi 0, %s165
    %s166 = sphi 0, %s163
    %s167 = sphi 0, %s166
    %s183 = sphi 0, %s167
  $region4: #{window_attention_forward.1} parent=0 // loop_header_branch
    %15 = sbr.rel (%p13) target = $region8
  $region5: #{window_attention_forward.1} parent=0 // loop_body
    %s17 = ssub.s32 %s12, 1
    %s18 = ssub.s32 %s12, 2
    %s19 = sadd.s32 %s12, 1
    %s20 = ssub.s32 %s12, %s19
    %p21 = scmp.eq.s32.totalorder %s20, 0
    %s23 = sadd.s32 %s22, 1
    %s24 = scalar_select %p21, %s22, %s23
    %p27 = pneg %p21
    %p28 = scmp.eq.s32.totalorder %s12, 1
    %p29 = por %p27, %p28
    %p30 = scmp.ne.s32.totalorder %s22, %s25
    %p31 = scmp.eq.s32.totalorder %s12, 0
    %p32 = por %p30, %p31
    %p33 = scmp.ne.s32.totalorder %s22, %s25
    %p34 = scmp.eq.s32.totalorder %s17, 1
    %p35 = por %p33, %p34
    %p36 = scmp.ne.s32.totalorder %s25, %s26
    %p37 = scmp.eq.s32.totalorder %s17, 0
    %p38 = por %p36, %p37
    %p39 = scmp.ne.s32.totalorder %s25, %s26
    %p40 = scmp.eq.s32.totalorder %s18, 1
    %p41 = por %p39, %p40
    %p43 = scmp.ne.s32.totalorder %s26, %s42
    %p44 = scmp.eq.s32.totalorder %s18, 0
    %p45 = por %p43, %p44
    %s46 = ssub.s32 %s12, %s19
    %p47 = scmp.eq.s32.totalorder %s46, 0
    %s49 = sadd.s32 %s48, 1
    %s50 = scalar_select %p47, %s48, %s49
    %p53 = pneg %p47
    %p54 = scmp.eq.s32.totalorder %s12, 1
    %p55 = por %p53, %p54
    %p56 = scmp.ne.s32.totalorder %s48, %s51
    %p57 = scmp.eq.s32.totalorder %s12, 0
    %p58 = por %p56, %p57
    %p59 = scmp.ne.s32.totalorder %s48, %s51
    %p60 = scmp.eq.s32.totalorder %s17, 1
    %p61 = por %p59, %p60
    %p62 = scmp.ne.s32.totalorder %s51, %s52
    %p63 = scmp.eq.s32.totalorder %s17, 0
    %p64 = por %p62, %p63
    %p65 = scmp.ne.s32.totalorder %s51, %s52
    %p66 = scmp.eq.s32.totalorder %s18, 1
    %p67 = por %p65, %p66
    %p69 = scmp.ne.s32.totalorder %s52, %s68
    %p70 = scmp.eq.s32.totalorder %s18, 0
    %p71 = por %p69, %p70
    %s72 = ssub.s32 %s12, %s19
    %p73 = scmp.eq.s32.totalorder %s72, 0
    %s75 = sadd.s32 %s74, 1
    %s76 = scalar_select %p73, %s74, %s75
    %p79 = pneg %p73
    %p80 = scmp.eq.s32.totalorder %s12, 1
    %p81 = por %p79, %p80
    %p82 = scmp.ne.s32.totalorder %s74, %s77
    %p83 = scmp.eq.s32.totalorder %s12, 0
    %p84 = por %p82, %p83
    %p85 = scmp.ne.s32.totalorder %s74, %s77
    %p86 = scmp.eq.s32.totalorder %s17, 1
    %p87 = por %p85, %p86
    %p88 = scmp.ne.s32.totalorder %s77, %s78
    %p89 = scmp.eq.s32.totalorder %s17, 0
    %p90 = por %p88, %p89
    %p91 = scmp.ne.s32.totalorder %s77, %s78
    %p92 = scmp.eq.s32.totalorder %s18, 1
    %p93 = por %p91, %p92
    %p95 = scmp.ne.s32.totalorder %s78, %s94
    %p96 = scmp.eq.s32.totalorder %s18, 0
    %p97 = por %p95, %p96
    %s99 = sadd.s32 %s98, 1
    %p102 = scmp.eq.s32.totalorder %s12, 1
    %p103 = scmp.ne.s32.totalorder %s98, %s100
    %p104 = scmp.eq.s32.totalorder %s12, 0
    %p105 = por %p103, %p104
    %p106 = scmp.ne.s32.totalorder %s98, %s100
    %p107 = scmp.eq.s32.totalorder %s17, 1
    %p108 = por %p106, %p107
    %p109 = scmp.ne.s32.totalorder %s100, %s101
    %p110 = scmp.eq.s32.totalorder %s17, 0
    %p111 = por %p109, %p110
    %p112 = scmp.ne.s32.totalorder %s100, %s101
    %p113 = scmp.eq.s32.totalorder %s18, 1
    %p114 = por %p112, %p113
    %p116 = scmp.ne.s32.totalorder %s101, %s115
    %p117 = scmp.eq.s32.totalorder %s18, 0
    %p118 = por %p116, %p117
    %s120 = sadd.s32 %s119, 1
    %p123 = scmp.eq.s32.totalorder %s12, 1
    %p124 = scmp.ne.s32.totalorder %s119, %s121
    %p125 = scmp.eq.s32.totalorder %s12, 0
    %p126 = por %p124, %p125
    %p127 = scmp.ne.s32.totalorder %s119, %s121
    %p128 = scmp.eq.s32.totalorder %s17, 1
    %p129 = por %p127, %p128
    %p130 = scmp.ne.s32.totalorder %s121, %s122
    %p131 = scmp.eq.s32.totalorder %s17, 0
    %p132 = por %p130, %p131
    %p133 = scmp.ne.s32.totalorder %s121, %s122
    %p134 = scmp.eq.s32.totalorder %s18, 1
    %p135 = por %p133, %p134
    %p137 = scmp.ne.s32.totalorder %s122, %s136
    %p138 = scmp.eq.s32.totalorder %s18, 0
    %p139 = por %p137, %p138
    %s141 = sadd.s32 %s140, 1
    %p144 = scmp.eq.s32.totalorder %s12, 1
    %p145 = scmp.ne.s32.totalorder %s140, %s142
    %p146 = scmp.eq.s32.totalorder %s12, 0
    %p147 = por %p145, %p146
    %p148 = scmp.ne.s32.totalorder %s140, %s142
    %p149 = scmp.eq.s32.totalorder %s17, 1
    %p150 = por %p148, %p149
    %p151 = scmp.ne.s32.totalorder %s142, %s143
    %p152 = scmp.eq.s32.totalorder %s17, 0
    %p153 = por %p151, %p152
    %p154 = scmp.ne.s32.totalorder %s142, %s143
    %p155 = scmp.eq.s32.totalorder %s18, 1
    %p156 = por %p154, %p155
    %p158 = scmp.ne.s32.totalorder %s143, %s157
    %p159 = scmp.eq.s32.totalorder %s18, 0
    %p160 = por %p158, %p159
    %s161 = ssub.s32 %s12, %s19
    %p162 = scmp.eq.s32.totalorder %s161, 0
    %s164 = sadd.s32 %s163, 1
    %s165 = scalar_select %p162, %s163, %s164
    %p168 = pneg %p162
    %p169 = scmp.eq.s32.totalorder %s12, 1
    %p170 = por %p168, %p169
    %p171 = scmp.ne.s32.totalorder %s163, %s166
    %p172 = scmp.eq.s32.totalorder %s12, 0
    %p173 = por %p171, %p172
    %p174 = scmp.ne.s32.totalorder %s163, %s166
    %p175 = scmp.eq.s32.totalorder %s17, 1
    %p176 = por %p174, %p175
    %p177 = scmp.ne.s32.totalorder %s166, %s167
    %p178 = scmp.eq.s32.totalorder %s17, 0
    %p179 = por %p177, %p178
    %p180 = scmp.ne.s32.totalorder %s166, %s167
    %p181 = scmp.eq.s32.totalorder %s18, 1
    %p182 = por %p180, %p181
    %p184 = scmp.ne.s32.totalorder %s167, %s183
    %p185 = scmp.eq.s32.totalorder %s18, 0
    %p186 = por %p184, %p185
    %p187 = scmp.le.s32.totalorder 1, %s12
    %p188 = scmp.lt.s32.totalorder %s12, 3
    %p189 = pnand %p187, %p188
    %p190 = pneg %p189
    // Predicated region
    $region9: #{window_attention_forward.1} parent=5 // pred_check
      _
    $region10: #{window_attention_forward.1} parent=5 // pred_check_branch
      %192 = sbr.rel (%p189) target = $region12
    $region11: #{window_attention_forward.1} parent=5 // pred_region
      %s193 = ssub.s32 %s12, 1
      // Predicated region
      $region13: #{window_attention_forward.1} parent=11 // pred_check
        %p194 = pneg %p111
      $region14: #{window_attention_forward.1} parent=11 // pred_check_branch
        %196 = sbr.rel (%p194) target = $region16
      $region15: #{window_attention_forward.1} parent=11 // pred_region
        _
      $region16: #{window_attention_forward.1} parent=11 // pred_fallthru
        _
      // Predicated region
      $region17: #{window_attention_forward.1} parent=11 // pred_check
        %p197 = pneg %p132
      $region18: #{window_attention_forward.1} parent=11 // pred_check_branch
        %199 = sbr.rel (%p197) target = $region20
      $region19: #{window_attention_forward.1} parent=11 // pred_region
        _
      $region20: #{window_attention_forward.1} parent=11 // pred_fallthru
        _
      // Predicated region
      $region21: #{window_attention_forward.1} parent=11 // pred_check
        %p200 = pneg %p153
      $region22: #{window_attention_forward.1} parent=11 // pred_check_branch
        %202 = sbr.rel (%p200) target = $region24
      $region23: #{window_attention_forward.1} parent=11 // pred_region
        _
      $region24: #{window_attention_forward.1} parent=11 // pred_fallthru
        _
    $region12: #{window_attention_forward.1} parent=5 // pred_fallthru
      _
    %p203 = scmp.lt.s32.totalorder %s12, 2
    // Predicated region
    $region25: #{window_attention_forward.1} parent=5 // pred_check
      %p204 = pneg %p203
    $region26: #{window_attention_forward.1} parent=5 // pred_check_branch
      %206 = sbr.rel (%p204) target = $region28
    $region27: #{window_attention_forward.1} parent=5 // pred_region
      // Predicated region
      $region29: #{window_attention_forward.1} parent=27 // pred_check
        %p207 = pneg %p32
      $region30: #{window_attention_forward.1} parent=27 // pred_check_branch
        %209 = sbr.rel (%p207) target = $region32
      $region31: #{window_attention_forward.1} parent=27 // pred_region
        %s210 = smul.u32 4, %s12
        %p211 = scmp.lt.s32.totalorder %s210, 7
        %s212 = scalar_select %p211, %s210, 7
        %s213 = smul.addr %s212, 40
        %s214 = smul.addr %s213, 8
        %s215 = scalar_lea.vmem %s0, %s214
        %s216 = smul.u32 4, %s12
      $region32: #{window_attention_forward.1} parent=27 // pred_fallthru
        _
      // Predicated region
      $region33: #{window_attention_forward.1} parent=27 // pred_check
        %p217 = pneg %p58
      $region34: #{window_attention_forward.1} parent=27 // pred_check_branch
        %219 = sbr.rel (%p217) target = $region36
      $region35: #{window_attention_forward.1} parent=27 // pred_region
        %s220 = smul.u32 4, %s12
        %p221 = scmp.lt.s32.totalorder %s220, 7
        %s222 = scalar_select %p221, %s220, 7
        %s223 = smul.addr %s222, 40
        %s224 = smul.addr %s223, 8
        %s225 = scalar_lea.vmem %s1, %s224
        %s226 = smul.u32 4, %s12
      $region36: #{window_attention_forward.1} parent=27 // pred_fallthru
        _
      // Predicated region
      $region37: #{window_attention_forward.1} parent=27 // pred_check
        %p227 = pneg %p84
      $region38: #{window_attention_forward.1} parent=27 // pred_check_branch
        %229 = sbr.rel (%p227) target = $region40
      $region39: #{window_attention_forward.1} parent=27 // pred_region
        %s230 = smul.u32 4, %s12
        %p231 = scmp.lt.s32.totalorder %s230, 7
        %s232 = scalar_select %p231, %s230, 7
        %s233 = smul.addr %s232, 40
        %s234 = smul.addr %s233, 8
        %s235 = scalar_lea.vmem %s2, %s234
        %s236 = smul.u32 4, %s12
      $region40: #{window_attention_forward.1} parent=27 // pred_fallthru
        _
    $region28: #{window_attention_forward.1} parent=5 // pred_fallthru
      _
    %p237 = scmp.le.s32.totalorder 1, %s12
    %p238 = scmp.lt.s32.totalorder %s12, 3
    %p239 = pnand %p237, %p238
    %p240 = pneg %p239
    // Predicated region
    $region41: #{window_attention_forward.1} parent=5 // pred_check
      _
    $region42: #{window_attention_forward.1} parent=5 // pred_check_branch
      %242 = sbr.rel (%p239) target = $region44
    $region43: #{window_attention_forward.1} parent=5 // pred_region
      %s243 = ssub.s32 %s12, 1
      %s244 = smul.u32 4, %s17
      %p245 = scmp.lt.s32.totalorder %s244, 7
      %s246 = scalar_select %p245, %s244, 7
      %s247 = smul.addr %s246, 40
      %s248 = smul.addr %s247, 8
      %s249 = scalar_lea.vmem %s0, %s248
      %p250 = pneg %p38
      %p251 = pneg %p35
      %s252 = smul.u32 4, %s17
      %p253 = scmp.lt.s32.totalorder %s252, 7
      %s254 = scalar_select %p253, %s252, 7
      %s255 = smul.addr %s254, 40
      %s256 = smul.addr %s255, 8
      %s257 = scalar_lea.vmem %s1, %s256
      %p258 = pneg %p64
      %p259 = pneg %p61
      %s260 = smul.u32 4, %s17
      %p261 = scmp.lt.s32.totalorder %s260, 7
      %s262 = scalar_select %p261, %s260, 7
      %s263 = smul.addr %s262, 40
      %s264 = smul.addr %s263, 8
      %s265 = scalar_lea.vmem %s2, %s264
      %p266 = pneg %p90
      %p267 = pneg %p87
      %p268 = pneg %p111
      %p269 = pneg %p108
      %p270 = pneg %p132
      %p271 = pneg %p129
      %p272 = pneg %p153
      %p273 = pneg %p150
      %p274 = pneg %p179
      %p275 = pneg %p176
      %s276 = smul.u32 4, %s17
      %p277 = scmp.lt.s32.totalorder %s276, 7
      %s278 = scalar_select %p277, %s276, 7
      %s279 = smul.addr %s278, 10
      %s280 = smul.addr %s279, 8
      %s281 = scalar_lea.vmem %s6, %s280
      %s282 = smul.u32 4, %s17
      %p283 = scmp.lt.s32.totalorder %s282, 7
      %s284 = scalar_select %p283, %s282, 7
      %s285 = smul.addr %s284, 40
      %s286 = smul.addr %s285, 8
      %s287 = scalar_lea.vmem %s0, %s286
      %s288 = smul.u32 4, %s17
      %s289 = smul.u32 4, %s17
      %p290 = scmp.lt.s32.totalorder %s289, 7
      %s291 = scalar_select %p290, %s289, 7
      %s292 = smul.addr %s291, 40
      %s293 = smul.addr %s292, 8
      %s294 = scalar_lea.vmem %s1, %s293
      %s295 = smul.u32 4, %s17
      %s296 = smul.u32 4, %s17
      %p297 = scmp.lt.s32.totalorder %s296, 7
      %s298 = scalar_select %p297, %s296, 7
      %s299 = smul.addr %s298, 40
      %s300 = smul.addr %s299, 8
      %s301 = scalar_lea.vmem %s2, %s300
      %s302 = smul.u32 4, %s17
      %s303 = smul.u32 4, %s17
      %p304 = scmp.lt.s32.totalorder %s303, 7
      %s305 = scalar_select %p304, %s303, 7
      %s306 = smul.addr %s305, 10
      %s307 = smul.addr %s306, 8
      %s308 = scalar_lea.vmem %s6, %s307
      %s309 = smul.u32 4, %s17
      %v311 = vld [vmem:[%s287] sm:$0xff]
      %v312 = vld [vmem:[%s287 + $0x8] sm:$0xff]
      %v313 = vld [vmem:[%s287 + $0x10] sm:$0xff]
      %v314 = vld [vmem:[%s287 + $0x18] sm:$0xff]
      %v315 = vld [vmem:[%s287 + $0x20] sm:$0xff]
      %v316 = vld [vmem:[%s287 + $0x28] sm:$0xff]
      %v317 = vld [vmem:[%s287 + $0x30] sm:$0xff]
      %v318 = vld [vmem:[%s287 + $0x38] sm:$0xff]
      %v319 = vld [vmem:[%s287 + $0x40] sm:$0xff]
      %v320 = vld [vmem:[%s287 + $0x48] sm:$0xff]
      %v321 = vld [vmem:[%s287 + $0x140] sm:$0xff]
      %v322 = vld [vmem:[%s287 + $0x148] sm:$0xff]
      %v323 = vld [vmem:[%s287 + $0x150] sm:$0xff]
      %v324 = vld [vmem:[%s287 + $0x158] sm:$0xff]
      %v325 = vld [vmem:[%s287 + $0x160] sm:$0xff]
      %v326 = vld [vmem:[%s287 + $0x168] sm:$0xff]
      %v327 = vld [vmem:[%s287 + $0x170] sm:$0xff]
      %v328 = vld [vmem:[%s287 + $0x178] sm:$0xff]
      %v329 = vld [vmem:[%s287 + $0x180] sm:$0xff]
      %v330 = vld [vmem:[%s287 + $0x188] sm:$0xff]
      %v331 = vld [vmem:[%s287 + $0x280] sm:$0xff]
      %v332 = vld [vmem:[%s287 + $0x288] sm:$0xff]
      %v333 = vld [vmem:[%s287 + $0x290] sm:$0xff]
      %v334 = vld [vmem:[%s287 + $0x298] sm:$0xff]
      %v335 = vld [vmem:[%s287 + $0x2a0] sm:$0xff]
      %v336 = vld [vmem:[%s287 + $0x2a8] sm:$0xff]
      %v337 = vld [vmem:[%s287 + $0x2b0] sm:$0xff]
      %v338 = vld [vmem:[%s287 + $0x2b8] sm:$0xff]
      %v339 = vld [vmem:[%s287 + $0x2c0] sm:$0xff]
      %v340 = vld [vmem:[%s287 + $0x2c8] sm:$0xff]
      %v341 = vld [vmem:[%s287 + $0x3c0] sm:$0xff]
      %v342 = vld [vmem:[%s287 + $0x3c8] sm:$0xff]
      %v343 = vld [vmem:[%s287 + $0x3d0] sm:$0xff]
      %v344 = vld [vmem:[%s287 + $0x3d8] sm:$0xff]
      %v345 = vld [vmem:[%s287 + $0x3e0] sm:$0xff]
      %v346 = vld [vmem:[%s287 + $0x3e8] sm:$0xff]
      %v347 = vld [vmem:[%s287 + $0x3f0] sm:$0xff]
      %v348 = vld [vmem:[%s287 + $0x3f8] sm:$0xff]
      %v349 = vld [vmem:[%s287 + $0x400] sm:$0xff]
      %v350 = vld [vmem:[%s287 + $0x408] sm:$0xff]
      %v351 = vmul.f32 %v311, 0.35355338
      %v352 = vmul.f32 %v312, 0.35355338
      %v353 = vmul.f32 %v313, 0.35355338
      %v354 = vmul.f32 %v314, 0.35355338
      %v355 = vmul.f32 %v315, 0.35355338
      %v356 = vmul.f32 %v316, 0.35355338
      %v357 = vmul.f32 %v317, 0.35355338
      %v358 = vmul.f32 %v318, 0.35355338
      %v359 = vmul.f32 %v319, 0.35355338
      %v360 = vmul.f32 %v320, 0.35355338
      %v361 = vmul.f32 %v321, 0.35355338
      %v362 = vmul.f32 %v322, 0.35355338
      %v363 = vmul.f32 %v323, 0.35355338
      %v364 = vmul.f32 %v324, 0.35355338
      %v365 = vmul.f32 %v325, 0.35355338
      %v366 = vmul.f32 %v326, 0.35355338
      %v367 = vmul.f32 %v327, 0.35355338
      %v368 = vmul.f32 %v328, 0.35355338
      %v369 = vmul.f32 %v329, 0.35355338
      %v370 = vmul.f32 %v330, 0.35355338
      %v371 = vmul.f32 %v331, 0.35355338
      %v372 = vmul.f32 %v332, 0.35355338
      %v373 = vmul.f32 %v333, 0.35355338
      %v374 = vmul.f32 %v334, 0.35355338
      %v375 = vmul.f32 %v335, 0.35355338
      %v376 = vmul.f32 %v336, 0.35355338
      %v377 = vmul.f32 %v337, 0.35355338
      %v378 = vmul.f32 %v338, 0.35355338
      %v379 = vmul.f32 %v339, 0.35355338
      %v380 = vmul.f32 %v340, 0.35355338
      %v381 = vmul.f32 %v341, 0.35355338
      %v382 = vmul.f32 %v342, 0.35355338
      %v383 = vmul.f32 %v343, 0.35355338
      %v384 = vmul.f32 %v344, 0.35355338
      %v385 = vmul.f32 %v345, 0.35355338
      %v386 = vmul.f32 %v346, 0.35355338
      %v387 = vmul.f32 %v347, 0.35355338
      %v388 = vmul.f32 %v348, 0.35355338
      %v389 = vmul.f32 %v349, 0.35355338
      %v390 = vmul.f32 %v350, 0.35355338
      %v391 = vpack.c.bf16 %v352, %v351
      %v392 = vpack.c.bf16 %v354, %v353
      %v393 = vpack.c.bf16 %v356, %v355
      %v394 = vpack.c.bf16 %v358, %v357
      %v395 = vpack.c.bf16 %v360, %v359
      %v396 = vpack.c.bf16 %v362, %v361
      %v397 = vpack.c.bf16 %v364, %v363
      %v398 = vpack.c.bf16 %v366, %v365
      %v399 = vpack.c.bf16 %v368, %v367
      %v400 = vpack.c.bf16 %v370, %v369
      %v401 = vpack.c.bf16 %v372, %v371
      %v402 = vpack.c.bf16 %v374, %v373
      %v403 = vpack.c.bf16 %v376, %v375
      %v404 = vpack.c.bf16 %v378, %v377
      %v405 = vpack.c.bf16 %v380, %v379
      %v406 = vpack.c.bf16 %v382, %v381
      %v407 = vpack.c.bf16 %v384, %v383
      %v408 = vpack.c.bf16 %v386, %v385
      %v409 = vpack.c.bf16 %v388, %v387
      %v410 = vpack.c.bf16 %v390, %v389
      %v411 = vld [vmem:[%s294] sm:$0xff]
      %v412 = vld [vmem:[%s294 + $0x8] sm:$0xff]
      %v413 = vld [vmem:[%s294 + $0x10] sm:$0xff]
      %v414 = vld [vmem:[%s294 + $0x18] sm:$0xff]
      %v415 = vld [vmem:[%s294 + $0x20] sm:$0xff]
      %v416 = vld [vmem:[%s294 + $0x28] sm:$0xff]
      %v417 = vld [vmem:[%s294 + $0x30] sm:$0xff]
      %v418 = vld [vmem:[%s294 + $0x38] sm:$0xff]
      %v419 = vld [vmem:[%s294 + $0x40] sm:$0xff]
      %v420 = vld [vmem:[%s294 + $0x48] sm:$0xff]
      %v421 = vld [vmem:[%s294 + $0x140] sm:$0xff]
      %v422 = vld [vmem:[%s294 + $0x148] sm:$0xff]
      %v423 = vld [vmem:[%s294 + $0x150] sm:$0xff]
      %v424 = vld [vmem:[%s294 + $0x158] sm:$0xff]
      %v425 = vld [vmem:[%s294 + $0x160] sm:$0xff]
      %v426 = vld [vmem:[%s294 + $0x168] sm:$0xff]
      %v427 = vld [vmem:[%s294 + $0x170] sm:$0xff]
      %v428 = vld [vmem:[%s294 + $0x178] sm:$0xff]
      %v429 = vld [vmem:[%s294 + $0x180] sm:$0xff]
      %v430 = vld [vmem:[%s294 + $0x188] sm:$0xff]
      %v431 = vld [vmem:[%s294 + $0x280] sm:$0xff]
      %v432 = vld [vmem:[%s294 + $0x288] sm:$0xff]
      %v433 = vld [vmem:[%s294 + $0x290] sm:$0xff]
      %v434 = vld [vmem:[%s294 + $0x298] sm:$0xff]
      %v435 = vld [vmem:[%s294 + $0x2a0] sm:$0xff]
      %v436 = vld [vmem:[%s294 + $0x2a8] sm:$0xff]
      %v437 = vld [vmem:[%s294 + $0x2b0] sm:$0xff]
      %v438 = vld [vmem:[%s294 + $0x2b8] sm:$0xff]
      %v439 = vld [vmem:[%s294 + $0x2c0] sm:$0xff]
      %v440 = vld [vmem:[%s294 + $0x2c8] sm:$0xff]
      %v441 = vld [vmem:[%s294 + $0x3c0] sm:$0xff]
      %v442 = vld [vmem:[%s294 + $0x3c8] sm:$0xff]
      %v443 = vld [vmem:[%s294 + $0x3d0] sm:$0xff]
      %v444 = vld [vmem:[%s294 + $0x3d8] sm:$0xff]
      %v445 = vld [vmem:[%s294 + $0x3e0] sm:$0xff]
      %v446 = vld [vmem:[%s294 + $0x3e8] sm:$0xff]
      %v447 = vld [vmem:[%s294 + $0x3f0] sm:$0xff]
      %v448 = vld [vmem:[%s294 + $0x3f8] sm:$0xff]
      %v449 = vld [vmem:[%s294 + $0x400] sm:$0xff]
      %v450 = vld [vmem:[%s294 + $0x408] sm:$0xff]
      %v451 = vpack.c.bf16 %v412, %v411
      %v452 = vpack.c.bf16 %v414, %v413
      %v453 = vpack.c.bf16 %v416, %v415
      %v454 = vpack.c.bf16 %v418, %v417
      %v455 = vpack.c.bf16 %v420, %v419
      %v456 = vpack.c.bf16 %v422, %v421
      %v457 = vpack.c.bf16 %v424, %v423
      %v458 = vpack.c.bf16 %v426, %v425
      %v459 = vpack.c.bf16 %v428, %v427
      %v460 = vpack.c.bf16 %v430, %v429
      %v461 = vpack.c.bf16 %v432, %v431
      %v462 = vpack.c.bf16 %v434, %v433
      %v463 = vpack.c.bf16 %v436, %v435
      %v464 = vpack.c.bf16 %v438, %v437
      %v465 = vpack.c.bf16 %v440, %v439
      %v466 = vpack.c.bf16 %v442, %v441
      %v467 = vpack.c.bf16 %v444, %v443
      %v468 = vpack.c.bf16 %v446, %v445
      %v469 = vpack.c.bf16 %v448, %v447
      %v470 = vpack.c.bf16 %v450, %v449
      %v471 = vld [vmem:[%s301] sm:$0xff]
      %v472 = vld [vmem:[%s301 + $0x8] sm:$0xff]
      %v473 = vld [vmem:[%s301 + $0x10] sm:$0xff]
      %v474 = vld [vmem:[%s301 + $0x18] sm:$0xff]
      %v475 = vld [vmem:[%s301 + $0x20] sm:$0xff]
      %v476 = vld [vmem:[%s301 + $0x28] sm:$0xff]
      %v477 = vld [vmem:[%s301 + $0x30] sm:$0xff]
      %v478 = vld [vmem:[%s301 + $0x38] sm:$0xff]
      %v479 = vld [vmem:[%s301 + $0x40] sm:$0xff]
      %v480 = vld [vmem:[%s301 + $0x48] sm:$0xff]
      %v481 = vld [vmem:[%s301 + $0x140] sm:$0xff]
      %v482 = vld [vmem:[%s301 + $0x148] sm:$0xff]
      %v483 = vld [vmem:[%s301 + $0x150] sm:$0xff]
      %v484 = vld [vmem:[%s301 + $0x158] sm:$0xff]
      %v485 = vld [vmem:[%s301 + $0x160] sm:$0xff]
      %v486 = vld [vmem:[%s301 + $0x168] sm:$0xff]
      %v487 = vld [vmem:[%s301 + $0x170] sm:$0xff]
      %v488 = vld [vmem:[%s301 + $0x178] sm:$0xff]
      %v489 = vld [vmem:[%s301 + $0x180] sm:$0xff]
      %v490 = vld [vmem:[%s301 + $0x188] sm:$0xff]
      %v491 = vld [vmem:[%s301 + $0x280] sm:$0xff]
      %v492 = vld [vmem:[%s301 + $0x288] sm:$0xff]
      %v493 = vld [vmem:[%s301 + $0x290] sm:$0xff]
      %v494 = vld [vmem:[%s301 + $0x298] sm:$0xff]
      %v495 = vld [vmem:[%s301 + $0x2a0] sm:$0xff]
      %v496 = vld [vmem:[%s301 + $0x2a8] sm:$0xff]
      %v497 = vld [vmem:[%s301 + $0x2b0] sm:$0xff]
      %v498 = vld [vmem:[%s301 + $0x2b8] sm:$0xff]
      %v499 = vld [vmem:[%s301 + $0x2c0] sm:$0xff]
      %v500 = vld [vmem:[%s301 + $0x2c8] sm:$0xff]
      %v501 = vld [vmem:[%s301 + $0x3c0] sm:$0xff]
      %v502 = vld [vmem:[%s301 + $0x3c8] sm:$0xff]
      %v503 = vld [vmem:[%s301 + $0x3d0] sm:$0xff]
      %v504 = vld [vmem:[%s301 + $0x3d8] sm:$0xff]
      %v505 = vld [vmem:[%s301 + $0x3e0] sm:$0xff]
      %v506 = vld [vmem:[%s301 + $0x3e8] sm:$0xff]
      %v507 = vld [vmem:[%s301 + $0x3f0] sm:$0xff]
      %v508 = vld [vmem:[%s301 + $0x3f8] sm:$0xff]
      %v509 = vld [vmem:[%s301 + $0x400] sm:$0xff]
      %v510 = vld [vmem:[%s301 + $0x408] sm:$0xff]
      %v511 = vpack.c.bf16 %v472, %v471
      %v512 = vpack.c.bf16 %v474, %v473
      %v513 = vpack.c.bf16 %v476, %v475
      %v514 = vpack.c.bf16 %v478, %v477
      %v515 = vpack.c.bf16 %v480, %v479
      %v516 = vpack.c.bf16 %v482, %v481
      %v517 = vpack.c.bf16 %v484, %v483
      %v518 = vpack.c.bf16 %v486, %v485
      %v519 = vpack.c.bf16 %v488, %v487
      %v520 = vpack.c.bf16 %v490, %v489
      %v521 = vpack.c.bf16 %v492, %v491
      %v522 = vpack.c.bf16 %v494, %v493
      %v523 = vpack.c.bf16 %v496, %v495
      %v524 = vpack.c.bf16 %v498, %v497
      %v525 = vpack.c.bf16 %v500, %v499
      %v526 = vpack.c.bf16 %v502, %v501
      %v527 = vpack.c.bf16 %v504, %v503
      %v528 = vpack.c.bf16 %v506, %v505
      %v529 = vpack.c.bf16 %v508, %v507
      %v530 = vpack.c.bf16 %v510, %v509
      %v531 = vld [vmem:[%s3] sm:$0xff]
      %v532 = vld [vmem:[%s3 + $0x8] sm:$0xff]
      %v533 = vld [vmem:[%s3 + $0x10] sm:$0xff]
      %v534 = vld [vmem:[%s3 + $0x18] sm:$0xff]
      %v535 = vld [vmem:[%s3 + $0x20] sm:$0xff]
      %v536 = vld [vmem:[%s3 + $0x28] sm:$0xff]
      %v537 = vld [vmem:[%s3 + $0x30] sm:$0xff]
      %v538 = vld [vmem:[%s3 + $0x38] sm:$0xff]
      %v539 = vld [vmem:[%s3 + $0x40] sm:$0xff]
      %v540 = vld [vmem:[%s3 + $0x48] sm:$0xff]
      %vm541 = vcmask 64512
      %v543 = vsel %vm541, %v391, 0
      %v546 = vsel %vm541, %v392, 0
      %v549 = vsel %vm541, %v393, 0
      %v552 = vsel %vm541, %v394, 0
      %v555 = vsel %vm541, %v395, 0
      %v558 = vsel %vm541, %v451, 0
      %v561 = vsel %vm541, %v452, 0
      %v564 = vsel %vm541, %v453, 0
      %v567 = vsel %vm541, %v454, 0
      %v570 = vsel %vm541, %v455, 0
      %572 = vmatprep.subr.bf16.mxu0 0
      %573 = vmatpush1.bf16.xpose.msra.mxu0 %v558
      %574 = vmatprep.subr.bf16.mxu0 0
      %575 = vmatpush1.bf16.xpose.msra.mxu0 %v561
      %576 = vmatprep.subr.bf16.mxu0 0
      %577 = vmatpush1.bf16.xpose.msra.mxu0 %v564
      %578 = vmatprep.subr.bf16.mxu0 0
      %579 = vmatpush1.bf16.xpose.msra.mxu0 %v567
      %580 = vmatprep.subr.bf16.mxu0 0
      %581 = vmatpush1.bf16.xpose.msra.mxu0 %v570
      %582 = vmatprep.subr.bf16.mxu0 0
      %583 = vmatpush1.bf16.xpose.msra.mxu0 0
      %584 = vmatprep.subr.bf16.mxu0 0
      %585 = vmatpush1.bf16.xpose.msra.mxu0 0
      %586 = vmatprep.subr.bf16.mxu0 0
      %587 = vmatpush1.bf16.xpose.msra.mxu0 0
      %588 = vmatprep.subr.bf16.mxu0 0
      %589 = vmatpush1.bf16.xpose.msra.mxu0 0
      %590 = vmatprep.subr.bf16.mxu0 0
      %591 = vmatpush1.bf16.xpose.msra.mxu0 0
      %592 = vmatprep.subr.bf16.mxu0 0
      %593 = vmatpush1.bf16.xpose.msra.mxu0 0
      %594 = vmatprep.subr.bf16.mxu0 0
      %595 = vmatpush1.bf16.xpose.msra.mxu0 0
      %596 = vmatprep.subr.bf16.mxu0 0
      %597 = vmatpush1.bf16.xpose.msra.mxu0 0
      %598 = vmatprep.subr.bf16.mxu0 0
      %599 = vmatpush1.bf16.xpose.msra.mxu0 0
      %600 = vmatprep.subr.bf16.mxu0 0
      %601 = vmatpush1.bf16.xpose.msra.mxu0 0
      %602 = vmatprep.subr.bf16.mxu0 0
      %603 = vmatpush1.bf16.xpose.msra.mxu0 0
      %604 = vmatprep.mubr.bf16.mxu0 0
      %605 = vmatmul.mubr.bf16.gmra.mrb[0].mxu0 %v543
      %v606 = vpop.f32.mrb[0].mxu0
      %v607 = vadd.f32 %v531, %v606
      %v608 = vpop.f32.mrb[0].mxu0
      %v609 = vpop.f32.mrb[0].mxu0
      %v610 = vadd.f32 %v532, %v609
      %v611 = vpop.f32.mrb[0].mxu0
      %612 = vmatprep.mubr.bf16.mxu0 0
      %613 = vmatmul.mubr.bf16.gmra.mrb[0].mxu0 %v546
      %v614 = vpop.f32.mrb[0].mxu0
      %v615 = vadd.f32 %v533, %v614
      %v616 = vpop.f32.mrb[0].mxu0
      %v617 = vpop.f32.mrb[0].mxu0
      %v618 = vadd.f32 %v534, %v617
      %v619 = vpop.f32.mrb[0].mxu0
      %620 = vmatprep.mubr.bf16.mxu0 0
      %621 = vmatmul.mubr.bf16.gmra.mrb[0].mxu0 %v549
      %v622 = vpop.f32.mrb[0].mxu0
      %v623 = vadd.f32 %v535, %v622
      %v624 = vpop.f32.mrb[0].mxu0
      %v625 = vpop.f32.mrb[0].mxu0
      %v626 = vadd.f32 %v536, %v625
      %v627 = vpop.f32.mrb[0].mxu0
      %628 = vmatprep.mubr.bf16.mxu0 0
      %629 = vmatmul.mubr.bf16.gmra.mrb[0].mxu0 %v552
      %v630 = vpop.f32.mrb[0].mxu0
      %v631 = vadd.f32 %v537, %v630
      %v632 = vpop.f32.mrb[0].mxu0
      %v633 = vpop.f32.mrb[0].mxu0
      %v634 = vadd.f32 %v538, %v633
      %v635 = vpop.f32.mrb[0].mxu0
      %636 = vmatprep.mubr.bf16.mxu0 0
      %637 = vmatmul.mubr.bf16.gmra.mrb[0].mxu0 %v555
      %v638 = vpop.f32.mrb[0].mxu0
      %v639 = vadd.f32 %v539, %v638
      %v640 = vpop.f32.mrb[0].mxu0
      %v641 = vpop.f32.mrb[0].mxu0
      %v642 = vadd.f32 %v540, %v641
      %v643 = vpop.f32.mrb[0].mxu0
      %644 = vdwg.mxu0
      %v646 = vsel %vm541, %v396, 0
      %v649 = vsel %vm541, %v397, 0
      %v652 = vsel %vm541, %v398, 0
      %v655 = vsel %vm541, %v399, 0
      %v658 = vsel %vm541, %v400, 0
      %v661 = vsel %vm541, %v456, 0
      %v664 = vsel %vm541, %v457, 0
      %v667 = vsel %vm541, %v458, 0
      %v670 = vsel %vm541, %v459, 0
      %v673 = vsel %vm541, %v460, 0
      %675 = vmatprep.subr.bf16.mxu0 0
      %676 = vmatpush1.bf16.xpose.msra.mxu0 %v661
      %677 = vmatprep.subr.bf16.mxu0 0
      %678 = vmatpush1.bf16.xpose.msra.mxu0 %v664
      %679 = vmatprep.subr.bf16.mxu0 0
      %680 = vmatpush1.bf16.xpose.msra.mxu0 %v667
      %681 = vmatprep.subr.bf16.mxu0 0
      %682 = vmatpush1.bf16.xpose.msra.mxu0 %v670
      %683 = vmatprep.subr.bf16.mxu0 0
      %684 = vmatpush1.bf16.xpose.msra.mxu0 %v673
      %685 = vmatprep.subr.bf16.mxu0 0
      %686 = vmatpush1.bf16.xpose.msra.mxu0 0
      %687 = vmatprep.subr.bf16.mxu0 0
      %688 = vmatpush1.bf16.xpose.msra.mxu0 0
      %689 = vmatprep.subr.bf16.mxu0 0
      %690 = vmatpush1.bf16.xpose.msra.mxu0 0
      %691 = vmatprep.subr.bf16.mxu0 0
      %692 = vmatpush1.bf16.xpose.msra.mxu0 0
      %693 = vmatprep.subr.bf16.mxu0 0
      %694 = vmatpush1.bf16.xpose.msra.mxu0 0
      %695 = vmatprep.subr.bf16.mxu0 0
      %696 = vmatpush1.bf16.xpose.msra.mxu0 0
      %697 = vmatprep.subr.bf16.mxu0 0
      %698 = vmatpush1.bf16.xpose.msra.mxu0 0
      %699 = vmatprep.subr.bf16.mxu0 0
      %700 = vmatpush1.bf16.xpose.msra.mxu0 0
      %701 = vmatprep.subr.bf16.mxu0 0
      %702 = vmatpush1.bf16.xpose.msra.mxu0 0
      %703 = vmatprep.subr.bf16.mxu0 0
      %704 = vmatpush1.bf16.xpose.msra.mxu0 0
      %705 = vmatprep.subr.bf16.mxu0 0
      %706 = vmatpush1.bf16.xpose.msra.mxu0 0
      %707 = vmatprep.mubr.bf16.mxu0 0
      %708 = vmatmul.mubr.bf16.gmra.mrb[0].mxu0 %v646
      %v709 = vpop.f32.mrb[0].mxu0
      %v710 = vadd.f32 %v531, %v709
      %v711 = vpop.f32.mrb[0].mxu0
      %v712 = vpop.f32.mrb[0].mxu0
      %v713 = vadd.f32 %v532, %v712
      %v714 = vpop.f32.mrb[0].mxu0
      %715 = vmatprep.mubr.bf16.mxu0 0
      %716 = vmatmul.mubr.bf16.gmra.mrb[0].mxu0 %v649
      %v717 = vpop.f32.mrb[0].mxu0
      %v718 = vadd.f32 %v533, %v717
      %v719 = vpop.f32.mrb[0].mxu0
      %v720 = vpop.f32.mrb[0].mxu0
      %v721 = vadd.f32 %v534, %v720
      %v722 = vpop.f32.mrb[0].mxu0
      %723 = vmatprep.mubr.bf16.mxu0 0
      %724 = vmatmul.mubr.bf16.gmra.mrb[0].mxu0 %v652
      %v725 = vpop.f32.mrb[0].mxu0
      %v726 = vadd.f32 %v535, %v725
      %v727 = vpop.f32.mrb[0].mxu0
      %v728 = vpop.f32.mrb[0].mxu0
      %v729 = vadd.f32 %v536, %v728
      %v730 = vpop.f32.mrb[0].mxu0
      %731 = vmatprep.mubr.bf16.mxu0 0
      %732 = vmatmul.mubr.bf16.gmra.mrb[0].mxu0 %v655
      %v733 = vpop.f32.mrb[0].mxu0
      %v734 = vadd.f32 %v537, %v733
      %v735 = vpop.f32.mrb[0].mxu0
      %v736 = vpop.f32.mrb[0].mxu0
      %v737 = vadd.f32 %v538, %v736
      %v738 = vpop.f32.mrb[0].mxu0
      %739 = vmatprep.mubr.bf16.mxu0 0
      %740 = vmatmul.mubr.bf16.gmra.mrb[0].mxu0 %v658
      %v741 = vpop.f32.mrb[0].mxu0
      %v742 = vadd.f32 %v539, %v741
      %v743 = vpop.f32.mrb[0].mxu0
      %v744 = vpop.f32.mrb[0].mxu0
      %v745 = vadd.f32 %v540, %v744
      %v746 = vpop.f32.mrb[0].mxu0
      %747 = vdwg.mxu0
      %v749 = vsel %vm541, %v401, 0
      %v752 = vsel %vm541, %v402, 0
      %v755 = vsel %vm541, %v403, 0
      %v758 = vsel %vm541, %v404, 0
      %v761 = vsel %vm541, %v405, 0
      %v764 = vsel %vm541, %v461, 0
      %v767 = vsel %vm541, %v462, 0
      %v770 = vsel %vm541, %v463, 0
      %v773 = vsel %vm541, %v464, 0
      %v776 = vsel %vm541, %v465, 0
      %778 = vmatprep.subr.bf16.mxu0 0
      %779 = vmatpush1.bf16.xpose.msra.mxu0 %v764
      %780 = vmatprep.subr.bf16.mxu0 0
      %781 = vmatpush1.bf16.xpose.msra.mxu0 %v767
      %782 = vmatprep.subr.bf16.mxu0 0
      %783 = vmatpush1.bf16.xpose.msra.mxu0 %v770
      %784 = vmatprep.subr.bf16.mxu0 0
      %785 = vmatpush1.bf16.xpose.msra.mxu0 %v773
      %786 = vmatprep.subr.bf16.mxu0 0
      %787 = vmatpush1.bf16.xpose.msra.mxu0 %v776
      %788 = vmatprep.subr.bf16.mxu0 0
      %789 = vmatpush1.bf16.xpose.msra.mxu0 0
      %790 = vmatprep.subr.bf16.mxu0 0
      %791 = vmatpush1.bf16.xpose.msra.mxu0 0
      %792 = vmatprep.subr.bf16.mxu0 0
      %793 = vmatpush1.bf16.xpose.msra.mxu0 0
      %794 = vmatprep.subr.bf16.mxu0 0
      %795 = vmatpush1.bf16.xpose.msra.mxu0 0
      %796 = vmatprep.subr.bf16.mxu0 0
      %797 = vmatpush1.bf16.xpose.msra.mxu0 0
      %798 = vmatprep.subr.bf16.mxu0 0
      %799 = vmatpush1.bf16.xpose.msra.mxu0 0
      %800 = vmatprep.subr.bf16.mxu0 0
      %801 = vmatpush1.bf16.xpose.msra.mxu0 0
      %802 = vmatprep.subr.bf16.mxu0 0
      %803 = vmatpush1.bf16.xpose.msra.mxu0 0
      %804 = vmatprep.subr.bf16.mxu0 0
      %805 = vmatpush1.bf16.xpose.msra.mxu0 0
      %806 = vmatprep.subr.bf16.mxu0 0
      %807 = vmatpush1.bf16.xpose.msra.mxu0 0
      %808 = vmatprep.subr.bf16.mxu0 0
      %809 = vmatpush1.bf16.xpose.msra.mxu0 0
      %810 = vmatprep.mubr.bf16.mxu0 0
      %811 = vmatmul.mubr.bf16.gmra.mrb[0].mxu0 %v749
      %v812 = vpop.f32.mrb[0].mxu0
      %v813 = vadd.f32 %v531, %v812
      %v814 = vpop.f32.mrb[0].mxu0
      %v815 = vpop.f32.mrb[0].mxu0
      %v816 = vadd.f32 %v532, %v815
      %v817 = vpop.f32.mrb[0].mxu0
      %818 = vmatprep.mubr.bf16.mxu0 0
      %819 = vmatmul.mubr.bf16.gmra.mrb[0].mxu0 %v752
      %v820 = vpop.f32.mrb[0].mxu0
      %v821 = vadd.f32 %v533, %v820
      %v822 = vpop.f32.mrb[0].mxu0
      %v823 = vpop.f32.mrb[0].mxu0
      %v824 = vadd.f32 %v534, %v823
      %v825 = vpop.f32.mrb[0].mxu0
      %826 = vmatprep.mubr.bf16.mxu0 0
      %827 = vmatmul.mubr.bf16.gmra.mrb[0].mxu0 %v755
      %v828 = vpop.f32.mrb[0].mxu0
      %v829 = vadd.f32 %v535, %v828
      %v830 = vpop.f32.mrb[0].mxu0
      %v831 = vpop.f32.mrb[0].mxu0
      %v832 = vadd.f32 %v536, %v831
      %v833 = vpop.f32.mrb[0].mxu0
      %834 = vmatprep.mubr.bf16.mxu0 0
      %835 = vmatmul.mubr.bf16.gmra.mrb[0].mxu0 %v758
      %v836 = vpop.f32.mrb[0].mxu0
      %v837 = vadd.f32 %v537, %v836
      %v838 = vpop.f32.mrb[0].mxu0
      %v839 = vpop.f32.mrb[0].mxu0
      %v840 = vadd.f32 %v538, %v839
      %v841 = vpop.f32.mrb[0].mxu0
      %842 = vmatprep.mubr.bf16.mxu0 0
      %843 = vmatmul.mubr.bf16.gmra.mrb[0].mxu0 %v761
      %v844 = vpop.f32.mrb[0].mxu0
      %v845 = vadd.f32 %v539, %v844
      %v846 = vpop.f32.mrb[0].mxu0
      %v847 = vpop.f32.mrb[0].mxu0
      %v848 = vadd.f32 %v540, %v847
      %v849 = vpop.f32.mrb[0].mxu0
      %850 = vdwg.mxu0
      %v852 = vsel %vm541, %v406, 0
      %v855 = vsel %vm541, %v407, 0
      %v858 = vsel %vm541, %v408, 0
      %v861 = vsel %vm541, %v409, 0
      %v864 = vsel %vm541, %v410, 0
      %v867 = vsel %vm541, %v466, 0
      %v870 = vsel %vm541, %v467, 0
      %v873 = vsel %vm541, %v468, 0
      %v876 = vsel %vm541, %v469, 0
      %v879 = vsel %vm541, %v470, 0
      %881 = vmatprep.subr.bf16.mxu0 0
      %882 = vmatpush1.bf16.xpose.msra.mxu0 %v867
      %883 = vmatprep.subr.bf16.mxu0 0
      %884 = vmatpush1.bf16.xpose.msra.mxu0 %v870
      %885 = vmatprep.subr.bf16.mxu0 0
      %886 = vmatpush1.bf16.xpose.msra.mxu0 %v873
      %887 = vmatprep.subr.bf16.mxu0 0
      %888 = vmatpush1.bf16.xpose.msra.mxu0 %v876
      %889 = vmatprep.subr.bf16.mxu0 0
      %890 = vmatpush1.bf16.xpose.msra.mxu0 %v879
      %891 = vmatprep.subr.bf16.mxu0 0
      %892 = vmatpush1.bf16.xpose.msra.mxu0 0
      %893 = vmatprep.subr.bf16.mxu0 0
      %894 = vmatpush1.bf16.xpose.msra.mxu0 0
      %895 = vmatprep.subr.bf16.mxu0 0
      %896 = vmatpush1.bf16.xpose.msra.mxu0 0
      %897 = vmatprep.subr.bf16.mxu0 0
      %898 = vmatpush1.bf16.xpose.msra.mxu0 0
      %899 = vmatprep.subr.bf16.mxu0 0
      %900 = vmatpush1.bf16.xpose.msra.mxu0 0
      %901 = vmatprep.subr.bf16.mxu0 0
      %902 = vmatpush1.bf16.xpose.msra.mxu0 0
      %903 = vmatprep.subr.bf16.mxu0 0
      %904 = vmatpush1.bf16.xpose.msra.mxu0 0
      %905 = vmatprep.subr.bf16.mxu0 0
      %906 = vmatpush1.bf16.xpose.msra.mxu0 0
      %907 = vmatprep.subr.bf16.mxu0 0
      %908 = vmatpush1.bf16.xpose.msra.mxu0 0
      %909 = vmatprep.subr.bf16.mxu0 0
      %910 = vmatpush1.bf16.xpose.msra.mxu0 0
      %911 = vmatprep.subr.bf16.mxu0 0
      %912 = vmatpush1.bf16.xpose.msra.mxu0 0
      %913 = vmatprep.mubr.bf16.mxu0 0
      %914 = vmatmul.mubr.bf16.gmra.mrb[0].mxu0 %v852
      %v915 = vpop.f32.mrb[0].mxu0
      %v916 = vadd.f32 %v531, %v915
      %v917 = vpop.f32.mrb[0].mxu0
      %v918 = vpop.f32.mrb[0].mxu0
      %v919 = vadd.f32 %v532, %v918
      %v920 = vpop.f32.mrb[0].mxu0
      %921 = vmatprep.mubr.bf16.mxu0 0
      %922 = vmatmul.mubr.bf16.gmra.mrb[0].mxu0 %v855
      %v923 = vpop.f32.mrb[0].mxu0
      %v924 = vadd.f32 %v533, %v923
      %v925 = vpop.f32.mrb[0].mxu0
      %v926 = vpop.f32.mrb[0].mxu0
      %v927 = vadd.f32 %v534, %v926
      %v928 = vpop.f32.mrb[0].mxu0
      %929 = vmatprep.mubr.bf16.mxu0 0
      %930 = vmatmul.mubr.bf16.gmra.mrb[0].mxu0 %v858
      %v931 = vpop.f32.mrb[0].mxu0
      %v932 = vadd.f32 %v535, %v931
      %v933 = vpop.f32.mrb[0].mxu0
      %v934 = vpop.f32.mrb[0].mxu0
      %v935 = vadd.f32 %v536, %v934
      %v936 = vpop.f32.mrb[0].mxu0
      %937 = vmatprep.mubr.bf16.mxu0 0
      %938 = vmatmul.mubr.bf16.gmra.mrb[0].mxu0 %v861
      %v939 = vpop.f32.mrb[0].mxu0
      %v940 = vadd.f32 %v537, %v939
      %v941 = vpop.f32.mrb[0].mxu0
      %v942 = vpop.f32.mrb[0].mxu0
      %v943 = vadd.f32 %v538, %v942
      %v944 = vpop.f32.mrb[0].mxu0
      %945 = vmatprep.mubr.bf16.mxu0 0
      %946 = vmatmul.mubr.bf16.gmra.mrb[0].mxu0 %v864
      %v947 = vpop.f32.mrb[0].mxu0
      %v948 = vadd.f32 %v539, %v947
      %v949 = vpop.f32.mrb[0].mxu0
      %v950 = vpop.f32.mrb[0].mxu0
      %v951 = vadd.f32 %v540, %v950
      %v952 = vpop.f32.mrb[0].mxu0
      %953 = vdwg.mxu0
      %vm954 = vcmask 654336
      %v955 = vsel %vm954, %v607, -inf
      %956 = vmax.xlane.f32.xlu0 %v955
      %v957 = vpop.xlane.xlu0 %956
      %v958 = vsel %vm954, %v610, -inf
      %959 = vmax.xlane.f32.xlu0 %v958
      %v960 = vpop.xlane.xlu0 %959
      %v961 = vsel %vm954, %v615, -inf
      %962 = vmax.xlane.f32.xlu0 %v961
      %v963 = vpop.xlane.xlu0 %962
      %v964 = vsel %vm954, %v618, -inf
      %965 = vmax.xlane.f32.xlu0 %v964
      %v966 = vpop.xlane.xlu0 %965
      %v967 = vsel %vm954, %v623, -inf
      %968 = vmax.xlane.f32.xlu0 %v967
      %v969 = vpop.xlane.xlu0 %968
      %v970 = vsel %vm954, %v626, -inf
      %971 = vmax.xlane.f32.xlu0 %v970
      %v972 = vpop.xlane.xlu0 %971
      %v973 = vsel %vm954, %v631, -inf
      %974 = vmax.xlane.f32.xlu0 %v973
      %v975 = vpop.xlane.xlu0 %974
      %v976 = vsel %vm954, %v634, -inf
      %977 = vmax.xlane.f32.xlu0 %v976
      %v978 = vpop.xlane.xlu0 %977
      %v979 = vsel %vm954, %v639, -inf
      %980 = vmax.xlane.f32.xlu0 %v979
      %v981 = vpop.xlane.xlu0 %980
      %v982 = vsel %vm954, %v642, -inf
      %983 = vmax.xlane.f32.xlu0 %v982
      %v984 = vpop.xlane.xlu0 %983
      %v985 = vsel %vm954, %v710, -inf
      %986 = vmax.xlane.f32.xlu0 %v985
      %v987 = vpop.xlane.xlu0 %986
      %v988 = vsel %vm954, %v713, -inf
      %989 = vmax.xlane.f32.xlu0 %v988
      %v990 = vpop.xlane.xlu0 %989
      %v991 = vsel %vm954, %v718, -inf
      %992 = vmax.xlane.f32.xlu0 %v991
      %v993 = vpop.xlane.xlu0 %992
      %v994 = vsel %vm954, %v721, -inf
      %995 = vmax.xlane.f32.xlu0 %v994
      %v996 = vpop.xlane.xlu0 %995
      %v997 = vsel %vm954, %v726, -inf
      %998 = vmax.xlane.f32.xlu0 %v997
      %v999 = vpop.xlane.xlu0 %998
      %v1000 = vsel %vm954, %v729, -inf
      %1001 = vmax.xlane.f32.xlu0 %v1000
      %v1002 = vpop.xlane.xlu0 %1001
      %v1003 = vsel %vm954, %v734, -inf
      %1004 = vmax.xlane.f32.xlu0 %v1003
      %v1005 = vpop.xlane.xlu0 %1004
      %v1006 = vsel %vm954, %v737, -inf
      %1007 = vmax.xlane.f32.xlu0 %v1006
      %v1008 = vpop.xlane.xlu0 %1007
      %v1009 = vsel %vm954, %v742, -inf
      %1010 = vmax.xlane.f32.xlu0 %v1009
      %v1011 = vpop.xlane.xlu0 %1010
      %v1012 = vsel %vm954, %v745, -inf
      %1013 = vmax.xlane.f32.xlu0 %v1012
      %v1014 = vpop.xlane.xlu0 %1013
      %v1015 = vsel %vm954, %v813, -inf
      %1016 = vmax.xlane.f32.xlu0 %v1015
      %v1017 = vpop.xlane.xlu0 %1016
      %v1018 = vsel %vm954, %v816, -inf
      %1019 = vmax.xlane.f32.xlu0 %v1018
      %v1020 = vpop.xlane.xlu0 %1019
      %v1021 = vsel %vm954, %v821, -inf
      %1022 = vmax.xlane.f32.xlu0 %v1021
      %v1023 = vpop.xlane.xlu0 %1022
      %v1024 = vsel %vm954, %v824, -inf
      %1025 = vmax.xlane.f32.xlu0 %v1024
      %v1026 = vpop.xlane.xlu0 %1025
      %v1027 = vsel %vm954, %v829, -inf
      %1028 = vmax.xlane.f32.xlu0 %v1027
      %v1029 = vpop.xlane.xlu0 %1028
      %v1030 = vsel %vm954, %v832, -inf
      %1031 = vmax.xlane.f32.xlu0 %v1030
      %v1032 = vpop.xlane.xlu0 %1031
      %v1033 = vsel %vm954, %v837, -inf
      %1034 = vmax.xlane.f32.xlu0 %v1033
      %v1035 = vpop.xlane.xlu0 %1034
      %v1036 = vsel %vm954, %v840, -inf
      %1037 = vmax.xlane.f32.xlu0 %v1036
      %v1038 = vpop.xlane.xlu0 %1037
      %v1039 = vsel %vm954, %v845, -inf
      %1040 = vmax.xlane.f32.xlu0 %v1039
      %v1041 = vpop.xlane.xlu0 %1040
      %v1042 = vsel %vm954, %v848, -inf
      %1043 = vmax.xlane.f32.xlu0 %v1042
      %v1044 = vpop.xlane.xlu0 %1043
      %v1045 = vsel %vm954, %v916, -inf
      %1046 = vmax.xlane.f32.xlu0 %v1045
      %v1047 = vpop.xlane.xlu0 %1046
      %v1048 = vsel %vm954, %v919, -inf
      %1049 = vmax.xlane.f32.xlu0 %v1048
      %v1050 = vpop.xlane.xlu0 %1049
      %v1051 = vsel %vm954, %v924, -inf
      %1052 = vmax.xlane.f32.xlu0 %v1051
      %v1053 = vpop.xlane.xlu0 %1052
      %v1054 = vsel %vm954, %v927, -inf
      %1055 = vmax.xlane.f32.xlu0 %v1054
      %v1056 = vpop.xlane.xlu0 %1055
      %v1057 = vsel %vm954, %v932, -inf
      %1058 = vmax.xlane.f32.xlu0 %v1057
      %v1059 = vpop.xlane.xlu0 %1058
      %v1060 = vsel %vm954, %v935, -inf
      %1061 = vmax.xlane.f32.xlu0 %v1060
      %v1062 = vpop.xlane.xlu0 %1061
      %v1063 = vsel %vm954, %v940, -inf
      %1064 = vmax.xlane.f32.xlu0 %v1063
      %v1065 = vpop.xlane.xlu0 %1064
      %v1066 = vsel %vm954, %v943, -inf
      %1067 = vmax.xlane.f32.xlu0 %v1066
      %v1068 = vpop.xlane.xlu0 %1067
      %v1069 = vsel %vm954, %v948, -inf
      %1070 = vmax.xlane.f32.xlu0 %v1069
      %v1071 = vpop.xlane.xlu0 %1070
      %v1072 = vsel %vm954, %v951, -inf
      %1073 = vmax.xlane.f32.xlu0 %v1072
      %v1074 = vpop.xlane.xlu0 %1073
      %v1075 = vsub.f32 %v607, %v957
      %v1076 = vsub.f32 %v610, %v960
      %v1077 = vsub.f32 %v615, %v963
      %v1078 = vsub.f32 %v618, %v966
      %v1079 = vsub.f32 %v623, %v969
      %v1080 = vsub.f32 %v626, %v972
      %v1081 = vsub.f32 %v631, %v975
      %v1082 = vsub.f32 %v634, %v978
      %v1083 = vsub.f32 %v639, %v981
      %v1084 = vsub.f32 %v642, %v984
      %v1085 = vsub.f32 %v710, %v987
      %v1086 = vsub.f32 %v713, %v990
      %v1087 = vsub.f32 %v718, %v993
      %v1088 = vsub.f32 %v721, %v996
      %v1089 = vsub.f32 %v726, %v999
      %v1090 = vsub.f32 %v729, %v1002
      %v1091 = vsub.f32 %v734, %v1005
      %v1092 = vsub.f32 %v737, %v1008
      %v1093 = vsub.f32 %v742, %v1011
      %v1094 = vsub.f32 %v745, %v1014
      %v1095 = vsub.f32 %v813, %v1017
      %v1096 = vsub.f32 %v816, %v1020
      %v1097 = vsub.f32 %v821, %v1023
      %v1098 = vsub.f32 %v824, %v1026
      %v1099 = vsub.f32 %v829, %v1029
      %v1100 = vsub.f32 %v832, %v1032
      %v1101 = vsub.f32 %v837, %v1035
      %v1102 = vsub.f32 %v840, %v1038
      %v1103 = vsub.f32 %v845, %v1041
      %v1104 = vsub.f32 %v848, %v1044
      %v1105 = vsub.f32 %v916, %v1047
      %v1106 = vsub.f32 %v919, %v1050
      %v1107 = vsub.f32 %v924, %v1053
      %v1108 = vsub.f32 %v927, %v1056
      %v1109 = vsub.f32 %v932, %v1059
      %v1110 = vsub.f32 %v935, %v1062
      %v1111 = vsub.f32 %v940, %v1065
      %v1112 = vsub.f32 %v943, %v1068
      %v1113 = vsub.f32 %v948, %v1071
      %v1114 = vsub.f32 %v951, %v1074
      %v1115 = vmul.f32 %v1075, 1.442695
      %v1116 = vpow.pop %v1115
      %v1117 = vmul.f32 %v1076, 1.442695
      %v1118 = vpow.pop %v1117
      %v1119 = vmul.f32 %v1077, 1.442695
      %v1120 = vpow.pop %v1119
      %v1121 = vmul.f32 %v1078, 1.442695
      %v1122 = vpow.pop %v1121
      %v1123 = vmul.f32 %v1079, 1.442695
      %v1124 = vpow.pop %v1123
      %v1125 = vmul.f32 %v1080, 1.442695
      %v1126 = vpow.pop %v1125
      %v1127 = vmul.f32 %v1081, 1.442695
      %v1128 = vpow.pop %v1127
      %v1129 = vmul.f32 %v1082, 1.442695
      %v1130 = vpow.pop %v1129
      %v1131 = vmul.f32 %v1083, 1.442695
      %v1132 = vpow.pop %v1131
      %v1133 = vmul.f32 %v1084, 1.442695
      %v1134 = vpow.pop %v1133
      %v1135 = vmul.f32 %v1085, 1.442695
      %v1136 = vpow.pop %v1135
      %v1137 = vmul.f32 %v1086, 1.442695
      %v1138 = vpow.pop %v1137
      %v1139 = vmul.f32 %v1087, 1.442695
      %v1140 = vpow.pop %v1139
      %v1141 = vmul.f32 %v1088, 1.442695
      %v1142 = vpow.pop %v1141
      %v1143 = vmul.f32 %v1089, 1.442695
      %v1144 = vpow.pop %v1143
      %v1145 = vmul.f32 %v1090, 1.442695
      %v1146 = vpow.pop %v1145
      %v1147 = vmul.f32 %v1091, 1.442695
      %v1148 = vpow.pop %v1147
      %v1149 = vmul.f32 %v1092, 1.442695
      %v1150 = vpow.pop %v1149
      %v1151 = vmul.f32 %v1093, 1.442695
      %v1152 = vpow.pop %v1151
      %v1153 = vmul.f32 %v1094, 1.442695
      %v1154 = vpow.pop %v1153
      %v1155 = vmul.f32 %v1095, 1.442695
      %v1156 = vpow.pop %v1155
      %v1157 = vmul.f32 %v1096, 1.442695
      %v1158 = vpow.pop %v1157
      %v1159 = vmul.f32 %v1097, 1.442695
      %v1160 = vpow.pop %v1159
      %v1161 = vmul.f32 %v1098, 1.442695
      %v1162 = vpow.pop %v1161
      %v1163 = vmul.f32 %v1099, 1.442695
      %v1164 = vpow.pop %v1163
      %v1165 = vmul.f32 %v1100, 1.442695
      %v1166 = vpow.pop %v1165
      %v1167 = vmul.f32 %v1101, 1.442695
      %v1168 = vpow.pop %v1167
      %v1169 = vmul.f32 %v1102, 1.442695
      %v1170 = vpow.pop %v1169
      %v1171 = vmul.f32 %v1103, 1.442695
      %v1172 = vpow.pop %v1171
      %v1173 = vmul.f32 %v1104, 1.442695
      %v1174 = vpow.pop %v1173
      %v1175 = vmul.f32 %v1105, 1.442695
      %v1176 = vpow.pop %v1175
      %v1177 = vmul.f32 %v1106, 1.442695
      %v1178 = vpow.pop %v1177
      %v1179 = vmul.f32 %v1107, 1.442695
      %v1180 = vpow.pop %v1179
      %v1181 = vmul.f32 %v1108, 1.442695
      %v1182 = vpow.pop %v1181
      %v1183 = vmul.f32 %v1109, 1.442695
      %v1184 = vpow.pop %v1183
      %v1185 = vmul.f32 %v1110, 1.442695
      %v1186 = vpow.pop %v1185
      %v1187 = vmul.f32 %v1111, 1.442695
      %v1188 = vpow.pop %v1187
      %v1189 = vmul.f32 %v1112, 1.442695
      %v1190 = vpow.pop %v1189
      %v1191 = vmul.f32 %v1113, 1.442695
      %v1192 = vpow.pop %v1191
      %v1193 = vmul.f32 %v1114, 1.442695
      %v1194 = vpow.pop %v1193
      %v1195 = vsel %vm954, %v1116, 0.0
      %1196 = vadd.xlane.f32.xlu0 %v1195
      %v1197 = vpop.xlane.xlu0 %1196
      %v1198 = vsel %vm954, %v1118, 0.0
      %1199 = vadd.xlane.f32.xlu0 %v1198
      %v1200 = vpop.xlane.xlu0 %1199
      %v1201 = vsel %vm954, %v1120, 0.0
      %1202 = vadd.xlane.f32.xlu0 %v1201
      %v1203 = vpop.xlane.xlu0 %1202
      %v1204 = vsel %vm954, %v1122, 0.0
      %1205 = vadd.xlane.f32.xlu0 %v1204
      %v1206 = vpop.xlane.xlu0 %1205
      %v1207 = vsel %vm954, %v1124, 0.0
      %1208 = vadd.xlane.f32.xlu0 %v1207
      %v1209 = vpop.xlane.xlu0 %1208
      %v1210 = vsel %vm954, %v1126, 0.0
      %1211 = vadd.xlane.f32.xlu0 %v1210
      %v1212 = vpop.xlane.xlu0 %1211
      %v1213 = vsel %vm954, %v1128, 0.0
      %1214 = vadd.xlane.f32.xlu0 %v1213
      %v1215 = vpop.xlane.xlu0 %1214
      %v1216 = vsel %vm954, %v1130, 0.0
      %1217 = vadd.xlane.f32.xlu0 %v1216
      %v1218 = vpop.xlane.xlu0 %1217
      %v1219 = vsel %vm954, %v1132, 0.0
      %1220 = vadd.xlane.f32.xlu0 %v1219
      %v1221 = vpop.xlane.xlu0 %1220
      %v1222 = vsel %vm954, %v1134, 0.0
      %1223 = vadd.xlane.f32.xlu0 %v1222
      %v1224 = vpop.xlane.xlu0 %1223
      %v1225 = vsel %vm954, %v1136, 0.0
      %1226 = vadd.xlane.f32.xlu0 %v1225
      %v1227 = vpop.xlane.xlu0 %1226
      %v1228 = vsel %vm954, %v1138, 0.0
      %1229 = vadd.xlane.f32.xlu0 %v1228
      %v1230 = vpop.xlane.xlu0 %1229
      %v1231 = vsel %vm954, %v1140, 0.0
      %1232 = vadd.xlane.f32.xlu0 %v1231
      %v1233 = vpop.xlane.xlu0 %1232
      %v1234 = vsel %vm954, %v1142, 0.0
      %1235 = vadd.xlane.f32.xlu0 %v1234
      %v1236 = vpop.xlane.xlu0 %1235
      %v1237 = vsel %vm954, %v1144, 0.0
      %1238 = vadd.xlane.f32.xlu0 %v1237
      %v1239 = vpop.xlane.xlu0 %1238
      %v1240 = vsel %vm954, %v1146, 0.0
      %1241 = vadd.xlane.f32.xlu0 %v1240
      %v1242 = vpop.xlane.xlu0 %1241
      %v1243 = vsel %vm954, %v1148, 0.0
      %1244 = vadd.xlane.f32.xlu0 %v1243
      %v1245 = vpop.xlane.xlu0 %1244
      %v1246 = vsel %vm954, %v1150, 0.0
      %1247 = vadd.xlane.f32.xlu0 %v1246
      %v1248 = vpop.xlane.xlu0 %1247
      %v1249 = vsel %vm954, %v1152, 0.0
      %1250 = vadd.xlane.f32.xlu0 %v1249
      %v1251 = vpop.xlane.xlu0 %1250
      %v1252 = vsel %vm954, %v1154, 0.0
      %1253 = vadd.xlane.f32.xlu0 %v1252
      %v1254 = vpop.xlane.xlu0 %1253
      %v1255 = vsel %vm954, %v1156, 0.0
      %1256 = vadd.xlane.f32.xlu0 %v1255
      %v1257 = vpop.xlane.xlu0 %1256
      %v1258 = vsel %vm954, %v1158, 0.0
      %1259 = vadd.xlane.f32.xlu0 %v1258
      %v1260 = vpop.xlane.xlu0 %1259
      %v1261 = vsel %vm954, %v1160, 0.0
      %1262 = vadd.xlane.f32.xlu0 %v1261
      %v1263 = vpop.xlane.xlu0 %1262
      %v1264 = vsel %vm954, %v1162, 0.0
      %1265 = vadd.xlane.f32.xlu0 %v1264
      %v1266 = vpop.xlane.xlu0 %1265
      %v1267 = vsel %vm954, %v1164, 0.0
      %1268 = vadd.xlane.f32.xlu0 %v1267
      %v1269 = vpop.xlane.xlu0 %1268
      %v1270 = vsel %vm954, %v1166, 0.0
      %1271 = vadd.xlane.f32.xlu0 %v1270
      %v1272 = vpop.xlane.xlu0 %1271
      %v1273 = vsel %vm954, %v1168, 0.0
      %1274 = vadd.xlane.f32.xlu0 %v1273
      %v1275 = vpop.xlane.xlu0 %1274
      %v1276 = vsel %vm954, %v1170, 0.0
      %1277 = vadd.xlane.f32.xlu0 %v1276
      %v1278 = vpop.xlane.xlu0 %1277
      %v1279 = vsel %vm954, %v1172, 0.0
      %1280 = vadd.xlane.f32.xlu0 %v1279
      %v1281 = vpop.xlane.xlu0 %1280
      %v1282 = vsel %vm954, %v1174, 0.0
      %1283 = vadd.xlane.f32.xlu0 %v1282
      %v1284 = vpop.xlane.xlu0 %1283
      %v1285 = vsel %vm954, %v1176, 0.0
      %1286 = vadd.xlane.f32.xlu0 %v1285
      %v1287 = vpop.xlane.xlu0 %1286
      %v1288 = vsel %vm954, %v1178, 0.0
      %1289 = vadd.xlane.f32.xlu0 %v1288
      %v1290 = vpop.xlane.xlu0 %1289
      %v1291 = vsel %vm954, %v1180, 0.0
      %1292 = vadd.xlane.f32.xlu0 %v1291
      %v1293 = vpop.xlane.xlu0 %1292
      %v1294 = vsel %vm954, %v1182, 0.0
      %1295 = vadd.xlane.f32.xlu0 %v1294
      %v1296 = vpop.xlane.xlu0 %1295
      %v1297 = vsel %vm954, %v1184, 0.0
      %1298 = vadd.xlane.f32.xlu0 %v1297
      %v1299 = vpop.xlane.xlu0 %1298
      %v1300 = vsel %vm954, %v1186, 0.0
      %1301 = vadd.xlane.f32.xlu0 %v1300
      %v1302 = vpop.xlane.xlu0 %1301
      %v1303 = vsel %vm954, %v1188, 0.0
      %1304 = vadd.xlane.f32.xlu0 %v1303
      %v1305 = vpop.xlane.xlu0 %1304
      %v1306 = vsel %vm954, %v1190, 0.0
      %1307 = vadd.xlane.f32.xlu0 %v1306
      %v1308 = vpop.xlane.xlu0 %1307
      %v1309 = vsel %vm954, %v1192, 0.0
      %1310 = vadd.xlane.f32.xlu0 %v1309
      %v1311 = vpop.xlane.xlu0 %1310
      %v1312 = vsel %vm954, %v1194, 0.0
      %1313 = vadd.xlane.f32.xlu0 %v1312
      %v1314 = vpop.xlane.xlu0 %1313
      %v1315 = vrcp.pop %v1197
      %v1316 = vrcp.pop %v1200
      %v1317 = vrcp.pop %v1203
      %v1318 = vrcp.pop %v1206
      %v1319 = vrcp.pop %v1209
      %v1320 = vrcp.pop %v1212
      %v1321 = vrcp.pop %v1215
      %v1322 = vrcp.pop %v1218
      %v1323 = vrcp.pop %v1221
      %v1324 = vrcp.pop %v1224
      %v1325 = vrcp.pop %v1227
      %v1326 = vrcp.pop %v1230
      %v1327 = vrcp.pop %v1233
      %v1328 = vrcp.pop %v1236
      %v1329 = vrcp.pop %v1239
      %v1330 = vrcp.pop %v1242
      %v1331 = vrcp.pop %v1245
      %v1332 = vrcp.pop %v1248
      %v1333 = vrcp.pop %v1251
      %v1334 = vrcp.pop %v1254
      %v1335 = vrcp.pop %v1257
      %v1336 = vrcp.pop %v1260
      %v1337 = vrcp.pop %v1263
      %v1338 = vrcp.pop %v1266
      %v1339 = vrcp.pop %v1269
      %v1340 = vrcp.pop %v1272
      %v1341 = vrcp.pop %v1275
      %v1342 = vrcp.pop %v1278
      %v1343 = vrcp.pop %v1281
      %v1344 = vrcp.pop %v1284
      %v1345 = vrcp.pop %v1287
      %v1346 = vrcp.pop %v1290
      %v1347 = vrcp.pop %v1293
      %v1348 = vrcp.pop %v1296
      %v1349 = vrcp.pop %v1299
      %v1350 = vrcp.pop %v1302
      %v1351 = vrcp.pop %v1305
      %v1352 = vrcp.pop %v1308
      %v1353 = vrcp.pop %v1311
      %v1354 = vrcp.pop %v1314
      %v1355 = vmul.f32 %v1116, %v1315
      %v1356 = vmul.f32 %v1118, %v1316
      %v1357 = vmul.f32 %v1120, %v1317
      %v1358 = vmul.f32 %v1122, %v1318
      %v1359 = vmul.f32 %v1124, %v1319
      %v1360 = vmul.f32 %v1126, %v1320
      %v1361 = vmul.f32 %v1128, %v1321
      %v1362 = vmul.f32 %v1130, %v1322
      %v1363 = vmul.f32 %v1132, %v1323
      %v1364 = vmul.f32 %v1134, %v1324
      %v1365 = vmul.f32 %v1136, %v1325
      %v1366 = vmul.f32 %v1138, %v1326
      %v1367 = vmul.f32 %v1140, %v1327
      %v1368 = vmul.f32 %v1142, %v1328
      %v1369 = vmul.f32 %v1144, %v1329
      %v1370 = vmul.f32 %v1146, %v1330
      %v1371 = vmul.f32 %v1148, %v1331
      %v1372 = vmul.f32 %v1150, %v1332
      %v1373 = vmul.f32 %v1152, %v1333
      %v1374 = vmul.f32 %v1154, %v1334
      %v1375 = vmul.f32 %v1156, %v1335
      %v1376 = vmul.f32 %v1158, %v1336
      %v1377 = vmul.f32 %v1160, %v1337
      %v1378 = vmul.f32 %v1162, %v1338
      %v1379 = vmul.f32 %v1164, %v1339
      %v1380 = vmul.f32 %v1166, %v1340
      %v1381 = vmul.f32 %v1168, %v1341
      %v1382 = vmul.f32 %v1170, %v1342
      %v1383 = vmul.f32 %v1172, %v1343
      %v1384 = vmul.f32 %v1174, %v1344
      %v1385 = vmul.f32 %v1176, %v1345
      %v1386 = vmul.f32 %v1178, %v1346
      %v1387 = vmul.f32 %v1180, %v1347
      %v1388 = vmul.f32 %v1182, %v1348
      %v1389 = vmul.f32 %v1184, %v1349
      %v1390 = vmul.f32 %v1186, %v1350
      %v1391 = vmul.f32 %v1188, %v1351
      %v1392 = vmul.f32 %v1190, %v1352
      %v1393 = vmul.f32 %v1192, %v1353
      %v1394 = vmul.f32 %v1194, %v1354
      %v1395 = vpack.c.bf16 %v1356, %v1355
      %v1396 = vpack.c.bf16 %v1358, %v1357
      %v1397 = vpack.c.bf16 %v1360, %v1359
      %v1398 = vpack.c.bf16 %v1362, %v1361
      %v1399 = vpack.c.bf16 %v1364, %v1363
      %v1400 = vpack.c.bf16 %v1366, %v1365
      %v1401 = vpack.c.bf16 %v1368, %v1367
      %v1402 = vpack.c.bf16 %v1370, %v1369
      %v1403 = vpack.c.bf16 %v1372, %v1371
      %v1404 = vpack.c.bf16 %v1374, %v1373
      %v1405 = vpack.c.bf16 %v1376, %v1375
      %v1406 = vpack.c.bf16 %v1378, %v1377
      %v1407 = vpack.c.bf16 %v1380, %v1379
      %v1408 = vpack.c.bf16 %v1382, %v1381
      %v1409 = vpack.c.bf16 %v1384, %v1383
      %v1410 = vpack.c.bf16 %v1386, %v1385
      %v1411 = vpack.c.bf16 %v1388, %v1387
      %v1412 = vpack.c.bf16 %v1390, %v1389
      %v1413 = vpack.c.bf16 %v1392, %v1391
      %v1414 = vpack.c.bf16 %v1394, %v1393
      %v1416 = vsel %vm954, %v1395, 0
      %v1419 = vsel %vm954, %v1396, 0
      %v1422 = vsel %vm954, %v1397, 0
      %v1425 = vsel %vm954, %v1398, 0
      %v1428 = vsel %vm954, %v1399, 0
      %1430 = vmatprep.subr.bf16.mxu0 0
      %1431 = vmatpush1.bf16.msra.mxu0 %v511
      %1432 = vmatprep.subr.bf16.mxu0 0
      %1433 = vmatpush1.bf16.msra.mxu0 %v512
      %1434 = vmatprep.subr.bf16.mxu0 0
      %1435 = vmatpush1.bf16.msra.mxu0 %v513
      %1436 = vmatprep.subr.bf16.mxu0 0
      %1437 = vmatpush1.bf16.msra.mxu0 %v514
      %1438 = vmatprep.subr.bf16.mxu0 0
      %1439 = vmatpush1.bf16.msra.mxu0 %v515
      %1440 = vmatprep.subr.bf16.mxu0 0
      %1441 = vmatpush1.bf16.msra.mxu0 0
      %1442 = vmatprep.subr.bf16.mxu0 0
      %1443 = vmatpush1.bf16.msra.mxu0 0
      %1444 = vmatprep.subr.bf16.mxu0 0
      %1445 = vmatpush1.bf16.msra.mxu0 0
      %1446 = vmatprep.subr.bf16.mxu0 0
      %1447 = vmatpush1.bf16.msra.mxu0 0
      %1448 = vmatprep.subr.bf16.mxu0 0
      %1449 = vmatpush1.bf16.msra.mxu0 0
      %1450 = vmatprep.subr.bf16.mxu0 0
      %1451 = vmatpush1.bf16.msra.mxu0 0
      %1452 = vmatprep.subr.bf16.mxu0 0
      %1453 = vmatpush1.bf16.msra.mxu0 0
      %1454 = vmatprep.subr.bf16.mxu0 0
      %1455 = vmatpush1.bf16.msra.mxu0 0
      %1456 = vmatprep.subr.bf16.mxu0 0
      %1457 = vmatpush1.bf16.msra.mxu0 0
      %1458 = vmatprep.subr.bf16.mxu0 0
      %1459 = vmatpush1.bf16.msra.mxu0 0
      %1460 = vmatprep.subr.bf16.mxu0 0
      %1461 = vmatpush1.bf16.msra.mxu0 0
      %1462 = vmatprep.mubr.bf16.mxu0 0
      %1463 = vmatmul.mubr.bf16.gmra.mrb[0].mxu0 %v1416
      %v1464 = vpop.f32.mrb[0].mxu0
      %v1465 = vadd.f32 0.0, %v1464
      %v1466 = vpop.f32.mrb[0].mxu0
      %v1467 = vpop.f32.mrb[0].mxu0
      %v1468 = vadd.f32 0.0, %v1467
      %v1469 = vpop.f32.mrb[0].mxu0
      %1470 = vmatprep.mubr.bf16.mxu0 0
      %1471 = vmatmul.mubr.bf16.gmra.mrb[0].mxu0 %v1419
      %v1472 = vpop.f32.mrb[0].mxu0
      %v1473 = vadd.f32 0.0, %v1472
      %v1474 = vpop.f32.mrb[0].mxu0
      %v1475 = vpop.f32.mrb[0].mxu0
      %v1476 = vadd.f32 0.0, %v1475
      %v1477 = vpop.f32.mrb[0].mxu0
      %1478 = vmatprep.mubr.bf16.mxu0 0
      %1479 = vmatmul.mubr.bf16.gmra.mrb[0].mxu0 %v1422
      %v1480 = vpop.f32.mrb[0].mxu0
      %v1481 = vadd.f32 0.0, %v1480
      %v1482 = vpop.f32.mrb[0].mxu0
      %v1483 = vpop.f32.mrb[0].mxu0
      %v1484 = vadd.f32 0.0, %v1483
      %v1485 = vpop.f32.mrb[0].mxu0
      %1486 = vmatprep.mubr.bf16.mxu0 0
      %1487 = vmatmul.mubr.bf16.gmra.mrb[0].mxu0 %v1425
      %v1488 = vpop.f32.mrb[0].mxu0
      %v1489 = vadd.f32 0.0, %v1488
      %v1490 = vpop.f32.mrb[0].mxu0
      %v1491 = vpop.f32.mrb[0].mxu0
      %v1492 = vadd.f32 0.0, %v1491
      %v1493 = vpop.f32.mrb[0].mxu0
      %1494 = vmatprep.mubr.bf16.mxu0 0
      %1495 = vmatmul.mubr.bf16.gmra.mrb[0].mxu0 %v1428
      %v1496 = vpop.f32.mrb[0].mxu0
      %v1497 = vadd.f32 0.0, %v1496
      %v1498 = vpop.f32.mrb[0].mxu0
      %v1499 = vpop.f32.mrb[0].mxu0
      %v1500 = vadd.f32 0.0, %v1499
      %v1501 = vpop.f32.mrb[0].mxu0
      %1502 = vdwg.mxu0
      %v1504 = vsel %vm954, %v1400, 0
      %v1507 = vsel %vm954, %v1401, 0
      %v1510 = vsel %vm954, %v1402, 0
      %v1513 = vsel %vm954, %v1403, 0
      %v1516 = vsel %vm954, %v1404, 0
      %1518 = vmatprep.subr.bf16.mxu0 0
      %1519 = vmatpush1.bf16.msra.mxu0 %v516
      %1520 = vmatprep.subr.bf16.mxu0 0
      %1521 = vmatpush1.bf16.msra.mxu0 %v517
      %1522 = vmatprep.subr.bf16.mxu0 0
      %1523 = vmatpush1.bf16.msra.mxu0 %v518
      %1524 = vmatprep.subr.bf16.mxu0 0
      %1525 = vmatpush1.bf16.msra.mxu0 %v519
      %1526 = vmatprep.subr.bf16.mxu0 0
      %1527 = vmatpush1.bf16.msra.mxu0 %v520
      %1528 = vmatprep.subr.bf16.mxu0 0
      %1529 = vmatpush1.bf16.msra.mxu0 0
      %1530 = vmatprep.subr.bf16.mxu0 0
      %1531 = vmatpush1.bf16.msra.mxu0 0
      %1532 = vmatprep.subr.bf16.mxu0 0
      %1533 = vmatpush1.bf16.msra.mxu0 0
      %1534 = vmatprep.subr.bf16.mxu0 0
      %1535 = vmatpush1.bf16.msra.mxu0 0
      %1536 = vmatprep.subr.bf16.mxu0 0
      %1537 = vmatpush1.bf16.msra.mxu0 0
      %1538 = vmatprep.subr.bf16.mxu0 0
      %1539 = vmatpush1.bf16.msra.mxu0 0
      %1540 = vmatprep.subr.bf16.mxu0 0
      %1541 = vmatpush1.bf16.msra.mxu0 0
      %1542 = vmatprep.subr.bf16.mxu0 0
      %1543 = vmatpush1.bf16.msra.mxu0 0
      %1544 = vmatprep.subr.bf16.mxu0 0
      %1545 = vmatpush1.bf16.msra.mxu0 0
      %1546 = vmatprep.subr.bf16.mxu0 0
      %1547 = vmatpush1.bf16.msra.mxu0 0
      %1548 = vmatprep.subr.bf16.mxu0 0
      %1549 = vmatpush1.bf16.msra.mxu0 0
      %1550 = vmatprep.mubr.bf16.mxu0 0
      %1551 = vmatmul.mubr.bf16.gmra.mrb[0].mxu0 %v1504
      %v1552 = vpop.f32.mrb[0].mxu0
      %v1553 = vadd.f32 0.0, %v1552
      %v1554 = vpop.f32.mrb[0].mxu0
      %v1555 = vpop.f32.mrb[0].mxu0
      %v1556 = vadd.f32 0.0, %v1555
      %v1557 = vpop.f32.mrb[0].mxu0
      %1558 = vmatprep.mubr.bf16.mxu0 0
      %1559 = vmatmul.mubr.bf16.gmra.mrb[0].mxu0 %v1507
      %v1560 = vpop.f32.mrb[0].mxu0
      %v1561 = vadd.f32 0.0, %v1560
      %v1562 = vpop.f32.mrb[0].mxu0
      %v1563 = vpop.f32.mrb[0].mxu0
      %v1564 = vadd.f32 0.0, %v1563
      %v1565 = vpop.f32.mrb[0].mxu0
      %1566 = vmatprep.mubr.bf16.mxu0 0
      %1567 = vmatmul.mubr.bf16.gmra.mrb[0].mxu0 %v1510
      %v1568 = vpop.f32.mrb[0].mxu0
      %v1569 = vadd.f32 0.0, %v1568
      %v1570 = vpop.f32.mrb[0].mxu0
      %v1571 = vpop.f32.mrb[0].mxu0
      %v1572 = vadd.f32 0.0, %v1571
      %v1573 = vpop.f32.mrb[0].mxu0
      %1574 = vmatprep.mubr.bf16.mxu0 0
      %1575 = vmatmul.mubr.bf16.gmra.mrb[0].mxu0 %v1513
      %v1576 = vpop.f32.mrb[0].mxu0
      %v1577 = vadd.f32 0.0, %v1576
      %v1578 = vpop.f32.mrb[0].mxu0
      %v1579 = vpop.f32.mrb[0].mxu0
      %v1580 = vadd.f32 0.0, %v1579
      %v1581 = vpop.f32.mrb[0].mxu0
      %1582 = vmatprep.mubr.bf16.mxu0 0
      %1583 = vmatmul.mubr.bf16.gmra.mrb[0].mxu0 %v1516
      %v1584 = vpop.f32.mrb[0].mxu0
      %v1585 = vadd.f32 0.0, %v1584
      %v1586 = vpop.f32.mrb[0].mxu0
      %v1587 = vpop.f32.mrb[0].mxu0
      %v1588 = vadd.f32 0.0, %v1587
      %v1589 = vpop.f32.mrb[0].mxu0
      %1590 = vdwg.mxu0
      %v1592 = vsel %vm954, %v1405, 0
      %v1595 = vsel %vm954, %v1406, 0
      %v1598 = vsel %vm954, %v1407, 0
      %v1601 = vsel %vm954, %v1408, 0
      %v1604 = vsel %vm954, %v1409, 0
      %1606 = vmatprep.subr.bf16.mxu0 0
      %1607 = vmatpush1.bf16.msra.mxu0 %v521
      %1608 = vmatprep.subr.bf16.mxu0 0
      %1609 = vmatpush1.bf16.msra.mxu0 %v522
      %1610 = vmatprep.subr.bf16.mxu0 0
      %1611 = vmatpush1.bf16.msra.mxu0 %v523
      %1612 = vmatprep.subr.bf16.mxu0 0
      %1613 = vmatpush1.bf16.msra.mxu0 %v524
      %1614 = vmatprep.subr.bf16.mxu0 0
      %1615 = vmatpush1.bf16.msra.mxu0 %v525
      %1616 = vmatprep.subr.bf16.mxu0 0
      %1617 = vmatpush1.bf16.msra.mxu0 0
      %1618 = vmatprep.subr.bf16.mxu0 0
      %1619 = vmatpush1.bf16.msra.mxu0 0
      %1620 = vmatprep.subr.bf16.mxu0 0
      %1621 = vmatpush1.bf16.msra.mxu0 0
      %1622 = vmatprep.subr.bf16.mxu0 0
      %1623 = vmatpush1.bf16.msra.mxu0 0
      %1624 = vmatprep.subr.bf16.mxu0 0
      %1625 = vmatpush1.bf16.msra.mxu0 0
      %1626 = vmatprep.subr.bf16.mxu0 0
      %1627 = vmatpush1.bf16.msra.mxu0 0
      %1628 = vmatprep.subr.bf16.mxu0 0
      %1629 = vmatpush1.bf16.msra.mxu0 0
      %1630 = vmatprep.subr.bf16.mxu0 0
      %1631 = vmatpush1.bf16.msra.mxu0 0
      %1632 = vmatprep.subr.bf16.mxu0 0
      %1633 = vmatpush1.bf16.msra.mxu0 0
      %1634 = vmatprep.subr.bf16.mxu0 0
      %1635 = vmatpush1.bf16.msra.mxu0 0
      %1636 = vmatprep.subr.bf16.mxu0 0
      %1637 = vmatpush1.bf16.msra.mxu0 0
      %1638 = vmatprep.mubr.bf16.mxu0 0
      %1639 = vmatmul.mubr.bf16.gmra.mrb[0].mxu0 %v1592
      %v1640 = vpop.f32.mrb[0].mxu0
      %v1641 = vadd.f32 0.0, %v1640
      %v1642 = vpop.f32.mrb[0].mxu0
      %v1643 = vpop.f32.mrb[0].mxu0
      %v1644 = vadd.f32 0.0, %v1643
      %v1645 = vpop.f32.mrb[0].mxu0
      %1646 = vmatprep.mubr.bf16.mxu0 0
      %1647 = vmatmul.mubr.bf16.gmra.mrb[0].mxu0 %v1595
      %v1648 = vpop.f32.mrb[0].mxu0
      %v1649 = vadd.f32 0.0, %v1648
      %v1650 = vpop.f32.mrb[0].mxu0
      %v1651 = vpop.f32.mrb[0].mxu0
      %v1652 = vadd.f32 0.0, %v1651
      %v1653 = vpop.f32.mrb[0].mxu0
      %1654 = vmatprep.mubr.bf16.mxu0 0
      %1655 = vmatmul.mubr.bf16.gmra.mrb[0].mxu0 %v1598
      %v1656 = vpop.f32.mrb[0].mxu0
      %v1657 = vadd.f32 0.0, %v1656
      %v1658 = vpop.f32.mrb[0].mxu0
      %v1659 = vpop.f32.mrb[0].mxu0
      %v1660 = vadd.f32 0.0, %v1659
      %v1661 = vpop.f32.mrb[0].mxu0
      %1662 = vmatprep.mubr.bf16.mxu0 0
      %1663 = vmatmul.mubr.bf16.gmra.mrb[0].mxu0 %v1601
      %v1664 = vpop.f32.mrb[0].mxu0
      %v1665 = vadd.f32 0.0, %v1664
      %v1666 = vpop.f32.mrb[0].mxu0
      %v1667 = vpop.f32.mrb[0].mxu0
      %v1668 = vadd.f32 0.0, %v1667
      %v1669 = vpop.f32.mrb[0].mxu0
      %1670 = vmatprep.mubr.bf16.mxu0 0
      %1671 = vmatmul.mubr.bf16.gmra.mrb[0].mxu0 %v1604
      %v1672 = vpop.f32.mrb[0].mxu0
      %v1673 = vadd.f32 0.0, %v1672
      %v1674 = vpop.f32.mrb[0].mxu0
      %v1675 = vpop.f32.mrb[0].mxu0
      %v1676 = vadd.f32 0.0, %v1675
      %v1677 = vpop.f32.mrb[0].mxu0
      %1678 = vdwg.mxu0
      %v1680 = vsel %vm954, %v1410, 0
      %v1683 = vsel %vm954, %v1411, 0
      %v1686 = vsel %vm954, %v1412, 0
      %v1689 = vsel %vm954, %v1413, 0
      %v1692 = vsel %vm954, %v1414, 0
      %1694 = vmatprep.subr.bf16.mxu0 0
      %1695 = vmatpush1.bf16.msra.mxu0 %v526
      %1696 = vmatprep.subr.bf16.mxu0 0
      %1697 = vmatpush1.bf16.msra.mxu0 %v527
      %1698 = vmatprep.subr.bf16.mxu0 0
      %1699 = vmatpush1.bf16.msra.mxu0 %v528
      %1700 = vmatprep.subr.bf16.mxu0 0
      %1701 = vmatpush1.bf16.msra.mxu0 %v529
      %1702 = vmatprep.subr.bf16.mxu0 0
      %1703 = vmatpush1.bf16.msra.mxu0 %v530
      %1704 = vmatprep.subr.bf16.mxu0 0
      %1705 = vmatpush1.bf16.msra.mxu0 0
      %1706 = vmatprep.subr.bf16.mxu0 0
      %1707 = vmatpush1.bf16.msra.mxu0 0
      %1708 = vmatprep.subr.bf16.mxu0 0
      %1709 = vmatpush1.bf16.msra.mxu0 0
      %1710 = vmatprep.subr.bf16.mxu0 0
      %1711 = vmatpush1.bf16.msra.mxu0 0
      %1712 = vmatprep.subr.bf16.mxu0 0
      %1713 = vmatpush1.bf16.msra.mxu0 0
      %1714 = vmatprep.subr.bf16.mxu0 0
      %1715 = vmatpush1.bf16.msra.mxu0 0
      %1716 = vmatprep.subr.bf16.mxu0 0
      %1717 = vmatpush1.bf16.msra.mxu0 0
      %1718 = vmatprep.subr.bf16.mxu0 0
      %1719 = vmatpush1.bf16.msra.mxu0 0
      %1720 = vmatprep.subr.bf16.mxu0 0
      %1721 = vmatpush1.bf16.msra.mxu0 0
      %1722 = vmatprep.subr.bf16.mxu0 0
      %1723 = vmatpush1.bf16.msra.mxu0 0
      %1724 = vmatprep.subr.bf16.mxu0 0
      %1725 = vmatpush1.bf16.msra.mxu0 0
      %1726 = vmatprep.mubr.bf16.mxu0 0
      %1727 = vmatmul.mubr.bf16.gmra.mrb[0].mxu0 %v1680
      %v1728 = vpop.f32.mrb[0].mxu0
      %v1729 = vadd.f32 0.0, %v1728
      %v1730 = vpop.f32.mrb[0].mxu0
      %v1731 = vpop.f32.mrb[0].mxu0
      %v1732 = vadd.f32 0.0, %v1731
      %v1733 = vpop.f32.mrb[0].mxu0
      %1734 = vmatprep.mubr.bf16.mxu0 0
      %1735 = vmatmul.mubr.bf16.gmra.mrb[0].mxu0 %v1683
      %v1736 = vpop.f32.mrb[0].mxu0
      %v1737 = vadd.f32 0.0, %v1736
      %v1738 = vpop.f32.mrb[0].mxu0
      %v1739 = vpop.f32.mrb[0].mxu0
      %v1740 = vadd.f32 0.0, %v1739
      %v1741 = vpop.f32.mrb[0].mxu0
      %1742 = vmatprep.mubr.bf16.mxu0 0
      %1743 = vmatmul.mubr.bf16.gmra.mrb[0].mxu0 %v1686
      %v1744 = vpop.f32.mrb[0].mxu0
      %v1745 = vadd.f32 0.0, %v1744
      %v1746 = vpop.f32.mrb[0].mxu0
      %v1747 = vpop.f32.mrb[0].mxu0
      %v1748 = vadd.f32 0.0, %v1747
      %v1749 = vpop.f32.mrb[0].mxu0
      %1750 = vmatprep.mubr.bf16.mxu0 0
      %1751 = vmatmul.mubr.bf16.gmra.mrb[0].mxu0 %v1689
      %v1752 = vpop.f32.mrb[0].mxu0
      %v1753 = vadd.f32 0.0, %v1752
      %v1754 = vpop.f32.mrb[0].mxu0
      %v1755 = vpop.f32.mrb[0].mxu0
      %v1756 = vadd.f32 0.0, %v1755
      %v1757 = vpop.f32.mrb[0].mxu0
      %1758 = vmatprep.mubr.bf16.mxu0 0
      %1759 = vmatmul.mubr.bf16.gmra.mrb[0].mxu0 %v1692
      %v1760 = vpop.f32.mrb[0].mxu0
      %v1761 = vadd.f32 0.0, %v1760
      %v1762 = vpop.f32.mrb[0].mxu0
      %v1763 = vpop.f32.mrb[0].mxu0
      %v1764 = vadd.f32 0.0, %v1763
      %v1765 = vpop.f32.mrb[0].mxu0
      %1766 = vdwg.mxu0
      %1767 = vst.msk [vmem:[#allocation2] sm:$0xff] %vm541, %v1465
      %1768 = vst.msk [vmem:[#allocation2 + $0x8] sm:$0xff] %vm541, %v1468
      %1769 = vst.msk [vmem:[#allocation2 + $0x10] sm:$0xff] %vm541, %v1473
      %1770 = vst.msk [vmem:[#allocation2 + $0x18] sm:$0xff] %vm541, %v1476
      %1771 = vst.msk [vmem:[#allocation2 + $0x20] sm:$0xff] %vm541, %v1481
      %1772 = vst.msk [vmem:[#allocation2 + $0x28] sm:$0xff] %vm541, %v1484
      %1773 = vst.msk [vmem:[#allocation2 + $0x30] sm:$0xff] %vm541, %v1489
      %1774 = vst.msk [vmem:[#allocation2 + $0x38] sm:$0xff] %vm541, %v1492
      %1775 = vst.msk [vmem:[#allocation2 + $0x40] sm:$0xff] %vm541, %v1497
      %1776 = vst.msk [vmem:[#allocation2 + $0x48] sm:$0xff] %vm541, %v1500
      %1777 = vst.msk [vmem:[#allocation2 + $0x50] sm:$0xff] %vm541, %v1553
      %1778 = vst.msk [vmem:[#allocation2 + $0x58] sm:$0xff] %vm541, %v1556
      %1779 = vst.msk [vmem:[#allocation2 + $0x60] sm:$0xff] %vm541, %v1561
      %1780 = vst.msk [vmem:[#allocation2 + $0x68] sm:$0xff] %vm541, %v1564
      %1781 = vst.msk [vmem:[#allocation2 + $0x70] sm:$0xff] %vm541, %v1569
      %1782 = vst.msk [vmem:[#allocation2 + $0x78] sm:$0xff] %vm541, %v1572
      %1783 = vst.msk [vmem:[#allocation2 + $0x80] sm:$0xff] %vm541, %v1577
      %1784 = vst.msk [vmem:[#allocation2 + $0x88] sm:$0xff] %vm541, %v1580
      %1785 = vst.msk [vmem:[#allocation2 + $0x90] sm:$0xff] %vm541, %v1585
      %1786 = vst.msk [vmem:[#allocation2 + $0x98] sm:$0xff] %vm541, %v1588
      %1787 = vst.msk [vmem:[#allocation2 + $0xa0] sm:$0xff] %vm541, %v1641
      %1788 = vst.msk [vmem:[#allocation2 + $0xa8] sm:$0xff] %vm541, %v1644
      %1789 = vst.msk [vmem:[#allocation2 + $0xb0] sm:$0xff] %vm541, %v1649
      %1790 = vst.msk [vmem:[#allocation2 + $0xb8] sm:$0xff] %vm541, %v1652
      %1791 = vst.msk [vmem:[#allocation2 + $0xc0] sm:$0xff] %vm541, %v1657
      %1792 = vst.msk [vmem:[#allocation2 + $0xc8] sm:$0xff] %vm541, %v1660
      %1793 = vst.msk [vmem:[#allocation2 + $0xd0] sm:$0xff] %vm541, %v1665
      %1794 = vst.msk [vmem:[#allocation2 + $0xd8] sm:$0xff] %vm541, %v1668
      %1795 = vst.msk [vmem:[#allocation2 + $0xe0] sm:$0xff] %vm541, %v1673
      %1796 = vst.msk [vmem:[#allocation2 + $0xe8] sm:$0xff] %vm541, %v1676
      %1797 = vst.msk [vmem:[#allocation2 + $0xf0] sm:$0xff] %vm541, %v1729
      %1798 = vst.msk [vmem:[#allocation2 + $0xf8] sm:$0xff] %vm541, %v1732
      %1799 = vst.msk [vmem:[#allocation2 + $0x100] sm:$0xff] %vm541, %v1737
      %1800 = vst.msk [vmem:[#allocation2 + $0x108] sm:$0xff] %vm541, %v1740
      %1801 = vst.msk [vmem:[#allocation2 + $0x110] sm:$0xff] %vm541, %v1745
      %1802 = vst.msk [vmem:[#allocation2 + $0x118] sm:$0xff] %vm541, %v1748
      %1803 = vst.msk [vmem:[#allocation2 + $0x120] sm:$0xff] %vm541, %v1753
      %1804 = vst.msk [vmem:[#allocation2 + $0x128] sm:$0xff] %vm541, %v1756
      %1805 = vst.msk [vmem:[#allocation2 + $0x130] sm:$0xff] %vm541, %v1761
      %1806 = vst.msk [vmem:[#allocation2 + $0x138] sm:$0xff] %vm541, %v1764
      %s1807 = scalar_lea.vmem %s287, 80
      %v1808 = vld [vmem:[%s1807] sm:$0xff]
      %v1809 = vld [vmem:[%s1807 + $0x8] sm:$0xff]
      %v1810 = vld [vmem:[%s1807 + $0x10] sm:$0xff]
      %v1811 = vld [vmem:[%s1807 + $0x18] sm:$0xff]
      %v1812 = vld [vmem:[%s1807 + $0x20] sm:$0xff]
      %v1813 = vld [vmem:[%s1807 + $0x28] sm:$0xff]
      %v1814 = vld [vmem:[%s1807 + $0x30] sm:$0xff]
      %v1815 = vld [vmem:[%s1807 + $0x38] sm:$0xff]
      %v1816 = vld [vmem:[%s1807 + $0x40] sm:$0xff]
      %v1817 = vld [vmem:[%s1807 + $0x48] sm:$0xff]
      %v1818 = vld [vmem:[%s1807 + $0x140] sm:$0xff]
      %v1819 = vld [vmem:[%s1807 + $0x148] sm:$0xff]
      %v1820 = vld [vmem:[%s1807 + $0x150] sm:$0xff]
      %v1821 = vld [vmem:[%s1807 + $0x158] sm:$0xff]
      %v1822 = vld [vmem:[%s1807 + $0x160] sm:$0xff]
      %v1823 = vld [vmem:[%s1807 + $0x168] sm:$0xff]
      %v1824 = vld [vmem:[%s1807 + $0x170] sm:$0xff]
      %v1825 = vld [vmem:[%s1807 + $0x178] sm:$0xff]
      %v1826 = vld [vmem:[%s1807 + $0x180] sm:$0xff]
      %v1827 = vld [vmem:[%s1807 + $0x188] sm:$0xff]
      %v1828 = vld [vmem:[%s1807 + $0x280] sm:$0xff]
      %v1829 = vld [vmem:[%s1807 + $0x288] sm:$0xff]
      %v1830 = vld [vmem:[%s1807 + $0x290] sm:$0xff]
      %v1831 = vld [vmem:[%s1807 + $0x298] sm:$0xff]
      %v1832 = vld [vmem:[%s1807 + $0x2a0] sm:$0xff]
      %v1833 = vld [vmem:[%s1807 + $0x2a8] sm:$0xff]
      %v1834 = vld [vmem:[%s1807 + $0x2b0] sm:$0xff]
      %v1835 = vld [vmem:[%s1807 + $0x2b8] sm:$0xff]
      %v1836 = vld [vmem:[%s1807 + $0x2c0] sm:$0xff]
      %v1837 = vld [vmem:[%s1807 + $0x2c8] sm:$0xff]
      %v1838 = vld [vmem:[%s1807 + $0x3c0] sm:$0xff]
      %v1839 = vld [vmem:[%s1807 + $0x3c8] sm:$0xff]
      %v1840 = vld [vmem:[%s1807 + $0x3d0] sm:$0xff]
      %v1841 = vld [vmem:[%s1807 + $0x3d8] sm:$0xff]
      %v1842 = vld [vmem:[%s1807 + $0x3e0] sm:$0xff]
      %v1843 = vld [vmem:[%s1807 + $0x3e8] sm:$0xff]
      %v1844 = vld [vmem:[%s1807 + $0x3f0] sm:$0xff]
      %v1845 = vld [vmem:[%s1807 + $0x3f8] sm:$0xff]
      %v1846 = vld [vmem:[%s1807 + $0x400] sm:$0xff]
      %v1847 = vld [vmem:[%s1807 + $0x408] sm:$0xff]
      %v1848 = vmul.f32 %v1808, 0.35355338
      %v1849 = vmul.f32 %v1809, 0.35355338
      %v1850 = vmul.f32 %v1810, 0.35355338
      %v1851 = vmul.f32 %v1811, 0.35355338
      %v1852 = vmul.f32 %v1812, 0.35355338
      %v1853 = vmul.f32 %v1813, 0.35355338
      %v1854 = vmul.f32 %v1814, 0.35355338
      %v1855 = vmul.f32 %v1815, 0.35355338
      %v1856 = vmul.f32 %v1816, 0.35355338
      %v1857 = vmul.f32 %v1817, 0.35355338
      %v1858 = vmul.f32 %v1818, 0.35355338
      %v1859 = vmul.f32 %v1819, 0.35355338
      %v1860 = vmul.f32 %v1820, 0.35355338
      %v1861 = vmul.f32 %v1821, 0.35355338
      %v1862 = vmul.f32 %v1822, 0.35355338
      %v1863 = vmul.f32 %v1823, 0.35355338
      %v1864 = vmul.f32 %v1824, 0.35355338
      %v1865 = vmul.f32 %v1825, 0.35355338
      %v1866 = vmul.f32 %v1826, 0.35355338
      %v1867 = vmul.f32 %v1827, 0.35355338
      %v1868 = vmul.f32 %v1828, 0.35355338
      %v1869 = vmul.f32 %v1829, 0.35355338
      %v1870 = vmul.f32 %v1830, 0.35355338
      %v1871 = vmul.f32 %v1831, 0.35355338
      %v1872 = vmul.f32 %v1832, 0.35355338
      %v1873 = vmul.f32 %v1833, 0.35355338
      %v1874 = vmul.f32 %v1834, 0.35355338
      %v1875 = vmul.f32 %v1835, 0.35355338
      %v1876 = vmul.f32 %v1836, 0.35355338
      %v1877 = vmul.f32 %v1837, 0.35355338
      %v1878 = vmul.f32 %v1838, 0.35355338
      %v1879 = vmul.f32 %v1839, 0.35355338
      %v1880 = vmul.f32 %v1840, 0.35355338
      %v1881 = vmul.f32 %v1841, 0.35355338
      %v1882 = vmul.f32 %v1842, 0.35355338
      %v1883 = vmul.f32 %v1843, 0.35355338
      %v1884 = vmul.f32 %v1844, 0.35355338
      %v1885 = vmul.f32 %v1845, 0.35355338
      %v1886 = vmul.f32 %v1846, 0.35355338
      %v1887 = vmul.f32 %v1847, 0.35355338
      %v1888 = vpack.c.bf16 %v1849, %v1848
      %v1889 = vpack.c.bf16 %v1851, %v1850
      %v1890 = vpack.c.bf16 %v1853, %v1852
      %v1891 = vpack.c.bf16 %v1855, %v1854
      %v1892 = vpack.c.bf16 %v1857, %v1856
      %v1893 = vpack.c.bf16 %v1859, %v1858
      %v1894 = vpack.c.bf16 %v1861, %v1860
      %v1895 = vpack.c.bf16 %v1863, %v1862
      %v1896 = vpack.c.bf16 %v1865, %v1864
      %v1897 = vpack.c.bf16 %v1867, %v1866
      %v1898 = vpack.c.bf16 %v1869, %v1868
      %v1899 = vpack.c.bf16 %v1871, %v1870
      %v1900 = vpack.c.bf16 %v1873, %v1872
      %v1901 = vpack.c.bf16 %v1875, %v1874
      %v1902 = vpack.c.bf16 %v1877, %v1876
      %v1903 = vpack.c.bf16 %v1879, %v1878
      %v1904 = vpack.c.bf16 %v1881, %v1880
      %v1905 = vpack.c.bf16 %v1883, %v1882
      %v1906 = vpack.c.bf16 %v1885, %v1884
      %v1907 = vpack.c.bf16 %v1887, %v1886
      %s1908 = scalar_lea.vmem %s294, 80
      %v1909 = vld [vmem:[%s1908] sm:$0xff]
      %v1910 = vld [vmem:[%s1908 + $0x8] sm:$0xff]
      %v1911 = vld [vmem:[%s1908 + $0x10] sm:$0xff]
      %v1912 = vld [vmem:[%s1908 + $0x18] sm:$0xff]
      %v1913 = vld [vmem:[%s1908 + $0x20] sm:$0xff]
      %v1914 = vld [vmem:[%s1908 + $0x28] sm:$0xff]
      %v1915 = vld [vmem:[%s1908 + $0x30] sm:$0xff]
      %v1916 = vld [vmem:[%s1908 + $0x38] sm:$0xff]
      %v1917 = vld [vmem:[%s1908 + $0x40] sm:$0xff]
      %v1918 = vld [vmem:[%s1908 + $0x48] sm:$0xff]
      %v1919 = vld [vmem:[%s1908 + $0x140] sm:$0xff]
      %v1920 = vld [vmem:[%s1908 + $0x148] sm:$0xff]
      %v1921 = vld [vmem:[%s1908 + $0x150] sm:$0xff]
      %v1922 = vld [vmem:[%s1908 + $0x158] sm:$0xff]
      %v1923 = vld [vmem:[%s1908 + $0x160] sm:$0xff]
      %v1924 = vld [vmem:[%s1908 + $0x168] sm:$0xff]
      %v1925 = vld [vmem:[%s1908 + $0x170] sm:$0xff]
      %v1926 = vld [vmem:[%s1908 + $0x178] sm:$0xff]
      %v1927 = vld [vmem:[%s1908 + $0x180] sm:$0xff]
      %v1928 = vld [vmem:[%s1908 + $0x188] sm:$0xff]
      %v1929 = vld [vmem:[%s1908 + $0x280] sm:$0xff]
      %v1930 = vld [vmem:[%s1908 + $0x288] sm:$0xff]
      %v1931 = vld [vmem:[%s1908 + $0x290] sm:$0xff]
      %v1932 = vld [vmem:[%s1908 + $0x298] sm:$0xff]
      %v1933 = vld [vmem:[%s1908 + $0x2a0] sm:$0xff]
      %v1934 = vld [vmem:[%s1908 + $0x2a8] sm:$0xff]
      %v1935 = vld [vmem:[%s1908 + $0x2b0] sm:$0xff]
      %v1936 = vld [vmem:[%s1908 + $0x2b8] sm:$0xff]
      %v1937 = vld [vmem:[%s1908 + $0x2c0] sm:$0xff]
      %v1938 = vld [vmem:[%s1908 + $0x2c8] sm:$0xff]
      %v1939 = vld [vmem:[%s1908 + $0x3c0] sm:$0xff]
      %v1940 = vld [vmem:[%s1908 + $0x3c8] sm:$0xff]
      %v1941 = vld [vmem:[%s1908 + $0x3d0] sm:$0xff]
      %v1942 = vld [vmem:[%s1908 + $0x3d8] sm:$0xff]
      %v1943 = vld [vmem:[%s1908 + $0x3e0] sm:$0xff]
      %v1944 = vld [vmem:[%s1908 + $0x3e8] sm:$0xff]
      %v1945 = vld [vmem:[%s1908 + $0x3f0] sm:$0xff]
      %v1946 = vld [vmem:[%s1908 + $0x3f8] sm:$0xff]
      %v1947 = vld [vmem:[%s1908 + $0x400] sm:$0xff]
      %v1948 = vld [vmem:[%s1908 + $0x408] sm:$0xff]
      %v1949 = vpack.c.bf16 %v1910, %v1909
      %v1950 = vpack.c.bf16 %v1912, %v1911
      %v1951 = vpack.c.bf16 %v1914, %v1913
      %v1952 = vpack.c.bf16 %v1916, %v1915
      %v1953 = vpack.c.bf16 %v1918, %v1917
      %v1954 = vpack.c.bf16 %v1920, %v1919
      %v1955 = vpack.c.bf16 %v1922, %v1921
      %v1956 = vpack.c.bf16 %v1924, %v1923
      %v1957 = vpack.c.bf16 %v1926, %v1925
      %v1958 = vpack.c.bf16 %v1928, %v1927
      %v1959 = vpack.c.bf16 %v1930, %v1929
      %v1960 = vpack.c.bf16 %v1932, %v1931
      %v1961 = vpack.c.bf16 %v1934, %v1933
      %v1962 = vpack.c.bf16 %v1936, %v1935
      %v1963 = vpack.c.bf16 %v1938, %v1937
      %v1964 = vpack.c.bf16 %v1940, %v1939
      %v1965 = vpack.c.bf16 %v1942, %v1941
      %v1966 = vpack.c.bf16 %v1944, %v1943
      %v1967 = vpack.c.bf16 %v1946, %v1945
      %v1968 = vpack.c.bf16 %v1948, %v1947
      %s1969 = scalar_lea.vmem %s301, 80
      %v1970 = vld [vmem:[%s1969] sm:$0xff]
      %v1971 = vld [vmem:[%s1969 + $0x8] sm:$0xff]
      %v1972 = vld [vmem:[%s1969 + $0x10] sm:$0xff]
      %v1973 = vld [vmem:[%s1969 + $0x18] sm:$0xff]
      %v1974 = vld [vmem:[%s1969 + $0x20] sm:$0xff]
      %v1975 = vld [vmem:[%s1969 + $0x28] sm:$0xff]
      %v1976 = vld [vmem:[%s1969 + $0x30] sm:$0xff]
      %v1977 = vld [vmem:[%s1969 + $0x38] sm:$0xff]
      %v1978 = vld [vmem:[%s1969 + $0x40] sm:$0xff]
      %v1979 = vld [vmem:[%s1969 + $0x48] sm:$0xff]
      %v1980 = vld [vmem:[%s1969 + $0x140] sm:$0xff]
      %v1981 = vld [vmem:[%s1969 + $0x148] sm:$0xff]
      %v1982 = vld [vmem:[%s1969 + $0x150] sm:$0xff]
      %v1983 = vld [vmem:[%s1969 + $0x158] sm:$0xff]
      %v1984 = vld [vmem:[%s1969 + $0x160] sm:$0xff]
      %v1985 = vld [vmem:[%s1969 + $0x168] sm:$0xff]
      %v1986 = vld [vmem:[%s1969 + $0x170] sm:$0xff]
      %v1987 = vld [vmem:[%s1969 + $0x178] sm:$0xff]
      %v1988 = vld [vmem:[%s1969 + $0x180] sm:$0xff]
      %v1989 = vld [vmem:[%s1969 + $0x188] sm:$0xff]
      %v1990 = vld [vmem:[%s1969 + $0x280] sm:$0xff]
      %v1991 = vld [vmem:[%s1969 + $0x288] sm:$0xff]
      %v1992 = vld [vmem:[%s1969 + $0x290] sm:$0xff]
      %v1993 = vld [vmem:[%s1969 + $0x298] sm:$0xff]
      %v1994 = vld [vmem:[%s1969 + $0x2a0] sm:$0xff]
      %v1995 = vld [vmem:[%s1969 + $0x2a8] sm:$0xff]
      %v1996 = vld [vmem:[%s1969 + $0x2b0] sm:$0xff]
      %v1997 = vld [vmem:[%s1969 + $0x2b8] sm:$0xff]
      %v1998 = vld [vmem:[%s1969 + $0x2c0] sm:$0xff]
      %v1999 = vld [vmem:[%s1969 + $0x2c8] sm:$0xff]
      %v2000 = vld [vmem:[%s1969 + $0x3c0] sm:$0xff]
      %v2001 = vld [vmem:[%s1969 + $0x3c8] sm:$0xff]
      %v2002 = vld [vmem:[%s1969 + $0x3d0] sm:$0xff]
      %v2003 = vld [vmem:[%s1969 + $0x3d8] sm:$0xff]
      %v2004 = vld [vmem:[%s1969 + $0x3e0] sm:$0xff]
      %v2005 = vld [vmem:[%s1969 + $0x3e8] sm:$0xff]
      %v2006 = vld [vmem:[%s1969 + $0x3f0] sm:$0xff]
      %v2007 = vld [vmem:[%s1969 + $0x3f8] sm:$0xff]
      %v2008 = vld [vmem:[%s1969 + $0x400] sm:$0xff]
      %v2009 = vld [vmem:[%s1969 + $0x408] sm:$0xff]
      %v2010 = vpack.c.bf16 %v1971, %v1970
      %v2011 = vpack.c.bf16 %v1973, %v1972
      %v2012 = vpack.c.bf16 %v1975, %v1974
      %v2013 = vpack.c.bf16 %v1977, %v1976
      %v2014 = vpack.c.bf16 %v1979, %v1978
      %v2015 = vpack.c.bf16 %v1981, %v1980
      %v2016 = vpack.c.bf16 %v1983, %v1982
      %v2017 = vpack.c.bf16 %v1985, %v1984
      %v2018 = vpack.c.bf16 %v1987, %v1986
      %v2019 = vpack.c.bf16 %v1989, %v1988
      %v2020 = vpack.c.bf16 %v1991, %v1990
      %v2021 = vpack.c.bf16 %v1993, %v1992
      %v2022 = vpack.c.bf16 %v1995, %v1994
      %v2023 = vpack.c.bf16 %v1997, %v1996
      %v2024 = vpack.c.bf16 %v1999, %v1998
      %v2025 = vpack.c.bf16 %v2001, %v2000
      %v2026 = vpack.c.bf16 %v2003, %v2002
      %v2027 = vpack.c.bf16 %v2005, %v2004
      %v2028 = vpack.c.bf16 %v2007, %v2006
      %v2029 = vpack.c.bf16 %v2009, %v2008
      %s2030 = scalar_lea.vmem %s3, 80
      %v2031 = vld [vmem:[%s2030] sm:$0xff]
      %v2032 = vld [vmem:[%s2030 + $0x8] sm:$0xff]
      %v2033 = vld [vmem:[%s2030 + $0x10] sm:$0xff]
      %v2034 = vld [vmem:[%s2030 + $0x18] sm:$0xff]
      %v2035 = vld [vmem:[%s2030 + $0x20] sm:$0xff]
      %v2036 = vld [vmem:[%s2030 + $0x28] sm:$0xff]
      %v2037 = vld [vmem:[%s2030 + $0x30] sm:$0xff]
      %v2038 = vld [vmem:[%s2030 + $0x38] sm:$0xff]
      %v2039 = vld [vmem:[%s2030 + $0x40] sm:$0xff]
      %v2040 = vld [vmem:[%s2030 + $0x48] sm:$0xff]
      %v2042 = vsel %vm541, %v1888, 0
      %v2045 = vsel %vm541, %v1889, 0
      %v2048 = vsel %vm541, %v1890, 0
      %v2051 = vsel %vm541, %v1891, 0
      %v2054 = vsel %vm541, %v1892, 0
      %v2057 = vsel %vm541, %v1949, 0
      %v2060 = vsel %vm541, %v1950, 0
      %v2063 = vsel %vm541, %v1951, 0
      %v2066 = vsel %vm541, %v1952, 0
      %v2069 = vsel %vm541, %v1953, 0
      %2071 = vmatprep.subr.bf16.mxu0 0
      %2072 = vmatpush1.bf16.xpose.msra.mxu0 %v2057
      %2073 = vmatprep.subr.bf16.mxu0 0
      %2074 = vmatpush1.bf16.xpose.msra.mxu0 %v2060
      %2075 = vmatprep.subr.bf16.mxu0 0
      %2076 = vmatpush1.bf16.xpose.msra.mxu0 %v2063
      %2077 = vmatprep.subr.bf16.mxu0 0
      %2078 = vmatpush1.bf16.xpose.msra.mxu0 %v2066
      %2079 = vmatprep.subr.bf16.mxu0 0
      %2080 = vmatpush1.bf16.xpose.msra.mxu0 %v2069
      %2081 = vmatprep.subr.bf16.mxu0 0
      %2082 = vmatpush1.bf16.xpose.msra.mxu0 0
      %2083 = vmatprep.subr.bf16.mxu0 0
      %2084 = vmatpush1.bf16.xpose.msra.mxu0 0
      %2085 = vmatprep.subr.bf16.mxu0 0
      %2086 = vmatpush1.bf16.xpose.msra.mxu0 0
      %2087 = vmatprep.subr.bf16.mxu0 0
      %2088 = vmatpush1.bf16.xpose.msra.mxu0 0
      %2089 = vmatprep.subr.bf16.mxu0 0
      %2090 = vmatpush1.bf16.xpose.msra.mxu0 0
      %2091 = vmatprep.subr.bf16.mxu0 0
      %2092 = vmatpush1.bf16.xpose.msra.mxu0 0
      %2093 = vmatprep.subr.bf16.mxu0 0
      %2094 = vmatpush1.bf16.xpose.msra.mxu0 0
      %2095 = vmatprep.subr.bf16.mxu0 0
      %2096 = vmatpush1.bf16.xpose.msra.mxu0 0
      %2097 = vmatprep.subr.bf16.mxu0 0
      %2098 = vmatpush1.bf16.xpose.msra.mxu0 0
      %2099 = vmatprep.subr.bf16.mxu0 0
      %2100 = vmatpush1.bf16.xpose.msra.mxu0 0
      %2101 = vmatprep.subr.bf16.mxu0 0
      %2102 = vmatpush1.bf16.xpose.msra.mxu0 0
      %2103 = vmatprep.mubr.bf16.mxu0 0
      %2104 = vmatmul.mubr.bf16.gmra.mrb[0].mxu0 %v2042
      %v2105 = vpop.f32.mrb[0].mxu0
      %v2106 = vadd.f32 %v2031, %v2105
      %v2107 = vpop.f32.mrb[0].mxu0
      %v2108 = vpop.f32.mrb[0].mxu0
      %v2109 = vadd.f32 %v2032, %v2108
      %v2110 = vpop.f32.mrb[0].mxu0
      %2111 = vmatprep.mubr.bf16.mxu0 0
      %2112 = vmatmul.mubr.bf16.gmra.mrb[0].mxu0 %v2045
      %v2113 = vpop.f32.mrb[0].mxu0
      %v2114 = vadd.f32 %v2033, %v2113
      %v2115 = vpop.f32.mrb[0].mxu0
      %v2116 = vpop.f32.mrb[0].mxu0
      %v2117 = vadd.f32 %v2034, %v2116
      %v2118 = vpop.f32.mrb[0].mxu0
      %2119 = vmatprep.mubr.bf16.mxu0 0
      %2120 = vmatmul.mubr.bf16.gmra.mrb[0].mxu0 %v2048
      %v2121 = vpop.f32.mrb[0].mxu0
      %v2122 = vadd.f32 %v2035, %v2121
      %v2123 = vpop.f32.mrb[0].mxu0
      %v2124 = vpop.f32.mrb[0].mxu0
      %v2125 = vadd.f32 %v2036, %v2124
      %v2126 = vpop.f32.mrb[0].mxu0
      %2127 = vmatprep.mubr.bf16.mxu0 0
      %2128 = vmatmul.mubr.bf16.gmra.mrb[0].mxu0 %v2051
      %v2129 = vpop.f32.mrb[0].mxu0
      %v2130 = vadd.f32 %v2037, %v2129
      %v2131 = vpop.f32.mrb[0].mxu0
      %v2132 = vpop.f32.mrb[0].mxu0
      %v2133 = vadd.f32 %v2038, %v2132
      %v2134 = vpop.f32.mrb[0].mxu0
      %2135 = vmatprep.mubr.bf16.mxu0 0
      %2136 = vmatmul.mubr.bf16.gmra.mrb[0].mxu0 %v2054
      %v2137 = vpop.f32.mrb[0].mxu0
      %v2138 = vadd.f32 %v2039, %v2137
      %v2139 = vpop.f32.mrb[0].mxu0
      %v2140 = vpop.f32.mrb[0].mxu0
      %v2141 = vadd.f32 %v2040, %v2140
      %v2142 = vpop.f32.mrb[0].mxu0
      %2143 = vdwg.mxu0
      %v2145 = vsel %vm541, %v1893, 0
      %v2148 = vsel %vm541, %v1894, 0
      %v2151 = vsel %vm541, %v1895, 0
      %v2154 = vsel %vm541, %v1896, 0
      %v2157 = vsel %vm541, %v1897, 0
      %v2160 = vsel %vm541, %v1954, 0
      %v2163 = vsel %vm541, %v1955, 0
      %v2166 = vsel %vm541, %v1956, 0
      %v2169 = vsel %vm541, %v1957, 0
      %v2172 = vsel %vm541, %v1958, 0
      %2174 = vmatprep.subr.bf16.mxu0 0
      %2175 = vmatpush1.bf16.xpose.msra.mxu0 %v2160
      %2176 = vmatprep.subr.bf16.mxu0 0
      %2177 = vmatpush1.bf16.xpose.msra.mxu0 %v2163
      %2178 = vmatprep.subr.bf16.mxu0 0
      %2179 = vmatpush1.bf16.xpose.msra.mxu0 %v2166
      %2180 = vmatprep.subr.bf16.mxu0 0
      %2181 = vmatpush1.bf16.xpose.msra.mxu0 %v2169
      %2182 = vmatprep.subr.bf16.mxu0 0
      %2183 = vmatpush1.bf16.xpose.msra.mxu0 %v2172
      %2184 = vmatprep.subr.bf16.mxu0 0
      %2185 = vmatpush1.bf16.xpose.msra.mxu0 0
      %2186 = vmatprep.subr.bf16.mxu0 0
      %2187 = vmatpush1.bf16.xpose.msra.mxu0 0
      %2188 = vmatprep.subr.bf16.mxu0 0
      %2189 = vmatpush1.bf16.xpose.msra.mxu0 0
      %2190 = vmatprep.subr.bf16.mxu0 0
      %2191 = vmatpush1.bf16.xpose.msra.mxu0 0
      %2192 = vmatprep.subr.bf16.mxu0 0
      %2193 = vmatpush1.bf16.xpose.msra.mxu0 0
      %2194 = vmatprep.subr.bf16.mxu0 0
      %2195 = vmatpush1.bf16.xpose.msra.mxu0 0
      %2196 = vmatprep.subr.bf16.mxu0 0
      %2197 = vmatpush1.bf16.xpose.msra.mxu0 0
      %2198 = vmatprep.subr.bf16.mxu0 0
      %2199 = vmatpush1.bf16.xpose.msra.mxu0 0
      %2200 = vmatprep.subr.bf16.mxu0 0
      %2201 = vmatpush1.bf16.xpose.msra.mxu0 0
      %2202 = vmatprep.subr.bf16.mxu0 0
      %2203 = vmatpush1.bf16.xpose.msra.mxu0 0
      %2204 = vmatprep.subr.bf16.mxu0 0
      %2205 = vmatpush1.bf16.xpose.msra.mxu0 0
      %2206 = vmatprep.mubr.bf16.mxu0 0
      %2207 = vmatmul.mubr.bf16.gmra.mrb[0].mxu0 %v2145
      %v2208 = vpop.f32.mrb[0].mxu0
      %v2209 = vadd.f32 %v2031, %v2208
      %v2210 = vpop.f32.mrb[0].mxu0
      %v2211 = vpop.f32.mrb[0].mxu0
      %v2212 = vadd.f32 %v2032, %v2211
      %v2213 = vpop.f32.mrb[0].mxu0
      %2214 = vmatprep.mubr.bf16.mxu0 0
      %2215 = vmatmul.mubr.bf16.gmra.mrb[0].mxu0 %v2148
      %v2216 = vpop.f32.mrb[0].mxu0
      %v2217 = vadd.f32 %v2033, %v2216
      %v2218 = vpop.f32.mrb[0].mxu0
      %v2219 = vpop.f32.mrb[0].mxu0
      %v2220 = vadd.f32 %v2034, %v2219
      %v2221 = vpop.f32.mrb[0].mxu0
      %2222 = vmatprep.mubr.bf16.mxu0 0
      %2223 = vmatmul.mubr.bf16.gmra.mrb[0].mxu0 %v2151
      %v2224 = vpop.f32.mrb[0].mxu0
      %v2225 = vadd.f32 %v2035, %v2224
      %v2226 = vpop.f32.mrb[0].mxu0
      %v2227 = vpop.f32.mrb[0].mxu0
      %v2228 = vadd.f32 %v2036, %v2227
      %v2229 = vpop.f32.mrb[0].mxu0
      %2230 = vmatprep.mubr.bf16.mxu0 0
      %2231 = vmatmul.mubr.bf16.gmra.mrb[0].mxu0 %v2154
      %v2232 = vpop.f32.mrb[0].mxu0
      %v2233 = vadd.f32 %v2037, %v2232
      %v2234 = vpop.f32.mrb[0].mxu0
      %v2235 = vpop.f32.mrb[0].mxu0
      %v2236 = vadd.f32 %v2038, %v2235
      %v2237 = vpop.f32.mrb[0].mxu0
      %2238 = vmatprep.mubr.bf16.mxu0 0
      %2239 = vmatmul.mubr.bf16.gmra.mrb[0].mxu0 %v2157
      %v2240 = vpop.f32.mrb[0].mxu0
      %v2241 = vadd.f32 %v2039, %v2240
      %v2242 = vpop.f32.mrb[0].mxu0
      %v2243 = vpop.f32.mrb[0].mxu0
      %v2244 = vadd.f32 %v2040, %v2243
      %v2245 = vpop.f32.mrb[0].mxu0
      %2246 = vdwg.mxu0
      %v2248 = vsel %vm541, %v1898, 0
      %v2251 = vsel %vm541, %v1899, 0
      %v2254 = vsel %vm541, %v1900, 0
      %v2257 = vsel %vm541, %v1901, 0
      %v2260 = vsel %vm541, %v1902, 0
      %v2263 = vsel %vm541, %v1959, 0
      %v2266 = vsel %vm541, %v1960, 0
      %v2269 = vsel %vm541, %v1961, 0
      %v2272 = vsel %vm541, %v1962, 0
      %v2275 = vsel %vm541, %v1963, 0
      %2277 = vmatprep.subr.bf16.mxu0 0
      %2278 = vmatpush1.bf16.xpose.msra.mxu0 %v2263
      %2279 = vmatprep.subr.bf16.mxu0 0
      %2280 = vmatpush1.bf16.xpose.msra.mxu0 %v2266
      %2281 = vmatprep.subr.bf16.mxu0 0
      %2282 = vmatpush1.bf16.xpose.msra.mxu0 %v2269
      %2283 = vmatprep.subr.bf16.mxu0 0
      %2284 = vmatpush1.bf16.xpose.msra.mxu0 %v2272
      %2285 = vmatprep.subr.bf16.mxu0 0
      %2286 = vmatpush1.bf16.xpose.msra.mxu0 %v2275
      %2287 = vmatprep.subr.bf16.mxu0 0
      %2288 = vmatpush1.bf16.xpose.msra.mxu0 0
      %2289 = vmatprep.subr.bf16.mxu0 0
      %2290 = vmatpush1.bf16.xpose.msra.mxu0 0
      %2291 = vmatprep.subr.bf16.mxu0 0
      %2292 = vmatpush1.bf16.xpose.msra.mxu0 0
      %2293 = vmatprep.subr.bf16.mxu0 0
      %2294 = vmatpush1.bf16.xpose.msra.mxu0 0
      %2295 = vmatprep.subr.bf16.mxu0 0
      %2296 = vmatpush1.bf16.xpose.msra.mxu0 0
      %2297 = vmatprep.subr.bf16.mxu0 0
      %2298 = vmatpush1.bf16.xpose.msra.mxu0 0
      %2299 = vmatprep.subr.bf16.mxu0 0
      %2300 = vmatpush1.bf16.xpose.msra.mxu0 0
      %2301 = vmatprep.subr.bf16.mxu0 0
      %2302 = vmatpush1.bf16.xpose.msra.mxu0 0
      %2303 = vmatprep.subr.bf16.mxu0 0
      %2304 = vmatpush1.bf16.xpose.msra.mxu0 0
      %2305 = vmatprep.subr.bf16.mxu0 0
      %2306 = vmatpush1.bf16.xpose.msra.mxu0 0
      %2307 = vmatprep.subr.bf16.mxu0 0
      %2308 = vmatpush1.bf16.xpose.msra.mxu0 0
      %2309 = vmatprep.mubr.bf16.mxu0 0
      %2310 = vmatmul.mubr.bf16.gmra.mrb[0].mxu0 %v2248
      %v2311 = vpop.f32.mrb[0].mxu0
      %v2312 = vadd.f32 %v2031, %v2311
      %v2313 = vpop.f32.mrb[0].mxu0
      %v2314 = vpop.f32.mrb[0].mxu0
      %v2315 = vadd.f32 %v2032, %v2314
      %v2316 = vpop.f32.mrb[0].mxu0
      %2317 = vmatprep.mubr.bf16.mxu0 0
      %2318 = vmatmul.mubr.bf16.gmra.mrb[0].mxu0 %v2251
      %v2319 = vpop.f32.mrb[0].mxu0
      %v2320 = vadd.f32 %v2033, %v2319
      %v2321 = vpop.f32.mrb[0].mxu0
      %v2322 = vpop.f32.mrb[0].mxu0
      %v2323 = vadd.f32 %v2034, %v2322
      %v2324 = vpop.f32.mrb[0].mxu0
      %2325 = vmatprep.mubr.bf16.mxu0 0
      %2326 = vmatmul.mubr.bf16.gmra.mrb[0].mxu0 %v2254
      %v2327 = vpop.f32.mrb[0].mxu0
      %v2328 = vadd.f32 %v2035, %v2327
      %v2329 = vpop.f32.mrb[0].mxu0
      %v2330 = vpop.f32.mrb[0].mxu0
      %v2331 = vadd.f32 %v2036, %v2330
      %v2332 = vpop.f32.mrb[0].mxu0
      %2333 = vmatprep.mubr.bf16.mxu0 0
      %2334 = vmatmul.mubr.bf16.gmra.mrb[0].mxu0 %v2257
      %v2335 = vpop.f32.mrb[0].mxu0
      %v2336 = vadd.f32 %v2037, %v2335
      %v2337 = vpop.f32.mrb[0].mxu0
      %v2338 = vpop.f32.mrb[0].mxu0
      %v2339 = vadd.f32 %v2038, %v2338
      %v2340 = vpop.f32.mrb[0].mxu0
      %2341 = vmatprep.mubr.bf16.mxu0 0
      %2342 = vmatmul.mubr.bf16.gmra.mrb[0].mxu0 %v2260
      %v2343 = vpop.f32.mrb[0].mxu0
      %v2344 = vadd.f32 %v2039, %v2343
      %v2345 = vpop.f32.mrb[0].mxu0
      %v2346 = vpop.f32.mrb[0].mxu0
      %v2347 = vadd.f32 %v2040, %v2346
      %v2348 = vpop.f32.mrb[0].mxu0
      %2349 = vdwg.mxu0
      %v2351 = vsel %vm541, %v1903, 0
      %v2354 = vsel %vm541, %v1904, 0
      %v2357 = vsel %vm541, %v1905, 0
      %v2360 = vsel %vm541, %v1906, 0
      %v2363 = vsel %vm541, %v1907, 0
      %v2366 = vsel %vm541, %v1964, 0
      %v2369 = vsel %vm541, %v1965, 0
      %v2372 = vsel %vm541, %v1966, 0
      %v2375 = vsel %vm541, %v1967, 0
      %v2378 = vsel %vm541, %v1968, 0
      %2380 = vmatprep.subr.bf16.mxu0 0
      %2381 = vmatpush1.bf16.xpose.msra.mxu0 %v2366
      %2382 = vmatprep.subr.bf16.mxu0 0
      %2383 = vmatpush1.bf16.xpose.msra.mxu0 %v2369
      %2384 = vmatprep.subr.bf16.mxu0 0
      %2385 = vmatpush1.bf16.xpose.msra.mxu0 %v2372
      %2386 = vmatprep.subr.bf16.mxu0 0
      %2387 = vmatpush1.bf16.xpose.msra.mxu0 %v2375
      %2388 = vmatprep.subr.bf16.mxu0 0
      %2389 = vmatpush1.bf16.xpose.msra.mxu0 %v2378
      %2390 = vmatprep.subr.bf16.mxu0 0
      %2391 = vmatpush1.bf16.xpose.msra.mxu0 0
      %2392 = vmatprep.subr.bf16.mxu0 0
      %2393 = vmatpush1.bf16.xpose.msra.mxu0 0
      %2394 = vmatprep.subr.bf16.mxu0 0
      %2395 = vmatpush1.bf16.xpose.msra.mxu0 0
      %2396 = vmatprep.subr.bf16.mxu0 0
      %2397 = vmatpush1.bf16.xpose.msra.mxu0 0
      %2398 = vmatprep.subr.bf16.mxu0 0
      %2399 = vmatpush1.bf16.xpose.msra.mxu0 0
      %2400 = vmatprep.subr.bf16.mxu0 0
      %2401 = vmatpush1.bf16.xpose.msra.mxu0 0
      %2402 = vmatprep.subr.bf16.mxu0 0
      %2403 = vmatpush1.bf16.xpose.msra.mxu0 0
      %2404 = vmatprep.subr.bf16.mxu0 0
      %2405 = vmatpush1.bf16.xpose.msra.mxu0 0
      %2406 = vmatprep.subr.bf16.mxu0 0
      %2407 = vmatpush1.bf16.xpose.msra.mxu0 0
      %2408 = vmatprep.subr.bf16.mxu0 0
      %2409 = vmatpush1.bf16.xpose.msra.mxu0 0
      %2410 = vmatprep.subr.bf16.mxu0 0
      %2411 = vmatpush1.bf16.xpose.msra.mxu0 0
      %2412 = vmatprep.mubr.bf16.mxu0 0
      %2413 = vmatmul.mubr.bf16.gmra.mrb[0].mxu0 %v2351
      %v2414 = vpop.f32.mrb[0].mxu0
      %v2415 = vadd.f32 %v2031, %v2414
      %v2416 = vpop.f32.mrb[0].mxu0
      %v2417 = vpop.f32.mrb[0].mxu0
      %v2418 = vadd.f32 %v2032, %v2417
      %v2419 = vpop.f32.mrb[0].mxu0
      %2420 = vmatprep.mubr.bf16.mxu0 0
      %2421 = vmatmul.mubr.bf16.gmra.mrb[0].mxu0 %v2354
      %v2422 = vpop.f32.mrb[0].mxu0
      %v2423 = vadd.f32 %v2033, %v2422
      %v2424 = vpop.f32.mrb[0].mxu0
      %v2425 = vpop.f32.mrb[0].mxu0
      %v2426 = vadd.f32 %v2034, %v2425
      %v2427 = vpop.f32.mrb[0].mxu0
      %2428 = vmatprep.mubr.bf16.mxu0 0
      %2429 = vmatmul.mubr.bf16.gmra.mrb[0].mxu0 %v2357
      %v2430 = vpop.f32.mrb[0].mxu0
      %v2431 = vadd.f32 %v2035, %v2430
      %v2432 = vpop.f32.mrb[0].mxu0
      %v2433 = vpop.f32.mrb[0].mxu0
      %v2434 = vadd.f32 %v2036, %v2433
      %v2435 = vpop.f32.mrb[0].mxu0
      %2436 = vmatprep.mubr.bf16.mxu0 0
      %2437 = vmatmul.mubr.bf16.gmra.mrb[0].mxu0 %v2360
      %v2438 = vpop.f32.mrb[0].mxu0
      %v2439 = vadd.f32 %v2037, %v2438
      %v2440 = vpop.f32.mrb[0].mxu0
      %v2441 = vpop.f32.mrb[0].mxu0
      %v2442 = vadd.f32 %v2038, %v2441
      %v2443 = vpop.f32.mrb[0].mxu0
      %2444 = vmatprep.mubr.bf16.mxu0 0
      %2445 = vmatmul.mubr.bf16.gmra.mrb[0].mxu0 %v2363
      %v2446 = vpop.f32.mrb[0].mxu0
      %v2447 = vadd.f32 %v2039, %v2446
      %v2448 = vpop.f32.mrb[0].mxu0
      %v2449 = vpop.f32.mrb[0].mxu0
      %v2450 = vadd.f32 %v2040, %v2449
      %v2451 = vpop.f32.mrb[0].mxu0
      %2452 = vdwg.mxu0
      %v2453 = vsel %vm954, %v2106, -inf
      %2454 = vmax.xlane.f32.xlu0 %v2453
      %v2455 = vpop.xlane.xlu0 %2454
      %v2456 = vsel %vm954, %v2109, -inf
      %2457 = vmax.xlane.f32.xlu0 %v2456
      %v2458 = vpop.xlane.xlu0 %2457
      %v2459 = vsel %vm954, %v2114, -inf
      %2460 = vmax.xlane.f32.xlu0 %v2459
      %v2461 = vpop.xlane.xlu0 %2460
      %v2462 = vsel %vm954, %v2117, -inf
      %2463 = vmax.xlane.f32.xlu0 %v2462
      %v2464 = vpop.xlane.xlu0 %2463
      %v2465 = vsel %vm954, %v2122, -inf
      %2466 = vmax.xlane.f32.xlu0 %v2465
      %v2467 = vpop.xlane.xlu0 %2466
      %v2468 = vsel %vm954, %v2125, -inf
      %2469 = vmax.xlane.f32.xlu0 %v2468
      %v2470 = vpop.xlane.xlu0 %2469
      %v2471 = vsel %vm954, %v2130, -inf
      %2472 = vmax.xlane.f32.xlu0 %v2471
      %v2473 = vpop.xlane.xlu0 %2472
      %v2474 = vsel %vm954, %v2133, -inf
      %2475 = vmax.xlane.f32.xlu0 %v2474
      %v2476 = vpop.xlane.xlu0 %2475
      %v2477 = vsel %vm954, %v2138, -inf
      %2478 = vmax.xlane.f32.xlu0 %v2477
      %v2479 = vpop.xlane.xlu0 %2478
      %v2480 = vsel %vm954, %v2141, -inf
      %2481 = vmax.xlane.f32.xlu0 %v2480
      %v2482 = vpop.xlane.xlu0 %2481
      %v2483 = vsel %vm954, %v2209, -inf
      %2484 = vmax.xlane.f32.xlu0 %v2483
      %v2485 = vpop.xlane.xlu0 %2484
      %v2486 = vsel %vm954, %v2212, -inf
      %2487 = vmax.xlane.f32.xlu0 %v2486
      %v2488 = vpop.xlane.xlu0 %2487
      %v2489 = vsel %vm954, %v2217, -inf
      %2490 = vmax.xlane.f32.xlu0 %v2489
      %v2491 = vpop.xlane.xlu0 %2490
      %v2492 = vsel %vm954, %v2220, -inf
      %2493 = vmax.xlane.f32.xlu0 %v2492
      %v2494 = vpop.xlane.xlu0 %2493
      %v2495 = vsel %vm954, %v2225, -inf
      %2496 = vmax.xlane.f32.xlu0 %v2495
      %v2497 = vpop.xlane.xlu0 %2496
      %v2498 = vsel %vm954, %v2228, -inf
      %2499 = vmax.xlane.f32.xlu0 %v2498
      %v2500 = vpop.xlane.xlu0 %2499
      %v2501 = vsel %vm954, %v2233, -inf
      %2502 = vmax.xlane.f32.xlu0 %v2501
      %v2503 = vpop.xlane.xlu0 %2502
      %v2504 = vsel %vm954, %v2236, -inf
      %2505 = vmax.xlane.f32.xlu0 %v2504
      %v2506 = vpop.xlane.xlu0 %2505
      %v2507 = vsel %vm954, %v2241, -inf
      %2508 = vmax.xlane.f32.xlu0 %v2507
      %v2509 = vpop.xlane.xlu0 %2508
      %v2510 = vsel %vm954, %v2244, -inf
      %2511 = vmax.xlane.f32.xlu0 %v2510
      %v2512 = vpop.xlane.xlu0 %2511
      %v2513 = vsel %vm954, %v2312, -inf
      %2514 = vmax.xlane.f32.xlu0 %v2513
      %v2515 = vpop.xlane.xlu0 %2514
      %v2516 = vsel %vm954, %v2315, -inf
      %2517 = vmax.xlane.f32.xlu0 %v2516
      %v2518 = vpop.xlane.xlu0 %2517
      %v2519 = vsel %vm954, %v2320, -inf
      %2520 = vmax.xlane.f32.xlu0 %v2519
      %v2521 = vpop.xlane.xlu0 %2520
      %v2522 = vsel %vm954, %v2323, -inf
      %2523 = vmax.xlane.f32.xlu0 %v2522
      %v2524 = vpop.xlane.xlu0 %2523
      %v2525 = vsel %vm954, %v2328, -inf
      %2526 = vmax.xlane.f32.xlu0 %v2525
      %v2527 = vpop.xlane.xlu0 %2526
      %v2528 = vsel %vm954, %v2331, -inf
      %2529 = vmax.xlane.f32.xlu0 %v2528
      %v2530 = vpop.xlane.xlu0 %2529
      %v2531 = vsel %vm954, %v2336, -inf
      %2532 = vmax.xlane.f32.xlu0 %v2531
      %v2533 = vpop.xlane.xlu0 %2532
      %v2534 = vsel %vm954, %v2339, -inf
      %2535 = vmax.xlane.f32.xlu0 %v2534
      %v2536 = vpop.xlane.xlu0 %2535
      %v2537 = vsel %vm954, %v2344, -inf
      %2538 = vmax.xlane.f32.xlu0 %v2537
      %v2539 = vpop.xlane.xlu0 %2538
      %v2540 = vsel %vm954, %v2347, -inf
      %2541 = vmax.xlane.f32.xlu0 %v2540
      %v2542 = vpop.xlane.xlu0 %2541
      %v2543 = vsel %vm954, %v2415, -inf
      %2544 = vmax.xlane.f32.xlu0 %v2543
      %v2545 = vpop.xlane.xlu0 %2544
      %v2546 = vsel %vm954, %v2418, -inf
      %2547 = vmax.xlane.f32.xlu0 %v2546
      %v2548 = vpop.xlane.xlu0 %2547
      %v2549 = vsel %vm954, %v2423, -inf
      %2550 = vmax.xlane.f32.xlu0 %v2549
      %v2551 = vpop.xlane.xlu0 %2550
      %v2552 = vsel %vm954, %v2426, -inf
      %2553 = vmax.xlane.f32.xlu0 %v2552
      %v2554 = vpop.xlane.xlu0 %2553
      %v2555 = vsel %vm954, %v2431, -inf
      %2556 = vmax.xlane.f32.xlu0 %v2555
      %v2557 = vpop.xlane.xlu0 %2556
      %v2558 = vsel %vm954, %v2434, -inf
      %2559 = vmax.xlane.f32.xlu0 %v2558
      %v2560 = vpop.xlane.xlu0 %2559
      %v2561 = vsel %vm954, %v2439, -inf
      %2562 = vmax.xlane.f32.xlu0 %v2561
      %v2563 = vpop.xlane.xlu0 %2562
      %v2564 = vsel %vm954, %v2442, -inf
      %2565 = vmax.xlane.f32.xlu0 %v2564
      %v2566 = vpop.xlane.xlu0 %2565
      %v2567 = vsel %vm954, %v2447, -inf
      %2568 = vmax.xlane.f32.xlu0 %v2567
      %v2569 = vpop.xlane.xlu0 %2568
      %v2570 = vsel %vm954, %v2450, -inf
      %2571 = vmax.xlane.f32.xlu0 %v2570
      %v2572 = vpop.xlane.xlu0 %2571
      %v2573 = vsub.f32 %v2106, %v2455
      %v2574 = vsub.f32 %v2109, %v2458
      %v2575 = vsub.f32 %v2114, %v2461
      %v2576 = vsub.f32 %v2117, %v2464
      %v2577 = vsub.f32 %v2122, %v2467
      %v2578 = vsub.f32 %v2125, %v2470
      %v2579 = vsub.f32 %v2130, %v2473
      %v2580 = vsub.f32 %v2133, %v2476
      %v2581 = vsub.f32 %v2138, %v2479
      %v2582 = vsub.f32 %v2141, %v2482
      %v2583 = vsub.f32 %v2209, %v2485
      %v2584 = vsub.f32 %v2212, %v2488
      %v2585 = vsub.f32 %v2217, %v2491
      %v2586 = vsub.f32 %v2220, %v2494
      %v2587 = vsub.f32 %v2225, %v2497
      %v2588 = vsub.f32 %v2228, %v2500
      %v2589 = vsub.f32 %v2233, %v2503
      %v2590 = vsub.f32 %v2236, %v2506
      %v2591 = vsub.f32 %v2241, %v2509
      %v2592 = vsub.f32 %v2244, %v2512
      %v2593 = vsub.f32 %v2312, %v2515
      %v2594 = vsub.f32 %v2315, %v2518
      %v2595 = vsub.f32 %v2320, %v2521
      %v2596 = vsub.f32 %v2323, %v2524
      %v2597 = vsub.f32 %v2328, %v2527
      %v2598 = vsub.f32 %v2331, %v2530
      %v2599 = vsub.f32 %v2336, %v2533
      %v2600 = vsub.f32 %v2339, %v2536
      %v2601 = vsub.f32 %v2344, %v2539
      %v2602 = vsub.f32 %v2347, %v2542
      %v2603 = vsub.f32 %v2415, %v2545
      %v2604 = vsub.f32 %v2418, %v2548
      %v2605 = vsub.f32 %v2423, %v2551
      %v2606 = vsub.f32 %v2426, %v2554
      %v2607 = vsub.f32 %v2431, %v2557
      %v2608 = vsub.f32 %v2434, %v2560
      %v2609 = vsub.f32 %v2439, %v2563
      %v2610 = vsub.f32 %v2442, %v2566
      %v2611 = vsub.f32 %v2447, %v2569
      %v2612 = vsub.f32 %v2450, %v2572
      %v2613 = vmul.f32 %v2573, 1.442695
      %v2614 = vpow.pop %v2613
      %v2615 = vmul.f32 %v2574, 1.442695
      %v2616 = vpow.pop %v2615
      %v2617 = vmul.f32 %v2575, 1.442695
      %v2618 = vpow.pop %v2617
      %v2619 = vmul.f32 %v2576, 1.442695
      %v2620 = vpow.pop %v2619
      %v2621 = vmul.f32 %v2577, 1.442695
      %v2622 = vpow.pop %v2621
      %v2623 = vmul.f32 %v2578, 1.442695
      %v2624 = vpow.pop %v2623
      %v2625 = vmul.f32 %v2579, 1.442695
      %v2626 = vpow.pop %v2625
      %v2627 = vmul.f32 %v2580, 1.442695
      %v2628 = vpow.pop %v2627
      %v2629 = vmul.f32 %v2581, 1.442695
      %v2630 = vpow.pop %v2629
      %v2631 = vmul.f32 %v2582, 1.442695
      %v2632 = vpow.pop %v2631
      %v2633 = vmul.f32 %v2583, 1.442695
      %v2634 = vpow.pop %v2633
      %v2635 = vmul.f32 %v2584, 1.442695
      %v2636 = vpow.pop %v2635
      %v2637 = vmul.f32 %v2585, 1.442695
      %v2638 = vpow.pop %v2637
      %v2639 = vmul.f32 %v2586, 1.442695
      %v2640 = vpow.pop %v2639
      %v2641 = vmul.f32 %v2587, 1.442695
      %v2642 = vpow.pop %v2641
      %v2643 = vmul.f32 %v2588, 1.442695
      %v2644 = vpow.pop %v2643
      %v2645 = vmul.f32 %v2589, 1.442695
      %v2646 = vpow.pop %v2645
      %v2647 = vmul.f32 %v2590, 1.442695
      %v2648 = vpow.pop %v2647
      %v2649 = vmul.f32 %v2591, 1.442695
      %v2650 = vpow.pop %v2649
      %v2651 = vmul.f32 %v2592, 1.442695
      %v2652 = vpow.pop %v2651
      %v2653 = vmul.f32 %v2593, 1.442695
      %v2654 = vpow.pop %v2653
      %v2655 = vmul.f32 %v2594, 1.442695
      %v2656 = vpow.pop %v2655
      %v2657 = vmul.f32 %v2595, 1.442695
      %v2658 = vpow.pop %v2657
      %v2659 = vmul.f32 %v2596, 1.442695
      %v2660 = vpow.pop %v2659
      %v2661 = vmul.f32 %v2597, 1.442695
      %v2662 = vpow.pop %v2661
      %v2663 = vmul.f32 %v2598, 1.442695
      %v2664 = vpow.pop %v2663
      %v2665 = vmul.f32 %v2599, 1.442695
      %v2666 = vpow.pop %v2665
      %v2667 = vmul.f32 %v2600, 1.442695
      %v2668 = vpow.pop %v2667
      %v2669 = vmul.f32 %v2601, 1.442695
      %v2670 = vpow.pop %v2669
      %v2671 = vmul.f32 %v2602, 1.442695
      %v2672 = vpow.pop %v2671
      %v2673 = vmul.f32 %v2603, 1.442695
      %v2674 = vpow.pop %v2673
      %v2675 = vmul.f32 %v2604, 1.442695
      %v2676 = vpow.pop %v2675
      %v2677 = vmul.f32 %v2605, 1.442695
      %v2678 = vpow.pop %v2677
      %v2679 = vmul.f32 %v2606, 1.442695
      %v2680 = vpow.pop %v2679
      %v2681 = vmul.f32 %v2607, 1.442695
      %v2682 = vpow.pop %v2681
      %v2683 = vmul.f32 %v2608, 1.442695
      %v2684 = vpow.pop %v2683
      %v2685 = vmul.f32 %v2609, 1.442695
      %v2686 = vpow.pop %v2685
      %v2687 = vmul.f32 %v2610, 1.442695
      %v2688 = vpow.pop %v2687
      %v2689 = vmul.f32 %v2611, 1.442695
      %v2690 = vpow.pop %v2689
      %v2691 = vmul.f32 %v2612, 1.442695
      %v2692 = vpow.pop %v2691
      %v2693 = vsel %vm954, %v2614, 0.0
      %2694 = vadd.xlane.f32.xlu0 %v2693
      %v2695 = vpop.xlane.xlu0 %2694
      %v2696 = vsel %vm954, %v2616, 0.0
      %2697 = vadd.xlane.f32.xlu0 %v2696
      %v2698 = vpop.xlane.xlu0 %2697
      %v2699 = vsel %vm954, %v2618, 0.0
      %2700 = vadd.xlane.f32.xlu0 %v2699
      %v2701 = vpop.xlane.xlu0 %2700
      %v2702 = vsel %vm954, %v2620, 0.0
      %2703 = vadd.xlane.f32.xlu0 %v2702
      %v2704 = vpop.xlane.xlu0 %2703
      %v2705 = vsel %vm954, %v2622, 0.0
      %2706 = vadd.xlane.f32.xlu0 %v2705
      %v2707 = vpop.xlane.xlu0 %2706
      %v2708 = vsel %vm954, %v2624, 0.0
      %2709 = vadd.xlane.f32.xlu0 %v2708
      %v2710 = vpop.xlane.xlu0 %2709
      %v2711 = vsel %vm954, %v2626, 0.0
      %2712 = vadd.xlane.f32.xlu0 %v2711
      %v2713 = vpop.xlane.xlu0 %2712
      %v2714 = vsel %vm954, %v2628, 0.0
      %2715 = vadd.xlane.f32.xlu0 %v2714
      %v2716 = vpop.xlane.xlu0 %2715
      %v2717 = vsel %vm954, %v2630, 0.0
      %2718 = vadd.xlane.f32.xlu0 %v2717
      %v2719 = vpop.xlane.xlu0 %2718
      %v2720 = vsel %vm954, %v2632, 0.0
      %2721 = vadd.xlane.f32.xlu0 %v2720
      %v2722 = vpop.xlane.xlu0 %2721
      %v2723 = vsel %vm954, %v2634, 0.0
      %2724 = vadd.xlane.f32.xlu0 %v2723
      %v2725 = vpop.xlane.xlu0 %2724
      %v2726 = vsel %vm954, %v2636, 0.0
      %2727 = vadd.xlane.f32.xlu0 %v2726
      %v2728 = vpop.xlane.xlu0 %2727
      %v2729 = vsel %vm954, %v2638, 0.0
      %2730 = vadd.xlane.f32.xlu0 %v2729
      %v2731 = vpop.xlane.xlu0 %2730
      %v2732 = vsel %vm954, %v2640, 0.0
      %2733 = vadd.xlane.f32.xlu0 %v2732
      %v2734 = vpop.xlane.xlu0 %2733
      %v2735 = vsel %vm954, %v2642, 0.0
      %2736 = vadd.xlane.f32.xlu0 %v2735
      %v2737 = vpop.xlane.xlu0 %2736
      %v2738 = vsel %vm954, %v2644, 0.0
      %2739 = vadd.xlane.f32.xlu0 %v2738
      %v2740 = vpop.xlane.xlu0 %2739
      %v2741 = vsel %vm954, %v2646, 0.0
      %2742 = vadd.xlane.f32.xlu0 %v2741
      %v2743 = vpop.xlane.xlu0 %2742
      %v2744 = vsel %vm954, %v2648, 0.0
      %2745 = vadd.xlane.f32.xlu0 %v2744
      %v2746 = vpop.xlane.xlu0 %2745
      %v2747 = vsel %vm954, %v2650, 0.0
      %2748 = vadd.xlane.f32.xlu0 %v2747
      %v2749 = vpop.xlane.xlu0 %2748
      %v2750 = vsel %vm954, %v2652, 0.0
      %2751 = vadd.xlane.f32.xlu0 %v2750
      %v2752 = vpop.xlane.xlu0 %2751
      %v2753 = vsel %vm954, %v2654, 0.0
      %2754 = vadd.xlane.f32.xlu0 %v2753
      %v2755 = vpop.xlane.xlu0 %2754
      %v2756 = vsel %vm954, %v2656, 0.0
      %2757 = vadd.xlane.f32.xlu0 %v2756
      %v2758 = vpop.xlane.xlu0 %2757
      %v2759 = vsel %vm954, %v2658, 0.0
      %2760 = vadd.xlane.f32.xlu0 %v2759
      %v2761 = vpop.xlane.xlu0 %2760
      %v2762 = vsel %vm954, %v2660, 0.0
      %2763 = vadd.xlane.f32.xlu0 %v2762
      %v2764 = vpop.xlane.xlu0 %2763
      %v2765 = vsel %vm954, %v2662, 0.0
      %2766 = vadd.xlane.f32.xlu0 %v2765
      %v2767 = vpop.xlane.xlu0 %2766
      %v2768 = vsel %vm954, %v2664, 0.0
      %2769 = vadd.xlane.f32.xlu0 %v2768
      %v2770 = vpop.xlane.xlu0 %2769
      %v2771 = vsel %vm954, %v2666, 0.0
      %2772 = vadd.xlane.f32.xlu0 %v2771
      %v2773 = vpop.xlane.xlu0 %2772
      %v2774 = vsel %vm954, %v2668, 0.0
      %2775 = vadd.xlane.f32.xlu0 %v2774
      %v2776 = vpop.xlane.xlu0 %2775
      %v2777 = vsel %vm954, %v2670, 0.0
      %2778 = vadd.xlane.f32.xlu0 %v2777
      %v2779 = vpop.xlane.xlu0 %2778
      %v2780 = vsel %vm954, %v2672, 0.0
      %2781 = vadd.xlane.f32.xlu0 %v2780
      %v2782 = vpop.xlane.xlu0 %2781
      %v2783 = vsel %vm954, %v2674, 0.0
      %2784 = vadd.xlane.f32.xlu0 %v2783
      %v2785 = vpop.xlane.xlu0 %2784
      %v2786 = vsel %vm954, %v2676, 0.0
      %2787 = vadd.xlane.f32.xlu0 %v2786
      %v2788 = vpop.xlane.xlu0 %2787
      %v2789 = vsel %vm954, %v2678, 0.0
      %2790 = vadd.xlane.f32.xlu0 %v2789
      %v2791 = vpop.xlane.xlu0 %2790
      %v2792 = vsel %vm954, %v2680, 0.0
      %2793 = vadd.xlane.f32.xlu0 %v2792
      %v2794 = vpop.xlane.xlu0 %2793
      %v2795 = vsel %vm954, %v2682, 0.0
      %2796 = vadd.xlane.f32.xlu0 %v2795
      %v2797 = vpop.xlane.xlu0 %2796
      %v2798 = vsel %vm954, %v2684, 0.0
      %2799 = vadd.xlane.f32.xlu0 %v2798
      %v2800 = vpop.xlane.xlu0 %2799
      %v2801 = vsel %vm954, %v2686, 0.0
      %2802 = vadd.xlane.f32.xlu0 %v2801
      %v2803 = vpop.xlane.xlu0 %2802
      %v2804 = vsel %vm954, %v2688, 0.0
      %2805 = vadd.xlane.f32.xlu0 %v2804
      %v2806 = vpop.xlane.xlu0 %2805
      %v2807 = vsel %vm954, %v2690, 0.0
      %2808 = vadd.xlane.f32.xlu0 %v2807
      %v2809 = vpop.xlane.xlu0 %2808
      %v2810 = vsel %vm954, %v2692, 0.0
      %2811 = vadd.xlane.f32.xlu0 %v2810
      %v2812 = vpop.xlane.xlu0 %2811
      %v2813 = vrcp.pop %v2695
      %v2814 = vrcp.pop %v2698
      %v2815 = vrcp.pop %v2701
      %v2816 = vrcp.pop %v2704
      %v2817 = vrcp.pop %v2707
      %v2818 = vrcp.pop %v2710
      %v2819 = vrcp.pop %v2713
      %v2820 = vrcp.pop %v2716
      %v2821 = vrcp.pop %v2719
      %v2822 = vrcp.pop %v2722
      %v2823 = vrcp.pop %v2725
      %v2824 = vrcp.pop %v2728
      %v2825 = vrcp.pop %v2731
      %v2826 = vrcp.pop %v2734
      %v2827 = vrcp.pop %v2737
      %v2828 = vrcp.pop %v2740
      %v2829 = vrcp.pop %v2743
      %v2830 = vrcp.pop %v2746
      %v2831 = vrcp.pop %v2749
      %v2832 = vrcp.pop %v2752
      %v2833 = vrcp.pop %v2755
      %v2834 = vrcp.pop %v2758
      %v2835 = vrcp.pop %v2761
      %v2836 = vrcp.pop %v2764
      %v2837 = vrcp.pop %v2767
      %v2838 = vrcp.pop %v2770
      %v2839 = vrcp.pop %v2773
      %v2840 = vrcp.pop %v2776
      %v2841 = vrcp.pop %v2779
      %v2842 = vrcp.pop %v2782
      %v2843 = vrcp.pop %v2785
      %v2844 = vrcp.pop %v2788
      %v2845 = vrcp.pop %v2791
      %v2846 = vrcp.pop %v2794
      %v2847 = vrcp.pop %v2797
      %v2848 = vrcp.pop %v2800
      %v2849 = vrcp.pop %v2803
      %v2850 = vrcp.pop %v2806
      %v2851 = vrcp.pop %v2809
      %v2852 = vrcp.pop %v2812
      %v2853 = vmul.f32 %v2614, %v2813
      %v2854 = vmul.f32 %v2616, %v2814
      %v2855 = vmul.f32 %v2618, %v2815
      %v2856 = vmul.f32 %v2620, %v2816
      %v2857 = vmul.f32 %v2622, %v2817
      %v2858 = vmul.f32 %v2624, %v2818
      %v2859 = vmul.f32 %v2626, %v2819
      %v2860 = vmul.f32 %v2628, %v2820
      %v2861 = vmul.f32 %v2630, %v2821
      %v2862 = vmul.f32 %v2632, %v2822
      %v2863 = vmul.f32 %v2634, %v2823
      %v2864 = vmul.f32 %v2636, %v2824
      %v2865 = vmul.f32 %v2638, %v2825
      %v2866 = vmul.f32 %v2640, %v2826
      %v2867 = vmul.f32 %v2642, %v2827
      %v2868 = vmul.f32 %v2644, %v2828
      %v2869 = vmul.f32 %v2646, %v2829
      %v2870 = vmul.f32 %v2648, %v2830
      %v2871 = vmul.f32 %v2650, %v2831
      %v2872 = vmul.f32 %v2652, %v2832
      %v2873 = vmul.f32 %v2654, %v2833
      %v2874 = vmul.f32 %v2656, %v2834
      %v2875 = vmul.f32 %v2658, %v2835
      %v2876 = vmul.f32 %v2660, %v2836
      %v2877 = vmul.f32 %v2662, %v2837
      %v2878 = vmul.f32 %v2664, %v2838
      %v2879 = vmul.f32 %v2666, %v2839
      %v2880 = vmul.f32 %v2668, %v2840
      %v2881 = vmul.f32 %v2670, %v2841
      %v2882 = vmul.f32 %v2672, %v2842
      %v2883 = vmul.f32 %v2674, %v2843
      %v2884 = vmul.f32 %v2676, %v2844
      %v2885 = vmul.f32 %v2678, %v2845
      %v2886 = vmul.f32 %v2680, %v2846
      %v2887 = vmul.f32 %v2682, %v2847
      %v2888 = vmul.f32 %v2684, %v2848
      %v2889 = vmul.f32 %v2686, %v2849
      %v2890 = vmul.f32 %v2688, %v2850
      %v2891 = vmul.f32 %v2690, %v2851
      %v2892 = vmul.f32 %v2692, %v2852
      %v2893 = vpack.c.bf16 %v2854, %v2853
      %v2894 = vpack.c.bf16 %v2856, %v2855
      %v2895 = vpack.c.bf16 %v2858, %v2857
      %v2896 = vpack.c.bf16 %v2860, %v2859
      %v2897 = vpack.c.bf16 %v2862, %v2861
      %v2898 = vpack.c.bf16 %v2864, %v2863
      %v2899 = vpack.c.bf16 %v2866, %v2865
      %v2900 = vpack.c.bf16 %v2868, %v2867
      %v2901 = vpack.c.bf16 %v2870, %v2869
      %v2902 = vpack.c.bf16 %v2872, %v2871
      %v2903 = vpack.c.bf16 %v2874, %v2873
      %v2904 = vpack.c.bf16 %v2876, %v2875
      %v2905 = vpack.c.bf16 %v2878, %v2877
      %v2906 = vpack.c.bf16 %v2880, %v2879
      %v2907 = vpack.c.bf16 %v2882, %v2881
      %v2908 = vpack.c.bf16 %v2884, %v2883
      %v2909 = vpack.c.bf16 %v2886, %v2885
      %v2910 = vpack.c.bf16 %v2888, %v2887
      %v2911 = vpack.c.bf16 %v2890, %v2889
      %v2912 = vpack.c.bf16 %v2892, %v2891
      %v2914 = vsel %vm954, %v2893, 0
      %v2917 = vsel %vm954, %v2894, 0
      %v2920 = vsel %vm954, %v2895, 0
      %v2923 = vsel %vm954, %v2896, 0
      %v2926 = vsel %vm954, %v2897, 0
      %2928 = vmatprep.subr.bf16.mxu0 0
      %2929 = vmatpush1.bf16.msra.mxu0 %v2010
      %2930 = vmatprep.subr.bf16.mxu0 0
      %2931 = vmatpush1.bf16.msra.mxu0 %v2011
      %2932 = vmatprep.subr.bf16.mxu0 0
      %2933 = vmatpush1.bf16.msra.mxu0 %v2012
      %2934 = vmatprep.subr.bf16.mxu0 0
      %2935 = vmatpush1.bf16.msra.mxu0 %v2013
      %2936 = vmatprep.subr.bf16.mxu0 0
      %2937 = vmatpush1.bf16.msra.mxu0 %v2014
      %2938 = vmatprep.subr.bf16.mxu0 0
      %2939 = vmatpush1.bf16.msra.mxu0 0
      %2940 = vmatprep.subr.bf16.mxu0 0
      %2941 = vmatpush1.bf16.msra.mxu0 0
      %2942 = vmatprep.subr.bf16.mxu0 0
      %2943 = vmatpush1.bf16.msra.mxu0 0
      %2944 = vmatprep.subr.bf16.mxu0 0
      %2945 = vmatpush1.bf16.msra.mxu0 0
      %2946 = vmatprep.subr.bf16.mxu0 0
      %2947 = vmatpush1.bf16.msra.mxu0 0
      %2948 = vmatprep.subr.bf16.mxu0 0
      %2949 = vmatpush1.bf16.msra.mxu0 0
      %2950 = vmatprep.subr.bf16.mxu0 0
      %2951 = vmatpush1.bf16.msra.mxu0 0
      %2952 = vmatprep.subr.bf16.mxu0 0
      %2953 = vmatpush1.bf16.msra.mxu0 0
      %2954 = vmatprep.subr.bf16.mxu0 0
      %2955 = vmatpush1.bf16.msra.mxu0 0
      %2956 = vmatprep.subr.bf16.mxu0 0
      %2957 = vmatpush1.bf16.msra.mxu0 0
      %2958 = vmatprep.subr.bf16.mxu0 0
      %2959 = vmatpush1.bf16.msra.mxu0 0
      %2960 = vmatprep.mubr.bf16.mxu0 0
      %2961 = vmatmul.mubr.bf16.gmra.mrb[0].mxu0 %v2914
      %v2962 = vpop.f32.mrb[0].mxu0
      %v2963 = vadd.f32 0.0, %v2962
      %v2964 = vpop.f32.mrb[0].mxu0
      %v2965 = vpop.f32.mrb[0].mxu0
      %v2966 = vadd.f32 0.0, %v2965
      %v2967 = vpop.f32.mrb[0].mxu0
      %2968 = vmatprep.mubr.bf16.mxu0 0
      %2969 = vmatmul.mubr.bf16.gmra.mrb[0].mxu0 %v2917
      %v2970 = vpop.f32.mrb[0].mxu0
      %v2971 = vadd.f32 0.0, %v2970
      %v2972 = vpop.f32.mrb[0].mxu0
      %v2973 = vpop.f32.mrb[0].mxu0
      %v2974 = vadd.f32 0.0, %v2973
      %v2975 = vpop.f32.mrb[0].mxu0
      %2976 = vmatprep.mubr.bf16.mxu0 0
      %2977 = vmatmul.mubr.bf16.gmra.mrb[0].mxu0 %v2920
      %v2978 = vpop.f32.mrb[0].mxu0
      %v2979 = vadd.f32 0.0, %v2978
      %v2980 = vpop.f32.mrb[0].mxu0
      %v2981 = vpop.f32.mrb[0].mxu0
      %v2982 = vadd.f32 0.0, %v2981
      %v2983 = vpop.f32.mrb[0].mxu0
      %2984 = vmatprep.mubr.bf16.mxu0 0
      %2985 = vmatmul.mubr.bf16.gmra.mrb[0].mxu0 %v2923
      %v2986 = vpop.f32.mrb[0].mxu0
      %v2987 = vadd.f32 0.0, %v2986
      %v2988 = vpop.f32.mrb[0].mxu0
      %v2989 = vpop.f32.mrb[0].mxu0
      %v2990 = vadd.f32 0.0, %v2989
      %v2991 = vpop.f32.mrb[0].mxu0
      %2992 = vmatprep.mubr.bf16.mxu0 0
      %2993 = vmatmul.mubr.bf16.gmra.mrb[0].mxu0 %v2926
      %v2994 = vpop.f32.mrb[0].mxu0
      %v2995 = vadd.f32 0.0, %v2994
      %v2996 = vpop.f32.mrb[0].mxu0
      %v2997 = vpop.f32.mrb[0].mxu0
      %v2998 = vadd.f32 0.0, %v2997
      %v2999 = vpop.f32.mrb[0].mxu0
      %3000 = vdwg.mxu0
      %v3002 = vsel %vm954, %v2898, 0
      %v3005 = vsel %vm954, %v2899, 0
      %v3008 = vsel %vm954, %v2900, 0
      %v3011 = vsel %vm954, %v2901, 0
      %v3014 = vsel %vm954, %v2902, 0
      %3016 = vmatprep.subr.bf16.mxu0 0
      %3017 = vmatpush1.bf16.msra.mxu0 %v2015
      %3018 = vmatprep.subr.bf16.mxu0 0
      %3019 = vmatpush1.bf16.msra.mxu0 %v2016
      %3020 = vmatprep.subr.bf16.mxu0 0
      %3021 = vmatpush1.bf16.msra.mxu0 %v2017
      %3022 = vmatprep.subr.bf16.mxu0 0
      %3023 = vmatpush1.bf16.msra.mxu0 %v2018
      %3024 = vmatprep.subr.bf16.mxu0 0
      %3025 = vmatpush1.bf16.msra.mxu0 %v2019
      %3026 = vmatprep.subr.bf16.mxu0 0
      %3027 = vmatpush1.bf16.msra.mxu0 0
      %3028 = vmatprep.subr.bf16.mxu0 0
      %3029 = vmatpush1.bf16.msra.mxu0 0
      %3030 = vmatprep.subr.bf16.mxu0 0
      %3031 = vmatpush1.bf16.msra.mxu0 0
      %3032 = vmatprep.subr.bf16.mxu0 0
      %3033 = vmatpush1.bf16.msra.mxu0 0
      %3034 = vmatprep.subr.bf16.mxu0 0
      %3035 = vmatpush1.bf16.msra.mxu0 0
      %3036 = vmatprep.subr.bf16.mxu0 0
      %3037 = vmatpush1.bf16.msra.mxu0 0
      %3038 = vmatprep.subr.bf16.mxu0 0
      %3039 = vmatpush1.bf16.msra.mxu0 0
      %3040 = vmatprep.subr.bf16.mxu0 0
      %3041 = vmatpush1.bf16.msra.mxu0 0
      %3042 = vmatprep.subr.bf16.mxu0 0
      %3043 = vmatpush1.bf16.msra.mxu0 0
      %3044 = vmatprep.subr.bf16.mxu0 0
      %3045 = vmatpush1.bf16.msra.mxu0 0
      %3046 = vmatprep.subr.bf16.mxu0 0
      %3047 = vmatpush1.bf16.msra.mxu0 0
      %3048 = vmatprep.mubr.bf16.mxu0 0
      %3049 = vmatmul.mubr.bf16.gmra.mrb[0].mxu0 %v3002
      %v3050 = vpop.f32.mrb[0].mxu0
      %v3051 = vadd.f32 0.0, %v3050
      %v3052 = vpop.f32.mrb[0].mxu0
      %v3053 = vpop.f32.mrb[0].mxu0
      %v3054 = vadd.f32 0.0, %v3053
      %v3055 = vpop.f32.mrb[0].mxu0
      %3056 = vmatprep.mubr.bf16.mxu0 0
      %3057 = vmatmul.mubr.bf16.gmra.mrb[0].mxu0 %v3005
      %v3058 = vpop.f32.mrb[0].mxu0
      %v3059 = vadd.f32 0.0, %v3058
      %v3060 = vpop.f32.mrb[0].mxu0
      %v3061 = vpop.f32.mrb[0].mxu0
      %v3062 = vadd.f32 0.0, %v3061
      %v3063 = vpop.f32.mrb[0].mxu0
      %3064 = vmatprep.mubr.bf16.mxu0 0
      %3065 = vmatmul.mubr.bf16.gmra.mrb[0].mxu0 %v3008
      %v3066 = vpop.f32.mrb[0].mxu0
      %v3067 = vadd.f32 0.0, %v3066
      %v3068 = vpop.f32.mrb[0].mxu0
      %v3069 = vpop.f32.mrb[0].mxu0
      %v3070 = vadd.f32 0.0, %v3069
      %v3071 = vpop.f32.mrb[0].mxu0
      %3072 = vmatprep.mubr.bf16.mxu0 0
      %3073 = vmatmul.mubr.bf16.gmra.mrb[0].mxu0 %v3011
      %v3074 = vpop.f32.mrb[0].mxu0
      %v3075 = vadd.f32 0.0, %v3074
      %v3076 = vpop.f32.mrb[0].mxu0
      %v3077 = vpop.f32.mrb[0].mxu0
      %v3078 = vadd.f32 0.0, %v3077
      %v3079 = vpop.f32.mrb[0].mxu0
      %3080 = vmatprep.mubr.bf16.mxu0 0
      %3081 = vmatmul.mubr.bf16.gmra.mrb[0].mxu0 %v3014
      %v3082 = vpop.f32.mrb[0].mxu0
      %v3083 = vadd.f32 0.0, %v3082
      %v3084 = vpop.f32.mrb[0].mxu0
      %v3085 = vpop.f32.mrb[0].mxu0
      %v3086 = vadd.f32 0.0, %v3085
      %v3087 = vpop.f32.mrb[0].mxu0
      %3088 = vdwg.mxu0
      %v3090 = vsel %vm954, %v2903, 0
      %v3093 = vsel %vm954, %v2904, 0
      %v3096 = vsel %vm954, %v2905, 0
      %v3099 = vsel %vm954, %v2906, 0
      %v3102 = vsel %vm954, %v2907, 0
      %3104 = vmatprep.subr.bf16.mxu0 0
      %3105 = vmatpush1.bf16.msra.mxu0 %v2020
      %3106 = vmatprep.subr.bf16.mxu0 0
      %3107 = vmatpush1.bf16.msra.mxu0 %v2021
      %3108 = vmatprep.subr.bf16.mxu0 0
      %3109 = vmatpush1.bf16.msra.mxu0 %v2022
      %3110 = vmatprep.subr.bf16.mxu0 0
      %3111 = vmatpush1.bf16.msra.mxu0 %v2023
      %3112 = vmatprep.subr.bf16.mxu0 0
      %3113 = vmatpush1.bf16.msra.mxu0 %v2024
      %3114 = vmatprep.subr.bf16.mxu0 0
      %3115 = vmatpush1.bf16.msra.mxu0 0
      %3116 = vmatprep.subr.bf16.mxu0 0
      %3117 = vmatpush1.bf16.msra.mxu0 0
      %3118 = vmatprep.subr.bf16.mxu0 0
      %3119 = vmatpush1.bf16.msra.mxu0 0
      %3120 = vmatprep.subr.bf16.mxu0 0
      %3121 = vmatpush1.bf16.msra.mxu0 0
      %3122 = vmatprep.subr.bf16.mxu0 0
      %3123 = vmatpush1.bf16.msra.mxu0 0
      %3124 = vmatprep.subr.bf16.mxu0 0
      %3125 = vmatpush1.bf16.msra.mxu0 0
      %3126 = vmatprep.subr.bf16.mxu0 0
      %3127 = vmatpush1.bf16.msra.mxu0 0
      %3128 = vmatprep.subr.bf16.mxu0 0
      %3129 = vmatpush1.bf16.msra.mxu0 0
      %3130 = vmatprep.subr.bf16.mxu0 0
      %3131 = vmatpush1.bf16.msra.mxu0 0
      %3132 = vmatprep.subr.bf16.mxu0 0
      %3133 = vmatpush1.bf16.msra.mxu0 0
      %3134 = vmatprep.subr.bf16.mxu0 0
      %3135 = vmatpush1.bf16.msra.mxu0 0
      %3136 = vmatprep.mubr.bf16.mxu0 0
      %3137 = vmatmul.mubr.bf16.gmra.mrb[0].mxu0 %v3090
      %v3138 = vpop.f32.mrb[0].mxu0
      %v3139 = vadd.f32 0.0, %v3138
      %v3140 = vpop.f32.mrb[0].mxu0
      %v3141 = vpop.f32.mrb[0].mxu0
      %v3142 = vadd.f32 0.0, %v3141
      %v3143 = vpop.f32.mrb[0].mxu0
      %3144 = vmatprep.mubr.bf16.mxu0 0
      %3145 = vmatmul.mubr.bf16.gmra.mrb[0].mxu0 %v3093
      %v3146 = vpop.f32.mrb[0].mxu0
      %v3147 = vadd.f32 0.0, %v3146
      %v3148 = vpop.f32.mrb[0].mxu0
      %v3149 = vpop.f32.mrb[0].mxu0
      %v3150 = vadd.f32 0.0, %v3149
      %v3151 = vpop.f32.mrb[0].mxu0
      %3152 = vmatprep.mubr.bf16.mxu0 0
      %3153 = vmatmul.mubr.bf16.gmra.mrb[0].mxu0 %v3096
      %v3154 = vpop.f32.mrb[0].mxu0
      %v3155 = vadd.f32 0.0, %v3154
      %v3156 = vpop.f32.mrb[0].mxu0
      %v3157 = vpop.f32.mrb[0].mxu0
      %v3158 = vadd.f32 0.0, %v3157
      %v3159 = vpop.f32.mrb[0].mxu0
      %3160 = vmatprep.mubr.bf16.mxu0 0
      %3161 = vmatmul.mubr.bf16.gmra.mrb[0].mxu0 %v3099
      %v3162 = vpop.f32.mrb[0].mxu0
      %v3163 = vadd.f32 0.0, %v3162
      %v3164 = vpop.f32.mrb[0].mxu0
      %v3165 = vpop.f32.mrb[0].mxu0
      %v3166 = vadd.f32 0.0, %v3165
      %v3167 = vpop.f32.mrb[0].mxu0
      %3168 = vmatprep.mubr.bf16.mxu0 0
      %3169 = vmatmul.mubr.bf16.gmra.mrb[0].mxu0 %v3102
      %v3170 = vpop.f32.mrb[0].mxu0
      %v3171 = vadd.f32 0.0, %v3170
      %v3172 = vpop.f32.mrb[0].mxu0
      %v3173 = vpop.f32.mrb[0].mxu0
      %v3174 = vadd.f32 0.0, %v3173
      %v3175 = vpop.f32.mrb[0].mxu0
      %3176 = vdwg.mxu0
      %v3178 = vsel %vm954, %v2908, 0
      %v3181 = vsel %vm954, %v2909, 0
      %v3184 = vsel %vm954, %v2910, 0
      %v3187 = vsel %vm954, %v2911, 0
      %v3190 = vsel %vm954, %v2912, 0
      %3192 = vmatprep.subr.bf16.mxu0 0
      %3193 = vmatpush1.bf16.msra.mxu0 %v2025
      %3194 = vmatprep.subr.bf16.mxu0 0
      %3195 = vmatpush1.bf16.msra.mxu0 %v2026
      %3196 = vmatprep.subr.bf16.mxu0 0
      %3197 = vmatpush1.bf16.msra.mxu0 %v2027
      %3198 = vmatprep.subr.bf16.mxu0 0
      %3199 = vmatpush1.bf16.msra.mxu0 %v2028
      %3200 = vmatprep.subr.bf16.mxu0 0
      %3201 = vmatpush1.bf16.msra.mxu0 %v2029
      %3202 = vmatprep.subr.bf16.mxu0 0
      %3203 = vmatpush1.bf16.msra.mxu0 0
      %3204 = vmatprep.subr.bf16.mxu0 0
      %3205 = vmatpush1.bf16.msra.mxu0 0
      %3206 = vmatprep.subr.bf16.mxu0 0
      %3207 = vmatpush1.bf16.msra.mxu0 0
      %3208 = vmatprep.subr.bf16.mxu0 0
      %3209 = vmatpush1.bf16.msra.mxu0 0
      %3210 = vmatprep.subr.bf16.mxu0 0
      %3211 = vmatpush1.bf16.msra.mxu0 0
      %3212 = vmatprep.subr.bf16.mxu0 0
      %3213 = vmatpush1.bf16.msra.mxu0 0
      %3214 = vmatprep.subr.bf16.mxu0 0
      %3215 = vmatpush1.bf16.msra.mxu0 0
      %3216 = vmatprep.subr.bf16.mxu0 0
      %3217 = vmatpush1.bf16.msra.mxu0 0
      %3218 = vmatprep.subr.bf16.mxu0 0
      %3219 = vmatpush1.bf16.msra.mxu0 0
      %3220 = vmatprep.subr.bf16.mxu0 0
      %3221 = vmatpush1.bf16.msra.mxu0 0
      %3222 = vmatprep.subr.bf16.mxu0 0
      %3223 = vmatpush1.bf16.msra.mxu0 0
      %3224 = vmatprep.mubr.bf16.mxu0 0
      %3225 = vmatmul.mubr.bf16.gmra.mrb[0].mxu0 %v3178
      %v3226 = vpop.f32.mrb[0].mxu0
      %v3227 = vadd.f32 0.0, %v3226
      %v3228 = vpop.f32.mrb[0].mxu0
      %v3229 = vpop.f32.mrb[0].mxu0
      %v3230 = vadd.f32 0.0, %v3229
      %v3231 = vpop.f32.mrb[0].mxu0
      %3232 = vmatprep.mubr.bf16.mxu0 0
      %3233 = vmatmul.mubr.bf16.gmra.mrb[0].mxu0 %v3181
      %v3234 = vpop.f32.mrb[0].mxu0
      %v3235 = vadd.f32 0.0, %v3234
      %v3236 = vpop.f32.mrb[0].mxu0
      %v3237 = vpop.f32.mrb[0].mxu0
      %v3238 = vadd.f32 0.0, %v3237
      %v3239 = vpop.f32.mrb[0].mxu0
      %3240 = vmatprep.mubr.bf16.mxu0 0
      %3241 = vmatmul.mubr.bf16.gmra.mrb[0].mxu0 %v3184
      %v3242 = vpop.f32.mrb[0].mxu0
      %v3243 = vadd.f32 0.0, %v3242
      %v3244 = vpop.f32.mrb[0].mxu0
      %v3245 = vpop.f32.mrb[0].mxu0
      %v3246 = vadd.f32 0.0, %v3245
      %v3247 = vpop.f32.mrb[0].mxu0
      %3248 = vmatprep.mubr.bf16.mxu0 0
      %3249 = vmatmul.mubr.bf16.gmra.mrb[0].mxu0 %v3187
      %v3250 = vpop.f32.mrb[0].mxu0
      %v3251 = vadd.f32 0.0, %v3250
      %v3252 = vpop.f32.mrb[0].mxu0
      %v3253 = vpop.f32.mrb[0].mxu0
      %v3254 = vadd.f32 0.0, %v3253
      %v3255 = vpop.f32.mrb[0].mxu0
      %3256 = vmatprep.mubr.bf16.mxu0 0
      %3257 = vmatmul.mubr.bf16.gmra.mrb[0].mxu0 %v3190
      %v3258 = vpop.f32.mrb[0].mxu0
      %v3259 = vadd.f32 0.0, %v3258
      %v3260 = vpop.f32.mrb[0].mxu0
      %v3261 = vpop.f32.mrb[0].mxu0
      %v3262 = vadd.f32 0.0, %v3261
      %v3263 = vpop.f32.mrb[0].mxu0
      %3264 = vdwg.mxu0
      %3305 = vrot.lane.b32.xlu0 %v2963, 8
      %v3306 = vpop.permute.xlu0 %3305
      %3307 = vrot.lane.b32.xlu0 %v2966, 8
      %v3308 = vpop.permute.xlu0 %3307
      %3309 = vrot.lane.b32.xlu0 %v2971, 8
      %v3310 = vpop.permute.xlu0 %3309
      %3311 = vrot.lane.b32.xlu0 %v2974, 8
      %v3312 = vpop.permute.xlu0 %3311
      %3313 = vrot.lane.b32.xlu0 %v2979, 8
      %v3314 = vpop.permute.xlu0 %3313
      %3315 = vrot.lane.b32.xlu0 %v2982, 8
      %v3316 = vpop.permute.xlu0 %3315
      %3317 = vrot.lane.b32.xlu0 %v2987, 8
      %v3318 = vpop.permute.xlu0 %3317
      %3319 = vrot.lane.b32.xlu0 %v2990, 8
      %v3320 = vpop.permute.xlu0 %3319
      %3321 = vrot.lane.b32.xlu0 %v2995, 8
      %v3322 = vpop.permute.xlu0 %3321
      %3323 = vrot.lane.b32.xlu0 %v2998, 8
      %v3324 = vpop.permute.xlu0 %3323
      %3325 = vrot.lane.b32.xlu0 %v3051, 8
      %v3326 = vpop.permute.xlu0 %3325
      %3327 = vrot.lane.b32.xlu0 %v3054, 8
      %v3328 = vpop.permute.xlu0 %3327
      %3329 = vrot.lane.b32.xlu0 %v3059, 8
      %v3330 = vpop.permute.xlu0 %3329
      %3331 = vrot.lane.b32.xlu0 %v3062, 8
      %v3332 = vpop.permute.xlu0 %3331
      %3333 = vrot.lane.b32.xlu0 %v3067, 8
      %v3334 = vpop.permute.xlu0 %3333
      %3335 = vrot.lane.b32.xlu0 %v3070, 8
      %v3336 = vpop.permute.xlu0 %3335
      %3337 = vrot.lane.b32.xlu0 %v3075, 8
      %v3338 = vpop.permute.xlu0 %3337
      %3339 = vrot.lane.b32.xlu0 %v3078, 8
      %v3340 = vpop.permute.xlu0 %3339
      %3341 = vrot.lane.b32.xlu0 %v3083, 8
      %v3342 = vpop.permute.xlu0 %3341
      %3343 = vrot.lane.b32.xlu0 %v3086, 8
      %v3344 = vpop.permute.xlu0 %3343
      %3345 = vrot.lane.b32.xlu0 %v3139, 8
      %v3346 = vpop.permute.xlu0 %3345
      %3347 = vrot.lane.b32.xlu0 %v3142, 8
      %v3348 = vpop.permute.xlu0 %3347
      %3349 = vrot.lane.b32.xlu0 %v3147, 8
      %v3350 = vpop.permute.xlu0 %3349
      %3351 = vrot.lane.b32.xlu0 %v3150, 8
      %v3352 = vpop.permute.xlu0 %3351
      %3353 = vrot.lane.b32.xlu0 %v3155, 8
      %v3354 = vpop.permute.xlu0 %3353
      %3355 = vrot.lane.b32.xlu0 %v3158, 8
      %v3356 = vpop.permute.xlu0 %3355
      %3357 = vrot.lane.b32.xlu0 %v3163, 8
      %v3358 = vpop.permute.xlu0 %3357
      %3359 = vrot.lane.b32.xlu0 %v3166, 8
      %v3360 = vpop.permute.xlu0 %3359
      %3361 = vrot.lane.b32.xlu0 %v3171, 8
      %v3362 = vpop.permute.xlu0 %3361
      %3363 = vrot.lane.b32.xlu0 %v3174, 8
      %v3364 = vpop.permute.xlu0 %3363
      %3365 = vrot.lane.b32.xlu0 %v3227, 8
      %v3366 = vpop.permute.xlu0 %3365
      %3367 = vrot.lane.b32.xlu0 %v3230, 8
      %v3368 = vpop.permute.xlu0 %3367
      %3369 = vrot.lane.b32.xlu0 %v3235, 8
      %v3370 = vpop.permute.xlu0 %3369
      %3371 = vrot.lane.b32.xlu0 %v3238, 8
      %v3372 = vpop.permute.xlu0 %3371
      %3373 = vrot.lane.b32.xlu0 %v3243, 8
      %v3374 = vpop.permute.xlu0 %3373
      %3375 = vrot.lane.b32.xlu0 %v3246, 8
      %v3376 = vpop.permute.xlu0 %3375
      %3377 = vrot.lane.b32.xlu0 %v3251, 8
      %v3378 = vpop.permute.xlu0 %3377
      %3379 = vrot.lane.b32.xlu0 %v3254, 8
      %v3380 = vpop.permute.xlu0 %3379
      %3381 = vrot.lane.b32.xlu0 %v3259, 8
      %v3382 = vpop.permute.xlu0 %3381
      %3383 = vrot.lane.b32.xlu0 %v3262, 8
      %v3384 = vpop.permute.xlu0 %3383
      %vm3425 = vcmask 130112
      %3426 = vst.msk [vmem:[#allocation2] sm:$0xff] %vm3425, %v3306
      %3427 = vst.msk [vmem:[#allocation2 + $0x8] sm:$0xff] %vm3425, %v3308
      %3428 = vst.msk [vmem:[#allocation2 + $0x10] sm:$0xff] %vm3425, %v3310
      %3429 = vst.msk [vmem:[#allocation2 + $0x18] sm:$0xff] %vm3425, %v3312
      %3430 = vst.msk [vmem:[#allocation2 + $0x20] sm:$0xff] %vm3425, %v3314
      %3431 = vst.msk [vmem:[#allocation2 + $0x28] sm:$0xff] %vm3425, %v3316
      %3432 = vst.msk [vmem:[#allocation2 + $0x30] sm:$0xff] %vm3425, %v3318
      %3433 = vst.msk [vmem:[#allocation2 + $0x38] sm:$0xff] %vm3425, %v3320
      %3434 = vst.msk [vmem:[#allocation2 + $0x40] sm:$0xff] %vm3425, %v3322
      %3435 = vst.msk [vmem:[#allocation2 + $0x48] sm:$0xff] %vm3425, %v3324
      %3436 = vst.msk [vmem:[#allocation2 + $0x50] sm:$0xff] %vm3425, %v3326
      %3437 = vst.msk [vmem:[#allocation2 + $0x58] sm:$0xff] %vm3425, %v3328
      %3438 = vst.msk [vmem:[#allocation2 + $0x60] sm:$0xff] %vm3425, %v3330
      %3439 = vst.msk [vmem:[#allocation2 + $0x68] sm:$0xff] %vm3425, %v3332
      %3440 = vst.msk [vmem:[#allocation2 + $0x70] sm:$0xff] %vm3425, %v3334
      %3441 = vst.msk [vmem:[#allocation2 + $0x78] sm:$0xff] %vm3425, %v3336
      %3442 = vst.msk [vmem:[#allocation2 + $0x80] sm:$0xff] %vm3425, %v3338
      %3443 = vst.msk [vmem:[#allocation2 + $0x88] sm:$0xff] %vm3425, %v3340
      %3444 = vst.msk [vmem:[#allocation2 + $0x90] sm:$0xff] %vm3425, %v3342
      %3445 = vst.msk [vmem:[#allocation2 + $0x98] sm:$0xff] %vm3425, %v3344
      %3446 = vst.msk [vmem:[#allocation2 + $0xa0] sm:$0xff] %vm3425, %v3346
      %3447 = vst.msk [vmem:[#allocation2 + $0xa8] sm:$0xff] %vm3425, %v3348
      %3448 = vst.msk [vmem:[#allocation2 + $0xb0] sm:$0xff] %vm3425, %v3350
      %3449 = vst.msk [vmem:[#allocation2 + $0xb8] sm:$0xff] %vm3425, %v3352
      %3450 = vst.msk [vmem:[#allocation2 + $0xc0] sm:$0xff] %vm3425, %v3354
      %3451 = vst.msk [vmem:[#allocation2 + $0xc8] sm:$0xff] %vm3425, %v3356
      %3452 = vst.msk [vmem:[#allocation2 + $0xd0] sm:$0xff] %vm3425, %v3358
      %3453 = vst.msk [vmem:[#allocation2 + $0xd8] sm:$0xff] %vm3425, %v3360
      %3454 = vst.msk [vmem:[#allocation2 + $0xe0] sm:$0xff] %vm3425, %v3362
      %3455 = vst.msk [vmem:[#allocation2 + $0xe8] sm:$0xff] %vm3425, %v3364
      %3456 = vst.msk [vmem:[#allocation2 + $0xf0] sm:$0xff] %vm3425, %v3366
      %3457 = vst.msk [vmem:[#allocation2 + $0xf8] sm:$0xff] %vm3425, %v3368
      %3458 = vst.msk [vmem:[#allocation2 + $0x100] sm:$0xff] %vm3425, %v3370
      %3459 = vst.msk [vmem:[#allocation2 + $0x108] sm:$0xff] %vm3425, %v3372
      %3460 = vst.msk [vmem:[#allocation2 + $0x110] sm:$0xff] %vm3425, %v3374
      %3461 = vst.msk [vmem:[#allocation2 + $0x118] sm:$0xff] %vm3425, %v3376
      %3462 = vst.msk [vmem:[#allocation2 + $0x120] sm:$0xff] %vm3425, %v3378
      %3463 = vst.msk [vmem:[#allocation2 + $0x128] sm:$0xff] %vm3425, %v3380
      %3464 = vst.msk [vmem:[#allocation2 + $0x130] sm:$0xff] %vm3425, %v3382
      %3465 = vst.msk [vmem:[#allocation2 + $0x138] sm:$0xff] %vm3425, %v3384
      %s3466 = scalar_lea.vmem %s287, 160
      %v3467 = vld [vmem:[%s3466] sm:$0xff]
      %v3468 = vld [vmem:[%s3466 + $0x8] sm:$0xff]
      %v3469 = vld [vmem:[%s3466 + $0x10] sm:$0xff]
      %v3470 = vld [vmem:[%s3466 + $0x18] sm:$0xff]
      %v3471 = vld [vmem:[%s3466 + $0x20] sm:$0xff]
      %v3472 = vld [vmem:[%s3466 + $0x28] sm:$0xff]
      %v3473 = vld [vmem:[%s3466 + $0x30] sm:$0xff]
      %v3474 = vld [vmem:[%s3466 + $0x38] sm:$0xff]
      %v3475 = vld [vmem:[%s3466 + $0x40] sm:$0xff]
      %v3476 = vld [vmem:[%s3466 + $0x48] sm:$0xff]
      %v3477 = vld [vmem:[%s3466 + $0x140] sm:$0xff]
      %v3478 = vld [vmem:[%s3466 + $0x148] sm:$0xff]
      %v3479 = vld [vmem:[%s3466 + $0x150] sm:$0xff]
      %v3480 = vld [vmem:[%s3466 + $0x158] sm:$0xff]
      %v3481 = vld [vmem:[%s3466 + $0x160] sm:$0xff]
      %v3482 = vld [vmem:[%s3466 + $0x168] sm:$0xff]
      %v3483 = vld [vmem:[%s3466 + $0x170] sm:$0xff]
      %v3484 = vld [vmem:[%s3466 + $0x178] sm:$0xff]
      %v3485 = vld [vmem:[%s3466 + $0x180] sm:$0xff]
      %v3486 = vld [vmem:[%s3466 + $0x188] sm:$0xff]
      %v3487 = vld [vmem:[%s3466 + $0x280] sm:$0xff]
      %v3488 = vld [vmem:[%s3466 + $0x288] sm:$0xff]
      %v3489 = vld [vmem:[%s3466 + $0x290] sm:$0xff]
      %v3490 = vld [vmem:[%s3466 + $0x298] sm:$0xff]
      %v3491 = vld [vmem:[%s3466 + $0x2a0] sm:$0xff]
      %v3492 = vld [vmem:[%s3466 + $0x2a8] sm:$0xff]
      %v3493 = vld [vmem:[%s3466 + $0x2b0] sm:$0xff]
      %v3494 = vld [vmem:[%s3466 + $0x2b8] sm:$0xff]
      %v3495 = vld [vmem:[%s3466 + $0x2c0] sm:$0xff]
      %v3496 = vld [vmem:[%s3466 + $0x2c8] sm:$0xff]
      %v3497 = vld [vmem:[%s3466 + $0x3c0] sm:$0xff]
      %v3498 = vld [vmem:[%s3466 + $0x3c8] sm:$0xff]
      %v3499 = vld [vmem:[%s3466 + $0x3d0] sm:$0xff]
      %v3500 = vld [vmem:[%s3466 + $0x3d8] sm:$0xff]
      %v3501 = vld [vmem:[%s3466 + $0x3e0] sm:$0xff]
      %v3502 = vld [vmem:[%s3466 + $0x3e8] sm:$0xff]
      %v3503 = vld [vmem:[%s3466 + $0x3f0] sm:$0xff]
      %v3504 = vld [vmem:[%s3466 + $0x3f8] sm:$0xff]
      %v3505 = vld [vmem:[%s3466 + $0x400] sm:$0xff]
      %v3506 = vld [vmem:[%s3466 + $0x408] sm:$0xff]
      %v3507 = vmul.f32 %v3467, 0.35355338
      %v3508 = vmul.f32 %v3468, 0.35355338
      %v3509 = vmul.f32 %v3469, 0.35355338
      %v3510 = vmul.f32 %v3470, 0.35355338
      %v3511 = vmul.f32 %v3471, 0.35355338
      %v3512 = vmul.f32 %v3472, 0.35355338
      %v3513 = vmul.f32 %v3473, 0.35355338
      %v3514 = vmul.f32 %v3474, 0.35355338
      %v3515 = vmul.f32 %v3475, 0.35355338
      %v3516 = vmul.f32 %v3476, 0.35355338
      %v3517 = vmul.f32 %v3477, 0.35355338
      %v3518 = vmul.f32 %v3478, 0.35355338
      %v3519 = vmul.f32 %v3479, 0.35355338
      %v3520 = vmul.f32 %v3480, 0.35355338
      %v3521 = vmul.f32 %v3481, 0.35355338
      %v3522 = vmul.f32 %v3482, 0.35355338
      %v3523 = vmul.f32 %v3483, 0.35355338
      %v3524 = vmul.f32 %v3484, 0.35355338
      %v3525 = vmul.f32 %v3485, 0.35355338
      %v3526 = vmul.f32 %v3486, 0.35355338
      %v3527 = vmul.f32 %v3487, 0.35355338
      %v3528 = vmul.f32 %v3488, 0.35355338
      %v3529 = vmul.f32 %v3489, 0.35355338
      %v3530 = vmul.f32 %v3490, 0.35355338
      %v3531 = vmul.f32 %v3491, 0.35355338
      %v3532 = vmul.f32 %v3492, 0.35355338
      %v3533 = vmul.f32 %v3493, 0.35355338
      %v3534 = vmul.f32 %v3494, 0.35355338
      %v3535 = vmul.f32 %v3495, 0.35355338
      %v3536 = vmul.f32 %v3496, 0.35355338
      %v3537 = vmul.f32 %v3497, 0.35355338
      %v3538 = vmul.f32 %v3498, 0.35355338
      %v3539 = vmul.f32 %v3499, 0.35355338
      %v3540 = vmul.f32 %v3500, 0.35355338
      %v3541 = vmul.f32 %v3501, 0.35355338
      %v3542 = vmul.f32 %v3502, 0.35355338
      %v3543 = vmul.f32 %v3503, 0.35355338
      %v3544 = vmul.f32 %v3504, 0.35355338
      %v3545 = vmul.f32 %v3505, 0.35355338
      %v3546 = vmul.f32 %v3506, 0.35355338
      %v3547 = vpack.c.bf16 %v3508, %v3507
      %v3548 = vpack.c.bf16 %v3510, %v3509
      %v3549 = vpack.c.bf16 %v3512, %v3511
      %v3550 = vpack.c.bf16 %v3514, %v3513
      %v3551 = vpack.c.bf16 %v3516, %v3515
      %v3552 = vpack.c.bf16 %v3518, %v3517
      %v3553 = vpack.c.bf16 %v3520, %v3519
      %v3554 = vpack.c.bf16 %v3522, %v3521
      %v3555 = vpack.c.bf16 %v3524, %v3523
      %v3556 = vpack.c.bf16 %v3526, %v3525
      %v3557 = vpack.c.bf16 %v3528, %v3527
      %v3558 = vpack.c.bf16 %v3530, %v3529
      %v3559 = vpack.c.bf16 %v3532, %v3531
      %v3560 = vpack.c.bf16 %v3534, %v3533
      %v3561 = vpack.c.bf16 %v3536, %v3535
      %v3562 = vpack.c.bf16 %v3538, %v3537
      %v3563 = vpack.c.bf16 %v3540, %v3539
      %v3564 = vpack.c.bf16 %v3542, %v3541
      %v3565 = vpack.c.bf16 %v3544, %v3543
      %v3566 = vpack.c.bf16 %v3546, %v3545
      %s3567 = scalar_lea.vmem %s294, 160
      %v3568 = vld [vmem:[%s3567] sm:$0xff]
      %v3569 = vld [vmem:[%s3567 + $0x8] sm:$0xff]
      %v3570 = vld [vmem:[%s3567 + $0x10] sm:$0xff]
      %v3571 = vld [vmem:[%s3567 + $0x18] sm:$0xff]
      %v3572 = vld [vmem:[%s3567 + $0x20] sm:$0xff]
      %v3573 = vld [vmem:[%s3567 + $0x28] sm:$0xff]
      %v3574 = vld [vmem:[%s3567 + $0x30] sm:$0xff]
      %v3575 = vld [vmem:[%s3567 + $0x38] sm:$0xff]
      %v3576 = vld [vmem:[%s3567 + $0x40] sm:$0xff]
      %v3577 = vld [vmem:[%s3567 + $0x48] sm:$0xff]
      %v3578 = vld [vmem:[%s3567 + $0x140] sm:$0xff]
      %v3579 = vld [vmem:[%s3567 + $0x148] sm:$0xff]
      %v3580 = vld [vmem:[%s3567 + $0x150] sm:$0xff]
      %v3581 = vld [vmem:[%s3567 + $0x158] sm:$0xff]
      %v3582 = vld [vmem:[%s3567 + $0x160] sm:$0xff]
      %v3583 = vld [vmem:[%s3567 + $0x168] sm:$0xff]
      %v3584 = vld [vmem:[%s3567 + $0x170] sm:$0xff]
      %v3585 = vld [vmem:[%s3567 + $0x178] sm:$0xff]
      %v3586 = vld [vmem:[%s3567 + $0x180] sm:$0xff]
      %v3587 = vld [vmem:[%s3567 + $0x188] sm:$0xff]
      %v3588 = vld [vmem:[%s3567 + $0x280] sm:$0xff]
      %v3589 = vld [vmem:[%s3567 + $0x288] sm:$0xff]
      %v3590 = vld [vmem:[%s3567 + $0x290] sm:$0xff]
      %v3591 = vld [vmem:[%s3567 + $0x298] sm:$0xff]
      %v3592 = vld [vmem:[%s3567 + $0x2a0] sm:$0xff]
      %v3593 = vld [vmem:[%s3567 + $0x2a8] sm:$0xff]
      %v3594 = vld [vmem:[%s3567 + $0x2b0] sm:$0xff]
      %v3595 = vld [vmem:[%s3567 + $0x2b8] sm:$0xff]
      %v3596 = vld [vmem:[%s3567 + $0x2c0] sm:$0xff]
      %v3597 = vld [vmem:[%s3567 + $0x2c8] sm:$0xff]
      %v3598 = vld [vmem:[%s3567 + $0x3c0] sm:$0xff]
      %v3599 = vld [vmem:[%s3567 + $0x3c8] sm:$0xff]
      %v3600 = vld [vmem:[%s3567 + $0x3d0] sm:$0xff]
      %v3601 = vld [vmem:[%s3567 + $0x3d8] sm:$0xff]
      %v3602 = vld [vmem:[%s3567 + $0x3e0] sm:$0xff]
      %v3603 = vld [vmem:[%s3567 + $0x3e8] sm:$0xff]
      %v3604 = vld [vmem:[%s3567 + $0x3f0] sm:$0xff]
      %v3605 = vld [vmem:[%s3567 + $0x3f8] sm:$0xff]
      %v3606 = vld [vmem:[%s3567 + $0x400] sm:$0xff]
      %v3607 = vld [vmem:[%s3567 + $0x408] sm:$0xff]
      %v3608 = vpack.c.bf16 %v3569, %v3568
      %v3609 = vpack.c.bf16 %v3571, %v3570
      %v3610 = vpack.c.bf16 %v3573, %v3572
      %v3611 = vpack.c.bf16 %v3575, %v3574
      %v3612 = vpack.c.bf16 %v3577, %v3576
      %v3613 = vpack.c.bf16 %v3579, %v3578
      %v3614 = vpack.c.bf16 %v3581, %v3580
      %v3615 = vpack.c.bf16 %v3583, %v3582
      %v3616 = vpack.c.bf16 %v3585, %v3584
      %v3617 = vpack.c.bf16 %v3587, %v3586
      %v3618 = vpack.c.bf16 %v3589, %v3588
      %v3619 = vpack.c.bf16 %v3591, %v3590
      %v3620 = vpack.c.bf16 %v3593, %v3592
      %v3621 = vpack.c.bf16 %v3595, %v3594
      %v3622 = vpack.c.bf16 %v3597, %v3596
      %v3623 = vpack.c.bf16 %v3599, %v3598
      %v3624 = vpack.c.bf16 %v3601, %v3600
      %v3625 = vpack.c.bf16 %v3603, %v3602
      %v3626 = vpack.c.bf16 %v3605, %v3604
      %v3627 = vpack.c.bf16 %v3607, %v3606
      %s3628 = scalar_lea.vmem %s301, 160
      %v3629 = vld [vmem:[%s3628] sm:$0xff]
      %v3630 = vld [vmem:[%s3628 + $0x8] sm:$0xff]
      %v3631 = vld [vmem:[%s3628 + $0x10] sm:$0xff]
      %v3632 = vld [vmem:[%s3628 + $0x18] sm:$0xff]
      %v3633 = vld [vmem:[%s3628 + $0x20] sm:$0xff]
      %v3634 = vld [vmem:[%s3628 + $0x28] sm:$0xff]
      %v3635 = vld [vmem:[%s3628 + $0x30] sm:$0xff]
      %v3636 = vld [vmem:[%s3628 + $0x38] sm:$0xff]
      %v3637 = vld [vmem:[%s3628 + $0x40] sm:$0xff]
      %v3638 = vld [vmem:[%s3628 + $0x48] sm:$0xff]
      %v3639 = vld [vmem:[%s3628 + $0x140] sm:$0xff]
      %v3640 = vld [vmem:[%s3628 + $0x148] sm:$0xff]
      %v3641 = vld [vmem:[%s3628 + $0x150] sm:$0xff]
      %v3642 = vld [vmem:[%s3628 + $0x158] sm:$0xff]
      %v3643 = vld [vmem:[%s3628 + $0x160] sm:$0xff]
      %v3644 = vld [vmem:[%s3628 + $0x168] sm:$0xff]
      %v3645 = vld [vmem:[%s3628 + $0x170] sm:$0xff]
      %v3646 = vld [vmem:[%s3628 + $0x178] sm:$0xff]
      %v3647 = vld [vmem:[%s3628 + $0x180] sm:$0xff]
      %v3648 = vld [vmem:[%s3628 + $0x188] sm:$0xff]
      %v3649 = vld [vmem:[%s3628 + $0x280] sm:$0xff]
      %v3650 = vld [vmem:[%s3628 + $0x288] sm:$0xff]
      %v3651 = vld [vmem:[%s3628 + $0x290] sm:$0xff]
      %v3652 = vld [vmem:[%s3628 + $0x298] sm:$0xff]
      %v3653 = vld [vmem:[%s3628 + $0x2a0] sm:$0xff]
      %v3654 = vld [vmem:[%s3628 + $0x2a8] sm:$0xff]
      %v3655 = vld [vmem:[%s3628 + $0x2b0] sm:$0xff]
      %v3656 = vld [vmem:[%s3628 + $0x2b8] sm:$0xff]
      %v3657 = vld [vmem:[%s3628 + $0x2c0] sm:$0xff]
      %v3658 = vld [vmem:[%s3628 + $0x2c8] sm:$0xff]
      %v3659 = vld [vmem:[%s3628 + $0x3c0] sm:$0xff]
      %v3660 = vld [vmem:[%s3628 + $0x3c8] sm:$0xff]
      %v3661 = vld [vmem:[%s3628 + $0x3d0] sm:$0xff]
      %v3662 = vld [vmem:[%s3628 + $0x3d8] sm:$0xff]
      %v3663 = vld [vmem:[%s3628 + $0x3e0] sm:$0xff]
      %v3664 = vld [vmem:[%s3628 + $0x3e8] sm:$0xff]
      %v3665 = vld [vmem:[%s3628 + $0x3f0] sm:$0xff]
      %v3666 = vld [vmem:[%s3628 + $0x3f8] sm:$0xff]
      %v3667 = vld [vmem:[%s3628 + $0x400] sm:$0xff]
      %v3668 = vld [vmem:[%s3628 + $0x408] sm:$0xff]
      %v3669 = vpack.c.bf16 %v3630, %v3629
      %v3670 = vpack.c.bf16 %v3632, %v3631
      %v3671 = vpack.c.bf16 %v3634, %v3633
      %v3672 = vpack.c.bf16 %v3636, %v3635
      %v3673 = vpack.c.bf16 %v3638, %v3637
      %v3674 = vpack.c.bf16 %v3640, %v3639
      %v3675 = vpack.c.bf16 %v3642, %v3641
      %v3676 = vpack.c.bf16 %v3644, %v3643
      %v3677 = vpack.c.bf16 %v3646, %v3645
      %v3678 = vpack.c.bf16 %v3648, %v3647
      %v3679 = vpack.c.bf16 %v3650, %v3649
      %v3680 = vpack.c.bf16 %v3652, %v3651
      %v3681 = vpack.c.bf16 %v3654, %v3653
      %v3682 = vpack.c.bf16 %v3656, %v3655
      %v3683 = vpack.c.bf16 %v3658, %v3657
      %v3684 = vpack.c.bf16 %v3660, %v3659
      %v3685 = vpack.c.bf16 %v3662, %v3661
      %v3686 = vpack.c.bf16 %v3664, %v3663
      %v3687 = vpack.c.bf16 %v3666, %v3665
      %v3688 = vpack.c.bf16 %v3668, %v3667
      %s3689 = scalar_lea.vmem %s3, 160
      %v3690 = vld [vmem:[%s3689] sm:$0xff]
      %v3691 = vld [vmem:[%s3689 + $0x8] sm:$0xff]
      %v3692 = vld [vmem:[%s3689 + $0x10] sm:$0xff]
      %v3693 = vld [vmem:[%s3689 + $0x18] sm:$0xff]
      %v3694 = vld [vmem:[%s3689 + $0x20] sm:$0xff]
      %v3695 = vld [vmem:[%s3689 + $0x28] sm:$0xff]
      %v3696 = vld [vmem:[%s3689 + $0x30] sm:$0xff]
      %v3697 = vld [vmem:[%s3689 + $0x38] sm:$0xff]
      %v3698 = vld [vmem:[%s3689 + $0x40] sm:$0xff]
      %v3699 = vld [vmem:[%s3689 + $0x48] sm:$0xff]
      %v3701 = vsel %vm541, %v3547, 0
      %v3704 = vsel %vm541, %v3548, 0
      %v3707 = vsel %vm541, %v3549, 0
      %v3710 = vsel %vm541, %v3550, 0
      %v3713 = vsel %vm541, %v3551, 0
      %v3716 = vsel %vm541, %v3608, 0
      %v3719 = vsel %vm541, %v3609, 0
      %v3722 = vsel %vm541, %v3610, 0
      %v3725 = vsel %vm541, %v3611, 0
      %v3728 = vsel %vm541, %v3612, 0
      %3730 = vmatprep.subr.bf16.mxu0 0
      %3731 = vmatpush1.bf16.xpose.msra.mxu0 %v3716
      %3732 = vmatprep.subr.bf16.mxu0 0
      %3733 = vmatpush1.bf16.xpose.msra.mxu0 %v3719
      %3734 = vmatprep.subr.bf16.mxu0 0
      %3735 = vmatpush1.bf16.xpose.msra.mxu0 %v3722
      %3736 = vmatprep.subr.bf16.mxu0 0
      %3737 = vmatpush1.bf16.xpose.msra.mxu0 %v3725
      %3738 = vmatprep.subr.bf16.mxu0 0
      %3739 = vmatpush1.bf16.xpose.msra.mxu0 %v3728
      %3740 = vmatprep.subr.bf16.mxu0 0
      %3741 = vmatpush1.bf16.xpose.msra.mxu0 0
      %3742 = vmatprep.subr.bf16.mxu0 0
      %3743 = vmatpush1.bf16.xpose.msra.mxu0 0
      %3744 = vmatprep.subr.bf16.mxu0 0
      %3745 = vmatpush1.bf16.xpose.msra.mxu0 0
      %3746 = vmatprep.subr.bf16.mxu0 0
      %3747 = vmatpush1.bf16.xpose.msra.mxu0 0
      %3748 = vmatprep.subr.bf16.mxu0 0
      %3749 = vmatpush1.bf16.xpose.msra.mxu0 0
      %3750 = vmatprep.subr.bf16.mxu0 0
      %3751 = vmatpush1.bf16.xpose.msra.mxu0 0
      %3752 = vmatprep.subr.bf16.mxu0 0
      %3753 = vmatpush1.bf16.xpose.msra.mxu0 0
      %3754 = vmatprep.subr.bf16.mxu0 0
      %3755 = vmatpush1.bf16.xpose.msra.mxu0 0
      %3756 = vmatprep.subr.bf16.mxu0 0
      %3757 = vmatpush1.bf16.xpose.msra.mxu0 0
      %3758 = vmatprep.subr.bf16.mxu0 0
      %3759 = vmatpush1.bf16.xpose.msra.mxu0 0
      %3760 = vmatprep.subr.bf16.mxu0 0
      %3761 = vmatpush1.bf16.xpose.msra.mxu0 0
      %3762 = vmatprep.mubr.bf16.mxu0 0
      %3763 = vmatmul.mubr.bf16.gmra.mrb[0].mxu0 %v3701
      %v3764 = vpop.f32.mrb[0].mxu0
      %v3765 = vadd.f32 %v3690, %v3764
      %v3766 = vpop.f32.mrb[0].mxu0
      %v3767 = vpop.f32.mrb[0].mxu0
      %v3768 = vadd.f32 %v3691, %v3767
      %v3769 = vpop.f32.mrb[0].mxu0
      %3770 = vmatprep.mubr.bf16.mxu0 0
      %3771 = vmatmul.mubr.bf16.gmra.mrb[0].mxu0 %v3704
      %v3772 = vpop.f32.mrb[0].mxu0
      %v3773 = vadd.f32 %v3692, %v3772
      %v3774 = vpop.f32.mrb[0].mxu0
      %v3775 = vpop.f32.mrb[0].mxu0
      %v3776 = vadd.f32 %v3693, %v3775
      %v3777 = vpop.f32.mrb[0].mxu0
      %3778 = vmatprep.mubr.bf16.mxu0 0
      %3779 = vmatmul.mubr.bf16.gmra.mrb[0].mxu0 %v3707
      %v3780 = vpop.f32.mrb[0].mxu0
      %v3781 = vadd.f32 %v3694, %v3780
      %v3782 = vpop.f32.mrb[0].mxu0
      %v3783 = vpop.f32.mrb[0].mxu0
      %v3784 = vadd.f32 %v3695, %v3783
      %v3785 = vpop.f32.mrb[0].mxu0
      %3786 = vmatprep.mubr.bf16.mxu0 0
      %3787 = vmatmul.mubr.bf16.gmra.mrb[0].mxu0 %v3710
      %v3788 = vpop.f32.mrb[0].mxu0
      %v3789 = vadd.f32 %v3696, %v3788
      %v3790 = vpop.f32.mrb[0].mxu0
      %v3791 = vpop.f32.mrb[0].mxu0
      %v3792 = vadd.f32 %v3697, %v3791
      %v3793 = vpop.f32.mrb[0].mxu0
      %3794 = vmatprep.mubr.bf16.mxu0 0
      %3795 = vmatmul.mubr.bf16.gmra.mrb[0].mxu0 %v3713
      %v3796 = vpop.f32.mrb[0].mxu0
      %v3797 = vadd.f32 %v3698, %v3796
      %v3798 = vpop.f32.mrb[0].mxu0
      %v3799 = vpop.f32.mrb[0].mxu0
      %v3800 = vadd.f32 %v3699, %v3799
      %v3801 = vpop.f32.mrb[0].mxu0
      %3802 = vdwg.mxu0
      %v3804 = vsel %vm541, %v3552, 0
      %v3807 = vsel %vm541, %v3553, 0
      %v3810 = vsel %vm541, %v3554, 0
      %v3813 = vsel %vm541, %v3555, 0
      %v3816 = vsel %vm541, %v3556, 0
      %v3819 = vsel %vm541, %v3613, 0
      %v3822 = vsel %vm541, %v3614, 0
      %v3825 = vsel %vm541, %v3615, 0
      %v3828 = vsel %vm541, %v3616, 0
      %v3831 = vsel %vm541, %v3617, 0
      %3833 = vmatprep.subr.bf16.mxu0 0
      %3834 = vmatpush1.bf16.xpose.msra.mxu0 %v3819
      %3835 = vmatprep.subr.bf16.mxu0 0
      %3836 = vmatpush1.bf16.xpose.msra.mxu0 %v3822
      %3837 = vmatprep.subr.bf16.mxu0 0
      %3838 = vmatpush1.bf16.xpose.msra.mxu0 %v3825
      %3839 = vmatprep.subr.bf16.mxu0 0
      %3840 = vmatpush1.bf16.xpose.msra.mxu0 %v3828
      %3841 = vmatprep.subr.bf16.mxu0 0
      %3842 = vmatpush1.bf16.xpose.msra.mxu0 %v3831
      %3843 = vmatprep.subr.bf16.mxu0 0
      %3844 = vmatpush1.bf16.xpose.msra.mxu0 0
      %3845 = vmatprep.subr.bf16.mxu0 0
      %3846 = vmatpush1.bf16.xpose.msra.mxu0 0
      %3847 = vmatprep.subr.bf16.mxu0 0
      %3848 = vmatpush1.bf16.xpose.msra.mxu0 0
      %3849 = vmatprep.subr.bf16.mxu0 0
      %3850 = vmatpush1.bf16.xpose.msra.mxu0 0
      %3851 = vmatprep.subr.bf16.mxu0 0
      %3852 = vmatpush1.bf16.xpose.msra.mxu0 0
      %3853 = vmatprep.subr.bf16.mxu0 0
      %3854 = vmatpush1.bf16.xpose.msra.mxu0 0
      %3855 = vmatprep.subr.bf16.mxu0 0
      %3856 = vmatpush1.bf16.xpose.msra.mxu0 0
      %3857 = vmatprep.subr.bf16.mxu0 0
      %3858 = vmatpush1.bf16.xpose.msra.mxu0 0
      %3859 = vmatprep.subr.bf16.mxu0 0
      %3860 = vmatpush1.bf16.xpose.msra.mxu0 0
      %3861 = vmatprep.subr.bf16.mxu0 0
      %3862 = vmatpush1.bf16.xpose.msra.mxu0 0
      %3863 = vmatprep.subr.bf16.mxu0 0
      %3864 = vmatpush1.bf16.xpose.msra.mxu0 0
      %3865 = vmatprep.mubr.bf16.mxu0 0
      %3866 = vmatmul.mubr.bf16.gmra.mrb[0].mxu0 %v3804
      %v3867 = vpop.f32.mrb[0].mxu0
      %v3868 = vadd.f32 %v3690, %v3867
      %v3869 = vpop.f32.mrb[0].mxu0
      %v3870 = vpop.f32.mrb[0].mxu0
      %v3871 = vadd.f32 %v3691, %v3870
      %v3872 = vpop.f32.mrb[0].mxu0
      %3873 = vmatprep.mubr.bf16.mxu0 0
      %3874 = vmatmul.mubr.bf16.gmra.mrb[0].mxu0 %v3807
      %v3875 = vpop.f32.mrb[0].mxu0
      %v3876 = vadd.f32 %v3692, %v3875
      %v3877 = vpop.f32.mrb[0].mxu0
      %v3878 = vpop.f32.mrb[0].mxu0
      %v3879 = vadd.f32 %v3693, %v3878
      %v3880 = vpop.f32.mrb[0].mxu0
      %3881 = vmatprep.mubr.bf16.mxu0 0
      %3882 = vmatmul.mubr.bf16.gmra.mrb[0].mxu0 %v3810
      %v3883 = vpop.f32.mrb[0].mxu0
      %v3884 = vadd.f32 %v3694, %v3883
      %v3885 = vpop.f32.mrb[0].mxu0
      %v3886 = vpop.f32.mrb[0].mxu0
      %v3887 = vadd.f32 %v3695, %v3886
      %v3888 = vpop.f32.mrb[0].mxu0
      %3889 = vmatprep.mubr.bf16.mxu0 0
      %3890 = vmatmul.mubr.bf16.gmra.mrb[0].mxu0 %v3813
      %v3891 = vpop.f32.mrb[0].mxu0
      %v3892 = vadd.f32 %v3696, %v3891
      %v3893 = vpop.f32.mrb[0].mxu0
      %v3894 = vpop.f32.mrb[0].mxu0
      %v3895 = vadd.f32 %v3697, %v3894
      %v3896 = vpop.f32.mrb[0].mxu0
      %3897 = vmatprep.mubr.bf16.mxu0 0
      %3898 = vmatmul.mubr.bf16.gmra.mrb[0].mxu0 %v3816
      %v3899 = vpop.f32.mrb[0].mxu0
      %v3900 = vadd.f32 %v3698, %v3899
      %v3901 = vpop.f32.mrb[0].mxu0
      %v3902 = vpop.f32.mrb[0].mxu0
      %v3903 = vadd.f32 %v3699, %v3902
      %v3904 = vpop.f32.mrb[0].mxu0
      %3905 = vdwg.mxu0
      %v3907 = vsel %vm541, %v3557, 0
      %v3910 = vsel %vm541, %v3558, 0
      %v3913 = vsel %vm541, %v3559, 0
      %v3916 = vsel %vm541, %v3560, 0
      %v3919 = vsel %vm541, %v3561, 0
      %v3922 = vsel %vm541, %v3618, 0
      %v3925 = vsel %vm541, %v3619, 0
      %v3928 = vsel %vm541, %v3620, 0
      %v3931 = vsel %vm541, %v3621, 0
      %v3934 = vsel %vm541, %v3622, 0
      %3936 = vmatprep.subr.bf16.mxu0 0
      %3937 = vmatpush1.bf16.xpose.msra.mxu0 %v3922
      %3938 = vmatprep.subr.bf16.mxu0 0
      %3939 = vmatpush1.bf16.xpose.msra.mxu0 %v3925
      %3940 = vmatprep.subr.bf16.mxu0 0
      %3941 = vmatpush1.bf16.xpose.msra.mxu0 %v3928
      %3942 = vmatprep.subr.bf16.mxu0 0
      %3943 = vmatpush1.bf16.xpose.msra.mxu0 %v3931
      %3944 = vmatprep.subr.bf16.mxu0 0
      %3945 = vmatpush1.bf16.xpose.msra.mxu0 %v3934
      %3946 = vmatprep.subr.bf16.mxu0 0
      %3947 = vmatpush1.bf16.xpose.msra.mxu0 0
      %3948 = vmatprep.subr.bf16.mxu0 0
      %3949 = vmatpush1.bf16.xpose.msra.mxu0 0
      %3950 = vmatprep.subr.bf16.mxu0 0
      %3951 = vmatpush1.bf16.xpose.msra.mxu0 0
      %3952 = vmatprep.subr.bf16.mxu0 0
      %3953 = vmatpush1.bf16.xpose.msra.mxu0 0
      %3954 = vmatprep.subr.bf16.mxu0 0
      %3955 = vmatpush1.bf16.xpose.msra.mxu0 0
      %3956 = vmatprep.subr.bf16.mxu0 0
      %3957 = vmatpush1.bf16.xpose.msra.mxu0 0
      %3958 = vmatprep.subr.bf16.mxu0 0
      %3959 = vmatpush1.bf16.xpose.msra.mxu0 0
      %3960 = vmatprep.subr.bf16.mxu0 0
      %3961 = vmatpush1.bf16.xpose.msra.mxu0 0
      %3962 = vmatprep.subr.bf16.mxu0 0
      %3963 = vmatpush1.bf16.xpose.msra.mxu0 0
      %3964 = vmatprep.subr.bf16.mxu0 0
      %3965 = vmatpush1.bf16.xpose.msra.mxu0 0
      %3966 = vmatprep.subr.bf16.mxu0 0
      %3967 = vmatpush1.bf16.xpose.msra.mxu0 0
      %3968 = vmatprep.mubr.bf16.mxu0 0
      %3969 = vmatmul.mubr.bf16.gmra.mrb[0].mxu0 %v3907
      %v3970 = vpop.f32.mrb[0].mxu0
      %v3971 = vadd.f32 %v3690, %v3970
      %v3972 = vpop.f32.mrb[0].mxu0
      %v3973 = vpop.f32.mrb[0].mxu0
      %v3974 = vadd.f32 %v3691, %v3973
      %v3975 = vpop.f32.mrb[0].mxu0
      %3976 = vmatprep.mubr.bf16.mxu0 0
      %3977 = vmatmul.mubr.bf16.gmra.mrb[0].mxu0 %v3910
      %v3978 = vpop.f32.mrb[0].mxu0
      %v3979 = vadd.f32 %v3692, %v3978
      %v3980 = vpop.f32.mrb[0].mxu0
      %v3981 = vpop.f32.mrb[0].mxu0
      %v3982 = vadd.f32 %v3693, %v3981
      %v3983 = vpop.f32.mrb[0].mxu0
      %3984 = vmatprep.mubr.bf16.mxu0 0
      %3985 = vmatmul.mubr.bf16.gmra.mrb[0].mxu0 %v3913
      %v3986 = vpop.f32.mrb[0].mxu0
      %v3987 = vadd.f32 %v3694, %v3986
      %v3988 = vpop.f32.mrb[0].mxu0
      %v3989 = vpop.f32.mrb[0].mxu0
      %v3990 = vadd.f32 %v3695, %v3989
      %v3991 = vpop.f32.mrb[0].mxu0
      %3992 = vmatprep.mubr.bf16.mxu0 0
      %3993 = vmatmul.mubr.bf16.gmra.mrb[0].mxu0 %v3916
      %v3994 = vpop.f32.mrb[0].mxu0
      %v3995 = vadd.f32 %v3696, %v3994
      %v3996 = vpop.f32.mrb[0].mxu0
      %v3997 = vpop.f32.mrb[0].mxu0
      %v3998 = vadd.f32 %v3697, %v3997
      %v3999 = vpop.f32.mrb[0].mxu0
      %4000 = vmatprep.mubr.bf16.mxu0 0
      %4001 = vmatmul.mubr.bf16.gmra.mrb[0].mxu0 %v3919
      %v4002 = vpop.f32.mrb[0].mxu0
      %v4003 = vadd.f32 %v3698, %v4002
      %v4004 = vpop.f32.mrb[0].mxu0
      %v4005 = vpop.f32.mrb[0].mxu0
      %v4006 = vadd.f32 %v3699, %v4005
      %v4007 = vpop.f32.mrb[0].mxu0
      %4008 = vdwg.mxu0
      %v4010 = vsel %vm541, %v3562, 0
      %v4013 = vsel %vm541, %v3563, 0
      %v4016 = vsel %vm541, %v3564, 0
      %v4019 = vsel %vm541, %v3565, 0
      %v4022 = vsel %vm541, %v3566, 0
      %v4025 = vsel %vm541, %v3623, 0
      %v4028 = vsel %vm541, %v3624, 0
      %v4031 = vsel %vm541, %v3625, 0
      %v4034 = vsel %vm541, %v3626, 0
      %v4037 = vsel %vm541, %v3627, 0
      %4039 = vmatprep.subr.bf16.mxu0 0
      %4040 = vmatpush1.bf16.xpose.msra.mxu0 %v4025
      %4041 = vmatprep.subr.bf16.mxu0 0
      %4042 = vmatpush1.bf16.xpose.msra.mxu0 %v4028
      %4043 = vmatprep.subr.bf16.mxu0 0
      %4044 = vmatpush1.bf16.xpose.msra.mxu0 %v4031
      %4045 = vmatprep.subr.bf16.mxu0 0
      %4046 = vmatpush1.bf16.xpose.msra.mxu0 %v4034
      %4047 = vmatprep.subr.bf16.mxu0 0
      %4048 = vmatpush1.bf16.xpose.msra.mxu0 %v4037
      %4049 = vmatprep.subr.bf16.mxu0 0
      %4050 = vmatpush1.bf16.xpose.msra.mxu0 0
      %4051 = vmatprep.subr.bf16.mxu0 0
      %4052 = vmatpush1.bf16.xpose.msra.mxu0 0
      %4053 = vmatprep.subr.bf16.mxu0 0
      %4054 = vmatpush1.bf16.xpose.msra.mxu0 0
      %4055 = vmatprep.subr.bf16.mxu0 0
      %4056 = vmatpush1.bf16.xpose.msra.mxu0 0
      %4057 = vmatprep.subr.bf16.mxu0 0
      %4058 = vmatpush1.bf16.xpose.msra.mxu0 0
      %4059 = vmatprep.subr.bf16.mxu0 0
      %4060 = vmatpush1.bf16.xpose.msra.mxu0 0
      %4061 = vmatprep.subr.bf16.mxu0 0
      %4062 = vmatpush1.bf16.xpose.msra.mxu0 0
      %4063 = vmatprep.subr.bf16.mxu0 0
      %4064 = vmatpush1.bf16.xpose.msra.mxu0 0
      %4065 = vmatprep.subr.bf16.mxu0 0
      %4066 = vmatpush1.bf16.xpose.msra.mxu0 0
      %4067 = vmatprep.subr.bf16.mxu0 0
      %4068 = vmatpush1.bf16.xpose.msra.mxu0 0
      %4069 = vmatprep.subr.bf16.mxu0 0
      %4070 = vmatpush1.bf16.xpose.msra.mxu0 0
      %4071 = vmatprep.mubr.bf16.mxu0 0
      %4072 = vmatmul.mubr.bf16.gmra.mrb[0].mxu0 %v4010
      %v4073 = vpop.f32.mrb[0].mxu0
      %v4074 = vadd.f32 %v3690, %v4073
      %v4075 = vpop.f32.mrb[0].mxu0
      %v4076 = vpop.f32.mrb[0].mxu0
      %v4077 = vadd.f32 %v3691, %v4076
      %v4078 = vpop.f32.mrb[0].mxu0
      %4079 = vmatprep.mubr.bf16.mxu0 0
      %4080 = vmatmul.mubr.bf16.gmra.mrb[0].mxu0 %v4013
      %v4081 = vpop.f32.mrb[0].mxu0
      %v4082 = vadd.f32 %v3692, %v4081
      %v4083 = vpop.f32.mrb[0].mxu0
      %v4084 = vpop.f32.mrb[0].mxu0
      %v4085 = vadd.f32 %v3693, %v4084
      %v4086 = vpop.f32.mrb[0].mxu0
      %4087 = vmatprep.mubr.bf16.mxu0 0
      %4088 = vmatmul.mubr.bf16.gmra.mrb[0].mxu0 %v4016
      %v4089 = vpop.f32.mrb[0].mxu0
      %v4090 = vadd.f32 %v3694, %v4089
      %v4091 = vpop.f32.mrb[0].mxu0
      %v4092 = vpop.f32.mrb[0].mxu0
      %v4093 = vadd.f32 %v3695, %v4092
      %v4094 = vpop.f32.mrb[0].mxu0
      %4095 = vmatprep.mubr.bf16.mxu0 0
      %4096 = vmatmul.mubr.bf16.gmra.mrb[0].mxu0 %v4019
      %v4097 = vpop.f32.mrb[0].mxu0
      %v4098 = vadd.f32 %v3696, %v4097
      %v4099 = vpop.f32.mrb[0].mxu0
      %v4100 = vpop.f32.mrb[0].mxu0
      %v4101 = vadd.f32 %v3697, %v4100
      %v4102 = vpop.f32.mrb[0].mxu0
      %4103 = vmatprep.mubr.bf16.mxu0 0
      %4104 = vmatmul.mubr.bf16.gmra.mrb[0].mxu0 %v4022
      %v4105 = vpop.f32.mrb[0].mxu0
      %v4106 = vadd.f32 %v3698, %v4105
      %v4107 = vpop.f32.mrb[0].mxu0
      %v4108 = vpop.f32.mrb[0].mxu0
      %v4109 = vadd.f32 %v3699, %v4108
      %v4110 = vpop.f32.mrb[0].mxu0
      %4111 = vdwg.mxu0
      %v4112 = vsel %vm954, %v3765, -inf
      %4113 = vmax.xlane.f32.xlu0 %v4112
      %v4114 = vpop.xlane.xlu0 %4113
      %v4115 = vsel %vm954, %v3768, -inf
      %4116 = vmax.xlane.f32.xlu0 %v4115
      %v4117 = vpop.xlane.xlu0 %4116
      %v4118 = vsel %vm954, %v3773, -inf
      %4119 = vmax.xlane.f32.xlu0 %v4118
      %v4120 = vpop.xlane.xlu0 %4119
      %v4121 = vsel %vm954, %v3776, -inf
      %4122 = vmax.xlane.f32.xlu0 %v4121
      %v4123 = vpop.xlane.xlu0 %4122
      %v4124 = vsel %vm954, %v3781, -inf
      %4125 = vmax.xlane.f32.xlu0 %v4124
      %v4126 = vpop.xlane.xlu0 %4125
      %v4127 = vsel %vm954, %v3784, -inf
      %4128 = vmax.xlane.f32.xlu0 %v4127
      %v4129 = vpop.xlane.xlu0 %4128
      %v4130 = vsel %vm954, %v3789, -inf
      %4131 = vmax.xlane.f32.xlu0 %v4130
      %v4132 = vpop.xlane.xlu0 %4131
      %v4133 = vsel %vm954, %v3792, -inf
      %4134 = vmax.xlane.f32.xlu0 %v4133
      %v4135 = vpop.xlane.xlu0 %4134
      %v4136 = vsel %vm954, %v3797, -inf
      %4137 = vmax.xlane.f32.xlu0 %v4136
      %v4138 = vpop.xlane.xlu0 %4137
      %v4139 = vsel %vm954, %v3800, -inf
      %4140 = vmax.xlane.f32.xlu0 %v4139
      %v4141 = vpop.xlane.xlu0 %4140
      %v4142 = vsel %vm954, %v3868, -inf
      %4143 = vmax.xlane.f32.xlu0 %v4142
      %v4144 = vpop.xlane.xlu0 %4143
      %v4145 = vsel %vm954, %v3871, -inf
      %4146 = vmax.xlane.f32.xlu0 %v4145
      %v4147 = vpop.xlane.xlu0 %4146
      %v4148 = vsel %vm954, %v3876, -inf
      %4149 = vmax.xlane.f32.xlu0 %v4148
      %v4150 = vpop.xlane.xlu0 %4149
      %v4151 = vsel %vm954, %v3879, -inf
      %4152 = vmax.xlane.f32.xlu0 %v4151
      %v4153 = vpop.xlane.xlu0 %4152
      %v4154 = vsel %vm954, %v3884, -inf
      %4155 = vmax.xlane.f32.xlu0 %v4154
      %v4156 = vpop.xlane.xlu0 %4155
      %v4157 = vsel %vm954, %v3887, -inf
      %4158 = vmax.xlane.f32.xlu0 %v4157
      %v4159 = vpop.xlane.xlu0 %4158
      %v4160 = vsel %vm954, %v3892, -inf
      %4161 = vmax.xlane.f32.xlu0 %v4160
      %v4162 = vpop.xlane.xlu0 %4161
      %v4163 = vsel %vm954, %v3895, -inf
      %4164 = vmax.xlane.f32.xlu0 %v4163
      %v4165 = vpop.xlane.xlu0 %4164
      %v4166 = vsel %vm954, %v3900, -inf
      %4167 = vmax.xlane.f32.xlu0 %v4166
      %v4168 = vpop.xlane.xlu0 %4167
      %v4169 = vsel %vm954, %v3903, -inf
      %4170 = vmax.xlane.f32.xlu0 %v4169
      %v4171 = vpop.xlane.xlu0 %4170
      %v4172 = vsel %vm954, %v3971, -inf
      %4173 = vmax.xlane.f32.xlu0 %v4172
      %v4174 = vpop.xlane.xlu0 %4173
      %v4175 = vsel %vm954, %v3974, -inf
      %4176 = vmax.xlane.f32.xlu0 %v4175
      %v4177 = vpop.xlane.xlu0 %4176
      %v4178 = vsel %vm954, %v3979, -inf
      %4179 = vmax.xlane.f32.xlu0 %v4178
      %v4180 = vpop.xlane.xlu0 %4179
      %v4181 = vsel %vm954, %v3982, -inf
      %4182 = vmax.xlane.f32.xlu0 %v4181
      %v4183 = vpop.xlane.xlu0 %4182
      %v4184 = vsel %vm954, %v3987, -inf
      %4185 = vmax.xlane.f32.xlu0 %v4184
      %v4186 = vpop.xlane.xlu0 %4185
      %v4187 = vsel %vm954, %v3990, -inf
      %4188 = vmax.xlane.f32.xlu0 %v4187
      %v4189 = vpop.xlane.xlu0 %4188
      %v4190 = vsel %vm954, %v3995, -inf
      %4191 = vmax.xlane.f32.xlu0 %v4190
      %v4192 = vpop.xlane.xlu0 %4191
      %v4193 = vsel %vm954, %v3998, -inf
      %4194 = vmax.xlane.f32.xlu0 %v4193
      %v4195 = vpop.xlane.xlu0 %4194
      %v4196 = vsel %vm954, %v4003, -inf
      %4197 = vmax.xlane.f32.xlu0 %v4196
      %v4198 = vpop.xlane.xlu0 %4197
      %v4199 = vsel %vm954, %v4006, -inf
      %4200 = vmax.xlane.f32.xlu0 %v4199
      %v4201 = vpop.xlane.xlu0 %4200
      %v4202 = vsel %vm954, %v4074, -inf
      %4203 = vmax.xlane.f32.xlu0 %v4202
      %v4204 = vpop.xlane.xlu0 %4203
      %v4205 = vsel %vm954, %v4077, -inf
      %4206 = vmax.xlane.f32.xlu0 %v4205
      %v4207 = vpop.xlane.xlu0 %4206
      %v4208 = vsel %vm954, %v4082, -inf
      %4209 = vmax.xlane.f32.xlu0 %v4208
      %v4210 = vpop.xlane.xlu0 %4209
      %v4211 = vsel %vm954, %v4085, -inf
      %4212 = vmax.xlane.f32.xlu0 %v4211
      %v4213 = vpop.xlane.xlu0 %4212
      %v4214 = vsel %vm954, %v4090, -inf
      %4215 = vmax.xlane.f32.xlu0 %v4214
      %v4216 = vpop.xlane.xlu0 %4215
      %v4217 = vsel %vm954, %v4093, -inf
      %4218 = vmax.xlane.f32.xlu0 %v4217
      %v4219 = vpop.xlane.xlu0 %4218
      %v4220 = vsel %vm954, %v4098, -inf
      %4221 = vmax.xlane.f32.xlu0 %v4220
      %v4222 = vpop.xlane.xlu0 %4221
      %v4223 = vsel %vm954, %v4101, -inf
      %4224 = vmax.xlane.f32.xlu0 %v4223
      %v4225 = vpop.xlane.xlu0 %4224
      %v4226 = vsel %vm954, %v4106, -inf
      %4227 = vmax.xlane.f32.xlu0 %v4226
      %v4228 = vpop.xlane.xlu0 %4227
      %v4229 = vsel %vm954, %v4109, -inf
      %4230 = vmax.xlane.f32.xlu0 %v4229
      %v4231 = vpop.xlane.xlu0 %4230
      %v4232 = vsub.f32 %v3765, %v4114
      %v4233 = vsub.f32 %v3768, %v4117
      %v4234 = vsub.f32 %v3773, %v4120
      %v4235 = vsub.f32 %v3776, %v4123
      %v4236 = vsub.f32 %v3781, %v4126
      %v4237 = vsub.f32 %v3784, %v4129
      %v4238 = vsub.f32 %v3789, %v4132
      %v4239 = vsub.f32 %v3792, %v4135
      %v4240 = vsub.f32 %v3797, %v4138
      %v4241 = vsub.f32 %v3800, %v4141
      %v4242 = vsub.f32 %v3868, %v4144
      %v4243 = vsub.f32 %v3871, %v4147
      %v4244 = vsub.f32 %v3876, %v4150
      %v4245 = vsub.f32 %v3879, %v4153
      %v4246 = vsub.f32 %v3884, %v4156
      %v4247 = vsub.f32 %v3887, %v4159
      %v4248 = vsub.f32 %v3892, %v4162
      %v4249 = vsub.f32 %v3895, %v4165
      %v4250 = vsub.f32 %v3900, %v4168
      %v4251 = vsub.f32 %v3903, %v4171
      %v4252 = vsub.f32 %v3971, %v4174
      %v4253 = vsub.f32 %v3974, %v4177
      %v4254 = vsub.f32 %v3979, %v4180
      %v4255 = vsub.f32 %v3982, %v4183
      %v4256 = vsub.f32 %v3987, %v4186
      %v4257 = vsub.f32 %v3990, %v4189
      %v4258 = vsub.f32 %v3995, %v4192
      %v4259 = vsub.f32 %v3998, %v4195
      %v4260 = vsub.f32 %v4003, %v4198
      %v4261 = vsub.f32 %v4006, %v4201
      %v4262 = vsub.f32 %v4074, %v4204
      %v4263 = vsub.f32 %v4077, %v4207
      %v4264 = vsub.f32 %v4082, %v4210
      %v4265 = vsub.f32 %v4085, %v4213
      %v4266 = vsub.f32 %v4090, %v4216
      %v4267 = vsub.f32 %v4093, %v4219
      %v4268 = vsub.f32 %v4098, %v4222
      %v4269 = vsub.f32 %v4101, %v4225
      %v4270 = vsub.f32 %v4106, %v4228
      %v4271 = vsub.f32 %v4109, %v4231
      %v4272 = vmul.f32 %v4232, 1.442695
      %v4273 = vpow.pop %v4272
      %v4274 = vmul.f32 %v4233, 1.442695
      %v4275 = vpow.pop %v4274
      %v4276 = vmul.f32 %v4234, 1.442695
      %v4277 = vpow.pop %v4276
      %v4278 = vmul.f32 %v4235, 1.442695
      %v4279 = vpow.pop %v4278
      %v4280 = vmul.f32 %v4236, 1.442695
      %v4281 = vpow.pop %v4280
      %v4282 = vmul.f32 %v4237, 1.442695
      %v4283 = vpow.pop %v4282
      %v4284 = vmul.f32 %v4238, 1.442695
      %v4285 = vpow.pop %v4284
      %v4286 = vmul.f32 %v4239, 1.442695
      %v4287 = vpow.pop %v4286
      %v4288 = vmul.f32 %v4240, 1.442695
      %v4289 = vpow.pop %v4288
      %v4290 = vmul.f32 %v4241, 1.442695
      %v4291 = vpow.pop %v4290
      %v4292 = vmul.f32 %v4242, 1.442695
      %v4293 = vpow.pop %v4292
      %v4294 = vmul.f32 %v4243, 1.442695
      %v4295 = vpow.pop %v4294
      %v4296 = vmul.f32 %v4244, 1.442695
      %v4297 = vpow.pop %v4296
      %v4298 = vmul.f32 %v4245, 1.442695
      %v4299 = vpow.pop %v4298
      %v4300 = vmul.f32 %v4246, 1.442695
      %v4301 = vpow.pop %v4300
      %v4302 = vmul.f32 %v4247, 1.442695
      %v4303 = vpow.pop %v4302
      %v4304 = vmul.f32 %v4248, 1.442695
      %v4305 = vpow.pop %v4304
      %v4306 = vmul.f32 %v4249, 1.442695
      %v4307 = vpow.pop %v4306
      %v4308 = vmul.f32 %v4250, 1.442695
      %v4309 = vpow.pop %v4308
      %v4310 = vmul.f32 %v4251, 1.442695
      %v4311 = vpow.pop %v4310
      %v4312 = vmul.f32 %v4252, 1.442695
      %v4313 = vpow.pop %v4312
      %v4314 = vmul.f32 %v4253, 1.442695
      %v4315 = vpow.pop %v4314
      %v4316 = vmul.f32 %v4254, 1.442695
      %v4317 = vpow.pop %v4316
      %v4318 = vmul.f32 %v4255, 1.442695
      %v4319 = vpow.pop %v4318
      %v4320 = vmul.f32 %v4256, 1.442695
      %v4321 = vpow.pop %v4320
      %v4322 = vmul.f32 %v4257, 1.442695
      %v4323 = vpow.pop %v4322
      %v4324 = vmul.f32 %v4258, 1.442695
      %v4325 = vpow.pop %v4324
      %v4326 = vmul.f32 %v4259, 1.442695
      %v4327 = vpow.pop %v4326
      %v4328 = vmul.f32 %v4260, 1.442695
      %v4329 = vpow.pop %v4328
      %v4330 = vmul.f32 %v4261, 1.442695
      %v4331 = vpow.pop %v4330
      %v4332 = vmul.f32 %v4262, 1.442695
      %v4333 = vpow.pop %v4332
      %v4334 = vmul.f32 %v4263, 1.442695
      %v4335 = vpow.pop %v4334
      %v4336 = vmul.f32 %v4264, 1.442695
      %v4337 = vpow.pop %v4336
      %v4338 = vmul.f32 %v4265, 1.442695
      %v4339 = vpow.pop %v4338
      %v4340 = vmul.f32 %v4266, 1.442695
      %v4341 = vpow.pop %v4340
      %v4342 = vmul.f32 %v4267, 1.442695
      %v4343 = vpow.pop %v4342
      %v4344 = vmul.f32 %v4268, 1.442695
      %v4345 = vpow.pop %v4344
      %v4346 = vmul.f32 %v4269, 1.442695
      %v4347 = vpow.pop %v4346
      %v4348 = vmul.f32 %v4270, 1.442695
      %v4349 = vpow.pop %v4348
      %v4350 = vmul.f32 %v4271, 1.442695
      %v4351 = vpow.pop %v4350
      %v4352 = vsel %vm954, %v4273, 0.0
      %4353 = vadd.xlane.f32.xlu0 %v4352
      %v4354 = vpop.xlane.xlu0 %4353
      %v4355 = vsel %vm954, %v4275, 0.0
      %4356 = vadd.xlane.f32.xlu0 %v4355
      %v4357 = vpop.xlane.xlu0 %4356
      %v4358 = vsel %vm954, %v4277, 0.0
      %4359 = vadd.xlane.f32.xlu0 %v4358
      %v4360 = vpop.xlane.xlu0 %4359
      %v4361 = vsel %vm954, %v4279, 0.0
      %4362 = vadd.xlane.f32.xlu0 %v4361
      %v4363 = vpop.xlane.xlu0 %4362
      %v4364 = vsel %vm954, %v4281, 0.0
      %4365 = vadd.xlane.f32.xlu0 %v4364
      %v4366 = vpop.xlane.xlu0 %4365
      %v4367 = vsel %vm954, %v4283, 0.0
      %4368 = vadd.xlane.f32.xlu0 %v4367
      %v4369 = vpop.xlane.xlu0 %4368
      %v4370 = vsel %vm954, %v4285, 0.0
      %4371 = vadd.xlane.f32.xlu0 %v4370
      %v4372 = vpop.xlane.xlu0 %4371
      %v4373 = vsel %vm954, %v4287, 0.0
      %4374 = vadd.xlane.f32.xlu0 %v4373
      %v4375 = vpop.xlane.xlu0 %4374
      %v4376 = vsel %vm954, %v4289, 0.0
      %4377 = vadd.xlane.f32.xlu0 %v4376
      %v4378 = vpop.xlane.xlu0 %4377
      %v4379 = vsel %vm954, %v4291, 0.0
      %4380 = vadd.xlane.f32.xlu0 %v4379
      %v4381 = vpop.xlane.xlu0 %4380
      %v4382 = vsel %vm954, %v4293, 0.0
      %4383 = vadd.xlane.f32.xlu0 %v4382
      %v4384 = vpop.xlane.xlu0 %4383
      %v4385 = vsel %vm954, %v4295, 0.0
      %4386 = vadd.xlane.f32.xlu0 %v4385
      %v4387 = vpop.xlane.xlu0 %4386
      %v4388 = vsel %vm954, %v4297, 0.0
      %4389 = vadd.xlane.f32.xlu0 %v4388
      %v4390 = vpop.xlane.xlu0 %4389
      %v4391 = vsel %vm954, %v4299, 0.0
      %4392 = vadd.xlane.f32.xlu0 %v4391
      %v4393 = vpop.xlane.xlu0 %4392
      %v4394 = vsel %vm954, %v4301, 0.0
      %4395 = vadd.xlane.f32.xlu0 %v4394
      %v4396 = vpop.xlane.xlu0 %4395
      %v4397 = vsel %vm954, %v4303, 0.0
      %4398 = vadd.xlane.f32.xlu0 %v4397
      %v4399 = vpop.xlane.xlu0 %4398
      %v4400 = vsel %vm954, %v4305, 0.0
      %4401 = vadd.xlane.f32.xlu0 %v4400
      %v4402 = vpop.xlane.xlu0 %4401
      %v4403 = vsel %vm954, %v4307, 0.0
      %4404 = vadd.xlane.f32.xlu0 %v4403
      %v4405 = vpop.xlane.xlu0 %4404
      %v4406 = vsel %vm954, %v4309, 0.0
      %4407 = vadd.xlane.f32.xlu0 %v4406
      %v4408 = vpop.xlane.xlu0 %4407
      %v4409 = vsel %vm954, %v4311, 0.0
      %4410 = vadd.xlane.f32.xlu0 %v4409
      %v4411 = vpop.xlane.xlu0 %4410
      %v4412 = vsel %vm954, %v4313, 0.0
      %4413 = vadd.xlane.f32.xlu0 %v4412
      %v4414 = vpop.xlane.xlu0 %4413
      %v4415 = vsel %vm954, %v4315, 0.0
      %4416 = vadd.xlane.f32.xlu0 %v4415
      %v4417 = vpop.xlane.xlu0 %4416
      %v4418 = vsel %vm954, %v4317, 0.0
      %4419 = vadd.xlane.f32.xlu0 %v4418
      %v4420 = vpop.xlane.xlu0 %4419
      %v4421 = vsel %vm954, %v4319, 0.0
      %4422 = vadd.xlane.f32.xlu0 %v4421
      %v4423 = vpop.xlane.xlu0 %4422
      %v4424 = vsel %vm954, %v4321, 0.0
      %4425 = vadd.xlane.f32.xlu0 %v4424
      %v4426 = vpop.xlane.xlu0 %4425
      %v4427 = vsel %vm954, %v4323, 0.0
      %4428 = vadd.xlane.f32.xlu0 %v4427
      %v4429 = vpop.xlane.xlu0 %4428
      %v4430 = vsel %vm954, %v4325, 0.0
      %4431 = vadd.xlane.f32.xlu0 %v4430
      %v4432 = vpop.xlane.xlu0 %4431
      %v4433 = vsel %vm954, %v4327, 0.0
      %4434 = vadd.xlane.f32.xlu0 %v4433
      %v4435 = vpop.xlane.xlu0 %4434
      %v4436 = vsel %vm954, %v4329, 0.0
      %4437 = vadd.xlane.f32.xlu0 %v4436
      %v4438 = vpop.xlane.xlu0 %4437
      %v4439 = vsel %vm954, %v4331, 0.0
      %4440 = vadd.xlane.f32.xlu0 %v4439
      %v4441 = vpop.xlane.xlu0 %4440
      %v4442 = vsel %vm954, %v4333, 0.0
      %4443 = vadd.xlane.f32.xlu0 %v4442
      %v4444 = vpop.xlane.xlu0 %4443
      %v4445 = vsel %vm954, %v4335, 0.0
      %4446 = vadd.xlane.f32.xlu0 %v4445
      %v4447 = vpop.xlane.xlu0 %4446
      %v4448 = vsel %vm954, %v4337, 0.0
      %4449 = vadd.xlane.f32.xlu0 %v4448
      %v4450 = vpop.xlane.xlu0 %4449
      %v4451 = vsel %vm954, %v4339, 0.0
      %4452 = vadd.xlane.f32.xlu0 %v4451
      %v4453 = vpop.xlane.xlu0 %4452
      %v4454 = vsel %vm954, %v4341, 0.0
      %4455 = vadd.xlane.f32.xlu0 %v4454
      %v4456 = vpop.xlane.xlu0 %4455
      %v4457 = vsel %vm954, %v4343, 0.0
      %4458 = vadd.xlane.f32.xlu0 %v4457
      %v4459 = vpop.xlane.xlu0 %4458
      %v4460 = vsel %vm954, %v4345, 0.0
      %4461 = vadd.xlane.f32.xlu0 %v4460
      %v4462 = vpop.xlane.xlu0 %4461
      %v4463 = vsel %vm954, %v4347, 0.0
      %4464 = vadd.xlane.f32.xlu0 %v4463
      %v4465 = vpop.xlane.xlu0 %4464
      %v4466 = vsel %vm954, %v4349, 0.0
      %4467 = vadd.xlane.f32.xlu0 %v4466
      %v4468 = vpop.xlane.xlu0 %4467
      %v4469 = vsel %vm954, %v4351, 0.0
      %4470 = vadd.xlane.f32.xlu0 %v4469
      %v4471 = vpop.xlane.xlu0 %4470
      %v4472 = vrcp.pop %v4354
      %v4473 = vrcp.pop %v4357
      %v4474 = vrcp.pop %v4360
      %v4475 = vrcp.pop %v4363
      %v4476 = vrcp.pop %v4366
      %v4477 = vrcp.pop %v4369
      %v4478 = vrcp.pop %v4372
      %v4479 = vrcp.pop %v4375
      %v4480 = vrcp.pop %v4378
      %v4481 = vrcp.pop %v4381
      %v4482 = vrcp.pop %v4384
      %v4483 = vrcp.pop %v4387
      %v4484 = vrcp.pop %v4390
      %v4485 = vrcp.pop %v4393
      %v4486 = vrcp.pop %v4396
      %v4487 = vrcp.pop %v4399
      %v4488 = vrcp.pop %v4402
      %v4489 = vrcp.pop %v4405
      %v4490 = vrcp.pop %v4408
      %v4491 = vrcp.pop %v4411
      %v4492 = vrcp.pop %v4414
      %v4493 = vrcp.pop %v4417
      %v4494 = vrcp.pop %v4420
      %v4495 = vrcp.pop %v4423
      %v4496 = vrcp.pop %v4426
      %v4497 = vrcp.pop %v4429
      %v4498 = vrcp.pop %v4432
      %v4499 = vrcp.pop %v4435
      %v4500 = vrcp.pop %v4438
      %v4501 = vrcp.pop %v4441
      %v4502 = vrcp.pop %v4444
      %v4503 = vrcp.pop %v4447
      %v4504 = vrcp.pop %v4450
      %v4505 = vrcp.pop %v4453
      %v4506 = vrcp.pop %v4456
      %v4507 = vrcp.pop %v4459
      %v4508 = vrcp.pop %v4462
      %v4509 = vrcp.pop %v4465
      %v4510 = vrcp.pop %v4468
      %v4511 = vrcp.pop %v4471
      %v4512 = vmul.f32 %v4273, %v4472
      %v4513 = vmul.f32 %v4275, %v4473
      %v4514 = vmul.f32 %v4277, %v4474
      %v4515 = vmul.f32 %v4279, %v4475
      %v4516 = vmul.f32 %v4281, %v4476
      %v4517 = vmul.f32 %v4283, %v4477
      %v4518 = vmul.f32 %v4285, %v4478
      %v4519 = vmul.f32 %v4287, %v4479
      %v4520 = vmul.f32 %v4289, %v4480
      %v4521 = vmul.f32 %v4291, %v4481
      %v4522 = vmul.f32 %v4293, %v4482
      %v4523 = vmul.f32 %v4295, %v4483
      %v4524 = vmul.f32 %v4297, %v4484
      %v4525 = vmul.f32 %v4299, %v4485
      %v4526 = vmul.f32 %v4301, %v4486
      %v4527 = vmul.f32 %v4303, %v4487
      %v4528 = vmul.f32 %v4305, %v4488
      %v4529 = vmul.f32 %v4307, %v4489
      %v4530 = vmul.f32 %v4309, %v4490
      %v4531 = vmul.f32 %v4311, %v4491
      %v4532 = vmul.f32 %v4313, %v4492
      %v4533 = vmul.f32 %v4315, %v4493
      %v4534 = vmul.f32 %v4317, %v4494
      %v4535 = vmul.f32 %v4319, %v4495
      %v4536 = vmul.f32 %v4321, %v4496
      %v4537 = vmul.f32 %v4323, %v4497
      %v4538 = vmul.f32 %v4325, %v4498
      %v4539 = vmul.f32 %v4327, %v4499
      %v4540 = vmul.f32 %v4329, %v4500
      %v4541 = vmul.f32 %v4331, %v4501
      %v4542 = vmul.f32 %v4333, %v4502
      %v4543 = vmul.f32 %v4335, %v4503
      %v4544 = vmul.f32 %v4337, %v4504
      %v4545 = vmul.f32 %v4339, %v4505
      %v4546 = vmul.f32 %v4341, %v4506
      %v4547 = vmul.f32 %v4343, %v4507
      %v4548 = vmul.f32 %v4345, %v4508
      %v4549 = vmul.f32 %v4347, %v4509
      %v4550 = vmul.f32 %v4349, %v4510
      %v4551 = vmul.f32 %v4351, %v4511
      %v4552 = vpack.c.bf16 %v4513, %v4512
      %v4553 = vpack.c.bf16 %v4515, %v4514
      %v4554 = vpack.c.bf16 %v4517, %v4516
      %v4555 = vpack.c.bf16 %v4519, %v4518
      %v4556 = vpack.c.bf16 %v4521, %v4520
      %v4557 = vpack.c.bf16 %v4523, %v4522
      %v4558 = vpack.c.bf16 %v4525, %v4524
      %v4559 = vpack.c.bf16 %v4527, %v4526
      %v4560 = vpack.c.bf16 %v4529, %v4528
      %v4561 = vpack.c.bf16 %v4531, %v4530
      %v4562 = vpack.c.bf16 %v4533, %v4532
      %v4563 = vpack.c.bf16 %v4535, %v4534
      %v4564 = vpack.c.bf16 %v4537, %v4536
      %v4565 = vpack.c.bf16 %v4539, %v4538
      %v4566 = vpack.c.bf16 %v4541, %v4540
      %v4567 = vpack.c.bf16 %v4543, %v4542
      %v4568 = vpack.c.bf16 %v4545, %v4544
      %v4569 = vpack.c.bf16 %v4547, %v4546
      %v4570 = vpack.c.bf16 %v4549, %v4548
      %v4571 = vpack.c.bf16 %v4551, %v4550
      %v4573 = vsel %vm954, %v4552, 0
      %v4576 = vsel %vm954, %v4553, 0
      %v4579 = vsel %vm954, %v4554, 0
      %v4582 = vsel %vm954, %v4555, 0
      %v4585 = vsel %vm954, %v4556, 0
      %4587 = vmatprep.subr.bf16.mxu0 0
      %4588 = vmatpush1.bf16.msra.mxu0 %v3669
      %4589 = vmatprep.subr.bf16.mxu0 0
      %4590 = vmatpush1.bf16.msra.mxu0 %v3670
      %4591 = vmatprep.subr.bf16.mxu0 0
      %4592 = vmatpush1.bf16.msra.mxu0 %v3671
      %4593 = vmatprep.subr.bf16.mxu0 0
      %4594 = vmatpush1.bf16.msra.mxu0 %v3672
      %4595 = vmatprep.subr.bf16.mxu0 0
      %4596 = vmatpush1.bf16.msra.mxu0 %v3673
      %4597 = vmatprep.subr.bf16.mxu0 0
      %4598 = vmatpush1.bf16.msra.mxu0 0
      %4599 = vmatprep.subr.bf16.mxu0 0
      %4600 = vmatpush1.bf16.msra.mxu0 0
      %4601 = vmatprep.subr.bf16.mxu0 0
      %4602 = vmatpush1.bf16.msra.mxu0 0
      %4603 = vmatprep.subr.bf16.mxu0 0
      %4604 = vmatpush1.bf16.msra.mxu0 0
      %4605 = vmatprep.subr.bf16.mxu0 0
      %4606 = vmatpush1.bf16.msra.mxu0 0
      %4607 = vmatprep.subr.bf16.mxu0 0
      %4608 = vmatpush1.bf16.msra.mxu0 0
      %4609 = vmatprep.subr.bf16.mxu0 0
      %4610 = vmatpush1.bf16.msra.mxu0 0
      %4611 = vmatprep.subr.bf16.mxu0 0
      %4612 = vmatpush1.bf16.msra.mxu0 0
      %4613 = vmatprep.subr.bf16.mxu0 0
      %4614 = vmatpush1.bf16.msra.mxu0 0
      %4615 = vmatprep.subr.bf16.mxu0 0
      %4616 = vmatpush1.bf16.msra.mxu0 0
      %4617 = vmatprep.subr.bf16.mxu0 0
      %4618 = vmatpush1.bf16.msra.mxu0 0
      %4619 = vmatprep.mubr.bf16.mxu0 0
      %4620 = vmatmul.mubr.bf16.gmra.mrb[0].mxu0 %v4573
      %v4621 = vpop.f32.mrb[0].mxu0
      %v4622 = vadd.f32 0.0, %v4621
      %v4623 = vpop.f32.mrb[0].mxu0
      %v4624 = vpop.f32.mrb[0].mxu0
      %v4625 = vadd.f32 0.0, %v4624
      %v4626 = vpop.f32.mrb[0].mxu0
      %4627 = vmatprep.mubr.bf16.mxu0 0
      %4628 = vmatmul.mubr.bf16.gmra.mrb[0].mxu0 %v4576
      %v4629 = vpop.f32.mrb[0].mxu0
      %v4630 = vadd.f32 0.0, %v4629
      %v4631 = vpop.f32.mrb[0].mxu0
      %v4632 = vpop.f32.mrb[0].mxu0
      %v4633 = vadd.f32 0.0, %v4632
      %v4634 = vpop.f32.mrb[0].mxu0
      %4635 = vmatprep.mubr.bf16.mxu0 0
      %4636 = vmatmul.mubr.bf16.gmra.mrb[0].mxu0 %v4579
      %v4637 = vpop.f32.mrb[0].mxu0
      %v4638 = vadd.f32 0.0, %v4637
      %v4639 = vpop.f32.mrb[0].mxu0
      %v4640 = vpop.f32.mrb[0].mxu0
      %v4641 = vadd.f32 0.0, %v4640
      %v4642 = vpop.f32.mrb[0].mxu0
      %4643 = vmatprep.mubr.bf16.mxu0 0
      %4644 = vmatmul.mubr.bf16.gmra.mrb[0].mxu0 %v4582
      %v4645 = vpop.f32.mrb[0].mxu0
      %v4646 = vadd.f32 0.0, %v4645
      %v4647 = vpop.f32.mrb[0].mxu0
      %v4648 = vpop.f32.mrb[0].mxu0
      %v4649 = vadd.f32 0.0, %v4648
      %v4650 = vpop.f32.mrb[0].mxu0
      %4651 = vmatprep.mubr.bf16.mxu0 0
      %4652 = vmatmul.mubr.bf16.gmra.mrb[0].mxu0 %v4585
      %v4653 = vpop.f32.mrb[0].mxu0
      %v4654 = vadd.f32 0.0, %v4653
      %v4655 = vpop.f32.mrb[0].mxu0
      %v4656 = vpop.f32.mrb[0].mxu0
      %v4657 = vadd.f32 0.0, %v4656
      %v4658 = vpop.f32.mrb[0].mxu0
      %4659 = vdwg.mxu0
      %v4661 = vsel %vm954, %v4557, 0
      %v4664 = vsel %vm954, %v4558, 0
      %v4667 = vsel %vm954, %v4559, 0
      %v4670 = vsel %vm954, %v4560, 0
      %v4673 = vsel %vm954, %v4561, 0
      %4675 = vmatprep.subr.bf16.mxu0 0
      %4676 = vmatpush1.bf16.msra.mxu0 %v3674
      %4677 = vmatprep.subr.bf16.mxu0 0
      %4678 = vmatpush1.bf16.msra.mxu0 %v3675
      %4679 = vmatprep.subr.bf16.mxu0 0
      %4680 = vmatpush1.bf16.msra.mxu0 %v3676
      %4681 = vmatprep.subr.bf16.mxu0 0
      %4682 = vmatpush1.bf16.msra.mxu0 %v3677
      %4683 = vmatprep.subr.bf16.mxu0 0
      %4684 = vmatpush1.bf16.msra.mxu0 %v3678
      %4685 = vmatprep.subr.bf16.mxu0 0
      %4686 = vmatpush1.bf16.msra.mxu0 0
      %4687 = vmatprep.subr.bf16.mxu0 0
      %4688 = vmatpush1.bf16.msra.mxu0 0
      %4689 = vmatprep.subr.bf16.mxu0 0
      %4690 = vmatpush1.bf16.msra.mxu0 0
      %4691 = vmatprep.subr.bf16.mxu0 0
      %4692 = vmatpush1.bf16.msra.mxu0 0
      %4693 = vmatprep.subr.bf16.mxu0 0
      %4694 = vmatpush1.bf16.msra.mxu0 0
      %4695 = vmatprep.subr.bf16.mxu0 0
      %4696 = vmatpush1.bf16.msra.mxu0 0
      %4697 = vmatprep.subr.bf16.mxu0 0
      %4698 = vmatpush1.bf16.msra.mxu0 0
      %4699 = vmatprep.subr.bf16.mxu0 0
      %4700 = vmatpush1.bf16.msra.mxu0 0
      %4701 = vmatprep.subr.bf16.mxu0 0
      %4702 = vmatpush1.bf16.msra.mxu0 0
      %4703 = vmatprep.subr.bf16.mxu0 0
      %4704 = vmatpush1.bf16.msra.mxu0 0
      %4705 = vmatprep.subr.bf16.mxu0 0
      %4706 = vmatpush1.bf16.msra.mxu0 0
      %4707 = vmatprep.mubr.bf16.mxu0 0
      %4708 = vmatmul.mubr.bf16.gmra.mrb[0].mxu0 %v4661
      %v4709 = vpop.f32.mrb[0].mxu0
      %v4710 = vadd.f32 0.0, %v4709
      %v4711 = vpop.f32.mrb[0].mxu0
      %v4712 = vpop.f32.mrb[0].mxu0
      %v4713 = vadd.f32 0.0, %v4712
      %v4714 = vpop.f32.mrb[0].mxu0
      %4715 = vmatprep.mubr.bf16.mxu0 0
      %4716 = vmatmul.mubr.bf16.gmra.mrb[0].mxu0 %v4664
      %v4717 = vpop.f32.mrb[0].mxu0
      %v4718 = vadd.f32 0.0, %v4717
      %v4719 = vpop.f32.mrb[0].mxu0
      %v4720 = vpop.f32.mrb[0].mxu0
      %v4721 = vadd.f32 0.0, %v4720
      %v4722 = vpop.f32.mrb[0].mxu0
      %4723 = vmatprep.mubr.bf16.mxu0 0
      %4724 = vmatmul.mubr.bf16.gmra.mrb[0].mxu0 %v4667
      %v4725 = vpop.f32.mrb[0].mxu0
      %v4726 = vadd.f32 0.0, %v4725
      %v4727 = vpop.f32.mrb[0].mxu0
      %v4728 = vpop.f32.mrb[0].mxu0
      %v4729 = vadd.f32 0.0, %v4728
      %v4730 = vpop.f32.mrb[0].mxu0
      %4731 = vmatprep.mubr.bf16.mxu0 0
      %4732 = vmatmul.mubr.bf16.gmra.mrb[0].mxu0 %v4670
      %v4733 = vpop.f32.mrb[0].mxu0
      %v4734 = vadd.f32 0.0, %v4733
      %v4735 = vpop.f32.mrb[0].mxu0
      %v4736 = vpop.f32.mrb[0].mxu0
      %v4737 = vadd.f32 0.0, %v4736
      %v4738 = vpop.f32.mrb[0].mxu0
      %4739 = vmatprep.mubr.bf16.mxu0 0
      %4740 = vmatmul.mubr.bf16.gmra.mrb[0].mxu0 %v4673
      %v4741 = vpop.f32.mrb[0].mxu0
      %v4742 = vadd.f32 0.0, %v4741
      %v4743 = vpop.f32.mrb[0].mxu0
      %v4744 = vpop.f32.mrb[0].mxu0
      %v4745 = vadd.f32 0.0, %v4744
      %v4746 = vpop.f32.mrb[0].mxu0
      %4747 = vdwg.mxu0
      %v4749 = vsel %vm954, %v4562, 0
      %v4752 = vsel %vm954, %v4563, 0
      %v4755 = vsel %vm954, %v4564, 0
      %v4758 = vsel %vm954, %v4565, 0
      %v4761 = vsel %vm954, %v4566, 0
      %4763 = vmatprep.subr.bf16.mxu0 0
      %4764 = vmatpush1.bf16.msra.mxu0 %v3679
      %4765 = vmatprep.subr.bf16.mxu0 0
      %4766 = vmatpush1.bf16.msra.mxu0 %v3680
      %4767 = vmatprep.subr.bf16.mxu0 0
      %4768 = vmatpush1.bf16.msra.mxu0 %v3681
      %4769 = vmatprep.subr.bf16.mxu0 0
      %4770 = vmatpush1.bf16.msra.mxu0 %v3682
      %4771 = vmatprep.subr.bf16.mxu0 0
      %4772 = vmatpush1.bf16.msra.mxu0 %v3683
      %4773 = vmatprep.subr.bf16.mxu0 0
      %4774 = vmatpush1.bf16.msra.mxu0 0
      %4775 = vmatprep.subr.bf16.mxu0 0
      %4776 = vmatpush1.bf16.msra.mxu0 0
      %4777 = vmatprep.subr.bf16.mxu0 0
      %4778 = vmatpush1.bf16.msra.mxu0 0
      %4779 = vmatprep.subr.bf16.mxu0 0
      %4780 = vmatpush1.bf16.msra.mxu0 0
      %4781 = vmatprep.subr.bf16.mxu0 0
      %4782 = vmatpush1.bf16.msra.mxu0 0
      %4783 = vmatprep.subr.bf16.mxu0 0
      %4784 = vmatpush1.bf16.msra.mxu0 0
      %4785 = vmatprep.subr.bf16.mxu0 0
      %4786 = vmatpush1.bf16.msra.mxu0 0
      %4787 = vmatprep.subr.bf16.mxu0 0
      %4788 = vmatpush1.bf16.msra.mxu0 0
      %4789 = vmatprep.subr.bf16.mxu0 0
      %4790 = vmatpush1.bf16.msra.mxu0 0
      %4791 = vmatprep.subr.bf16.mxu0 0
      %4792 = vmatpush1.bf16.msra.mxu0 0
      %4793 = vmatprep.subr.bf16.mxu0 0
      %4794 = vmatpush1.bf16.msra.mxu0 0
      %4795 = vmatprep.mubr.bf16.mxu0 0
      %4796 = vmatmul.mubr.bf16.gmra.mrb[0].mxu0 %v4749
      %v4797 = vpop.f32.mrb[0].mxu0
      %v4798 = vadd.f32 0.0, %v4797
      %v4799 = vpop.f32.mrb[0].mxu0
      %v4800 = vpop.f32.mrb[0].mxu0
      %v4801 = vadd.f32 0.0, %v4800
      %v4802 = vpop.f32.mrb[0].mxu0
      %4803 = vmatprep.mubr.bf16.mxu0 0
      %4804 = vmatmul.mubr.bf16.gmra.mrb[0].mxu0 %v4752
      %v4805 = vpop.f32.mrb[0].mxu0
      %v4806 = vadd.f32 0.0, %v4805
      %v4807 = vpop.f32.mrb[0].mxu0
      %v4808 = vpop.f32.mrb[0].mxu0
      %v4809 = vadd.f32 0.0, %v4808
      %v4810 = vpop.f32.mrb[0].mxu0
      %4811 = vmatprep.mubr.bf16.mxu0 0
      %4812 = vmatmul.mubr.bf16.gmra.mrb[0].mxu0 %v4755
      %v4813 = vpop.f32.mrb[0].mxu0
      %v4814 = vadd.f32 0.0, %v4813
      %v4815 = vpop.f32.mrb[0].mxu0
      %v4816 = vpop.f32.mrb[0].mxu0
      %v4817 = vadd.f32 0.0, %v4816
      %v4818 = vpop.f32.mrb[0].mxu0
      %4819 = vmatprep.mubr.bf16.mxu0 0
      %4820 = vmatmul.mubr.bf16.gmra.mrb[0].mxu0 %v4758
      %v4821 = vpop.f32.mrb[0].mxu0
      %v4822 = vadd.f32 0.0, %v4821
      %v4823 = vpop.f32.mrb[0].mxu0
      %v4824 = vpop.f32.mrb[0].mxu0
      %v4825 = vadd.f32 0.0, %v4824
      %v4826 = vpop.f32.mrb[0].mxu0
      %4827 = vmatprep.mubr.bf16.mxu0 0
      %4828 = vmatmul.mubr.bf16.gmra.mrb[0].mxu0 %v4761
      %v4829 = vpop.f32.mrb[0].mxu0
      %v4830 = vadd.f32 0.0, %v4829
      %v4831 = vpop.f32.mrb[0].mxu0
      %v4832 = vpop.f32.mrb[0].mxu0
      %v4833 = vadd.f32 0.0, %v4832
      %v4834 = vpop.f32.mrb[0].mxu0
      %4835 = vdwg.mxu0
      %v4837 = vsel %vm954, %v4567, 0
      %v4840 = vsel %vm954, %v4568, 0
      %v4843 = vsel %vm954, %v4569, 0
      %v4846 = vsel %vm954, %v4570, 0
      %v4849 = vsel %vm954, %v4571, 0
      %4851 = vmatprep.subr.bf16.mxu0 0
      %4852 = vmatpush1.bf16.msra.mxu0 %v3684
      %4853 = vmatprep.subr.bf16.mxu0 0
      %4854 = vmatpush1.bf16.msra.mxu0 %v3685
      %4855 = vmatprep.subr.bf16.mxu0 0
      %4856 = vmatpush1.bf16.msra.mxu0 %v3686
      %4857 = vmatprep.subr.bf16.mxu0 0
      %4858 = vmatpush1.bf16.msra.mxu0 %v3687
      %4859 = vmatprep.subr.bf16.mxu0 0
      %4860 = vmatpush1.bf16.msra.mxu0 %v3688
      %4861 = vmatprep.subr.bf16.mxu0 0
      %4862 = vmatpush1.bf16.msra.mxu0 0
      %4863 = vmatprep.subr.bf16.mxu0 0
      %4864 = vmatpush1.bf16.msra.mxu0 0
      %4865 = vmatprep.subr.bf16.mxu0 0
      %4866 = vmatpush1.bf16.msra.mxu0 0
      %4867 = vmatprep.subr.bf16.mxu0 0
      %4868 = vmatpush1.bf16.msra.mxu0 0
      %4869 = vmatprep.subr.bf16.mxu0 0
      %4870 = vmatpush1.bf16.msra.mxu0 0
      %4871 = vmatprep.subr.bf16.mxu0 0
      %4872 = vmatpush1.bf16.msra.mxu0 0
      %4873 = vmatprep.subr.bf16.mxu0 0
      %4874 = vmatpush1.bf16.msra.mxu0 0
      %4875 = vmatprep.subr.bf16.mxu0 0
      %4876 = vmatpush1.bf16.msra.mxu0 0
      %4877 = vmatprep.subr.bf16.mxu0 0
      %4878 = vmatpush1.bf16.msra.mxu0 0
      %4879 = vmatprep.subr.bf16.mxu0 0
      %4880 = vmatpush1.bf16.msra.mxu0 0
      %4881 = vmatprep.subr.bf16.mxu0 0
      %4882 = vmatpush1.bf16.msra.mxu0 0
      %4883 = vmatprep.mubr.bf16.mxu0 0
      %4884 = vmatmul.mubr.bf16.gmra.mrb[0].mxu0 %v4837
      %v4885 = vpop.f32.mrb[0].mxu0
      %v4886 = vadd.f32 0.0, %v4885
      %v4887 = vpop.f32.mrb[0].mxu0
      %v4888 = vpop.f32.mrb[0].mxu0
      %v4889 = vadd.f32 0.0, %v4888
      %v4890 = vpop.f32.mrb[0].mxu0
      %4891 = vmatprep.mubr.bf16.mxu0 0
      %4892 = vmatmul.mubr.bf16.gmra.mrb[0].mxu0 %v4840
      %v4893 = vpop.f32.mrb[0].mxu0
      %v4894 = vadd.f32 0.0, %v4893
      %v4895 = vpop.f32.mrb[0].mxu0
      %v4896 = vpop.f32.mrb[0].mxu0
      %v4897 = vadd.f32 0.0, %v4896
      %v4898 = vpop.f32.mrb[0].mxu0
      %4899 = vmatprep.mubr.bf16.mxu0 0
      %4900 = vmatmul.mubr.bf16.gmra.mrb[0].mxu0 %v4843
      %v4901 = vpop.f32.mrb[0].mxu0
      %v4902 = vadd.f32 0.0, %v4901
      %v4903 = vpop.f32.mrb[0].mxu0
      %v4904 = vpop.f32.mrb[0].mxu0
      %v4905 = vadd.f32 0.0, %v4904
      %v4906 = vpop.f32.mrb[0].mxu0
      %4907 = vmatprep.mubr.bf16.mxu0 0
      %4908 = vmatmul.mubr.bf16.gmra.mrb[0].mxu0 %v4846
      %v4909 = vpop.f32.mrb[0].mxu0
      %v4910 = vadd.f32 0.0, %v4909
      %v4911 = vpop.f32.mrb[0].mxu0
      %v4912 = vpop.f32.mrb[0].mxu0
      %v4913 = vadd.f32 0.0, %v4912
      %v4914 = vpop.f32.mrb[0].mxu0
      %4915 = vmatprep.mubr.bf16.mxu0 0
      %4916 = vmatmul.mubr.bf16.gmra.mrb[0].mxu0 %v4849
      %v4917 = vpop.f32.mrb[0].mxu0
      %v4918 = vadd.f32 0.0, %v4917
      %v4919 = vpop.f32.mrb[0].mxu0
      %v4920 = vpop.f32.mrb[0].mxu0
      %v4921 = vadd.f32 0.0, %v4920
      %v4922 = vpop.f32.mrb[0].mxu0
      %4923 = vdwg.mxu0
      %4964 = vrot.lane.b32.xlu0 %v4622, 16
      %v4965 = vpop.permute.xlu0 %4964
      %4966 = vrot.lane.b32.xlu0 %v4625, 16
      %v4967 = vpop.permute.xlu0 %4966
      %4968 = vrot.lane.b32.xlu0 %v4630, 16
      %v4969 = vpop.permute.xlu0 %4968
      %4970 = vrot.lane.b32.xlu0 %v4633, 16
      %v4971 = vpop.permute.xlu0 %4970
      %4972 = vrot.lane.b32.xlu0 %v4638, 16
      %v4973 = vpop.permute.xlu0 %4972
      %4974 = vrot.lane.b32.xlu0 %v4641, 16
      %v4975 = vpop.permute.xlu0 %4974
      %4976 = vrot.lane.b32.xlu0 %v4646, 16
      %v4977 = vpop.permute.xlu0 %4976
      %4978 = vrot.lane.b32.xlu0 %v4649, 16
      %v4979 = vpop.permute.xlu0 %4978
      %4980 = vrot.lane.b32.xlu0 %v4654, 16
      %v4981 = vpop.permute.xlu0 %4980
      %4982 = vrot.lane.b32.xlu0 %v4657, 16
      %v4983 = vpop.permute.xlu0 %4982
      %4984 = vrot.lane.b32.xlu0 %v4710, 16
      %v4985 = vpop.permute.xlu0 %4984
      %4986 = vrot.lane.b32.xlu0 %v4713, 16
      %v4987 = vpop.permute.xlu0 %4986
      %4988 = vrot.lane.b32.xlu0 %v4718, 16
      %v4989 = vpop.permute.xlu0 %4988
      %4990 = vrot.lane.b32.xlu0 %v4721, 16
      %v4991 = vpop.permute.xlu0 %4990
      %4992 = vrot.lane.b32.xlu0 %v4726, 16
      %v4993 = vpop.permute.xlu0 %4992
      %4994 = vrot.lane.b32.xlu0 %v4729, 16
      %v4995 = vpop.permute.xlu0 %4994
      %4996 = vrot.lane.b32.xlu0 %v4734, 16
      %v4997 = vpop.permute.xlu0 %4996
      %4998 = vrot.lane.b32.xlu0 %v4737, 16
      %v4999 = vpop.permute.xlu0 %4998
      %5000 = vrot.lane.b32.xlu0 %v4742, 16
      %v5001 = vpop.permute.xlu0 %5000
      %5002 = vrot.lane.b32.xlu0 %v4745, 16
      %v5003 = vpop.permute.xlu0 %5002
      %5004 = vrot.lane.b32.xlu0 %v4798, 16
      %v5005 = vpop.permute.xlu0 %5004
      %5006 = vrot.lane.b32.xlu0 %v4801, 16
      %v5007 = vpop.permute.xlu0 %5006
      %5008 = vrot.lane.b32.xlu0 %v4806, 16
      %v5009 = vpop.permute.xlu0 %5008
      %5010 = vrot.lane.b32.xlu0 %v4809, 16
      %v5011 = vpop.permute.xlu0 %5010
      %5012 = vrot.lane.b32.xlu0 %v4814, 16
      %v5013 = vpop.permute.xlu0 %5012
      %5014 = vrot.lane.b32.xlu0 %v4817, 16
      %v5015 = vpop.permute.xlu0 %5014
      %5016 = vrot.lane.b32.xlu0 %v4822, 16
      %v5017 = vpop.permute.xlu0 %5016
      %5018 = vrot.lane.b32.xlu0 %v4825, 16
      %v5019 = vpop.permute.xlu0 %5018
      %5020 = vrot.lane.b32.xlu0 %v4830, 16
      %v5021 = vpop.permute.xlu0 %5020
      %5022 = vrot.lane.b32.xlu0 %v4833, 16
      %v5023 = vpop.permute.xlu0 %5022
      %5024 = vrot.lane.b32.xlu0 %v4886, 16
      %v5025 = vpop.permute.xlu0 %5024
      %5026 = vrot.lane.b32.xlu0 %v4889, 16
      %v5027 = vpop.permute.xlu0 %5026
      %5028 = vrot.lane.b32.xlu0 %v4894, 16
      %v5029 = vpop.permute.xlu0 %5028
      %5030 = vrot.lane.b32.xlu0 %v4897, 16
      %v5031 = vpop.permute.xlu0 %5030
      %5032 = vrot.lane.b32.xlu0 %v4902, 16
      %v5033 = vpop.permute.xlu0 %5032
      %5034 = vrot.lane.b32.xlu0 %v4905, 16
      %v5035 = vpop.permute.xlu0 %5034
      %5036 = vrot.lane.b32.xlu0 %v4910, 16
      %v5037 = vpop.permute.xlu0 %5036
      %5038 = vrot.lane.b32.xlu0 %v4913, 16
      %v5039 = vpop.permute.xlu0 %5038
      %5040 = vrot.lane.b32.xlu0 %v4918, 16
      %v5041 = vpop.permute.xlu0 %5040
      %5042 = vrot.lane.b32.xlu0 %v4921, 16
      %v5043 = vpop.permute.xlu0 %5042
      %vm5084 = vcmask 195712
      %5085 = vst.msk [vmem:[#allocation2] sm:$0xff] %vm5084, %v4965
      %5086 = vst.msk [vmem:[#allocation2 + $0x8] sm:$0xff] %vm5084, %v4967
      %5087 = vst.msk [vmem:[#allocation2 + $0x10] sm:$0xff] %vm5084, %v4969
      %5088 = vst.msk [vmem:[#allocation2 + $0x18] sm:$0xff] %vm5084, %v4971
      %5089 = vst.msk [vmem:[#allocation2 + $0x20] sm:$0xff] %vm5084, %v4973
      %5090 = vst.msk [vmem:[#allocation2 + $0x28] sm:$0xff] %vm5084, %v4975
      %5091 = vst.msk [vmem:[#allocation2 + $0x30] sm:$0xff] %vm5084, %v4977
      %5092 = vst.msk [vmem:[#allocation2 + $0x38] sm:$0xff] %vm5084, %v4979
      %5093 = vst.msk [vmem:[#allocation2 + $0x40] sm:$0xff] %vm5084, %v4981
      %5094 = vst.msk [vmem:[#allocation2 + $0x48] sm:$0xff] %vm5084, %v4983
      %5095 = vst.msk [vmem:[#allocation2 + $0x50] sm:$0xff] %vm5084, %v4985
      %5096 = vst.msk [vmem:[#allocation2 + $0x58] sm:$0xff] %vm5084, %v4987
      %5097 = vst.msk [vmem:[#allocation2 + $0x60] sm:$0xff] %vm5084, %v4989
      %5098 = vst.msk [vmem:[#allocation2 + $0x68] sm:$0xff] %vm5084, %v4991
      %5099 = vst.msk [vmem:[#allocation2 + $0x70] sm:$0xff] %vm5084, %v4993
      %5100 = vst.msk [vmem:[#allocation2 + $0x78] sm:$0xff] %vm5084, %v4995
      %5101 = vst.msk [vmem:[#allocation2 + $0x80] sm:$0xff] %vm5084, %v4997
      %5102 = vst.msk [vmem:[#allocation2 + $0x88] sm:$0xff] %vm5084, %v4999
      %5103 = vst.msk [vmem:[#allocation2 + $0x90] sm:$0xff] %vm5084, %v5001
      %5104 = vst.msk [vmem:[#allocation2 + $0x98] sm:$0xff] %vm5084, %v5003
      %5105 = vst.msk [vmem:[#allocation2 + $0xa0] sm:$0xff] %vm5084, %v5005
      %5106 = vst.msk [vmem:[#allocation2 + $0xa8] sm:$0xff] %vm5084, %v5007
      %5107 = vst.msk [vmem:[#allocation2 + $0xb0] sm:$0xff] %vm5084, %v5009
      %5108 = vst.msk [vmem:[#allocation2 + $0xb8] sm:$0xff] %vm5084, %v5011
      %5109 = vst.msk [vmem:[#allocation2 + $0xc0] sm:$0xff] %vm5084, %v5013
      %5110 = vst.msk [vmem:[#allocation2 + $0xc8] sm:$0xff] %vm5084, %v5015
      %5111 = vst.msk [vmem:[#allocation2 + $0xd0] sm:$0xff] %vm5084, %v5017
      %5112 = vst.msk [vmem:[#allocation2 + $0xd8] sm:$0xff] %vm5084, %v5019
      %5113 = vst.msk [vmem:[#allocation2 + $0xe0] sm:$0xff] %vm5084, %v5021
      %5114 = vst.msk [vmem:[#allocation2 + $0xe8] sm:$0xff] %vm5084, %v5023
      %5115 = vst.msk [vmem:[#allocation2 + $0xf0] sm:$0xff] %vm5084, %v5025
      %5116 = vst.msk [vmem:[#allocation2 + $0xf8] sm:$0xff] %vm5084, %v5027
      %5117 = vst.msk [vmem:[#allocation2 + $0x100] sm:$0xff] %vm5084, %v5029
      %5118 = vst.msk [vmem:[#allocation2 + $0x108] sm:$0xff] %vm5084, %v5031
      %5119 = vst.msk [vmem:[#allocation2 + $0x110] sm:$0xff] %vm5084, %v5033
      %5120 = vst.msk [vmem:[#allocation2 + $0x118] sm:$0xff] %vm5084, %v5035
      %5121 = vst.msk [vmem:[#allocation2 + $0x120] sm:$0xff] %vm5084, %v5037
      %5122 = vst.msk [vmem:[#allocation2 + $0x128] sm:$0xff] %vm5084, %v5039
      %5123 = vst.msk [vmem:[#allocation2 + $0x130] sm:$0xff] %vm5084, %v5041
      %5124 = vst.msk [vmem:[#allocation2 + $0x138] sm:$0xff] %vm5084, %v5043
      %s5125 = scalar_lea.vmem %s287, 240
      %v5126 = vld [vmem:[%s5125] sm:$0xff]
      %v5127 = vld [vmem:[%s5125 + $0x8] sm:$0xff]
      %v5128 = vld [vmem:[%s5125 + $0x10] sm:$0xff]
      %v5129 = vld [vmem:[%s5125 + $0x18] sm:$0xff]
      %v5130 = vld [vmem:[%s5125 + $0x20] sm:$0xff]
      %v5131 = vld [vmem:[%s5125 + $0x28] sm:$0xff]
      %v5132 = vld [vmem:[%s5125 + $0x30] sm:$0xff]
      %v5133 = vld [vmem:[%s5125 + $0x38] sm:$0xff]
      %v5134 = vld [vmem:[%s5125 + $0x40] sm:$0xff]
      %v5135 = vld [vmem:[%s5125 + $0x48] sm:$0xff]
      %v5136 = vld [vmem:[%s5125 + $0x140] sm:$0xff]
      %v5137 = vld [vmem:[%s5125 + $0x148] sm:$0xff]
      %v5138 = vld [vmem:[%s5125 + $0x150] sm:$0xff]
      %v5139 = vld [vmem:[%s5125 + $0x158] sm:$0xff]
      %v5140 = vld [vmem:[%s5125 + $0x160] sm:$0xff]
      %v5141 = vld [vmem:[%s5125 + $0x168] sm:$0xff]
      %v5142 = vld [vmem:[%s5125 + $0x170] sm:$0xff]
      %v5143 = vld [vmem:[%s5125 + $0x178] sm:$0xff]
      %v5144 = vld [vmem:[%s5125 + $0x180] sm:$0xff]
      %v5145 = vld [vmem:[%s5125 + $0x188] sm:$0xff]
      %v5146 = vld [vmem:[%s5125 + $0x280] sm:$0xff]
      %v5147 = vld [vmem:[%s5125 + $0x288] sm:$0xff]
      %v5148 = vld [vmem:[%s5125 + $0x290] sm:$0xff]
      %v5149 = vld [vmem:[%s5125 + $0x298] sm:$0xff]
      %v5150 = vld [vmem:[%s5125 + $0x2a0] sm:$0xff]
      %v5151 = vld [vmem:[%s5125 + $0x2a8] sm:$0xff]
      %v5152 = vld [vmem:[%s5125 + $0x2b0] sm:$0xff]
      %v5153 = vld [vmem:[%s5125 + $0x2b8] sm:$0xff]
      %v5154 = vld [vmem:[%s5125 + $0x2c0] sm:$0xff]
      %v5155 = vld [vmem:[%s5125 + $0x2c8] sm:$0xff]
      %v5156 = vld [vmem:[%s5125 + $0x3c0] sm:$0xff]
      %v5157 = vld [vmem:[%s5125 + $0x3c8] sm:$0xff]
      %v5158 = vld [vmem:[%s5125 + $0x3d0] sm:$0xff]
      %v5159 = vld [vmem:[%s5125 + $0x3d8] sm:$0xff]
      %v5160 = vld [vmem:[%s5125 + $0x3e0] sm:$0xff]
      %v5161 = vld [vmem:[%s5125 + $0x3e8] sm:$0xff]
      %v5162 = vld [vmem:[%s5125 + $0x3f0] sm:$0xff]
      %v5163 = vld [vmem:[%s5125 + $0x3f8] sm:$0xff]
      %v5164 = vld [vmem:[%s5125 + $0x400] sm:$0xff]
      %v5165 = vld [vmem:[%s5125 + $0x408] sm:$0xff]
      %v5166 = vmul.f32 %v5126, 0.35355338
      %v5167 = vmul.f32 %v5127, 0.35355338
      %v5168 = vmul.f32 %v5128, 0.35355338
      %v5169 = vmul.f32 %v5129, 0.35355338
      %v5170 = vmul.f32 %v5130, 0.35355338
      %v5171 = vmul.f32 %v5131, 0.35355338
      %v5172 = vmul.f32 %v5132, 0.35355338
      %v5173 = vmul.f32 %v5133, 0.35355338
      %v5174 = vmul.f32 %v5134, 0.35355338
      %v5175 = vmul.f32 %v5135, 0.35355338
      %v5176 = vmul.f32 %v5136, 0.35355338
      %v5177 = vmul.f32 %v5137, 0.35355338
      %v5178 = vmul.f32 %v5138, 0.35355338
      %v5179 = vmul.f32 %v5139, 0.35355338
      %v5180 = vmul.f32 %v5140, 0.35355338
      %v5181 = vmul.f32 %v5141, 0.35355338
      %v5182 = vmul.f32 %v5142, 0.35355338
      %v5183 = vmul.f32 %v5143, 0.35355338
      %v5184 = vmul.f32 %v5144, 0.35355338
      %v5185 = vmul.f32 %v5145, 0.35355338
      %v5186 = vmul.f32 %v5146, 0.35355338
      %v5187 = vmul.f32 %v5147, 0.35355338
      %v5188 = vmul.f32 %v5148, 0.35355338
      %v5189 = vmul.f32 %v5149, 0.35355338
      %v5190 = vmul.f32 %v5150, 0.35355338
      %v5191 = vmul.f32 %v5151, 0.35355338
      %v5192 = vmul.f32 %v5152, 0.35355338
      %v5193 = vmul.f32 %v5153, 0.35355338
      %v5194 = vmul.f32 %v5154, 0.35355338
      %v5195 = vmul.f32 %v5155, 0.35355338
      %v5196 = vmul.f32 %v5156, 0.35355338
      %v5197 = vmul.f32 %v5157, 0.35355338
      %v5198 = vmul.f32 %v5158, 0.35355338
      %v5199 = vmul.f32 %v5159, 0.35355338
      %v5200 = vmul.f32 %v5160, 0.35355338
      %v5201 = vmul.f32 %v5161, 0.35355338
      %v5202 = vmul.f32 %v5162, 0.35355338
      %v5203 = vmul.f32 %v5163, 0.35355338
      %v5204 = vmul.f32 %v5164, 0.35355338
      %v5205 = vmul.f32 %v5165, 0.35355338
      %v5206 = vpack.c.bf16 %v5167, %v5166
      %v5207 = vpack.c.bf16 %v5169, %v5168
      %v5208 = vpack.c.bf16 %v5171, %v5170
      %v5209 = vpack.c.bf16 %v5173, %v5172
      %v5210 = vpack.c.bf16 %v5175, %v5174
      %v5211 = vpack.c.bf16 %v5177, %v5176
      %v5212 = vpack.c.bf16 %v5179, %v5178
      %v5213 = vpack.c.bf16 %v5181, %v5180
      %v5214 = vpack.c.bf16 %v5183, %v5182
      %v5215 = vpack.c.bf16 %v5185, %v5184
      %v5216 = vpack.c.bf16 %v5187, %v5186
      %v5217 = vpack.c.bf16 %v5189, %v5188
      %v5218 = vpack.c.bf16 %v5191, %v5190
      %v5219 = vpack.c.bf16 %v5193, %v5192
      %v5220 = vpack.c.bf16 %v5195, %v5194
      %v5221 = vpack.c.bf16 %v5197, %v5196
      %v5222 = vpack.c.bf16 %v5199, %v5198
      %v5223 = vpack.c.bf16 %v5201, %v5200
      %v5224 = vpack.c.bf16 %v5203, %v5202
      %v5225 = vpack.c.bf16 %v5205, %v5204
      %s5226 = scalar_lea.vmem %s294, 240
      %v5227 = vld [vmem:[%s5226] sm:$0xff]
      %v5228 = vld [vmem:[%s5226 + $0x8] sm:$0xff]
      %v5229 = vld [vmem:[%s5226 + $0x10] sm:$0xff]
      %v5230 = vld [vmem:[%s5226 + $0x18] sm:$0xff]
      %v5231 = vld [vmem:[%s5226 + $0x20] sm:$0xff]
      %v5232 = vld [vmem:[%s5226 + $0x28] sm:$0xff]
      %v5233 = vld [vmem:[%s5226 + $0x30] sm:$0xff]
      %v5234 = vld [vmem:[%s5226 + $0x38] sm:$0xff]
      %v5235 = vld [vmem:[%s5226 + $0x40] sm:$0xff]
      %v5236 = vld [vmem:[%s5226 + $0x48] sm:$0xff]
      %v5237 = vld [vmem:[%s5226 + $0x140] sm:$0xff]
      %v5238 = vld [vmem:[%s5226 + $0x148] sm:$0xff]
      %v5239 = vld [vmem:[%s5226 + $0x150] sm:$0xff]
      %v5240 = vld [vmem:[%s5226 + $0x158] sm:$0xff]
      %v5241 = vld [vmem:[%s5226 + $0x160] sm:$0xff]
      %v5242 = vld [vmem:[%s5226 + $0x168] sm:$0xff]
      %v5243 = vld [vmem:[%s5226 + $0x170] sm:$0xff]
      %v5244 = vld [vmem:[%s5226 + $0x178] sm:$0xff]
      %v5245 = vld [vmem:[%s5226 + $0x180] sm:$0xff]
      %v5246 = vld [vmem:[%s5226 + $0x188] sm:$0xff]
      %v5247 = vld [vmem:[%s5226 + $0x280] sm:$0xff]
      %v5248 = vld [vmem:[%s5226 + $0x288] sm:$0xff]
      %v5249 = vld [vmem:[%s5226 + $0x290] sm:$0xff]
      %v5250 = vld [vmem:[%s5226 + $0x298] sm:$0xff]
      %v5251 = vld [vmem:[%s5226 + $0x2a0] sm:$0xff]
      %v5252 = vld [vmem:[%s5226 + $0x2a8] sm:$0xff]
      %v5253 = vld [vmem:[%s5226 + $0x2b0] sm:$0xff]
      %v5254 = vld [vmem:[%s5226 + $0x2b8] sm:$0xff]
      %v5255 = vld [vmem:[%s5226 + $0x2c0] sm:$0xff]
      %v5256 = vld [vmem:[%s5226 + $0x2c8] sm:$0xff]
      %v5257 = vld [vmem:[%s5226 + $0x3c0] sm:$0xff]
      %v5258 = vld [vmem:[%s5226 + $0x3c8] sm:$0xff]
      %v5259 = vld [vmem:[%s5226 + $0x3d0] sm:$0xff]
      %v5260 = vld [vmem:[%s5226 + $0x3d8] sm:$0xff]
      %v5261 = vld [vmem:[%s5226 + $0x3e0] sm:$0xff]
      %v5262 = vld [vmem:[%s5226 + $0x3e8] sm:$0xff]
      %v5263 = vld [vmem:[%s5226 + $0x3f0] sm:$0xff]
      %v5264 = vld [vmem:[%s5226 + $0x3f8] sm:$0xff]
      %v5265 = vld [vmem:[%s5226 + $0x400] sm:$0xff]
      %v5266 = vld [vmem:[%s5226 + $0x408] sm:$0xff]
      %v5267 = vpack.c.bf16 %v5228, %v5227
      %v5268 = vpack.c.bf16 %v5230, %v5229
      %v5269 = vpack.c.bf16 %v5232, %v5231
      %v5270 = vpack.c.bf16 %v5234, %v5233
      %v5271 = vpack.c.bf16 %v5236, %v5235
      %v5272 = vpack.c.bf16 %v5238, %v5237
      %v5273 = vpack.c.bf16 %v5240, %v5239
      %v5274 = vpack.c.bf16 %v5242, %v5241
      %v5275 = vpack.c.bf16 %v5244, %v5243
      %v5276 = vpack.c.bf16 %v5246, %v5245
      %v5277 = vpack.c.bf16 %v5248, %v5247
      %v5278 = vpack.c.bf16 %v5250, %v5249
      %v5279 = vpack.c.bf16 %v5252, %v5251
      %v5280 = vpack.c.bf16 %v5254, %v5253
      %v5281 = vpack.c.bf16 %v5256, %v5255
      %v5282 = vpack.c.bf16 %v5258, %v5257
      %v5283 = vpack.c.bf16 %v5260, %v5259
      %v5284 = vpack.c.bf16 %v5262, %v5261
      %v5285 = vpack.c.bf16 %v5264, %v5263
      %v5286 = vpack.c.bf16 %v5266, %v5265
      %s5287 = scalar_lea.vmem %s301, 240
      %v5288 = vld [vmem:[%s5287] sm:$0xff]
      %v5289 = vld [vmem:[%s5287 + $0x8] sm:$0xff]
      %v5290 = vld [vmem:[%s5287 + $0x10] sm:$0xff]
      %v5291 = vld [vmem:[%s5287 + $0x18] sm:$0xff]
      %v5292 = vld [vmem:[%s5287 + $0x20] sm:$0xff]
      %v5293 = vld [vmem:[%s5287 + $0x28] sm:$0xff]
      %v5294 = vld [vmem:[%s5287 + $0x30] sm:$0xff]
      %v5295 = vld [vmem:[%s5287 + $0x38] sm:$0xff]
      %v5296 = vld [vmem:[%s5287 + $0x40] sm:$0xff]
      %v5297 = vld [vmem:[%s5287 + $0x48] sm:$0xff]
      %v5298 = vld [vmem:[%s5287 + $0x140] sm:$0xff]
      %v5299 = vld [vmem:[%s5287 + $0x148] sm:$0xff]
      %v5300 = vld [vmem:[%s5287 + $0x150] sm:$0xff]
      %v5301 = vld [vmem:[%s5287 + $0x158] sm:$0xff]
      %v5302 = vld [vmem:[%s5287 + $0x160] sm:$0xff]
      %v5303 = vld [vmem:[%s5287 + $0x168] sm:$0xff]
      %v5304 = vld [vmem:[%s5287 + $0x170] sm:$0xff]
      %v5305 = vld [vmem:[%s5287 + $0x178] sm:$0xff]
      %v5306 = vld [vmem:[%s5287 + $0x180] sm:$0xff]
      %v5307 = vld [vmem:[%s5287 + $0x188] sm:$0xff]
      %v5308 = vld [vmem:[%s5287 + $0x280] sm:$0xff]
      %v5309 = vld [vmem:[%s5287 + $0x288] sm:$0xff]
      %v5310 = vld [vmem:[%s5287 + $0x290] sm:$0xff]
      %v5311 = vld [vmem:[%s5287 + $0x298] sm:$0xff]
      %v5312 = vld [vmem:[%s5287 + $0x2a0] sm:$0xff]
      %v5313 = vld [vmem:[%s5287 + $0x2a8] sm:$0xff]
      %v5314 = vld [vmem:[%s5287 + $0x2b0] sm:$0xff]
      %v5315 = vld [vmem:[%s5287 + $0x2b8] sm:$0xff]
      %v5316 = vld [vmem:[%s5287 + $0x2c0] sm:$0xff]
      %v5317 = vld [vmem:[%s5287 + $0x2c8] sm:$0xff]
      %v5318 = vld [vmem:[%s5287 + $0x3c0] sm:$0xff]
      %v5319 = vld [vmem:[%s5287 + $0x3c8] sm:$0xff]
      %v5320 = vld [vmem:[%s5287 + $0x3d0] sm:$0xff]
      %v5321 = vld [vmem:[%s5287 + $0x3d8] sm:$0xff]
      %v5322 = vld [vmem:[%s5287 + $0x3e0] sm:$0xff]
      %v5323 = vld [vmem:[%s5287 + $0x3e8] sm:$0xff]
      %v5324 = vld [vmem:[%s5287 + $0x3f0] sm:$0xff]
      %v5325 = vld [vmem:[%s5287 + $0x3f8] sm:$0xff]
      %v5326 = vld [vmem:[%s5287 + $0x400] sm:$0xff]
      %v5327 = vld [vmem:[%s5287 + $0x408] sm:$0xff]
      %v5328 = vpack.c.bf16 %v5289, %v5288
      %v5329 = vpack.c.bf16 %v5291, %v5290
      %v5330 = vpack.c.bf16 %v5293, %v5292
      %v5331 = vpack.c.bf16 %v5295, %v5294
      %v5332 = vpack.c.bf16 %v5297, %v5296
      %v5333 = vpack.c.bf16 %v5299, %v5298
      %v5334 = vpack.c.bf16 %v5301, %v5300
      %v5335 = vpack.c.bf16 %v5303, %v5302
      %v5336 = vpack.c.bf16 %v5305, %v5304
      %v5337 = vpack.c.bf16 %v5307, %v5306
      %v5338 = vpack.c.bf16 %v5309, %v5308
      %v5339 = vpack.c.bf16 %v5311, %v5310
      %v5340 = vpack.c.bf16 %v5313, %v5312
      %v5341 = vpack.c.bf16 %v5315, %v5314
      %v5342 = vpack.c.bf16 %v5317, %v5316
      %v5343 = vpack.c.bf16 %v5319, %v5318
      %v5344 = vpack.c.bf16 %v5321, %v5320
      %v5345 = vpack.c.bf16 %v5323, %v5322
      %v5346 = vpack.c.bf16 %v5325, %v5324
      %v5347 = vpack.c.bf16 %v5327, %v5326
      %s5348 = scalar_lea.vmem %s3, 240
      %v5349 = vld [vmem:[%s5348] sm:$0xff]
      %v5350 = vld [vmem:[%s5348 + $0x8] sm:$0xff]
      %v5351 = vld [vmem:[%s5348 + $0x10] sm:$0xff]
      %v5352 = vld [vmem:[%s5348 + $0x18] sm:$0xff]
      %v5353 = vld [vmem:[%s5348 + $0x20] sm:$0xff]
      %v5354 = vld [vmem:[%s5348 + $0x28] sm:$0xff]
      %v5355 = vld [vmem:[%s5348 + $0x30] sm:$0xff]
      %v5356 = vld [vmem:[%s5348 + $0x38] sm:$0xff]
      %v5357 = vld [vmem:[%s5348 + $0x40] sm:$0xff]
      %v5358 = vld [vmem:[%s5348 + $0x48] sm:$0xff]
      %v5360 = vsel %vm541, %v5206, 0
      %v5363 = vsel %vm541, %v5207, 0
      %v5366 = vsel %vm541, %v5208, 0
      %v5369 = vsel %vm541, %v5209, 0
      %v5372 = vsel %vm541, %v5210, 0
      %v5375 = vsel %vm541, %v5267, 0
      %v5378 = vsel %vm541, %v5268, 0
      %v5381 = vsel %vm541, %v5269, 0
      %v5384 = vsel %vm541, %v5270, 0
      %v5387 = vsel %vm541, %v5271, 0
      %5389 = vmatprep.subr.bf16.mxu0 0
      %5390 = vmatpush1.bf16.xpose.msra.mxu0 %v5375
      %5391 = vmatprep.subr.bf16.mxu0 0
      %5392 = vmatpush1.bf16.xpose.msra.mxu0 %v5378
      %5393 = vmatprep.subr.bf16.mxu0 0
      %5394 = vmatpush1.bf16.xpose.msra.mxu0 %v5381
      %5395 = vmatprep.subr.bf16.mxu0 0
      %5396 = vmatpush1.bf16.xpose.msra.mxu0 %v5384
      %5397 = vmatprep.subr.bf16.mxu0 0
      %5398 = vmatpush1.bf16.xpose.msra.mxu0 %v5387
      %5399 = vmatprep.subr.bf16.mxu0 0
      %5400 = vmatpush1.bf16.xpose.msra.mxu0 0
      %5401 = vmatprep.subr.bf16.mxu0 0
      %5402 = vmatpush1.bf16.xpose.msra.mxu0 0
      %5403 = vmatprep.subr.bf16.mxu0 0
      %5404 = vmatpush1.bf16.xpose.msra.mxu0 0
      %5405 = vmatprep.subr.bf16.mxu0 0
      %5406 = vmatpush1.bf16.xpose.msra.mxu0 0
      %5407 = vmatprep.subr.bf16.mxu0 0
      %5408 = vmatpush1.bf16.xpose.msra.mxu0 0
      %5409 = vmatprep.subr.bf16.mxu0 0
      %5410 = vmatpush1.bf16.xpose.msra.mxu0 0
      %5411 = vmatprep.subr.bf16.mxu0 0
      %5412 = vmatpush1.bf16.xpose.msra.mxu0 0
      %5413 = vmatprep.subr.bf16.mxu0 0
      %5414 = vmatpush1.bf16.xpose.msra.mxu0 0
      %5415 = vmatprep.subr.bf16.mxu0 0
      %5416 = vmatpush1.bf16.xpose.msra.mxu0 0
      %5417 = vmatprep.subr.bf16.mxu0 0
      %5418 = vmatpush1.bf16.xpose.msra.mxu0 0
      %5419 = vmatprep.subr.bf16.mxu0 0
      %5420 = vmatpush1.bf16.xpose.msra.mxu0 0
      %5421 = vmatprep.mubr.bf16.mxu0 0
      %5422 = vmatmul.mubr.bf16.gmra.mrb[0].mxu0 %v5360
      %v5423 = vpop.f32.mrb[0].mxu0
      %v5424 = vadd.f32 %v5349, %v5423
      %v5425 = vpop.f32.mrb[0].mxu0
      %v5426 = vpop.f32.mrb[0].mxu0
      %v5427 = vadd.f32 %v5350, %v5426
      %v5428 = vpop.f32.mrb[0].mxu0
      %5429 = vmatprep.mubr.bf16.mxu0 0
      %5430 = vmatmul.mubr.bf16.gmra.mrb[0].mxu0 %v5363
      %v5431 = vpop.f32.mrb[0].mxu0
      %v5432 = vadd.f32 %v5351, %v5431
      %v5433 = vpop.f32.mrb[0].mxu0
      %v5434 = vpop.f32.mrb[0].mxu0
      %v5435 = vadd.f32 %v5352, %v5434
      %v5436 = vpop.f32.mrb[0].mxu0
      %5437 = vmatprep.mubr.bf16.mxu0 0
      %5438 = vmatmul.mubr.bf16.gmra.mrb[0].mxu0 %v5366
      %v5439 = vpop.f32.mrb[0].mxu0
      %v5440 = vadd.f32 %v5353, %v5439
      %v5441 = vpop.f32.mrb[0].mxu0
      %v5442 = vpop.f32.mrb[0].mxu0
      %v5443 = vadd.f32 %v5354, %v5442
      %v5444 = vpop.f32.mrb[0].mxu0
      %5445 = vmatprep.mubr.bf16.mxu0 0
      %5446 = vmatmul.mubr.bf16.gmra.mrb[0].mxu0 %v5369
      %v5447 = vpop.f32.mrb[0].mxu0
      %v5448 = vadd.f32 %v5355, %v5447
      %v5449 = vpop.f32.mrb[0].mxu0
      %v5450 = vpop.f32.mrb[0].mxu0
      %v5451 = vadd.f32 %v5356, %v5450
      %v5452 = vpop.f32.mrb[0].mxu0
      %5453 = vmatprep.mubr.bf16.mxu0 0
      %5454 = vmatmul.mubr.bf16.gmra.mrb[0].mxu0 %v5372
      %v5455 = vpop.f32.mrb[0].mxu0
      %v5456 = vadd.f32 %v5357, %v5455
      %v5457 = vpop.f32.mrb[0].mxu0
      %v5458 = vpop.f32.mrb[0].mxu0
      %v5459 = vadd.f32 %v5358, %v5458
      %v5460 = vpop.f32.mrb[0].mxu0
      %5461 = vdwg.mxu0
      %v5463 = vsel %vm541, %v5211, 0
      %v5466 = vsel %vm541, %v5212, 0
      %v5469 = vsel %vm541, %v5213, 0
      %v5472 = vsel %vm541, %v5214, 0
      %v5475 = vsel %vm541, %v5215, 0
      %v5478 = vsel %vm541, %v5272, 0
      %v5481 = vsel %vm541, %v5273, 0
      %v5484 = vsel %vm541, %v5274, 0
      %v5487 = vsel %vm541, %v5275, 0
      %v5490 = vsel %vm541, %v5276, 0
      %5492 = vmatprep.subr.bf16.mxu0 0
      %5493 = vmatpush1.bf16.xpose.msra.mxu0 %v5478
      %5494 = vmatprep.subr.bf16.mxu0 0
      %5495 = vmatpush1.bf16.xpose.msra.mxu0 %v5481
      %5496 = vmatprep.subr.bf16.mxu0 0
      %5497 = vmatpush1.bf16.xpose.msra.mxu0 %v5484
      %5498 = vmatprep.subr.bf16.mxu0 0
      %5499 = vmatpush1.bf16.xpose.msra.mxu0 %v5487
      %5500 = vmatprep.subr.bf16.mxu0 0
      %5501 = vmatpush1.bf16.xpose.msra.mxu0 %v5490
      %5502 = vmatprep.subr.bf16.mxu0 0
      %5503 = vmatpush1.bf16.xpose.msra.mxu0 0
      %5504 = vmatprep.subr.bf16.mxu0 0
      %5505 = vmatpush1.bf16.xpose.msra.mxu0 0
      %5506 = vmatprep.subr.bf16.mxu0 0
      %5507 = vmatpush1.bf16.xpose.msra.mxu0 0
      %5508 = vmatprep.subr.bf16.mxu0 0
      %5509 = vmatpush1.bf16.xpose.msra.mxu0 0
      %5510 = vmatprep.subr.bf16.mxu0 0
      %5511 = vmatpush1.bf16.xpose.msra.mxu0 0
      %5512 = vmatprep.subr.bf16.mxu0 0
      %5513 = vmatpush1.bf16.xpose.msra.mxu0 0
      %5514 = vmatprep.subr.bf16.mxu0 0
      %5515 = vmatpush1.bf16.xpose.msra.mxu0 0
      %5516 = vmatprep.subr.bf16.mxu0 0
      %5517 = vmatpush1.bf16.xpose.msra.mxu0 0
      %5518 = vmatprep.subr.bf16.mxu0 0
      %5519 = vmatpush1.bf16.xpose.msra.mxu0 0
      %5520 = vmatprep.subr.bf16.mxu0 0
      %5521 = vmatpush1.bf16.xpose.msra.mxu0 0
      %5522 = vmatprep.subr.bf16.mxu0 0
      %5523 = vmatpush1.bf16.xpose.msra.mxu0 0
      %5524 = vmatprep.mubr.bf16.mxu0 0
      %5525 = vmatmul.mubr.bf16.gmra.mrb[0].mxu0 %v5463
      %v5526 = vpop.f32.mrb[0].mxu0
      %v5527 = vadd.f32 %v5349, %v5526
      %v5528 = vpop.f32.mrb[0].mxu0
      %v5529 = vpop.f32.mrb[0].mxu0
      %v5530 = vadd.f32 %v5350, %v5529
      %v5531 = vpop.f32.mrb[0].mxu0
      %5532 = vmatprep.mubr.bf16.mxu0 0
      %5533 = vmatmul.mubr.bf16.gmra.mrb[0].mxu0 %v5466
      %v5534 = vpop.f32.mrb[0].mxu0
      %v5535 = vadd.f32 %v5351, %v5534
      %v5536 = vpop.f32.mrb[0].mxu0
      %v5537 = vpop.f32.mrb[0].mxu0
      %v5538 = vadd.f32 %v5352, %v5537
      %v5539 = vpop.f32.mrb[0].mxu0
      %5540 = vmatprep.mubr.bf16.mxu0 0
      %5541 = vmatmul.mubr.bf16.gmra.mrb[0].mxu0 %v5469
      %v5542 = vpop.f32.mrb[0].mxu0
      %v5543 = vadd.f32 %v5353, %v5542
      %v5544 = vpop.f32.mrb[0].mxu0
      %v5545 = vpop.f32.mrb[0].mxu0
      %v5546 = vadd.f32 %v5354, %v5545
      %v5547 = vpop.f32.mrb[0].mxu0
      %5548 = vmatprep.mubr.bf16.mxu0 0
      %5549 = vmatmul.mubr.bf16.gmra.mrb[0].mxu0 %v5472
      %v5550 = vpop.f32.mrb[0].mxu0
      %v5551 = vadd.f32 %v5355, %v5550
      %v5552 = vpop.f32.mrb[0].mxu0
      %v5553 = vpop.f32.mrb[0].mxu0
      %v5554 = vadd.f32 %v5356, %v5553
      %v5555 = vpop.f32.mrb[0].mxu0
      %5556 = vmatprep.mubr.bf16.mxu0 0
      %5557 = vmatmul.mubr.bf16.gmra.mrb[0].mxu0 %v5475
      %v5558 = vpop.f32.mrb[0].mxu0
      %v5559 = vadd.f32 %v5357, %v5558
      %v5560 = vpop.f32.mrb[0].mxu0
      %v5561 = vpop.f32.mrb[0].mxu0
      %v5562 = vadd.f32 %v5358, %v5561
      %v5563 = vpop.f32.mrb[0].mxu0
      %5564 = vdwg.mxu0
      %v5566 = vsel %vm541, %v5216, 0
      %v5569 = vsel %vm541, %v5217, 0
      %v5572 = vsel %vm541, %v5218, 0
      %v5575 = vsel %vm541, %v5219, 0
      %v5578 = vsel %vm541, %v5220, 0
      %v5581 = vsel %vm541, %v5277, 0
      %v5584 = vsel %vm541, %v5278, 0
      %v5587 = vsel %vm541, %v5279, 0
      %v5590 = vsel %vm541, %v5280, 0
      %v5593 = vsel %vm541, %v5281, 0
      %5595 = vmatprep.subr.bf16.mxu0 0
      %5596 = vmatpush1.bf16.xpose.msra.mxu0 %v5581
      %5597 = vmatprep.subr.bf16.mxu0 0
      %5598 = vmatpush1.bf16.xpose.msra.mxu0 %v5584
      %5599 = vmatprep.subr.bf16.mxu0 0
      %5600 = vmatpush1.bf16.xpose.msra.mxu0 %v5587
      %5601 = vmatprep.subr.bf16.mxu0 0
      %5602 = vmatpush1.bf16.xpose.msra.mxu0 %v5590
      %5603 = vmatprep.subr.bf16.mxu0 0
      %5604 = vmatpush1.bf16.xpose.msra.mxu0 %v5593
      %5605 = vmatprep.subr.bf16.mxu0 0
      %5606 = vmatpush1.bf16.xpose.msra.mxu0 0
      %5607 = vmatprep.subr.bf16.mxu0 0
      %5608 = vmatpush1.bf16.xpose.msra.mxu0 0
      %5609 = vmatprep.subr.bf16.mxu0 0
      %5610 = vmatpush1.bf16.xpose.msra.mxu0 0
      %5611 = vmatprep.subr.bf16.mxu0 0
      %5612 = vmatpush1.bf16.xpose.msra.mxu0 0
      %5613 = vmatprep.subr.bf16.mxu0 0
      %5614 = vmatpush1.bf16.xpose.msra.mxu0 0
      %5615 = vmatprep.subr.bf16.mxu0 0
      %5616 = vmatpush1.bf16.xpose.msra.mxu0 0
      %5617 = vmatprep.subr.bf16.mxu0 0
      %5618 = vmatpush1.bf16.xpose.msra.mxu0 0
      %5619 = vmatprep.subr.bf16.mxu0 0
      %5620 = vmatpush1.bf16.xpose.msra.mxu0 0
      %5621 = vmatprep.subr.bf16.mxu0 0
      %5622 = vmatpush1.bf16.xpose.msra.mxu0 0
      %5623 = vmatprep.subr.bf16.mxu0 0
      %5624 = vmatpush1.bf16.xpose.msra.mxu0 0
      %5625 = vmatprep.subr.bf16.mxu0 0
      %5626 = vmatpush1.bf16.xpose.msra.mxu0 0
      %5627 = vmatprep.mubr.bf16.mxu0 0
      %5628 = vmatmul.mubr.bf16.gmra.mrb[0].mxu0 %v5566
      %v5629 = vpop.f32.mrb[0].mxu0
      %v5630 = vadd.f32 %v5349, %v5629
      %v5631 = vpop.f32.mrb[0].mxu0
      %v5632 = vpop.f32.mrb[0].mxu0
      %v5633 = vadd.f32 %v5350, %v5632
      %v5634 = vpop.f32.mrb[0].mxu0
      %5635 = vmatprep.mubr.bf16.mxu0 0
      %5636 = vmatmul.mubr.bf16.gmra.mrb[0].mxu0 %v5569
      %v5637 = vpop.f32.mrb[0].mxu0
      %v5638 = vadd.f32 %v5351, %v5637
      %v5639 = vpop.f32.mrb[0].mxu0
      %v5640 = vpop.f32.mrb[0].mxu0
      %v5641 = vadd.f32 %v5352, %v5640
      %v5642 = vpop.f32.mrb[0].mxu0
      %5643 = vmatprep.mubr.bf16.mxu0 0
      %5644 = vmatmul.mubr.bf16.gmra.mrb[0].mxu0 %v5572
      %v5645 = vpop.f32.mrb[0].mxu0
      %v5646 = vadd.f32 %v5353, %v5645
      %v5647 = vpop.f32.mrb[0].mxu0
      %v5648 = vpop.f32.mrb[0].mxu0
      %v5649 = vadd.f32 %v5354, %v5648
      %v5650 = vpop.f32.mrb[0].mxu0
      %5651 = vmatprep.mubr.bf16.mxu0 0
      %5652 = vmatmul.mubr.bf16.gmra.mrb[0].mxu0 %v5575
      %v5653 = vpop.f32.mrb[0].mxu0
      %v5654 = vadd.f32 %v5355, %v5653
      %v5655 = vpop.f32.mrb[0].mxu0
      %v5656 = vpop.f32.mrb[0].mxu0
      %v5657 = vadd.f32 %v5356, %v5656
      %v5658 = vpop.f32.mrb[0].mxu0
      %5659 = vmatprep.mubr.bf16.mxu0 0
      %5660 = vmatmul.mubr.bf16.gmra.mrb[0].mxu0 %v5578
      %v5661 = vpop.f32.mrb[0].mxu0
      %v5662 = vadd.f32 %v5357, %v5661
      %v5663 = vpop.f32.mrb[0].mxu0
      %v5664 = vpop.f32.mrb[0].mxu0
      %v5665 = vadd.f32 %v5358, %v5664
      %v5666 = vpop.f32.mrb[0].mxu0
      %5667 = vdwg.mxu0
      %v5669 = vsel %vm541, %v5221, 0
      %v5672 = vsel %vm541, %v5222, 0
      %v5675 = vsel %vm541, %v5223, 0
      %v5678 = vsel %vm541, %v5224, 0
      %v5681 = vsel %vm541, %v5225, 0
      %v5684 = vsel %vm541, %v5282, 0
      %v5687 = vsel %vm541, %v5283, 0
      %v5690 = vsel %vm541, %v5284, 0
      %v5693 = vsel %vm541, %v5285, 0
      %v5696 = vsel %vm541, %v5286, 0
      %5698 = vmatprep.subr.bf16.mxu0 0
      %5699 = vmatpush1.bf16.xpose.msra.mxu0 %v5684
      %5700 = vmatprep.subr.bf16.mxu0 0
      %5701 = vmatpush1.bf16.xpose.msra.mxu0 %v5687
      %5702 = vmatprep.subr.bf16.mxu0 0
      %5703 = vmatpush1.bf16.xpose.msra.mxu0 %v5690
      %5704 = vmatprep.subr.bf16.mxu0 0
      %5705 = vmatpush1.bf16.xpose.msra.mxu0 %v5693
      %5706 = vmatprep.subr.bf16.mxu0 0
      %5707 = vmatpush1.bf16.xpose.msra.mxu0 %v5696
      %5708 = vmatprep.subr.bf16.mxu0 0
      %5709 = vmatpush1.bf16.xpose.msra.mxu0 0
      %5710 = vmatprep.subr.bf16.mxu0 0
      %5711 = vmatpush1.bf16.xpose.msra.mxu0 0
      %5712 = vmatprep.subr.bf16.mxu0 0
      %5713 = vmatpush1.bf16.xpose.msra.mxu0 0
      %5714 = vmatprep.subr.bf16.mxu0 0
      %5715 = vmatpush1.bf16.xpose.msra.mxu0 0
      %5716 = vmatprep.subr.bf16.mxu0 0
      %5717 = vmatpush1.bf16.xpose.msra.mxu0 0
      %5718 = vmatprep.subr.bf16.mxu0 0
      %5719 = vmatpush1.bf16.xpose.msra.mxu0 0
      %5720 = vmatprep.subr.bf16.mxu0 0
      %5721 = vmatpush1.bf16.xpose.msra.mxu0 0
      %5722 = vmatprep.subr.bf16.mxu0 0
      %5723 = vmatpush1.bf16.xpose.msra.mxu0 0
      %5724 = vmatprep.subr.bf16.mxu0 0
      %5725 = vmatpush1.bf16.xpose.msra.mxu0 0
      %5726 = vmatprep.subr.bf16.mxu0 0
      %5727 = vmatpush1.bf16.xpose.msra.mxu0 0
      %5728 = vmatprep.subr.bf16.mxu0 0
      %5729 = vmatpush1.bf16.xpose.msra.mxu0 0
      %5730 = vmatprep.mubr.bf16.mxu0 0
      %5731 = vmatmul.mubr.bf16.gmra.mrb[0].mxu0 %v5669
      %v5732 = vpop.f32.mrb[0].mxu0
      %v5733 = vadd.f32 %v5349, %v5732
      %v5734 = vpop.f32.mrb[0].mxu0
      %v5735 = vpop.f32.mrb[0].mxu0
      %v5736 = vadd.f32 %v5350, %v5735
      %v5737 = vpop.f32.mrb[0].mxu0
      %5738 = vmatprep.mubr.bf16.mxu0 0
      %5739 = vmatmul.mubr.bf16.gmra.mrb[0].mxu0 %v5672
      %v5740 = vpop.f32.mrb[0].mxu0
      %v5741 = vadd.f32 %v5351, %v5740
      %v5742 = vpop.f32.mrb[0].mxu0
      %v5743 = vpop.f32.mrb[0].mxu0
      %v5744 = vadd.f32 %v5352, %v5743
      %v5745 = vpop.f32.mrb[0].mxu0
      %5746 = vmatprep.mubr.bf16.mxu0 0
      %5747 = vmatmul.mubr.bf16.gmra.mrb[0].mxu0 %v5675
      %v5748 = vpop.f32.mrb[0].mxu0
      %v5749 = vadd.f32 %v5353, %v5748
      %v5750 = vpop.f32.mrb[0].mxu0
      %v5751 = vpop.f32.mrb[0].mxu0
      %v5752 = vadd.f32 %v5354, %v5751
      %v5753 = vpop.f32.mrb[0].mxu0
      %5754 = vmatprep.mubr.bf16.mxu0 0
      %5755 = vmatmul.mubr.bf16.gmra.mrb[0].mxu0 %v5678
      %v5756 = vpop.f32.mrb[0].mxu0
      %v5757 = vadd.f32 %v5355, %v5756
      %v5758 = vpop.f32.mrb[0].mxu0
      %v5759 = vpop.f32.mrb[0].mxu0
      %v5760 = vadd.f32 %v5356, %v5759
      %v5761 = vpop.f32.mrb[0].mxu0
      %5762 = vmatprep.mubr.bf16.mxu0 0
      %5763 = vmatmul.mubr.bf16.gmra.mrb[0].mxu0 %v5681
      %v5764 = vpop.f32.mrb[0].mxu0
      %v5765 = vadd.f32 %v5357, %v5764
      %v5766 = vpop.f32.mrb[0].mxu0
      %v5767 = vpop.f32.mrb[0].mxu0
      %v5768 = vadd.f32 %v5358, %v5767
      %v5769 = vpop.f32.mrb[0].mxu0
      %5770 = vdwg.mxu0
      %v5771 = vsel %vm954, %v5424, -inf
      %5772 = vmax.xlane.f32.xlu0 %v5771
      %v5773 = vpop.xlane.xlu0 %5772
      %v5774 = vsel %vm954, %v5427, -inf
      %5775 = vmax.xlane.f32.xlu0 %v5774
      %v5776 = vpop.xlane.xlu0 %5775
      %v5777 = vsel %vm954, %v5432, -inf
      %5778 = vmax.xlane.f32.xlu0 %v5777
      %v5779 = vpop.xlane.xlu0 %5778
      %v5780 = vsel %vm954, %v5435, -inf
      %5781 = vmax.xlane.f32.xlu0 %v5780
      %v5782 = vpop.xlane.xlu0 %5781
      %v5783 = vsel %vm954, %v5440, -inf
      %5784 = vmax.xlane.f32.xlu0 %v5783
      %v5785 = vpop.xlane.xlu0 %5784
      %v5786 = vsel %vm954, %v5443, -inf
      %5787 = vmax.xlane.f32.xlu0 %v5786
      %v5788 = vpop.xlane.xlu0 %5787
      %v5789 = vsel %vm954, %v5448, -inf
      %5790 = vmax.xlane.f32.xlu0 %v5789
      %v5791 = vpop.xlane.xlu0 %5790
      %v5792 = vsel %vm954, %v5451, -inf
      %5793 = vmax.xlane.f32.xlu0 %v5792
      %v5794 = vpop.xlane.xlu0 %5793
      %v5795 = vsel %vm954, %v5456, -inf
      %5796 = vmax.xlane.f32.xlu0 %v5795
      %v5797 = vpop.xlane.xlu0 %5796
      %v5798 = vsel %vm954, %v5459, -inf
      %5799 = vmax.xlane.f32.xlu0 %v5798
      %v5800 = vpop.xlane.xlu0 %5799
      %v5801 = vsel %vm954, %v5527, -inf
      %5802 = vmax.xlane.f32.xlu0 %v5801
      %v5803 = vpop.xlane.xlu0 %5802
      %v5804 = vsel %vm954, %v5530, -inf
      %5805 = vmax.xlane.f32.xlu0 %v5804
      %v5806 = vpop.xlane.xlu0 %5805
      %v5807 = vsel %vm954, %v5535, -inf
      %5808 = vmax.xlane.f32.xlu0 %v5807
      %v5809 = vpop.xlane.xlu0 %5808
      %v5810 = vsel %vm954, %v5538, -inf
      %5811 = vmax.xlane.f32.xlu0 %v5810
      %v5812 = vpop.xlane.xlu0 %5811
      %v5813 = vsel %vm954, %v5543, -inf
      %5814 = vmax.xlane.f32.xlu0 %v5813
      %v5815 = vpop.xlane.xlu0 %5814
      %v5816 = vsel %vm954, %v5546, -inf
      %5817 = vmax.xlane.f32.xlu0 %v5816
      %v5818 = vpop.xlane.xlu0 %5817
      %v5819 = vsel %vm954, %v5551, -inf
      %5820 = vmax.xlane.f32.xlu0 %v5819
      %v5821 = vpop.xlane.xlu0 %5820
      %v5822 = vsel %vm954, %v5554, -inf
      %5823 = vmax.xlane.f32.xlu0 %v5822
      %v5824 = vpop.xlane.xlu0 %5823
      %v5825 = vsel %vm954, %v5559, -inf
      %5826 = vmax.xlane.f32.xlu0 %v5825
      %v5827 = vpop.xlane.xlu0 %5826
      %v5828 = vsel %vm954, %v5562, -inf
      %5829 = vmax.xlane.f32.xlu0 %v5828
      %v5830 = vpop.xlane.xlu0 %5829
      %v5831 = vsel %vm954, %v5630, -inf
      %5832 = vmax.xlane.f32.xlu0 %v5831
      %v5833 = vpop.xlane.xlu0 %5832
      %v5834 = vsel %vm954, %v5633, -inf
      %5835 = vmax.xlane.f32.xlu0 %v5834
      %v5836 = vpop.xlane.xlu0 %5835
      %v5837 = vsel %vm954, %v5638, -inf
      %5838 = vmax.xlane.f32.xlu0 %v5837
      %v5839 = vpop.xlane.xlu0 %5838
      %v5840 = vsel %vm954, %v5641, -inf
      %5841 = vmax.xlane.f32.xlu0 %v5840
      %v5842 = vpop.xlane.xlu0 %5841
      %v5843 = vsel %vm954, %v5646, -inf
      %5844 = vmax.xlane.f32.xlu0 %v5843
      %v5845 = vpop.xlane.xlu0 %5844
      %v5846 = vsel %vm954, %v5649, -inf
      %5847 = vmax.xlane.f32.xlu0 %v5846
      %v5848 = vpop.xlane.xlu0 %5847
      %v5849 = vsel %vm954, %v5654, -inf
      %5850 = vmax.xlane.f32.xlu0 %v5849
      %v5851 = vpop.xlane.xlu0 %5850
      %v5852 = vsel %vm954, %v5657, -inf
      %5853 = vmax.xlane.f32.xlu0 %v5852
      %v5854 = vpop.xlane.xlu0 %5853
      %v5855 = vsel %vm954, %v5662, -inf
      %5856 = vmax.xlane.f32.xlu0 %v5855
      %v5857 = vpop.xlane.xlu0 %5856
      %v5858 = vsel %vm954, %v5665, -inf
      %5859 = vmax.xlane.f32.xlu0 %v5858
      %v5860 = vpop.xlane.xlu0 %5859
      %v5861 = vsel %vm954, %v5733, -inf
      %5862 = vmax.xlane.f32.xlu0 %v5861
      %v5863 = vpop.xlane.xlu0 %5862
      %v5864 = vsel %vm954, %v5736, -inf
      %5865 = vmax.xlane.f32.xlu0 %v5864
      %v5866 = vpop.xlane.xlu0 %5865
      %v5867 = vsel %vm954, %v5741, -inf
      %5868 = vmax.xlane.f32.xlu0 %v5867
      %v5869 = vpop.xlane.xlu0 %5868
      %v5870 = vsel %vm954, %v5744, -inf
      %5871 = vmax.xlane.f32.xlu0 %v5870
      %v5872 = vpop.xlane.xlu0 %5871
      %v5873 = vsel %vm954, %v5749, -inf
      %5874 = vmax.xlane.f32.xlu0 %v5873
      %v5875 = vpop.xlane.xlu0 %5874
      %v5876 = vsel %vm954, %v5752, -inf
      %5877 = vmax.xlane.f32.xlu0 %v5876
      %v5878 = vpop.xlane.xlu0 %5877
      %v5879 = vsel %vm954, %v5757, -inf
      %5880 = vmax.xlane.f32.xlu0 %v5879
      %v5881 = vpop.xlane.xlu0 %5880
      %v5882 = vsel %vm954, %v5760, -inf
      %5883 = vmax.xlane.f32.xlu0 %v5882
      %v5884 = vpop.xlane.xlu0 %5883
      %v5885 = vsel %vm954, %v5765, -inf
      %5886 = vmax.xlane.f32.xlu0 %v5885
      %v5887 = vpop.xlane.xlu0 %5886
      %v5888 = vsel %vm954, %v5768, -inf
      %5889 = vmax.xlane.f32.xlu0 %v5888
      %v5890 = vpop.xlane.xlu0 %5889
      %v5891 = vsub.f32 %v5424, %v5773
      %v5892 = vsub.f32 %v5427, %v5776
      %v5893 = vsub.f32 %v5432, %v5779
      %v5894 = vsub.f32 %v5435, %v5782
      %v5895 = vsub.f32 %v5440, %v5785
      %v5896 = vsub.f32 %v5443, %v5788
      %v5897 = vsub.f32 %v5448, %v5791
      %v5898 = vsub.f32 %v5451, %v5794
      %v5899 = vsub.f32 %v5456, %v5797
      %v5900 = vsub.f32 %v5459, %v5800
      %v5901 = vsub.f32 %v5527, %v5803
      %v5902 = vsub.f32 %v5530, %v5806
      %v5903 = vsub.f32 %v5535, %v5809
      %v5904 = vsub.f32 %v5538, %v5812
      %v5905 = vsub.f32 %v5543, %v5815
      %v5906 = vsub.f32 %v5546, %v5818
      %v5907 = vsub.f32 %v5551, %v5821
      %v5908 = vsub.f32 %v5554, %v5824
      %v5909 = vsub.f32 %v5559, %v5827
      %v5910 = vsub.f32 %v5562, %v5830
      %v5911 = vsub.f32 %v5630, %v5833
      %v5912 = vsub.f32 %v5633, %v5836
      %v5913 = vsub.f32 %v5638, %v5839
      %v5914 = vsub.f32 %v5641, %v5842
      %v5915 = vsub.f32 %v5646, %v5845
      %v5916 = vsub.f32 %v5649, %v5848
      %v5917 = vsub.f32 %v5654, %v5851
      %v5918 = vsub.f32 %v5657, %v5854
      %v5919 = vsub.f32 %v5662, %v5857
      %v5920 = vsub.f32 %v5665, %v5860
      %v5921 = vsub.f32 %v5733, %v5863
      %v5922 = vsub.f32 %v5736, %v5866
      %v5923 = vsub.f32 %v5741, %v5869
      %v5924 = vsub.f32 %v5744, %v5872
      %v5925 = vsub.f32 %v5749, %v5875
      %v5926 = vsub.f32 %v5752, %v5878
      %v5927 = vsub.f32 %v5757, %v5881
      %v5928 = vsub.f32 %v5760, %v5884
      %v5929 = vsub.f32 %v5765, %v5887
      %v5930 = vsub.f32 %v5768, %v5890
      %v5931 = vmul.f32 %v5891, 1.442695
      %v5932 = vpow.pop %v5931
      %v5933 = vmul.f32 %v5892, 1.442695
      %v5934 = vpow.pop %v5933
      %v5935 = vmul.f32 %v5893, 1.442695
      %v5936 = vpow.pop %v5935
      %v5937 = vmul.f32 %v5894, 1.442695
      %v5938 = vpow.pop %v5937
      %v5939 = vmul.f32 %v5895, 1.442695
      %v5940 = vpow.pop %v5939
      %v5941 = vmul.f32 %v5896, 1.442695
      %v5942 = vpow.pop %v5941
      %v5943 = vmul.f32 %v5897, 1.442695
      %v5944 = vpow.pop %v5943
      %v5945 = vmul.f32 %v5898, 1.442695
      %v5946 = vpow.pop %v5945
      %v5947 = vmul.f32 %v5899, 1.442695
      %v5948 = vpow.pop %v5947
      %v5949 = vmul.f32 %v5900, 1.442695
      %v5950 = vpow.pop %v5949
      %v5951 = vmul.f32 %v5901, 1.442695
      %v5952 = vpow.pop %v5951
      %v5953 = vmul.f32 %v5902, 1.442695
      %v5954 = vpow.pop %v5953
      %v5955 = vmul.f32 %v5903, 1.442695
      %v5956 = vpow.pop %v5955
      %v5957 = vmul.f32 %v5904, 1.442695
      %v5958 = vpow.pop %v5957
      %v5959 = vmul.f32 %v5905, 1.442695
      %v5960 = vpow.pop %v5959
      %v5961 = vmul.f32 %v5906, 1.442695
      %v5962 = vpow.pop %v5961
      %v5963 = vmul.f32 %v5907, 1.442695
      %v5964 = vpow.pop %v5963
      %v5965 = vmul.f32 %v5908, 1.442695
      %v5966 = vpow.pop %v5965
      %v5967 = vmul.f32 %v5909, 1.442695
      %v5968 = vpow.pop %v5967
      %v5969 = vmul.f32 %v5910, 1.442695
      %v5970 = vpow.pop %v5969
      %v5971 = vmul.f32 %v5911, 1.442695
      %v5972 = vpow.pop %v5971
      %v5973 = vmul.f32 %v5912, 1.442695
      %v5974 = vpow.pop %v5973
      %v5975 = vmul.f32 %v5913, 1.442695
      %v5976 = vpow.pop %v5975
      %v5977 = vmul.f32 %v5914, 1.442695
      %v5978 = vpow.pop %v5977
      %v5979 = vmul.f32 %v5915, 1.442695
      %v5980 = vpow.pop %v5979
      %v5981 = vmul.f32 %v5916, 1.442695
      %v5982 = vpow.pop %v5981
      %v5983 = vmul.f32 %v5917, 1.442695
      %v5984 = vpow.pop %v5983
      %v5985 = vmul.f32 %v5918, 1.442695
      %v5986 = vpow.pop %v5985
      %v5987 = vmul.f32 %v5919, 1.442695
      %v5988 = vpow.pop %v5987
      %v5989 = vmul.f32 %v5920, 1.442695
      %v5990 = vpow.pop %v5989
      %v5991 = vmul.f32 %v5921, 1.442695
      %v5992 = vpow.pop %v5991
      %v5993 = vmul.f32 %v5922, 1.442695
      %v5994 = vpow.pop %v5993
      %v5995 = vmul.f32 %v5923, 1.442695
      %v5996 = vpow.pop %v5995
      %v5997 = vmul.f32 %v5924, 1.442695
      %v5998 = vpow.pop %v5997
      %v5999 = vmul.f32 %v5925, 1.442695
      %v6000 = vpow.pop %v5999
      %v6001 = vmul.f32 %v5926, 1.442695
      %v6002 = vpow.pop %v6001
      %v6003 = vmul.f32 %v5927, 1.442695
      %v6004 = vpow.pop %v6003
      %v6005 = vmul.f32 %v5928, 1.442695
      %v6006 = vpow.pop %v6005
      %v6007 = vmul.f32 %v5929, 1.442695
      %v6008 = vpow.pop %v6007
      %v6009 = vmul.f32 %v5930, 1.442695
      %v6010 = vpow.pop %v6009
      %v6011 = vsel %vm954, %v5932, 0.0
      %6012 = vadd.xlane.f32.xlu0 %v6011
      %v6013 = vpop.xlane.xlu0 %6012
      %v6014 = vsel %vm954, %v5934, 0.0
      %6015 = vadd.xlane.f32.xlu0 %v6014
      %v6016 = vpop.xlane.xlu0 %6015
      %v6017 = vsel %vm954, %v5936, 0.0
      %6018 = vadd.xlane.f32.xlu0 %v6017
      %v6019 = vpop.xlane.xlu0 %6018
      %v6020 = vsel %vm954, %v5938, 0.0
      %6021 = vadd.xlane.f32.xlu0 %v6020
      %v6022 = vpop.xlane.xlu0 %6021
      %v6023 = vsel %vm954, %v5940, 0.0
      %6024 = vadd.xlane.f32.xlu0 %v6023
      %v6025 = vpop.xlane.xlu0 %6024
      %v6026 = vsel %vm954, %v5942, 0.0
      %6027 = vadd.xlane.f32.xlu0 %v6026
      %v6028 = vpop.xlane.xlu0 %6027
      %v6029 = vsel %vm954, %v5944, 0.0
      %6030 = vadd.xlane.f32.xlu0 %v6029
      %v6031 = vpop.xlane.xlu0 %6030
      %v6032 = vsel %vm954, %v5946, 0.0
      %6033 = vadd.xlane.f32.xlu0 %v6032
      %v6034 = vpop.xlane.xlu0 %6033
      %v6035 = vsel %vm954, %v5948, 0.0
      %6036 = vadd.xlane.f32.xlu0 %v6035
      %v6037 = vpop.xlane.xlu0 %6036
      %v6038 = vsel %vm954, %v5950, 0.0
      %6039 = vadd.xlane.f32.xlu0 %v6038
      %v6040 = vpop.xlane.xlu0 %6039
      %v6041 = vsel %vm954, %v5952, 0.0
      %6042 = vadd.xlane.f32.xlu0 %v6041
      %v6043 = vpop.xlane.xlu0 %6042
      %v6044 = vsel %vm954, %v5954, 0.0
      %6045 = vadd.xlane.f32.xlu0 %v6044
      %v6046 = vpop.xlane.xlu0 %6045
      %v6047 = vsel %vm954, %v5956, 0.0
      %6048 = vadd.xlane.f32.xlu0 %v6047
      %v6049 = vpop.xlane.xlu0 %6048
      %v6050 = vsel %vm954, %v5958, 0.0
      %6051 = vadd.xlane.f32.xlu0 %v6050
      %v6052 = vpop.xlane.xlu0 %6051
      %v6053 = vsel %vm954, %v5960, 0.0
      %6054 = vadd.xlane.f32.xlu0 %v6053
      %v6055 = vpop.xlane.xlu0 %6054
      %v6056 = vsel %vm954, %v5962, 0.0
      %6057 = vadd.xlane.f32.xlu0 %v6056
      %v6058 = vpop.xlane.xlu0 %6057
      %v6059 = vsel %vm954, %v5964, 0.0
      %6060 = vadd.xlane.f32.xlu0 %v6059
      %v6061 = vpop.xlane.xlu0 %6060
      %v6062 = vsel %vm954, %v5966, 0.0
      %6063 = vadd.xlane.f32.xlu0 %v6062
      %v6064 = vpop.xlane.xlu0 %6063
      %v6065 = vsel %vm954, %v5968, 0.0
      %6066 = vadd.xlane.f32.xlu0 %v6065
      %v6067 = vpop.xlane.xlu0 %6066
      %v6068 = vsel %vm954, %v5970, 0.0
      %6069 = vadd.xlane.f32.xlu0 %v6068
      %v6070 = vpop.xlane.xlu0 %6069
      %v6071 = vsel %vm954, %v5972, 0.0
      %6072 = vadd.xlane.f32.xlu0 %v6071
      %v6073 = vpop.xlane.xlu0 %6072
      %v6074 = vsel %vm954, %v5974, 0.0
      %6075 = vadd.xlane.f32.xlu0 %v6074
      %v6076 = vpop.xlane.xlu0 %6075
      %v6077 = vsel %vm954, %v5976, 0.0
      %6078 = vadd.xlane.f32.xlu0 %v6077
      %v6079 = vpop.xlane.xlu0 %6078
      %v6080 = vsel %vm954, %v5978, 0.0
      %6081 = vadd.xlane.f32.xlu0 %v6080
      %v6082 = vpop.xlane.xlu0 %6081
      %v6083 = vsel %vm954, %v5980, 0.0
      %6084 = vadd.xlane.f32.xlu0 %v6083
      %v6085 = vpop.xlane.xlu0 %6084
      %v6086 = vsel %vm954, %v5982, 0.0
      %6087 = vadd.xlane.f32.xlu0 %v6086
      %v6088 = vpop.xlane.xlu0 %6087
      %v6089 = vsel %vm954, %v5984, 0.0
      %6090 = vadd.xlane.f32.xlu0 %v6089
      %v6091 = vpop.xlane.xlu0 %6090
      %v6092 = vsel %vm954, %v5986, 0.0
      %6093 = vadd.xlane.f32.xlu0 %v6092
      %v6094 = vpop.xlane.xlu0 %6093
      %v6095 = vsel %vm954, %v5988, 0.0
      %6096 = vadd.xlane.f32.xlu0 %v6095
      %v6097 = vpop.xlane.xlu0 %6096
      %v6098 = vsel %vm954, %v5990, 0.0
      %6099 = vadd.xlane.f32.xlu0 %v6098
      %v6100 = vpop.xlane.xlu0 %6099
      %v6101 = vsel %vm954, %v5992, 0.0
      %6102 = vadd.xlane.f32.xlu0 %v6101
      %v6103 = vpop.xlane.xlu0 %6102
      %v6104 = vsel %vm954, %v5994, 0.0
      %6105 = vadd.xlane.f32.xlu0 %v6104
      %v6106 = vpop.xlane.xlu0 %6105
      %v6107 = vsel %vm954, %v5996, 0.0
      %6108 = vadd.xlane.f32.xlu0 %v6107
      %v6109 = vpop.xlane.xlu0 %6108
      %v6110 = vsel %vm954, %v5998, 0.0
      %6111 = vadd.xlane.f32.xlu0 %v6110
      %v6112 = vpop.xlane.xlu0 %6111
      %v6113 = vsel %vm954, %v6000, 0.0
      %6114 = vadd.xlane.f32.xlu0 %v6113
      %v6115 = vpop.xlane.xlu0 %6114
      %v6116 = vsel %vm954, %v6002, 0.0
      %6117 = vadd.xlane.f32.xlu0 %v6116
      %v6118 = vpop.xlane.xlu0 %6117
      %v6119 = vsel %vm954, %v6004, 0.0
      %6120 = vadd.xlane.f32.xlu0 %v6119
      %v6121 = vpop.xlane.xlu0 %6120
      %v6122 = vsel %vm954, %v6006, 0.0
      %6123 = vadd.xlane.f32.xlu0 %v6122
      %v6124 = vpop.xlane.xlu0 %6123
      %v6125 = vsel %vm954, %v6008, 0.0
      %6126 = vadd.xlane.f32.xlu0 %v6125
      %v6127 = vpop.xlane.xlu0 %6126
      %v6128 = vsel %vm954, %v6010, 0.0
      %6129 = vadd.xlane.f32.xlu0 %v6128
      %v6130 = vpop.xlane.xlu0 %6129
      %v6131 = vrcp.pop %v6013
      %v6132 = vrcp.pop %v6016
      %v6133 = vrcp.pop %v6019
      %v6134 = vrcp.pop %v6022
      %v6135 = vrcp.pop %v6025
      %v6136 = vrcp.pop %v6028
      %v6137 = vrcp.pop %v6031
      %v6138 = vrcp.pop %v6034
      %v6139 = vrcp.pop %v6037
      %v6140 = vrcp.pop %v6040
      %v6141 = vrcp.pop %v6043
      %v6142 = vrcp.pop %v6046
      %v6143 = vrcp.pop %v6049
      %v6144 = vrcp.pop %v6052
      %v6145 = vrcp.pop %v6055
      %v6146 = vrcp.pop %v6058
      %v6147 = vrcp.pop %v6061
      %v6148 = vrcp.pop %v6064
      %v6149 = vrcp.pop %v6067
      %v6150 = vrcp.pop %v6070
      %v6151 = vrcp.pop %v6073
      %v6152 = vrcp.pop %v6076
      %v6153 = vrcp.pop %v6079
      %v6154 = vrcp.pop %v6082
      %v6155 = vrcp.pop %v6085
      %v6156 = vrcp.pop %v6088
      %v6157 = vrcp.pop %v6091
      %v6158 = vrcp.pop %v6094
      %v6159 = vrcp.pop %v6097
      %v6160 = vrcp.pop %v6100
      %v6161 = vrcp.pop %v6103
      %v6162 = vrcp.pop %v6106
      %v6163 = vrcp.pop %v6109
      %v6164 = vrcp.pop %v6112
      %v6165 = vrcp.pop %v6115
      %v6166 = vrcp.pop %v6118
      %v6167 = vrcp.pop %v6121
      %v6168 = vrcp.pop %v6124
      %v6169 = vrcp.pop %v6127
      %v6170 = vrcp.pop %v6130
      %v6171 = vmul.f32 %v5932, %v6131
      %v6172 = vmul.f32 %v5934, %v6132
      %v6173 = vmul.f32 %v5936, %v6133
      %v6174 = vmul.f32 %v5938, %v6134
      %v6175 = vmul.f32 %v5940, %v6135
      %v6176 = vmul.f32 %v5942, %v6136
      %v6177 = vmul.f32 %v5944, %v6137
      %v6178 = vmul.f32 %v5946, %v6138
      %v6179 = vmul.f32 %v5948, %v6139
      %v6180 = vmul.f32 %v5950, %v6140
      %v6181 = vmul.f32 %v5952, %v6141
      %v6182 = vmul.f32 %v5954, %v6142
      %v6183 = vmul.f32 %v5956, %v6143
      %v6184 = vmul.f32 %v5958, %v6144
      %v6185 = vmul.f32 %v5960, %v6145
      %v6186 = vmul.f32 %v5962, %v6146
      %v6187 = vmul.f32 %v5964, %v6147
      %v6188 = vmul.f32 %v5966, %v6148
      %v6189 = vmul.f32 %v5968, %v6149
      %v6190 = vmul.f32 %v5970, %v6150
      %v6191 = vmul.f32 %v5972, %v6151
      %v6192 = vmul.f32 %v5974, %v6152
      %v6193 = vmul.f32 %v5976, %v6153
      %v6194 = vmul.f32 %v5978, %v6154
      %v6195 = vmul.f32 %v5980, %v6155
      %v6196 = vmul.f32 %v5982, %v6156
      %v6197 = vmul.f32 %v5984, %v6157
      %v6198 = vmul.f32 %v5986, %v6158
      %v6199 = vmul.f32 %v5988, %v6159
      %v6200 = vmul.f32 %v5990, %v6160
      %v6201 = vmul.f32 %v5992, %v6161
      %v6202 = vmul.f32 %v5994, %v6162
      %v6203 = vmul.f32 %v5996, %v6163
      %v6204 = vmul.f32 %v5998, %v6164
      %v6205 = vmul.f32 %v6000, %v6165
      %v6206 = vmul.f32 %v6002, %v6166
      %v6207 = vmul.f32 %v6004, %v6167
      %v6208 = vmul.f32 %v6006, %v6168
      %v6209 = vmul.f32 %v6008, %v6169
      %v6210 = vmul.f32 %v6010, %v6170
      %v6211 = vpack.c.bf16 %v6172, %v6171
      %v6212 = vpack.c.bf16 %v6174, %v6173
      %v6213 = vpack.c.bf16 %v6176, %v6175
      %v6214 = vpack.c.bf16 %v6178, %v6177
      %v6215 = vpack.c.bf16 %v6180, %v6179
      %v6216 = vpack.c.bf16 %v6182, %v6181
      %v6217 = vpack.c.bf16 %v6184, %v6183
      %v6218 = vpack.c.bf16 %v6186, %v6185
      %v6219 = vpack.c.bf16 %v6188, %v6187
      %v6220 = vpack.c.bf16 %v6190, %v6189
      %v6221 = vpack.c.bf16 %v6192, %v6191
      %v6222 = vpack.c.bf16 %v6194, %v6193
      %v6223 = vpack.c.bf16 %v6196, %v6195
      %v6224 = vpack.c.bf16 %v6198, %v6197
      %v6225 = vpack.c.bf16 %v6200, %v6199
      %v6226 = vpack.c.bf16 %v6202, %v6201
      %v6227 = vpack.c.bf16 %v6204, %v6203
      %v6228 = vpack.c.bf16 %v6206, %v6205
      %v6229 = vpack.c.bf16 %v6208, %v6207
      %v6230 = vpack.c.bf16 %v6210, %v6209
      %v6232 = vsel %vm954, %v6211, 0
      %v6235 = vsel %vm954, %v6212, 0
      %v6238 = vsel %vm954, %v6213, 0
      %v6241 = vsel %vm954, %v6214, 0
      %v6244 = vsel %vm954, %v6215, 0
      %6246 = vmatprep.subr.bf16.mxu0 0
      %6247 = vmatpush1.bf16.msra.mxu0 %v5328
      %6248 = vmatprep.subr.bf16.mxu0 0
      %6249 = vmatpush1.bf16.msra.mxu0 %v5329
      %6250 = vmatprep.subr.bf16.mxu0 0
      %6251 = vmatpush1.bf16.msra.mxu0 %v5330
      %6252 = vmatprep.subr.bf16.mxu0 0
      %6253 = vmatpush1.bf16.msra.mxu0 %v5331
      %6254 = vmatprep.subr.bf16.mxu0 0
      %6255 = vmatpush1.bf16.msra.mxu0 %v5332
      %6256 = vmatprep.subr.bf16.mxu0 0
      %6257 = vmatpush1.bf16.msra.mxu0 0
      %6258 = vmatprep.subr.bf16.mxu0 0
      %6259 = vmatpush1.bf16.msra.mxu0 0
      %6260 = vmatprep.subr.bf16.mxu0 0
      %6261 = vmatpush1.bf16.msra.mxu0 0
      %6262 = vmatprep.subr.bf16.mxu0 0
      %6263 = vmatpush1.bf16.msra.mxu0 0
      %6264 = vmatprep.subr.bf16.mxu0 0
      %6265 = vmatpush1.bf16.msra.mxu0 0
      %6266 = vmatprep.subr.bf16.mxu0 0
      %6267 = vmatpush1.bf16.msra.mxu0 0
      %6268 = vmatprep.subr.bf16.mxu0 0
      %6269 = vmatpush1.bf16.msra.mxu0 0
      %6270 = vmatprep.subr.bf16.mxu0 0
      %6271 = vmatpush1.bf16.msra.mxu0 0
      %6272 = vmatprep.subr.bf16.mxu0 0
      %6273 = vmatpush1.bf16.msra.mxu0 0
      %6274 = vmatprep.subr.bf16.mxu0 0
      %6275 = vmatpush1.bf16.msra.mxu0 0
      %6276 = vmatprep.subr.bf16.mxu0 0
      %6277 = vmatpush1.bf16.msra.mxu0 0
      %6278 = vmatprep.mubr.bf16.mxu0 0
      %6279 = vmatmul.mubr.bf16.gmra.mrb[0].mxu0 %v6232
      %v6280 = vpop.f32.mrb[0].mxu0
      %v6281 = vadd.f32 0.0, %v6280
      %v6282 = vpop.f32.mrb[0].mxu0
      %v6283 = vpop.f32.mrb[0].mxu0
      %v6284 = vadd.f32 0.0, %v6283
      %v6285 = vpop.f32.mrb[0].mxu0
      %6286 = vmatprep.mubr.bf16.mxu0 0
      %6287 = vmatmul.mubr.bf16.gmra.mrb[0].mxu0 %v6235
      %v6288 = vpop.f32.mrb[0].mxu0
      %v6289 = vadd.f32 0.0, %v6288
      %v6290 = vpop.f32.mrb[0].mxu0
      %v6291 = vpop.f32.mrb[0].mxu0
      %v6292 = vadd.f32 0.0, %v6291
      %v6293 = vpop.f32.mrb[0].mxu0
      %6294 = vmatprep.mubr.bf16.mxu0 0
      %6295 = vmatmul.mubr.bf16.gmra.mrb[0].mxu0 %v6238
      %v6296 = vpop.f32.mrb[0].mxu0
      %v6297 = vadd.f32 0.0, %v6296
      %v6298 = vpop.f32.mrb[0].mxu0
      %v6299 = vpop.f32.mrb[0].mxu0
      %v6300 = vadd.f32 0.0, %v6299
      %v6301 = vpop.f32.mrb[0].mxu0
      %6302 = vmatprep.mubr.bf16.mxu0 0
      %6303 = vmatmul.mubr.bf16.gmra.mrb[0].mxu0 %v6241
      %v6304 = vpop.f32.mrb[0].mxu0
      %v6305 = vadd.f32 0.0, %v6304
      %v6306 = vpop.f32.mrb[0].mxu0
      %v6307 = vpop.f32.mrb[0].mxu0
      %v6308 = vadd.f32 0.0, %v6307
      %v6309 = vpop.f32.mrb[0].mxu0
      %6310 = vmatprep.mubr.bf16.mxu0 0
      %6311 = vmatmul.mubr.bf16.gmra.mrb[0].mxu0 %v6244
      %v6312 = vpop.f32.mrb[0].mxu0
      %v6313 = vadd.f32 0.0, %v6312
      %v6314 = vpop.f32.mrb[0].mxu0
      %v6315 = vpop.f32.mrb[0].mxu0
      %v6316 = vadd.f32 0.0, %v6315
      %v6317 = vpop.f32.mrb[0].mxu0
      %6318 = vdwg.mxu0
      %v6320 = vsel %vm954, %v6216, 0
      %v6323 = vsel %vm954, %v6217, 0
      %v6326 = vsel %vm954, %v6218, 0
      %v6329 = vsel %vm954, %v6219, 0
      %v6332 = vsel %vm954, %v6220, 0
      %6334 = vmatprep.subr.bf16.mxu0 0
      %6335 = vmatpush1.bf16.msra.mxu0 %v5333
      %6336 = vmatprep.subr.bf16.mxu0 0
      %6337 = vmatpush1.bf16.msra.mxu0 %v5334
      %6338 = vmatprep.subr.bf16.mxu0 0
      %6339 = vmatpush1.bf16.msra.mxu0 %v5335
      %6340 = vmatprep.subr.bf16.mxu0 0
      %6341 = vmatpush1.bf16.msra.mxu0 %v5336
      %6342 = vmatprep.subr.bf16.mxu0 0
      %6343 = vmatpush1.bf16.msra.mxu0 %v5337
      %6344 = vmatprep.subr.bf16.mxu0 0
      %6345 = vmatpush1.bf16.msra.mxu0 0
      %6346 = vmatprep.subr.bf16.mxu0 0
      %6347 = vmatpush1.bf16.msra.mxu0 0
      %6348 = vmatprep.subr.bf16.mxu0 0
      %6349 = vmatpush1.bf16.msra.mxu0 0
      %6350 = vmatprep.subr.bf16.mxu0 0
      %6351 = vmatpush1.bf16.msra.mxu0 0
      %6352 = vmatprep.subr.bf16.mxu0 0
      %6353 = vmatpush1.bf16.msra.mxu0 0
      %6354 = vmatprep.subr.bf16.mxu0 0
      %6355 = vmatpush1.bf16.msra.mxu0 0
      %6356 = vmatprep.subr.bf16.mxu0 0
      %6357 = vmatpush1.bf16.msra.mxu0 0
      %6358 = vmatprep.subr.bf16.mxu0 0
      %6359 = vmatpush1.bf16.msra.mxu0 0
      %6360 = vmatprep.subr.bf16.mxu0 0
      %6361 = vmatpush1.bf16.msra.mxu0 0
      %6362 = vmatprep.subr.bf16.mxu0 0
      %6363 = vmatpush1.bf16.msra.mxu0 0
      %6364 = vmatprep.subr.bf16.mxu0 0
      %6365 = vmatpush1.bf16.msra.mxu0 0
      %6366 = vmatprep.mubr.bf16.mxu0 0
      %6367 = vmatmul.mubr.bf16.gmra.mrb[0].mxu0 %v6320
      %v6368 = vpop.f32.mrb[0].mxu0
      %v6369 = vadd.f32 0.0, %v6368
      %v6370 = vpop.f32.mrb[0].mxu0
      %v6371 = vpop.f32.mrb[0].mxu0
      %v6372 = vadd.f32 0.0, %v6371
      %v6373 = vpop.f32.mrb[0].mxu0
      %6374 = vmatprep.mubr.bf16.mxu0 0
      %6375 = vmatmul.mubr.bf16.gmra.mrb[0].mxu0 %v6323
      %v6376 = vpop.f32.mrb[0].mxu0
      %v6377 = vadd.f32 0.0, %v6376
      %v6378 = vpop.f32.mrb[0].mxu0
      %v6379 = vpop.f32.mrb[0].mxu0
      %v6380 = vadd.f32 0.0, %v6379
      %v6381 = vpop.f32.mrb[0].mxu0
      %6382 = vmatprep.mubr.bf16.mxu0 0
      %6383 = vmatmul.mubr.bf16.gmra.mrb[0].mxu0 %v6326
      %v6384 = vpop.f32.mrb[0].mxu0
      %v6385 = vadd.f32 0.0, %v6384
      %v6386 = vpop.f32.mrb[0].mxu0
      %v6387 = vpop.f32.mrb[0].mxu0
      %v6388 = vadd.f32 0.0, %v6387
      %v6389 = vpop.f32.mrb[0].mxu0
      %6390 = vmatprep.mubr.bf16.mxu0 0
      %6391 = vmatmul.mubr.bf16.gmra.mrb[0].mxu0 %v6329
      %v6392 = vpop.f32.mrb[0].mxu0
      %v6393 = vadd.f32 0.0, %v6392
      %v6394 = vpop.f32.mrb[0].mxu0
      %v6395 = vpop.f32.mrb[0].mxu0
      %v6396 = vadd.f32 0.0, %v6395
      %v6397 = vpop.f32.mrb[0].mxu0
      %6398 = vmatprep.mubr.bf16.mxu0 0
      %6399 = vmatmul.mubr.bf16.gmra.mrb[0].mxu0 %v6332
      %v6400 = vpop.f32.mrb[0].mxu0
      %v6401 = vadd.f32 0.0, %v6400
      %v6402 = vpop.f32.mrb[0].mxu0
      %v6403 = vpop.f32.mrb[0].mxu0
      %v6404 = vadd.f32 0.0, %v6403
      %v6405 = vpop.f32.mrb[0].mxu0
      %6406 = vdwg.mxu0
      %v6408 = vsel %vm954, %v6221, 0
      %v6411 = vsel %vm954, %v6222, 0
      %v6414 = vsel %vm954, %v6223, 0
      %v6417 = vsel %vm954, %v6224, 0
      %v6420 = vsel %vm954, %v6225, 0
      %6422 = vmatprep.subr.bf16.mxu0 0
      %6423 = vmatpush1.bf16.msra.mxu0 %v5338
      %6424 = vmatprep.subr.bf16.mxu0 0
      %6425 = vmatpush1.bf16.msra.mxu0 %v5339
      %6426 = vmatprep.subr.bf16.mxu0 0
      %6427 = vmatpush1.bf16.msra.mxu0 %v5340
      %6428 = vmatprep.subr.bf16.mxu0 0
      %6429 = vmatpush1.bf16.msra.mxu0 %v5341
      %6430 = vmatprep.subr.bf16.mxu0 0
      %6431 = vmatpush1.bf16.msra.mxu0 %v5342
      %6432 = vmatprep.subr.bf16.mxu0 0
      %6433 = vmatpush1.bf16.msra.mxu0 0
      %6434 = vmatprep.subr.bf16.mxu0 0
      %6435 = vmatpush1.bf16.msra.mxu0 0
      %6436 = vmatprep.subr.bf16.mxu0 0
      %6437 = vmatpush1.bf16.msra.mxu0 0
      %6438 = vmatprep.subr.bf16.mxu0 0
      %6439 = vmatpush1.bf16.msra.mxu0 0
      %6440 = vmatprep.subr.bf16.mxu0 0
      %6441 = vmatpush1.bf16.msra.mxu0 0
      %6442 = vmatprep.subr.bf16.mxu0 0
      %6443 = vmatpush1.bf16.msra.mxu0 0
      %6444 = vmatprep.subr.bf16.mxu0 0
      %6445 = vmatpush1.bf16.msra.mxu0 0
      %6446 = vmatprep.subr.bf16.mxu0 0
      %6447 = vmatpush1.bf16.msra.mxu0 0
      %6448 = vmatprep.subr.bf16.mxu0 0
      %6449 = vmatpush1.bf16.msra.mxu0 0
      %6450 = vmatprep.subr.bf16.mxu0 0
      %6451 = vmatpush1.bf16.msra.mxu0 0
      %6452 = vmatprep.subr.bf16.mxu0 0
      %6453 = vmatpush1.bf16.msra.mxu0 0
      %6454 = vmatprep.mubr.bf16.mxu0 0
      %6455 = vmatmul.mubr.bf16.gmra.mrb[0].mxu0 %v6408
      %v6456 = vpop.f32.mrb[0].mxu0
      %v6457 = vadd.f32 0.0, %v6456
      %v6458 = vpop.f32.mrb[0].mxu0
      %v6459 = vpop.f32.mrb[0].mxu0
      %v6460 = vadd.f32 0.0, %v6459
      %v6461 = vpop.f32.mrb[0].mxu0
      %6462 = vmatprep.mubr.bf16.mxu0 0
      %6463 = vmatmul.mubr.bf16.gmra.mrb[0].mxu0 %v6411
      %v6464 = vpop.f32.mrb[0].mxu0
      %v6465 = vadd.f32 0.0, %v6464
      %v6466 = vpop.f32.mrb[0].mxu0
      %v6467 = vpop.f32.mrb[0].mxu0
      %v6468 = vadd.f32 0.0, %v6467
      %v6469 = vpop.f32.mrb[0].mxu0
      %6470 = vmatprep.mubr.bf16.mxu0 0
      %6471 = vmatmul.mubr.bf16.gmra.mrb[0].mxu0 %v6414
      %v6472 = vpop.f32.mrb[0].mxu0
      %v6473 = vadd.f32 0.0, %v6472
      %v6474 = vpop.f32.mrb[0].mxu0
      %v6475 = vpop.f32.mrb[0].mxu0
      %v6476 = vadd.f32 0.0, %v6475
      %v6477 = vpop.f32.mrb[0].mxu0
      %6478 = vmatprep.mubr.bf16.mxu0 0
      %6479 = vmatmul.mubr.bf16.gmra.mrb[0].mxu0 %v6417
      %v6480 = vpop.f32.mrb[0].mxu0
      %v6481 = vadd.f32 0.0, %v6480
      %v6482 = vpop.f32.mrb[0].mxu0
      %v6483 = vpop.f32.mrb[0].mxu0
      %v6484 = vadd.f32 0.0, %v6483
      %v6485 = vpop.f32.mrb[0].mxu0
      %6486 = vmatprep.mubr.bf16.mxu0 0
      %6487 = vmatmul.mubr.bf16.gmra.mrb[0].mxu0 %v6420
      %v6488 = vpop.f32.mrb[0].mxu0
      %v6489 = vadd.f32 0.0, %v6488
      %v6490 = vpop.f32.mrb[0].mxu0
      %v6491 = vpop.f32.mrb[0].mxu0
      %v6492 = vadd.f32 0.0, %v6491
      %v6493 = vpop.f32.mrb[0].mxu0
      %6494 = vdwg.mxu0
      %v6496 = vsel %vm954, %v6226, 0
      %v6499 = vsel %vm954, %v6227, 0
      %v6502 = vsel %vm954, %v6228, 0
      %v6505 = vsel %vm954, %v6229, 0
      %v6508 = vsel %vm954, %v6230, 0
      %6510 = vmatprep.subr.bf16.mxu0 0
      %6511 = vmatpush1.bf16.msra.mxu0 %v5343
      %6512 = vmatprep.subr.bf16.mxu0 0
      %6513 = vmatpush1.bf16.msra.mxu0 %v5344
      %6514 = vmatprep.subr.bf16.mxu0 0
      %6515 = vmatpush1.bf16.msra.mxu0 %v5345
      %6516 = vmatprep.subr.bf16.mxu0 0
      %6517 = vmatpush1.bf16.msra.mxu0 %v5346
      %6518 = vmatprep.subr.bf16.mxu0 0
      %6519 = vmatpush1.bf16.msra.mxu0 %v5347
      %6520 = vmatprep.subr.bf16.mxu0 0
      %6521 = vmatpush1.bf16.msra.mxu0 0
      %6522 = vmatprep.subr.bf16.mxu0 0
      %6523 = vmatpush1.bf16.msra.mxu0 0
      %6524 = vmatprep.subr.bf16.mxu0 0
      %6525 = vmatpush1.bf16.msra.mxu0 0
      %6526 = vmatprep.subr.bf16.mxu0 0
      %6527 = vmatpush1.bf16.msra.mxu0 0
      %6528 = vmatprep.subr.bf16.mxu0 0
      %6529 = vmatpush1.bf16.msra.mxu0 0
      %6530 = vmatprep.subr.bf16.mxu0 0
      %6531 = vmatpush1.bf16.msra.mxu0 0
      %6532 = vmatprep.subr.bf16.mxu0 0
      %6533 = vmatpush1.bf16.msra.mxu0 0
      %6534 = vmatprep.subr.bf16.mxu0 0
      %6535 = vmatpush1.bf16.msra.mxu0 0
      %6536 = vmatprep.subr.bf16.mxu0 0
      %6537 = vmatpush1.bf16.msra.mxu0 0
      %6538 = vmatprep.subr.bf16.mxu0 0
      %6539 = vmatpush1.bf16.msra.mxu0 0
      %6540 = vmatprep.subr.bf16.mxu0 0
      %6541 = vmatpush1.bf16.msra.mxu0 0
      %6542 = vmatprep.mubr.bf16.mxu0 0
      %6543 = vmatmul.mubr.bf16.gmra.mrb[0].mxu0 %v6496
      %v6544 = vpop.f32.mrb[0].mxu0
      %v6545 = vadd.f32 0.0, %v6544
      %v6546 = vpop.f32.mrb[0].mxu0
      %v6547 = vpop.f32.mrb[0].mxu0
      %v6548 = vadd.f32 0.0, %v6547
      %v6549 = vpop.f32.mrb[0].mxu0
      %6550 = vmatprep.mubr.bf16.mxu0 0
      %6551 = vmatmul.mubr.bf16.gmra.mrb[0].mxu0 %v6499
      %v6552 = vpop.f32.mrb[0].mxu0
      %v6553 = vadd.f32 0.0, %v6552
      %v6554 = vpop.f32.mrb[0].mxu0
      %v6555 = vpop.f32.mrb[0].mxu0
      %v6556 = vadd.f32 0.0, %v6555
      %v6557 = vpop.f32.mrb[0].mxu0
      %6558 = vmatprep.mubr.bf16.mxu0 0
      %6559 = vmatmul.mubr.bf16.gmra.mrb[0].mxu0 %v6502
      %v6560 = vpop.f32.mrb[0].mxu0
      %v6561 = vadd.f32 0.0, %v6560
      %v6562 = vpop.f32.mrb[0].mxu0
      %v6563 = vpop.f32.mrb[0].mxu0
      %v6564 = vadd.f32 0.0, %v6563
      %v6565 = vpop.f32.mrb[0].mxu0
      %6566 = vmatprep.mubr.bf16.mxu0 0
      %6567 = vmatmul.mubr.bf16.gmra.mrb[0].mxu0 %v6505
      %v6568 = vpop.f32.mrb[0].mxu0
      %v6569 = vadd.f32 0.0, %v6568
      %v6570 = vpop.f32.mrb[0].mxu0
      %v6571 = vpop.f32.mrb[0].mxu0
      %v6572 = vadd.f32 0.0, %v6571
      %v6573 = vpop.f32.mrb[0].mxu0
      %6574 = vmatprep.mubr.bf16.mxu0 0
      %6575 = vmatmul.mubr.bf16.gmra.mrb[0].mxu0 %v6508
      %v6576 = vpop.f32.mrb[0].mxu0
      %v6577 = vadd.f32 0.0, %v6576
      %v6578 = vpop.f32.mrb[0].mxu0
      %v6579 = vpop.f32.mrb[0].mxu0
      %v6580 = vadd.f32 0.0, %v6579
      %v6581 = vpop.f32.mrb[0].mxu0
      %6582 = vdwg.mxu0
      %6623 = vrot.lane.b32.xlu0 %v6281, 24
      %v6624 = vpop.permute.xlu0 %6623
      %6625 = vrot.lane.b32.xlu0 %v6284, 24
      %v6626 = vpop.permute.xlu0 %6625
      %6627 = vrot.lane.b32.xlu0 %v6289, 24
      %v6628 = vpop.permute.xlu0 %6627
      %6629 = vrot.lane.b32.xlu0 %v6292, 24
      %v6630 = vpop.permute.xlu0 %6629
      %6631 = vrot.lane.b32.xlu0 %v6297, 24
      %v6632 = vpop.permute.xlu0 %6631
      %6633 = vrot.lane.b32.xlu0 %v6300, 24
      %v6634 = vpop.permute.xlu0 %6633
      %6635 = vrot.lane.b32.xlu0 %v6305, 24
      %v6636 = vpop.permute.xlu0 %6635
      %6637 = vrot.lane.b32.xlu0 %v6308, 24
      %v6638 = vpop.permute.xlu0 %6637
      %6639 = vrot.lane.b32.xlu0 %v6313, 24
      %v6640 = vpop.permute.xlu0 %6639
      %6641 = vrot.lane.b32.xlu0 %v6316, 24
      %v6642 = vpop.permute.xlu0 %6641
      %6643 = vrot.lane.b32.xlu0 %v6369, 24
      %v6644 = vpop.permute.xlu0 %6643
      %6645 = vrot.lane.b32.xlu0 %v6372, 24
      %v6646 = vpop.permute.xlu0 %6645
      %6647 = vrot.lane.b32.xlu0 %v6377, 24
      %v6648 = vpop.permute.xlu0 %6647
      %6649 = vrot.lane.b32.xlu0 %v6380, 24
      %v6650 = vpop.permute.xlu0 %6649
      %6651 = vrot.lane.b32.xlu0 %v6385, 24
      %v6652 = vpop.permute.xlu0 %6651
      %6653 = vrot.lane.b32.xlu0 %v6388, 24
      %v6654 = vpop.permute.xlu0 %6653
      %6655 = vrot.lane.b32.xlu0 %v6393, 24
      %v6656 = vpop.permute.xlu0 %6655
      %6657 = vrot.lane.b32.xlu0 %v6396, 24
      %v6658 = vpop.permute.xlu0 %6657
      %6659 = vrot.lane.b32.xlu0 %v6401, 24
      %v6660 = vpop.permute.xlu0 %6659
      %6661 = vrot.lane.b32.xlu0 %v6404, 24
      %v6662 = vpop.permute.xlu0 %6661
      %6663 = vrot.lane.b32.xlu0 %v6457, 24
      %v6664 = vpop.permute.xlu0 %6663
      %6665 = vrot.lane.b32.xlu0 %v6460, 24
      %v6666 = vpop.permute.xlu0 %6665
      %6667 = vrot.lane.b32.xlu0 %v6465, 24
      %v6668 = vpop.permute.xlu0 %6667
      %6669 = vrot.lane.b32.xlu0 %v6468, 24
      %v6670 = vpop.permute.xlu0 %6669
      %6671 = vrot.lane.b32.xlu0 %v6473, 24
      %v6672 = vpop.permute.xlu0 %6671
      %6673 = vrot.lane.b32.xlu0 %v6476, 24
      %v6674 = vpop.permute.xlu0 %6673
      %6675 = vrot.lane.b32.xlu0 %v6481, 24
      %v6676 = vpop.permute.xlu0 %6675
      %6677 = vrot.lane.b32.xlu0 %v6484, 24
      %v6678 = vpop.permute.xlu0 %6677
      %6679 = vrot.lane.b32.xlu0 %v6489, 24
      %v6680 = vpop.permute.xlu0 %6679
      %6681 = vrot.lane.b32.xlu0 %v6492, 24
      %v6682 = vpop.permute.xlu0 %6681
      %6683 = vrot.lane.b32.xlu0 %v6545, 24
      %v6684 = vpop.permute.xlu0 %6683
      %6685 = vrot.lane.b32.xlu0 %v6548, 24
      %v6686 = vpop.permute.xlu0 %6685
      %6687 = vrot.lane.b32.xlu0 %v6553, 24
      %v6688 = vpop.permute.xlu0 %6687
      %6689 = vrot.lane.b32.xlu0 %v6556, 24
      %v6690 = vpop.permute.xlu0 %6689
      %6691 = vrot.lane.b32.xlu0 %v6561, 24
      %v6692 = vpop.permute.xlu0 %6691
      %6693 = vrot.lane.b32.xlu0 %v6564, 24
      %v6694 = vpop.permute.xlu0 %6693
      %6695 = vrot.lane.b32.xlu0 %v6569, 24
      %v6696 = vpop.permute.xlu0 %6695
      %6697 = vrot.lane.b32.xlu0 %v6572, 24
      %v6698 = vpop.permute.xlu0 %6697
      %6699 = vrot.lane.b32.xlu0 %v6577, 24
      %v6700 = vpop.permute.xlu0 %6699
      %6701 = vrot.lane.b32.xlu0 %v6580, 24
      %v6702 = vpop.permute.xlu0 %6701
      %vm6743 = vcmask 261312
      %6744 = vst.msk [vmem:[#allocation2] sm:$0xff] %vm6743, %v6624
      %6745 = vst.msk [vmem:[#allocation2 + $0x8] sm:$0xff] %vm6743, %v6626
      %6746 = vst.msk [vmem:[#allocation2 + $0x10] sm:$0xff] %vm6743, %v6628
      %6747 = vst.msk [vmem:[#allocation2 + $0x18] sm:$0xff] %vm6743, %v6630
      %6748 = vst.msk [vmem:[#allocation2 + $0x20] sm:$0xff] %vm6743, %v6632
      %6749 = vst.msk [vmem:[#allocation2 + $0x28] sm:$0xff] %vm6743, %v6634
      %6750 = vst.msk [vmem:[#allocation2 + $0x30] sm:$0xff] %vm6743, %v6636
      %6751 = vst.msk [vmem:[#allocation2 + $0x38] sm:$0xff] %vm6743, %v6638
      %6752 = vst.msk [vmem:[#allocation2 + $0x40] sm:$0xff] %vm6743, %v6640
      %6753 = vst.msk [vmem:[#allocation2 + $0x48] sm:$0xff] %vm6743, %v6642
      %6754 = vst.msk [vmem:[#allocation2 + $0x50] sm:$0xff] %vm6743, %v6644
      %6755 = vst.msk [vmem:[#allocation2 + $0x58] sm:$0xff] %vm6743, %v6646
      %6756 = vst.msk [vmem:[#allocation2 + $0x60] sm:$0xff] %vm6743, %v6648
      %6757 = vst.msk [vmem:[#allocation2 + $0x68] sm:$0xff] %vm6743, %v6650
      %6758 = vst.msk [vmem:[#allocation2 + $0x70] sm:$0xff] %vm6743, %v6652
      %6759 = vst.msk [vmem:[#allocation2 + $0x78] sm:$0xff] %vm6743, %v6654
      %6760 = vst.msk [vmem:[#allocation2 + $0x80] sm:$0xff] %vm6743, %v6656
      %6761 = vst.msk [vmem:[#allocation2 + $0x88] sm:$0xff] %vm6743, %v6658
      %6762 = vst.msk [vmem:[#allocation2 + $0x90] sm:$0xff] %vm6743, %v6660
      %6763 = vst.msk [vmem:[#allocation2 + $0x98] sm:$0xff] %vm6743, %v6662
      %6764 = vst.msk [vmem:[#allocation2 + $0xa0] sm:$0xff] %vm6743, %v6664
      %6765 = vst.msk [vmem:[#allocation2 + $0xa8] sm:$0xff] %vm6743, %v6666
      %6766 = vst.msk [vmem:[#allocation2 + $0xb0] sm:$0xff] %vm6743, %v6668
      %6767 = vst.msk [vmem:[#allocation2 + $0xb8] sm:$0xff] %vm6743, %v6670
      %6768 = vst.msk [vmem:[#allocation2 + $0xc0] sm:$0xff] %vm6743, %v6672
      %6769 = vst.msk [vmem:[#allocation2 + $0xc8] sm:$0xff] %vm6743, %v6674
      %6770 = vst.msk [vmem:[#allocation2 + $0xd0] sm:$0xff] %vm6743, %v6676
      %6771 = vst.msk [vmem:[#allocation2 + $0xd8] sm:$0xff] %vm6743, %v6678
      %6772 = vst.msk [vmem:[#allocation2 + $0xe0] sm:$0xff] %vm6743, %v6680
      %6773 = vst.msk [vmem:[#allocation2 + $0xe8] sm:$0xff] %vm6743, %v6682
      %6774 = vst.msk [vmem:[#allocation2 + $0xf0] sm:$0xff] %vm6743, %v6684
      %6775 = vst.msk [vmem:[#allocation2 + $0xf8] sm:$0xff] %vm6743, %v6686
      %6776 = vst.msk [vmem:[#allocation2 + $0x100] sm:$0xff] %vm6743, %v6688
      %6777 = vst.msk [vmem:[#allocation2 + $0x108] sm:$0xff] %vm6743, %v6690
      %6778 = vst.msk [vmem:[#allocation2 + $0x110] sm:$0xff] %vm6743, %v6692
      %6779 = vst.msk [vmem:[#allocation2 + $0x118] sm:$0xff] %vm6743, %v6694
      %6780 = vst.msk [vmem:[#allocation2 + $0x120] sm:$0xff] %vm6743, %v6696
      %6781 = vst.msk [vmem:[#allocation2 + $0x128] sm:$0xff] %vm6743, %v6698
      %6782 = vst.msk [vmem:[#allocation2 + $0x130] sm:$0xff] %vm6743, %v6700
      %6783 = vst.msk [vmem:[#allocation2 + $0x138] sm:$0xff] %vm6743, %v6702
      %v6784 = vld [vmem:[#allocation2] sm:$0xff]
      %v6785 = vld [vmem:[#allocation2 + $0x8] sm:$0xff]
      %v6786 = vld [vmem:[#allocation2 + $0x10] sm:$0xff]
      %v6787 = vld [vmem:[#allocation2 + $0x18] sm:$0xff]
      %v6788 = vld [vmem:[#allocation2 + $0x20] sm:$0xff]
      %v6789 = vld [vmem:[#allocation2 + $0x28] sm:$0xff]
      %v6790 = vld [vmem:[#allocation2 + $0x30] sm:$0xff]
      %v6791 = vld [vmem:[#allocation2 + $0x38] sm:$0xff]
      %v6792 = vld [vmem:[#allocation2 + $0x40] sm:$0xff]
      %v6793 = vld [vmem:[#allocation2 + $0x48] sm:$0xff]
      %v6794 = vld [vmem:[#allocation2 + $0x50] sm:$0xff]
      %v6795 = vld [vmem:[#allocation2 + $0x58] sm:$0xff]
      %v6796 = vld [vmem:[#allocation2 + $0x60] sm:$0xff]
      %v6797 = vld [vmem:[#allocation2 + $0x68] sm:$0xff]
      %v6798 = vld [vmem:[#allocation2 + $0x70] sm:$0xff]
      %v6799 = vld [vmem:[#allocation2 + $0x78] sm:$0xff]
      %v6800 = vld [vmem:[#allocation2 + $0x80] sm:$0xff]
      %v6801 = vld [vmem:[#allocation2 + $0x88] sm:$0xff]
      %v6802 = vld [vmem:[#allocation2 + $0x90] sm:$0xff]
      %v6803 = vld [vmem:[#allocation2 + $0x98] sm:$0xff]
      %v6804 = vld [vmem:[#allocation2 + $0xa0] sm:$0xff]
      %v6805 = vld [vmem:[#allocation2 + $0xa8] sm:$0xff]
      %v6806 = vld [vmem:[#allocation2 + $0xb0] sm:$0xff]
      %v6807 = vld [vmem:[#allocation2 + $0xb8] sm:$0xff]
      %v6808 = vld [vmem:[#allocation2 + $0xc0] sm:$0xff]
      %v6809 = vld [vmem:[#allocation2 + $0xc8] sm:$0xff]
      %v6810 = vld [vmem:[#allocation2 + $0xd0] sm:$0xff]
      %v6811 = vld [vmem:[#allocation2 + $0xd8] sm:$0xff]
      %v6812 = vld [vmem:[#allocation2 + $0xe0] sm:$0xff]
      %v6813 = vld [vmem:[#allocation2 + $0xe8] sm:$0xff]
      %v6814 = vld [vmem:[#allocation2 + $0xf0] sm:$0xff]
      %v6815 = vld [vmem:[#allocation2 + $0xf8] sm:$0xff]
      %v6816 = vld [vmem:[#allocation2 + $0x100] sm:$0xff]
      %v6817 = vld [vmem:[#allocation2 + $0x108] sm:$0xff]
      %v6818 = vld [vmem:[#allocation2 + $0x110] sm:$0xff]
      %v6819 = vld [vmem:[#allocation2 + $0x118] sm:$0xff]
      %v6820 = vld [vmem:[#allocation2 + $0x120] sm:$0xff]
      %v6821 = vld [vmem:[#allocation2 + $0x128] sm:$0xff]
      %v6822 = vld [vmem:[#allocation2 + $0x130] sm:$0xff]
      %v6823 = vld [vmem:[#allocation2 + $0x138] sm:$0xff]
      %v6824 = vld [vmem:[%s4] sm:$0xff]
      %v6825 = vld [vmem:[%s4 + $0x8] sm:$0xff]
      %v6826 = vld [vmem:[%s4 + $0x10] sm:$0xff]
      %v6827 = vld [vmem:[%s4 + $0x18] sm:$0xff]
      %v6828 = vld [vmem:[%s5] sm:$0x1]
      %v6830 = vlaneseq
      %v6831 = vshrl.u32 %v6830, 7
      %v6832 = vsub.s32 0, %v6831
      %v6833 = vrot.slane %v6828, %v6832
      %vm6835 = vcmask 261120
      %v6837 = vsel %vm6835, %v6784, 0
      %v6840 = vsel %vm6835, %v6785, 0
      %v6843 = vsel %vm6835, %v6786, 0
      %v6846 = vsel %vm6835, %v6787, 0
      %v6849 = vsel %vm6835, %v6788, 0
      %v6852 = vsel %vm6835, %v6789, 0
      %v6855 = vsel %vm6835, %v6790, 0
      %v6858 = vsel %vm6835, %v6791, 0
      %v6861 = vsel %vm6835, %v6792, 0
      %v6864 = vsel %vm6835, %v6793, 0
      %v6867 = vsel %vm6835, %v6794, 0
      %v6870 = vsel %vm6835, %v6795, 0
      %v6873 = vsel %vm6835, %v6796, 0
      %v6876 = vsel %vm6835, %v6797, 0
      %v6879 = vsel %vm6835, %v6798, 0
      %v6882 = vsel %vm6835, %v6799, 0
      %v6885 = vsel %vm6835, %v6800, 0
      %v6888 = vsel %vm6835, %v6801, 0
      %v6891 = vsel %vm6835, %v6802, 0
      %v6894 = vsel %vm6835, %v6803, 0
      %v6897 = vsel %vm6835, %v6804, 0
      %v6900 = vsel %vm6835, %v6805, 0
      %v6903 = vsel %vm6835, %v6806, 0
      %v6906 = vsel %vm6835, %v6807, 0
      %v6909 = vsel %vm6835, %v6808, 0
      %v6912 = vsel %vm6835, %v6809, 0
      %v6915 = vsel %vm6835, %v6810, 0
      %v6918 = vsel %vm6835, %v6811, 0
      %v6921 = vsel %vm6835, %v6812, 0
      %v6924 = vsel %vm6835, %v6813, 0
      %v6927 = vsel %vm6835, %v6814, 0
      %v6930 = vsel %vm6835, %v6815, 0
      %v6933 = vsel %vm6835, %v6816, 0
      %v6936 = vsel %vm6835, %v6817, 0
      %v6939 = vsel %vm6835, %v6818, 0
      %v6942 = vsel %vm6835, %v6819, 0
      %v6945 = vsel %vm6835, %v6820, 0
      %v6948 = vsel %vm6835, %v6821, 0
      %v6951 = vsel %vm6835, %v6822, 0
      %v6954 = vsel %vm6835, %v6823, 0
      %6956 = vmatprep.subr.mxu0 0.0
      %6957 = vmatpush1.msra.mxu0 %v6824
      %6958 = vmatprep.subr.mxu0 0.0
      %6959 = vmatpush1.msra.mxu0 %v6825
      %6960 = vmatprep.subr.mxu0 0.0
      %6961 = vmatpush1.msra.mxu0 %v6826
      %6962 = vmatprep.subr.mxu0 0.0
      %6963 = vmatpush1.msra.mxu0 %v6827
      %6964 = vmatprep.subr.mxu0 0.0
      %6965 = vmatpush1.msra.mxu0 0.0
      %6966 = vmatprep.subr.mxu0 0.0
      %6967 = vmatpush1.msra.mxu0 0.0
      %6968 = vmatprep.subr.mxu0 0.0
      %6969 = vmatpush1.msra.mxu0 0.0
      %6970 = vmatprep.subr.mxu0 0.0
      %6971 = vmatpush1.msra.mxu0 0.0
      %6972 = vmatprep.subr.mxu0 0.0
      %6973 = vmatpush1.msra.mxu0 0.0
      %6974 = vmatprep.subr.mxu0 0.0
      %6975 = vmatpush1.msra.mxu0 0.0
      %6976 = vmatprep.subr.mxu0 0.0
      %6977 = vmatpush1.msra.mxu0 0.0
      %6978 = vmatprep.subr.mxu0 0.0
      %6979 = vmatpush1.msra.mxu0 0.0
      %6980 = vmatprep.subr.mxu0 0.0
      %6981 = vmatpush1.msra.mxu0 0.0
      %6982 = vmatprep.subr.mxu0 0.0
      %6983 = vmatpush1.msra.mxu0 0.0
      %6984 = vmatprep.subr.mxu0 0.0
      %6985 = vmatpush1.msra.mxu0 0.0
      %6986 = vmatprep.subr.mxu0 0.0
      %6987 = vmatpush1.msra.mxu0 0.0
      %6988 = vmatprep.subr.mxu0 0.0
      %6989 = vmatpush1.msra.mxu0 0.0
      %6990 = vmatprep.subr.mxu0 0.0
      %6991 = vmatpush1.msra.mxu0 0.0
      %6992 = vmatprep.subr.mxu0 0.0
      %6993 = vmatpush1.msra.mxu0 0.0
      %6994 = vmatprep.subr.mxu0 0.0
      %6995 = vmatpush1.msra.mxu0 0.0
      %6996 = vmatprep.subr.mxu0 0.0
      %6997 = vmatpush1.msra.mxu0 0.0
      %6998 = vmatprep.subr.mxu0 0.0
      %6999 = vmatpush1.msra.mxu0 0.0
      %7000 = vmatprep.subr.mxu0 0.0
      %7001 = vmatpush1.msra.mxu0 0.0
      %7002 = vmatprep.subr.mxu0 0.0
      %7003 = vmatpush1.msra.mxu0 0.0
      %7004 = vmatprep.subr.mxu0 0.0
      %7005 = vmatpush1.msra.mxu0 0.0
      %7006 = vmatprep.subr.mxu0 0.0
      %7007 = vmatpush1.msra.mxu0 0.0
      %7008 = vmatprep.subr.mxu0 0.0
      %7009 = vmatpush1.msra.mxu0 0.0
      %7010 = vmatprep.subr.mxu0 0.0
      %7011 = vmatpush1.msra.mxu0 0.0
      %7012 = vmatprep.subr.mxu0 0.0
      %7013 = vmatpush1.msra.mxu0 0.0
      %7014 = vmatprep.subr.mxu0 0.0
      %7015 = vmatpush1.msra.mxu0 0.0
      %7016 = vmatprep.subr.mxu0 0.0
      %7017 = vmatpush1.msra.mxu0 0.0
      %7018 = vmatprep.subr.mxu0 0.0
      %7019 = vmatpush1.msra.mxu0 0.0
      %7020 = vmatprep.mubr.f32.mxu0 0.0
      %7021 = vmatmul.mubr.f32.gmra.mrb[0].mxu0 %v6837
      %v7022 = vpop.f32.mrb[0].mxu0
      %v7023 = vadd.f32 %v6833, %v7022
      %v7024 = vpop.f32.mrb[0].mxu0
      %7025 = vmatprep.mubr.f32.mxu0 0.0
      %7026 = vmatmul.mubr.f32.gmra.mrb[0].mxu0 %v6840
      %v7027 = vpop.f32.mrb[0].mxu0
      %v7028 = vadd.f32 %v6833, %v7027
      %v7029 = vpop.f32.mrb[0].mxu0
      %7030 = vmatprep.mubr.f32.mxu0 0.0
      %7031 = vmatmul.mubr.f32.gmra.mrb[0].mxu0 %v6843
      %v7032 = vpop.f32.mrb[0].mxu0
      %v7033 = vadd.f32 %v6833, %v7032
      %v7034 = vpop.f32.mrb[0].mxu0
      %7035 = vmatprep.mubr.f32.mxu0 0.0
      %7036 = vmatmul.mubr.f32.gmra.mrb[0].mxu0 %v6846
      %v7037 = vpop.f32.mrb[0].mxu0
      %v7038 = vadd.f32 %v6833, %v7037
      %v7039 = vpop.f32.mrb[0].mxu0
      %7040 = vmatprep.mubr.f32.mxu0 0.0
      %7041 = vmatmul.mubr.f32.gmra.mrb[0].mxu0 %v6849
      %v7042 = vpop.f32.mrb[0].mxu0
      %v7043 = vadd.f32 %v6833, %v7042
      %v7044 = vpop.f32.mrb[0].mxu0
      %7045 = vmatprep.mubr.f32.mxu0 0.0
      %7046 = vmatmul.mubr.f32.gmra.mrb[0].mxu0 %v6852
      %v7047 = vpop.f32.mrb[0].mxu0
      %v7048 = vadd.f32 %v6833, %v7047
      %v7049 = vpop.f32.mrb[0].mxu0
      %7050 = vmatprep.mubr.f32.mxu0 0.0
      %7051 = vmatmul.mubr.f32.gmra.mrb[0].mxu0 %v6855
      %v7052 = vpop.f32.mrb[0].mxu0
      %v7053 = vadd.f32 %v6833, %v7052
      %v7054 = vpop.f32.mrb[0].mxu0
      %7055 = vmatprep.mubr.f32.mxu0 0.0
      %7056 = vmatmul.mubr.f32.gmra.mrb[0].mxu0 %v6858
      %v7057 = vpop.f32.mrb[0].mxu0
      %v7058 = vadd.f32 %v6833, %v7057
      %v7059 = vpop.f32.mrb[0].mxu0
      %7060 = vmatprep.mubr.f32.mxu0 0.0
      %7061 = vmatmul.mubr.f32.gmra.mrb[0].mxu0 %v6861
      %v7062 = vpop.f32.mrb[0].mxu0
      %v7063 = vadd.f32 %v6833, %v7062
      %v7064 = vpop.f32.mrb[0].mxu0
      %7065 = vmatprep.mubr.f32.mxu0 0.0
      %7066 = vmatmul.mubr.f32.gmra.mrb[0].mxu0 %v6864
      %v7067 = vpop.f32.mrb[0].mxu0
      %v7068 = vadd.f32 %v6833, %v7067
      %v7069 = vpop.f32.mrb[0].mxu0
      %7070 = vmatprep.mubr.f32.mxu0 0.0
      %7071 = vmatmul.mubr.f32.gmra.mrb[0].mxu0 %v6867
      %v7072 = vpop.f32.mrb[0].mxu0
      %v7073 = vadd.f32 %v6833, %v7072
      %v7074 = vpop.f32.mrb[0].mxu0
      %7075 = vmatprep.mubr.f32.mxu0 0.0
      %7076 = vmatmul.mubr.f32.gmra.mrb[0].mxu0 %v6870
      %v7077 = vpop.f32.mrb[0].mxu0
      %v7078 = vadd.f32 %v6833, %v7077
      %v7079 = vpop.f32.mrb[0].mxu0
      %7080 = vmatprep.mubr.f32.mxu0 0.0
      %7081 = vmatmul.mubr.f32.gmra.mrb[0].mxu0 %v6873
      %v7082 = vpop.f32.mrb[0].mxu0
      %v7083 = vadd.f32 %v6833, %v7082
      %v7084 = vpop.f32.mrb[0].mxu0
      %7085 = vmatprep.mubr.f32.mxu0 0.0
      %7086 = vmatmul.mubr.f32.gmra.mrb[0].mxu0 %v6876
      %v7087 = vpop.f32.mrb[0].mxu0
      %v7088 = vadd.f32 %v6833, %v7087
      %v7089 = vpop.f32.mrb[0].mxu0
      %7090 = vmatprep.mubr.f32.mxu0 0.0
      %7091 = vmatmul.mubr.f32.gmra.mrb[0].mxu0 %v6879
      %v7092 = vpop.f32.mrb[0].mxu0
      %v7093 = vadd.f32 %v6833, %v7092
      %v7094 = vpop.f32.mrb[0].mxu0
      %7095 = vmatprep.mubr.f32.mxu0 0.0
      %7096 = vmatmul.mubr.f32.gmra.mrb[0].mxu0 %v6882
      %v7097 = vpop.f32.mrb[0].mxu0
      %v7098 = vadd.f32 %v6833, %v7097
      %v7099 = vpop.f32.mrb[0].mxu0
      %7100 = vmatprep.mubr.f32.mxu0 0.0
      %7101 = vmatmul.mubr.f32.gmra.mrb[0].mxu0 %v6885
      %v7102 = vpop.f32.mrb[0].mxu0
      %v7103 = vadd.f32 %v6833, %v7102
      %v7104 = vpop.f32.mrb[0].mxu0
      %7105 = vmatprep.mubr.f32.mxu0 0.0
      %7106 = vmatmul.mubr.f32.gmra.mrb[0].mxu0 %v6888
      %v7107 = vpop.f32.mrb[0].mxu0
      %v7108 = vadd.f32 %v6833, %v7107
      %v7109 = vpop.f32.mrb[0].mxu0
      %7110 = vmatprep.mubr.f32.mxu0 0.0
      %7111 = vmatmul.mubr.f32.gmra.mrb[0].mxu0 %v6891
      %v7112 = vpop.f32.mrb[0].mxu0
      %v7113 = vadd.f32 %v6833, %v7112
      %v7114 = vpop.f32.mrb[0].mxu0
      %7115 = vmatprep.mubr.f32.mxu0 0.0
      %7116 = vmatmul.mubr.f32.gmra.mrb[0].mxu0 %v6894
      %v7117 = vpop.f32.mrb[0].mxu0
      %v7118 = vadd.f32 %v6833, %v7117
      %v7119 = vpop.f32.mrb[0].mxu0
      %7120 = vmatprep.mubr.f32.mxu0 0.0
      %7121 = vmatmul.mubr.f32.gmra.mrb[0].mxu0 %v6897
      %v7122 = vpop.f32.mrb[0].mxu0
      %v7123 = vadd.f32 %v6833, %v7122
      %v7124 = vpop.f32.mrb[0].mxu0
      %7125 = vmatprep.mubr.f32.mxu0 0.0
      %7126 = vmatmul.mubr.f32.gmra.mrb[0].mxu0 %v6900
      %v7127 = vpop.f32.mrb[0].mxu0
      %v7128 = vadd.f32 %v6833, %v7127
      %v7129 = vpop.f32.mrb[0].mxu0
      %7130 = vmatprep.mubr.f32.mxu0 0.0
      %7131 = vmatmul.mubr.f32.gmra.mrb[0].mxu0 %v6903
      %v7132 = vpop.f32.mrb[0].mxu0
      %v7133 = vadd.f32 %v6833, %v7132
      %v7134 = vpop.f32.mrb[0].mxu0
      %7135 = vmatprep.mubr.f32.mxu0 0.0
      %7136 = vmatmul.mubr.f32.gmra.mrb[0].mxu0 %v6906
      %v7137 = vpop.f32.mrb[0].mxu0
      %v7138 = vadd.f32 %v6833, %v7137
      %v7139 = vpop.f32.mrb[0].mxu0
      %7140 = vmatprep.mubr.f32.mxu0 0.0
      %7141 = vmatmul.mubr.f32.gmra.mrb[0].mxu0 %v6909
      %v7142 = vpop.f32.mrb[0].mxu0
      %v7143 = vadd.f32 %v6833, %v7142
      %v7144 = vpop.f32.mrb[0].mxu0
      %7145 = vmatprep.mubr.f32.mxu0 0.0
      %7146 = vmatmul.mubr.f32.gmra.mrb[0].mxu0 %v6912
      %v7147 = vpop.f32.mrb[0].mxu0
      %v7148 = vadd.f32 %v6833, %v7147
      %v7149 = vpop.f32.mrb[0].mxu0
      %7150 = vmatprep.mubr.f32.mxu0 0.0
      %7151 = vmatmul.mubr.f32.gmra.mrb[0].mxu0 %v6915
      %v7152 = vpop.f32.mrb[0].mxu0
      %v7153 = vadd.f32 %v6833, %v7152
      %v7154 = vpop.f32.mrb[0].mxu0
      %7155 = vmatprep.mubr.f32.mxu0 0.0
      %7156 = vmatmul.mubr.f32.gmra.mrb[0].mxu0 %v6918
      %v7157 = vpop.f32.mrb[0].mxu0
      %v7158 = vadd.f32 %v6833, %v7157
      %v7159 = vpop.f32.mrb[0].mxu0
      %7160 = vmatprep.mubr.f32.mxu0 0.0
      %7161 = vmatmul.mubr.f32.gmra.mrb[0].mxu0 %v6921
      %v7162 = vpop.f32.mrb[0].mxu0
      %v7163 = vadd.f32 %v6833, %v7162
      %v7164 = vpop.f32.mrb[0].mxu0
      %7165 = vmatprep.mubr.f32.mxu0 0.0
      %7166 = vmatmul.mubr.f32.gmra.mrb[0].mxu0 %v6924
      %v7167 = vpop.f32.mrb[0].mxu0
      %v7168 = vadd.f32 %v6833, %v7167
      %v7169 = vpop.f32.mrb[0].mxu0
      %7170 = vmatprep.mubr.f32.mxu0 0.0
      %7171 = vmatmul.mubr.f32.gmra.mrb[0].mxu0 %v6927
      %v7172 = vpop.f32.mrb[0].mxu0
      %v7173 = vadd.f32 %v6833, %v7172
      %v7174 = vpop.f32.mrb[0].mxu0
      %7175 = vmatprep.mubr.f32.mxu0 0.0
      %7176 = vmatmul.mubr.f32.gmra.mrb[0].mxu0 %v6930
      %v7177 = vpop.f32.mrb[0].mxu0
      %v7178 = vadd.f32 %v6833, %v7177
      %v7179 = vpop.f32.mrb[0].mxu0
      %7180 = vmatprep.mubr.f32.mxu0 0.0
      %7181 = vmatmul.mubr.f32.gmra.mrb[0].mxu0 %v6933
      %v7182 = vpop.f32.mrb[0].mxu0
      %v7183 = vadd.f32 %v6833, %v7182
      %v7184 = vpop.f32.mrb[0].mxu0
      %7185 = vmatprep.mubr.f32.mxu0 0.0
      %7186 = vmatmul.mubr.f32.gmra.mrb[0].mxu0 %v6936
      %v7187 = vpop.f32.mrb[0].mxu0
      %v7188 = vadd.f32 %v6833, %v7187
      %v7189 = vpop.f32.mrb[0].mxu0
      %7190 = vmatprep.mubr.f32.mxu0 0.0
      %7191 = vmatmul.mubr.f32.gmra.mrb[0].mxu0 %v6939
      %v7192 = vpop.f32.mrb[0].mxu0
      %v7193 = vadd.f32 %v6833, %v7192
      %v7194 = vpop.f32.mrb[0].mxu0
      %7195 = vmatprep.mubr.f32.mxu0 0.0
      %7196 = vmatmul.mubr.f32.gmra.mrb[0].mxu0 %v6942
      %v7197 = vpop.f32.mrb[0].mxu0
      %v7198 = vadd.f32 %v6833, %v7197
      %v7199 = vpop.f32.mrb[0].mxu0
      %7200 = vmatprep.mubr.f32.mxu0 0.0
      %7201 = vmatmul.mubr.f32.gmra.mrb[0].mxu0 %v6945
      %v7202 = vpop.f32.mrb[0].mxu0
      %v7203 = vadd.f32 %v6833, %v7202
      %v7204 = vpop.f32.mrb[0].mxu0
      %7205 = vmatprep.mubr.f32.mxu0 0.0
      %7206 = vmatmul.mubr.f32.gmra.mrb[0].mxu0 %v6948
      %v7207 = vpop.f32.mrb[0].mxu0
      %v7208 = vadd.f32 %v6833, %v7207
      %v7209 = vpop.f32.mrb[0].mxu0
      %7210 = vmatprep.mubr.f32.mxu0 0.0
      %7211 = vmatmul.mubr.f32.gmra.mrb[0].mxu0 %v6951
      %v7212 = vpop.f32.mrb[0].mxu0
      %v7213 = vadd.f32 %v6833, %v7212
      %v7214 = vpop.f32.mrb[0].mxu0
      %7215 = vmatprep.mubr.f32.mxu0 0.0
      %7216 = vmatmul.mubr.f32.gmra.mrb[0].mxu0 %v6954
      %v7217 = vpop.f32.mrb[0].mxu0
      %v7218 = vadd.f32 %v6833, %v7217
      %v7219 = vpop.f32.mrb[0].mxu0
      %7220 = vdwg.mxu0
      %7221 = vst.msk [vmem:[%s308] sm:$0xff] %vm6835, %v7023
      %7222 = vst.msk [vmem:[%s308 + $0x8] sm:$0xff] %vm6835, %v7028
      %7223 = vst.msk [vmem:[%s308 + $0x10] sm:$0xff] %vm6835, %v7033
      %7224 = vst.msk [vmem:[%s308 + $0x18] sm:$0xff] %vm6835, %v7038
      %7225 = vst.msk [vmem:[%s308 + $0x20] sm:$0xff] %vm6835, %v7043
      %7226 = vst.msk [vmem:[%s308 + $0x28] sm:$0xff] %vm6835, %v7048
      %7227 = vst.msk [vmem:[%s308 + $0x30] sm:$0xff] %vm6835, %v7053
      %7228 = vst.msk [vmem:[%s308 + $0x38] sm:$0xff] %vm6835, %v7058
      %7229 = vst.msk [vmem:[%s308 + $0x40] sm:$0xff] %vm6835, %v7063
      %7230 = vst.msk [vmem:[%s308 + $0x48] sm:$0xff] %vm6835, %v7068
      %7231 = vst.msk [vmem:[%s308 + $0x50] sm:$0xff] %vm6835, %v7073
      %7232 = vst.msk [vmem:[%s308 + $0x58] sm:$0xff] %vm6835, %v7078
      %7233 = vst.msk [vmem:[%s308 + $0x60] sm:$0xff] %vm6835, %v7083
      %7234 = vst.msk [vmem:[%s308 + $0x68] sm:$0xff] %vm6835, %v7088
      %7235 = vst.msk [vmem:[%s308 + $0x70] sm:$0xff] %vm6835, %v7093
      %7236 = vst.msk [vmem:[%s308 + $0x78] sm:$0xff] %vm6835, %v7098
      %7237 = vst.msk [vmem:[%s308 + $0x80] sm:$0xff] %vm6835, %v7103
      %7238 = vst.msk [vmem:[%s308 + $0x88] sm:$0xff] %vm6835, %v7108
      %7239 = vst.msk [vmem:[%s308 + $0x90] sm:$0xff] %vm6835, %v7113
      %7240 = vst.msk [vmem:[%s308 + $0x98] sm:$0xff] %vm6835, %v7118
      %7241 = vst.msk [vmem:[%s308 + $0xa0] sm:$0xff] %vm6835, %v7123
      %7242 = vst.msk [vmem:[%s308 + $0xa8] sm:$0xff] %vm6835, %v7128
      %7243 = vst.msk [vmem:[%s308 + $0xb0] sm:$0xff] %vm6835, %v7133
      %7244 = vst.msk [vmem:[%s308 + $0xb8] sm:$0xff] %vm6835, %v7138
      %7245 = vst.msk [vmem:[%s308 + $0xc0] sm:$0xff] %vm6835, %v7143
      %7246 = vst.msk [vmem:[%s308 + $0xc8] sm:$0xff] %vm6835, %v7148
      %7247 = vst.msk [vmem:[%s308 + $0xd0] sm:$0xff] %vm6835, %v7153
      %7248 = vst.msk [vmem:[%s308 + $0xd8] sm:$0xff] %vm6835, %v7158
      %7249 = vst.msk [vmem:[%s308 + $0xe0] sm:$0xff] %vm6835, %v7163
      %7250 = vst.msk [vmem:[%s308 + $0xe8] sm:$0xff] %vm6835, %v7168
      %7251 = vst.msk [vmem:[%s308 + $0xf0] sm:$0xff] %vm6835, %v7173
      %7252 = vst.msk [vmem:[%s308 + $0xf8] sm:$0xff] %vm6835, %v7178
      %7253 = vst.msk [vmem:[%s308 + $0x100] sm:$0xff] %vm6835, %v7183
      %7254 = vst.msk [vmem:[%s308 + $0x108] sm:$0xff] %vm6835, %v7188
      %7255 = vst.msk [vmem:[%s308 + $0x110] sm:$0xff] %vm6835, %v7193
      %7256 = vst.msk [vmem:[%s308 + $0x118] sm:$0xff] %vm6835, %v7198
      %7257 = vst.msk [vmem:[%s308 + $0x120] sm:$0xff] %vm6835, %v7203
      %7258 = vst.msk [vmem:[%s308 + $0x128] sm:$0xff] %vm6835, %v7208
      %7259 = vst.msk [vmem:[%s308 + $0x130] sm:$0xff] %vm6835, %v7213
      %7260 = vst.msk [vmem:[%s308 + $0x138] sm:$0xff] %vm6835, %v7218
      %s7261 = smul.u32 4, %s17
      %p7262 = scmp.lt.s32.totalorder %s7261, 7
      %s7263 = scalar_select %p7262, %s7261, 7
      %s7264 = smul.addr %s7263, 10
      %s7265 = smul.addr %s7264, 8
      %s7266 = scalar_lea.vmem %s6, %s7265
      // Predicated region
      $region45: #{window_attention_forward.1} parent=43 // pred_check
        %p7267 = pneg %p176
      $region46: #{window_attention_forward.1} parent=43 // pred_check_branch
        %7269 = sbr.rel (%p7267) target = $region48
      $region47: #{window_attention_forward.1} parent=43 // pred_region
        %s7270 = smul.u32 4, %s17
      $region48: #{window_attention_forward.1} parent=43 // pred_fallthru
        _
    $region44: #{window_attention_forward.1} parent=5 // pred_fallthru
      _
    %p7271 = scmp.le.s32.totalorder 2, %s12
    // Predicated region
    $region49: #{window_attention_forward.1} parent=5 // pred_check
      %p7272 = pneg %p7271
    $region50: #{window_attention_forward.1} parent=5 // pred_check_branch
      %7274 = sbr.rel (%p7272) target = $region52
    $region51: #{window_attention_forward.1} parent=5 // pred_region
      %s7275 = ssub.s32 %s12, 2
      // Predicated region
      $region53: #{window_attention_forward.1} parent=51 // pred_check
        %p7276 = pneg %p182
      $region54: #{window_attention_forward.1} parent=51 // pred_check_branch
        %7278 = sbr.rel (%p7276) target = $region56
      $region55: #{window_attention_forward.1} parent=51 // pred_region
        %s7279 = smul.u32 4, %s18
        %p7280 = scmp.lt.s32.totalorder %s7279, 7
        %s7281 = scalar_select %p7280, %s7279, 7
        %s7282 = smul.addr %s7281, 10
        %s7283 = smul.addr %s7282, 8
        %s7284 = scalar_lea.vmem %s6, %s7283
      $region56: #{window_attention_forward.1} parent=51 // pred_fallthru
        _
    $region52: #{window_attention_forward.1} parent=5 // pred_fallthru
      _
  $region6: #{window_attention_forward.1} parent=0 // loop_footer
    %s16 = sadd.s32 1, %s12
  $region7: #{window_attention_forward.1} parent=0 // loop_footer_branch
    %11 = sbr.rel target = $region3
  $region8: #{window_attention_forward.1} parent=0 // loop_exit
    _

</llo_original>
